<compile_context>
chip_gen: v7x
topology: tpu7x:2x2x1
jax: 0.10.0
libtpu: 0.0.40
codegen_flags: <defaults>
</compile_context>

<pallas_src>
import functools
import math

import jax
import jax.numpy as jnp
from jax.experimental import pallas as pl
from jax.experimental.pallas import tpu as pltpu  # noqa: F401  (TPU backend assumed)

EPS = 1e-5       # nn.LayerNorm default
LANE = 128       # TPU lane width; fc output padded to a multiple of this


# ----------------------------------------------------------------------------
# in-kernel helpers (traced inside the fused Pallas kernel)
# ----------------------------------------------------------------------------
def _mm(x, wt_ref, b_ref):
    """x: (M, K) f32; wt_ref: (K, N) bf16 ref; b_ref: (1, N) f32 ref -> (M, N) f32."""
    return (jnp.dot(x.astype(jnp.bfloat16), wt_ref[...],
                    preferred_element_type=jnp.float32) + b_ref[...])


def _layer_norm(x, w, b):
    mu = jnp.mean(x, axis=-1, keepdims=True)
    xc = x - mu
    var = jnp.mean(xc * xc, axis=-1, keepdims=True)
    return xc * jax.lax.rsqrt(var + EPS) * w + b


def _mha(q3, kv3, wq, wk, wv, bq, bk, bv, wo, bo, nhead):
    """PyTorch nn.MultiheadAttention semantics (no mask), batch-first.

    q3: (B, Sq, E) f32, kv3: (B, Sk, E) f32.
    Per-head weights pre-split & stacked host-side:
      wq/wk/wv: (H, E, hd) bf16 (wq/bq pre-scaled by 1/sqrt(hd)),
      bq/bk/bv: (H, 1, hd) f32, wo: (H, hd, E) bf16, bo: (1, E) f32.
    Out-proj is applied per head and summed -> identical to concat(heads) @ Wo
    but with zero in-kernel lane slicing / concatenation.  Returns (B*Sq, E) f32.
    """
    B, Sq, E = q3.shape
    Sk = kv3.shape[1]
    hd = E // nhead
    q2 = q3.reshape(B * Sq, E).astype(jnp.bfloat16)     # cast hoisted out of loop
    kv2 = kv3.reshape(B * Sk, E).astype(jnp.bfloat16)
    acc = None
    for h in range(nhead):                               # tiny static count -> unrolled
        qh = (jnp.dot(q2, wq[h], preferred_element_type=jnp.float32)
              + bq[h]).reshape(B, Sq, hd)
        kh = (jnp.dot(kv2, wk[h], preferred_element_type=jnp.float32)
              + bk[h]).reshape(B, Sk, hd)
        vh = (jnp.dot(kv2, wv[h], preferred_element_type=jnp.float32)
              + bv[h]).reshape(B, Sk, hd)
        s = jnp.einsum('bqd,bkd->bqk', qh.astype(jnp.bfloat16),
                       kh.astype(jnp.bfloat16),
                       preferred_element_type=jnp.float32)     # scale folded into wq
        s = s - jnp.max(s, axis=-1, keepdims=True)             # f32 softmax stats
        p = jnp.exp(s)
        p = p * pl.reciprocal(jnp.sum(p, axis=-1, keepdims=True), approx=True)
        oh = jnp.einsum('bqk,bkd->bqd', p.astype(jnp.bfloat16),
                        vh.astype(jnp.bfloat16),
                        preferred_element_type=jnp.float32)
        part = jnp.dot(oh.reshape(B * Sq, hd).astype(jnp.bfloat16), wo[h],
                       preferred_element_type=jnp.float32)
        acc = part if acc is None else acc + part
    return acc + bo[...]


# ----------------------------------------------------------------------------
# the single fused Pallas kernel
# ----------------------------------------------------------------------------
def _fused_forward_kernel(nhead, B, S1, S2,
                          x1_ref, x2_ref, pe_enc_ref, pe_dec_ref, *refs):
    (emb1_wt, emb1_b, emb2_wt, emb2_b,
     e_wq, e_wk, e_wv, e_bq, e_bk, e_bv, e_wo, e_bo,
     e_ln1w, e_ln1b, e_w1, e_b1, e_w2, e_b2, e_ln2w, e_ln2b,
     s_wq, s_wk, s_wv, s_bq, s_bk, s_bv, s_wo, s_bo,
     c_wq, c_wk, c_wv, c_bq, c_bk, c_bv, c_wo, c_bo,
     d_ln1w, d_ln1b, d_ln2w, d_ln2b,
     d_w1, d_b1, d_w2, d_b2, d_ln3w, d_ln3b,
     fc_wt, fc_b,
     o_ref) = refs

    E = emb1_wt.shape[1]

    # embeddings — 2D (B*S, K) x (K, E) matmuls
    x1e = _mm(x1_ref[...], emb1_wt, emb1_b)          # (B*S1, E)
    x2e = _mm(x2_ref[...], emb2_wt, emb2_b)          # (B*S2, E)

    # ---------------- encoder layer (post-norm, 1 layer) ----------------
    src3 = x1e.reshape(B, S1, E) + pe_enc_ref[...]   # PE broadcast over batch
    sa = _mha(src3, src3, e_wq, e_wk, e_wv, e_bq, e_bk, e_bv, e_wo, e_bo, nhead)
    h = _layer_norm(src3.reshape(B * S1, E) + sa, e_ln1w[...], e_ln1b[...])
    ff = _mm(jax.nn.relu(_mm(h, e_w1, e_b1)), e_w2, e_b2)
    mem2 = _layer_norm(h + ff, e_ln2w[...], e_ln2b[...])
    mem3 = mem2.reshape(B, S1, E)

    # ---------------- decoder layer (post-norm, 1 layer) ----------------
    tgt3 = x2e.reshape(B, S2, E) + pe_dec_ref[...]
    sa = _mha(tgt3, tgt3, s_wq, s_wk, s_wv, s_bq, s_bk, s_bv, s_wo, s_bo, nhead)
    t = _layer_norm(tgt3.reshape(B * S2, E) + sa, d_ln1w[...], d_ln1b[...])
    ca = _mha(t.reshape(B, S2, E), mem3,
              c_wq, c_wk, c_wv, c_bq, c_bk, c_bv, c_wo, c_bo, nhead)
    t = _layer_norm(t + ca, d_ln2w[...], d_ln2b[...])
    ff = _mm(jax.nn.relu(_mm(t, d_w1, d_b1)), d_w2, d_b2)
    t = _layer_norm(t + ff, d_ln3w[...], d_ln3b[...])

    # final classifier — single lane-dense (B*S2, NPAD) store (NPAD = 128-mult.)
    o_ref[...] = _mm(t, fc_wt, fc_b).astype(o_ref.dtype)


# ----------------------------------------------------------------------------
# one-time parameter layout pass (host side, run once at load time)
# ----------------------------------------------------------------------------
def _positional_encoding_table(d_model, max_len=500):
    position = jnp.arange(max_len, dtype=jnp.float32)[:, None]
    div_term = jnp.exp(jnp.arange(0, d_model, 2, dtype=jnp.float32)
                       * (-math.log(10000.0) / d_model))
    ang = position * div_term
    pe = jnp.zeros((max_len, d_model), jnp.float32)
    pe = pe.at[:, 0::2].set(jnp.sin(ang))
    pe = pe.at[:, 1::2].set(jnp.cos(ang))
    return pe


def prepare_params(params, *, nhead, max_len=500):
    """Transpose / split heads / fold scales / pad / cast to kernel layout (once)."""
    E = params['emb1_w'].shape[0]
    hd = E // nhead
    scale = 1.0 / math.sqrt(hd)

    def wt(w):        # torch (out, in) -> (in, out), bf16 for the MXU
        return jnp.asarray(w, jnp.float32).T.astype(jnp.bfloat16)

    def bias(b):      # (N,) -> (1, N) f32
        return jnp.asarray(b, jnp.float32).reshape(1, -1)

    ln = bias         # LayerNorm weight/bias use the same (1, E) f32 layout

    def attn(a):
        w = jnp.asarray(a['in_w'], jnp.float32)      # (3E, E) packed q/k/v
        b = jnp.asarray(a['in_b'], jnp.float32)      # (3E,)

        def heads_w(wm, s=1.0):                      # torch (E_out, E_in) block
            wmt = wm.T * s                           # (E_in, E_out)
            return wmt.reshape(E, nhead, hd).transpose(1, 0, 2).astype(jnp.bfloat16)

        def heads_b(bv, s=1.0):
            return (bv * s).reshape(nhead, 1, hd).astype(jnp.float32)

        wo = jnp.asarray(a['out_w'], jnp.float32).T.reshape(nhead, hd, E)
        return dict(wq=heads_w(w[:E], scale), wk=heads_w(w[E:2 * E]),
                    wv=heads_w(w[2 * E:]),
                    bq=heads_b(b[:E], scale), bk=heads_b(b[E:2 * E]),
                    bv=heads_b(b[2 * E:]),
                    wo=wo.astype(jnp.bfloat16), bo=bias(a['out_b']))

    def ffn(p):
        return dict(lin1_wt=wt(p['lin1_w']), lin1_b=bias(p['lin1_b']),
                    lin2_wt=wt(p['lin2_w']), lin2_b=bias(p['lin2_b']))

    n_cls = params['fc_w'].shape[0]
    npad = max(LANE, ((n_cls + LANE - 1) // LANE) * LANE)
    fc_wt = jnp.zeros((E, npad), jnp.float32).at[:, :n_cls].set(
        jnp.asarray(params['fc_w'], jnp.float32).T)
    fc_b = jnp.zeros((1, npad), jnp.float32).at[:, :n_cls].set(
        jnp.asarray(params['fc_b'], jnp.float32))

    enc, dec = params['enc'], params['dec']
    return {
        'emb1_wt': wt(params['emb1_w']), 'emb1_b': bias(params['emb1_b']),
        'emb2_wt': wt(params['emb2_w']), 'emb2_b': bias(params['emb2_b']),
        'enc': {
            'attn': attn(enc['attn']),
            'ln1_w': ln(enc['ln1_w']), 'ln1_b': ln(enc['ln1_b']),
            **ffn(enc),
            'ln2_w': ln(enc['ln2_w']), 'ln2_b': ln(enc['ln2_b']),
        },
        'dec': {
            'self_attn': attn(dec['self_attn']),
            'cross_attn': attn(dec['cross_attn']),
            'ln1_w': ln(dec['ln1_w']), 'ln1_b': ln(dec['ln1_b']),
            'ln2_w': ln(dec['ln2_w']), 'ln2_b': ln(dec['ln2_b']),
            **ffn(dec),
            'ln3_w': ln(dec['ln3_w']), 'ln3_b': ln(dec['ln3_b']),
        },
        'fc_wt': fc_wt.astype(jnp.bfloat16), 'fc_b': fc_b,
        'pe': _positional_encoding_table(E, max_len),
    }


def _flat_weight_args(prep):
    e, d = prep['enc'], prep['dec']

    def attn_args(a):
        return [a['wq'], a['wk'], a['wv'], a['bq'], a['bk'], a['bv'],
                a['wo'], a['bo']]

    return ([prep['emb1_wt'], prep['emb1_b'], prep['emb2_wt'], prep['emb2_b']]
            + attn_args(e['attn'])
            + [e['ln1_w'], e['ln1_b'],
               e['lin1_wt'], e['lin1_b'], e['lin2_wt'], e['lin2_b'],
               e['ln2_w'], e['ln2_b']]
            + attn_args(d['self_attn']) + attn_args(d['cross_attn'])
            + [d['ln1_w'], d['ln1_b'], d['ln2_w'], d['ln2_b'],
               d['lin1_wt'], d['lin1_b'], d['lin2_wt'], d['lin2_b'],
               d['ln3_w'], d['ln3_b']]
            + [prep['fc_wt'], prep['fc_b']])


# ----------------------------------------------------------------------------
# forward wrapper: one fused pallas_call, whole-array VMEM residency (no grid)
# ----------------------------------------------------------------------------
def temporal_transformer_forward(prep, x1, x2, *, nhead=2, num_classes=4):
    """Mirror of TemporalTransformerModel.forward (eval mode), fully fused."""
    B = x1.shape[0]
    S1 = 3                                # x1.view(batch, 3, -1) — fixed by the module
    S2 = x2.shape[1]
    npad = prep['fc_wt'].shape[1]

    x1f = x1.reshape(B * S1, -1).astype(jnp.float32)
    x2f = x2.reshape(B * S2, -1).astype(jnp.float32)
    pe_enc = prep['pe'][:S1]
    pe_dec = prep['pe'][:S2]

    out = pl.pallas_call(
        functools.partial(_fused_forward_kernel, nhead, B, S1, S2),
        out_shape=jax.ShapeDtypeStruct((B * S2, npad), jnp.float32),
    )(x1f, x2f, pe_enc, pe_dec, *_flat_weight_args(prep))
    return out[:, :num_classes].reshape(B, S2, num_classes)


# ----------------------------------------------------------------------------
# deterministic synthetic parameters (torch weight layout: (out, in))
# ----------------------------------------------------------------------------
def init_params(key, input_dim1, input_dim2, num_classes, hidden, ffn):
    keys = iter(jax.random.split(key, 40))

    def w(shape, scale=0.05):
        return (scale * jax.random.normal(next(keys), shape)).astype(jnp.float32)

    def attn():
        return {'in_w': w((3 * hidden, hidden)), 'in_b': w((3 * hidden,)),
                'out_w': w((hidden, hidden)), 'out_b': w((hidden,))}

    ones = lambda: jnp.ones((hidden,), jnp.float32)
    zeros = lambda: jnp.zeros((hidden,), jnp.float32)

    return {
        'emb1_w': w((hidden, 2 * input_dim1)), 'emb1_b': w((hidden,)),
        'emb2_w': w((hidden, input_dim2)),     'emb2_b': w((hidden,)),
        'enc': {
            'attn': attn(),
            'ln1_w': ones(), 'ln1_b': zeros(),
            'lin1_w': w((ffn, hidden)), 'lin1_b': w((ffn,)),
            'lin2_w': w((hidden, ffn)), 'lin2_b': w((hidden,)),
            'ln2_w': ones(), 'ln2_b': zeros(),
        },
        'dec': {
            'self_attn': attn(),
            'cross_attn': attn(),
            'ln1_w': ones(), 'ln1_b': zeros(),
            'ln2_w': ones(), 'ln2_b': zeros(),
            'lin1_w': w((ffn, hidden)), 'lin1_b': w((ffn,)),
            'lin2_w': w((hidden, ffn)), 'lin2_b': w((hidden,)),
            'ln3_w': ones(), 'ln3_b': zeros(),
        },
        'fc_w': w((num_classes, hidden)), 'fc_b': w((num_classes,)),
    }


if __name__ == "__main__":
    B = 2
    INPUT_DIM1 = 64      # x1 flattens to 2*INPUT_DIM1 = 128 features per step
    INPUT_DIM2 = 4
    NUM_CLASSES = 4
    HIDDEN = 32
    NHEAD = 2
    FFN = 64             # scaled-down dim_feedforward for the small synthetic run
    S2 = 8               # decoder sequence length

    key = jax.random.PRNGKey(0)
    k1, k2, kp = jax.random.split(key, 3)
    x1 = jax.random.normal(k1, (B, 3, 2, INPUT_DIM1), dtype=jnp.float32)
    x2 = jax.random.normal(k2, (B, S2, INPUT_DIM2), dtype=jnp.float32)

    params = init_params(kp, INPUT_DIM1, INPUT_DIM2, NUM_CLASSES, HIDDEN, FFN)
    prep = prepare_params(params, nhead=NHEAD)      # one-time layout pass

    fwd = jax.jit(functools.partial(temporal_transformer_forward,
                                    nhead=NHEAD, num_classes=NUM_CLASSES))
    out = jax.block_until_ready(fwd(prep, x1, x2))

    assert out.shape == (B, S2, NUM_CLASSES), out.shape
    assert bool(jnp.all(jnp.isfinite(out)))
    print("KERNEL_OK")
</pallas_src>

<mosaic_0001>
module attributes {stable_mosaic.version = 11 : i64} {
  func.func @_fused_forward_kernel(%arg0: memref<6x128xf32, #tpu.memory_space<vmem>>, %arg1: memref<16x4xf32, #tpu.memory_space<vmem>>, %arg2: memref<3x32xf32, #tpu.memory_space<vmem>>, %arg3: memref<8x32xf32, #tpu.memory_space<vmem>>, %arg4: memref<128x32xbf16, #tpu.memory_space<vmem>>, %arg5: memref<1x32xf32, #tpu.memory_space<vmem>>, %arg6: memref<4x32xbf16, #tpu.memory_space<vmem>>, %arg7: memref<1x32xf32, #tpu.memory_space<vmem>>, %arg8: memref<2x32x16xbf16, #tpu.memory_space<vmem>>, %arg9: memref<2x32x16xbf16, #tpu.memory_space<vmem>>, %arg10: memref<2x32x16xbf16, #tpu.memory_space<vmem>>, %arg11: memref<2x1x16xf32, #tpu.memory_space<vmem>>, %arg12: memref<2x1x16xf32, #tpu.memory_space<vmem>>, %arg13: memref<2x1x16xf32, #tpu.memory_space<vmem>>, %arg14: memref<2x16x32xbf16, #tpu.memory_space<vmem>>, %arg15: memref<1x32xf32, #tpu.memory_space<vmem>>, %arg16: memref<1x32xf32, #tpu.memory_space<vmem>>, %arg17: memref<1x32xf32, #tpu.memory_space<vmem>>, %arg18: memref<32x64xbf16, #tpu.memory_space<vmem>>, %arg19: memref<1x64xf32, #tpu.memory_space<vmem>>, %arg20: memref<64x32xbf16, #tpu.memory_space<vmem>>, %arg21: memref<1x32xf32, #tpu.memory_space<vmem>>, %arg22: memref<1x32xf32, #tpu.memory_space<vmem>>, %arg23: memref<1x32xf32, #tpu.memory_space<vmem>>, %arg24: memref<2x32x16xbf16, #tpu.memory_space<vmem>>, %arg25: memref<2x32x16xbf16, #tpu.memory_space<vmem>>, %arg26: memref<2x32x16xbf16, #tpu.memory_space<vmem>>, %arg27: memref<2x1x16xf32, #tpu.memory_space<vmem>>, %arg28: memref<2x1x16xf32, #tpu.memory_space<vmem>>, %arg29: memref<2x1x16xf32, #tpu.memory_space<vmem>>, %arg30: memref<2x16x32xbf16, #tpu.memory_space<vmem>>, %arg31: memref<1x32xf32, #tpu.memory_space<vmem>>, %arg32: memref<2x32x16xbf16, #tpu.memory_space<vmem>>, %arg33: memref<2x32x16xbf16, #tpu.memory_space<vmem>>, %arg34: memref<2x32x16xbf16, #tpu.memory_space<vmem>>, %arg35: memref<2x1x16xf32, #tpu.memory_space<vmem>>, %arg36: memref<2x1x16xf32, #tpu.memory_space<vmem>>, %arg37: memref<2x1x16xf32, #tpu.memory_space<vmem>>, %arg38: memref<2x16x32xbf16, #tpu.memory_space<vmem>>, %arg39: memref<1x32xf32, #tpu.memory_space<vmem>>, %arg40: memref<1x32xf32, #tpu.memory_space<vmem>>, %arg41: memref<1x32xf32, #tpu.memory_space<vmem>>, %arg42: memref<1x32xf32, #tpu.memory_space<vmem>>, %arg43: memref<1x32xf32, #tpu.memory_space<vmem>>, %arg44: memref<32x64xbf16, #tpu.memory_space<vmem>>, %arg45: memref<1x64xf32, #tpu.memory_space<vmem>>, %arg46: memref<64x32xbf16, #tpu.memory_space<vmem>>, %arg47: memref<1x32xf32, #tpu.memory_space<vmem>>, %arg48: memref<1x32xf32, #tpu.memory_space<vmem>>, %arg49: memref<1x32xf32, #tpu.memory_space<vmem>>, %arg50: memref<32x128xbf16, #tpu.memory_space<vmem>>, %arg51: memref<1x128xf32, #tpu.memory_space<vmem>>, %arg52: memref<16x128xf32, #tpu.memory_space<vmem>>) attributes {dimension_semantics = [], scalar_prefetch = 0 : i64, scratch_operands = 0 : i64, tpu.core_type = #tpu.core_type<tc>} {
    %c0 = arith.constant 0 : index
    %c0_0 = arith.constant 0 : index
    %0 = vector.load %arg0[%c0, %c0_0] : memref<6x128xf32, #tpu.memory_space<vmem>>, vector<6x128xf32>
    %1 = arith.truncf %0 : vector<6x128xf32> to vector<6x128xbf16>
    %c0_1 = arith.constant 0 : index
    %c0_2 = arith.constant 0 : index
    %2 = vector.load %arg4[%c0_1, %c0_2] : memref<128x32xbf16, #tpu.memory_space<vmem>>, vector<128x32xbf16>
    %cst = arith.constant dense<0.000000e+00> : vector<6x32xf32>
    %3 = tpu.matmul %1, %2, %cst {dimension_numbers = #tpu.dot_dimension_numbers<[1], [0], [0], [1], [0, 0, 1, 1], [], []>} : vector<6x128xbf16>, vector<128x32xbf16>, vector<6x32xf32> -> vector<6x32xf32>
    %c0_3 = arith.constant 0 : index
    %c0_4 = arith.constant 0 : index
    %4 = vector.load %arg5[%c0_3, %c0_4] : memref<1x32xf32, #tpu.memory_space<vmem>>, vector<1x32xf32>
    %5 = vector.broadcast %4 : vector<1x32xf32> to vector<6x32xf32>
    %6 = arith.addf %3, %5 : vector<6x32xf32>
    %c0_5 = arith.constant 0 : index
    %c0_6 = arith.constant 0 : index
    %7 = vector.load %arg1[%c0_5, %c0_6] : memref<16x4xf32, #tpu.memory_space<vmem>>, vector<16x4xf32>
    %8 = arith.truncf %7 : vector<16x4xf32> to vector<16x4xbf16>
    %c0_7 = arith.constant 0 : index
    %c0_8 = arith.constant 0 : index
    %9 = vector.load %arg6[%c0_7, %c0_8] : memref<4x32xbf16, #tpu.memory_space<vmem>>, vector<4x32xbf16>
    %cst_9 = arith.constant dense<0.000000e+00> : vector<16x32xf32>
    %10 = tpu.matmul %8, %9, %cst_9 {dimension_numbers = #tpu.dot_dimension_numbers<[1], [0], [0], [1], [0, 0, 1, 1], [], []>} : vector<16x4xbf16>, vector<4x32xbf16>, vector<16x32xf32> -> vector<16x32xf32>
    %c0_10 = arith.constant 0 : index
    %c0_11 = arith.constant 0 : index
    %11 = vector.load %arg7[%c0_10, %c0_11] : memref<1x32xf32, #tpu.memory_space<vmem>>, vector<1x32xf32>
    %12 = vector.broadcast %11 : vector<1x32xf32> to vector<16x32xf32>
    %13 = arith.addf %10, %12 : vector<16x32xf32>
    %14 = vector.shape_cast %6 : vector<6x32xf32> to vector<2x3x32xf32>
    %c0_12 = arith.constant 0 : index
    %c0_13 = arith.constant 0 : index
    %15 = vector.load %arg2[%c0_12, %c0_13] : memref<3x32xf32, #tpu.memory_space<vmem>>, vector<3x32xf32>
    %16 = vector.shape_cast %15 : vector<3x32xf32> to vector<1x3x32xf32>
    %17 = vector.broadcast %16 : vector<1x3x32xf32> to vector<2x3x32xf32>
    %18 = arith.addf %14, %17 : vector<2x3x32xf32>
    %19 = vector.shape_cast %18 : vector<2x3x32xf32> to vector<6x32xf32>
    %20 = arith.truncf %19 : vector<6x32xf32> to vector<6x32xbf16>
    %21 = vector.shape_cast %18 : vector<2x3x32xf32> to vector<6x32xf32>
    %22 = arith.truncf %21 : vector<6x32xf32> to vector<6x32xbf16>
    %c0_14 = arith.constant 0 : index
    %c0_15 = arith.constant 0 : index
    %c0_16 = arith.constant 0 : index
    %23 = vector.load %arg8[%c0_14, %c0_15, %c0_16] : memref<2x32x16xbf16, #tpu.memory_space<vmem>>, vector<1x32x16xbf16>
    %24 = vector.shape_cast %23 : vector<1x32x16xbf16> to vector<32x16xbf16>
    %cst_17 = arith.constant dense<0.000000e+00> : vector<6x16xf32>
    %25 = tpu.matmul %20, %24, %cst_17 {dimension_numbers = #tpu.dot_dimension_numbers<[1], [0], [0], [1], [0, 0, 1, 1], [], []>} : vector<6x32xbf16>, vector<32x16xbf16>, vector<6x16xf32> -> vector<6x16xf32>
    %c0_18 = arith.constant 0 : index
    %c0_19 = arith.constant 0 : index
    %c0_20 = arith.constant 0 : index
    %26 = vector.load %arg11[%c0_18, %c0_19, %c0_20] : memref<2x1x16xf32, #tpu.memory_space<vmem>>, vector<1x1x16xf32>
    %27 = vector.shape_cast %26 : vector<1x1x16xf32> to vector<1x16xf32>
    %28 = vector.broadcast %27 : vector<1x16xf32> to vector<6x16xf32>
    %29 = arith.addf %25, %28 : vector<6x16xf32>
    %30 = vector.shape_cast %29 : vector<6x16xf32> to vector<2x3x16xf32>
    %c0_21 = arith.constant 0 : index
    %c0_22 = arith.constant 0 : index
    %c0_23 = arith.constant 0 : index
    %31 = vector.load %arg9[%c0_21, %c0_22, %c0_23] : memref<2x32x16xbf16, #tpu.memory_space<vmem>>, vector<1x32x16xbf16>
    %32 = vector.shape_cast %31 : vector<1x32x16xbf16> to vector<32x16xbf16>
    %cst_24 = arith.constant dense<0.000000e+00> : vector<6x16xf32>
    %33 = tpu.matmul %22, %32, %cst_24 {dimension_numbers = #tpu.dot_dimension_numbers<[1], [0], [0], [1], [0, 0, 1, 1], [], []>} : vector<6x32xbf16>, vector<32x16xbf16>, vector<6x16xf32> -> vector<6x16xf32>
    %c0_25 = arith.constant 0 : index
    %c0_26 = arith.constant 0 : index
    %c0_27 = arith.constant 0 : index
    %34 = vector.load %arg12[%c0_25, %c0_26, %c0_27] : memref<2x1x16xf32, #tpu.memory_space<vmem>>, vector<1x1x16xf32>
    %35 = vector.shape_cast %34 : vector<1x1x16xf32> to vector<1x16xf32>
    %36 = vector.broadcast %35 : vector<1x16xf32> to vector<6x16xf32>
    %37 = arith.addf %33, %36 : vector<6x16xf32>
    %38 = vector.shape_cast %37 : vector<6x16xf32> to vector<2x3x16xf32>
    %c0_28 = arith.constant 0 : index
    %c0_29 = arith.constant 0 : index
    %c0_30 = arith.constant 0 : index
    %39 = vector.load %arg10[%c0_28, %c0_29, %c0_30] : memref<2x32x16xbf16, #tpu.memory_space<vmem>>, vector<1x32x16xbf16>
    %40 = vector.shape_cast %39 : vector<1x32x16xbf16> to vector<32x16xbf16>
    %cst_31 = arith.constant dense<0.000000e+00> : vector<6x16xf32>
    %41 = tpu.matmul %22, %40, %cst_31 {dimension_numbers = #tpu.dot_dimension_numbers<[1], [0], [0], [1], [0, 0, 1, 1], [], []>} : vector<6x32xbf16>, vector<32x16xbf16>, vector<6x16xf32> -> vector<6x16xf32>
    %c0_32 = arith.constant 0 : index
    %c0_33 = arith.constant 0 : index
    %c0_34 = arith.constant 0 : index
    %42 = vector.load %arg13[%c0_32, %c0_33, %c0_34] : memref<2x1x16xf32, #tpu.memory_space<vmem>>, vector<1x1x16xf32>
    %43 = vector.shape_cast %42 : vector<1x1x16xf32> to vector<1x16xf32>
    %44 = vector.broadcast %43 : vector<1x16xf32> to vector<6x16xf32>
    %45 = arith.addf %41, %44 : vector<6x16xf32>
    %46 = vector.shape_cast %45 : vector<6x16xf32> to vector<2x3x16xf32>
    %47 = arith.truncf %30 : vector<2x3x16xf32> to vector<2x3x16xbf16>
    %48 = arith.truncf %38 : vector<2x3x16xf32> to vector<2x3x16xbf16>
    "tpu.trace_start"() <{level = 10 : i32, message = "bqd,bkd->bqk"}> : () -> ()
    %cst_35 = arith.constant dense<0.000000e+00> : vector<2x3x3xf32>
    %49 = tpu.matmul %47, %48, %cst_35 {dimension_numbers = #tpu.dot_dimension_numbers<[2], [2], [1], [1], [0, 0, 0, 1, 1, 1], [0], [0]>} : vector<2x3x16xbf16>, vector<2x3x16xbf16>, vector<2x3x3xf32> -> vector<2x3x3xf32>
    "tpu.trace_stop"() : () -> ()
    %cst_36 = arith.constant dense<0xFF800000> : vector<2x3xf32>
    %50 = vector.multi_reduction <maximumf>, %49, %cst_36 [2] : vector<2x3x3xf32> to vector<2x3xf32>
    %51 = vector.shape_cast %50 : vector<2x3xf32> to vector<2x3x1xf32>
    %52 = vector.broadcast %51 : vector<2x3x1xf32> to vector<2x3x3xf32>
    %53 = arith.subf %49, %52 : vector<2x3x3xf32>
    %54 = math.exp %53 : vector<2x3x3xf32>
    %cst_37 = arith.constant dense<0.000000e+00> : vector<2x3xf32>
    %55 = vector.multi_reduction <add>, %54, %cst_37 [2] : vector<2x3x3xf32> to vector<2x3xf32>
    %56 = vector.shape_cast %55 : vector<2x3xf32> to vector<2x3x1xf32>
    %57 = tpu.reciprocal %56 {approx = true} : vector<2x3x1xf32> -> vector<2x3x1xf32>
    %58 = vector.broadcast %57 : vector<2x3x1xf32> to vector<2x3x3xf32>
    %59 = arith.mulf %54, %58 : vector<2x3x3xf32>
    %60 = arith.truncf %59 : vector<2x3x3xf32> to vector<2x3x3xbf16>
    %61 = arith.truncf %46 : vector<2x3x16xf32> to vector<2x3x16xbf16>
    "tpu.trace_start"() <{level = 10 : i32, message = "bqk,bkd->bqd"}> : () -> ()
    %cst_38 = arith.constant dense<0.000000e+00> : vector<2x3x16xf32>
    %62 = tpu.matmul %60, %61, %cst_38 {dimension_numbers = #tpu.dot_dimension_numbers<[2], [1], [1], [2], [0, 0, 0, 1, 1, 2], [0], [0]>} : vector<2x3x3xbf16>, vector<2x3x16xbf16>, vector<2x3x16xf32> -> vector<2x3x16xf32>
    "tpu.trace_stop"() : () -> ()
    %63 = vector.shape_cast %62 : vector<2x3x16xf32> to vector<6x16xf32>
    %64 = arith.truncf %63 : vector<6x16xf32> to vector<6x16xbf16>
    %c0_39 = arith.constant 0 : index
    %c0_40 = arith.constant 0 : index
    %c0_41 = arith.constant 0 : index
    %65 = vector.load %arg14[%c0_39, %c0_40, %c0_41] : memref<2x16x32xbf16, #tpu.memory_space<vmem>>, vector<1x16x32xbf16>
    %66 = vector.shape_cast %65 : vector<1x16x32xbf16> to vector<16x32xbf16>
    %cst_42 = arith.constant dense<0.000000e+00> : vector<6x32xf32>
    %67 = tpu.matmul %64, %66, %cst_42 {dimension_numbers = #tpu.dot_dimension_numbers<[1], [0], [0], [1], [0, 0, 1, 1], [], []>} : vector<6x16xbf16>, vector<16x32xbf16>, vector<6x32xf32> -> vector<6x32xf32>
    %c1 = arith.constant 1 : index
    %c0_43 = arith.constant 0 : index
    %c0_44 = arith.constant 0 : index
    %68 = vector.load %arg8[%c1, %c0_43, %c0_44] : memref<2x32x16xbf16, #tpu.memory_space<vmem>>, vector<1x32x16xbf16>
    %69 = vector.shape_cast %68 : vector<1x32x16xbf16> to vector<32x16xbf16>
    %cst_45 = arith.constant dense<0.000000e+00> : vector<6x16xf32>
    %70 = tpu.matmul %20, %69, %cst_45 {dimension_numbers = #tpu.dot_dimension_numbers<[1], [0], [0], [1], [0, 0, 1, 1], [], []>} : vector<6x32xbf16>, vector<32x16xbf16>, vector<6x16xf32> -> vector<6x16xf32>
    %c1_46 = arith.constant 1 : index
    %c0_47 = arith.constant 0 : index
    %c0_48 = arith.constant 0 : index
    %71 = vector.load %arg11[%c1_46, %c0_47, %c0_48] : memref<2x1x16xf32, #tpu.memory_space<vmem>>, vector<1x1x16xf32>
    %72 = vector.shape_cast %71 : vector<1x1x16xf32> to vector<1x16xf32>
    %73 = vector.broadcast %72 : vector<1x16xf32> to vector<6x16xf32>
    %74 = arith.addf %70, %73 : vector<6x16xf32>
    %75 = vector.shape_cast %74 : vector<6x16xf32> to vector<2x3x16xf32>
    %c1_49 = arith.constant 1 : index
    %c0_50 = arith.constant 0 : index
    %c0_51 = arith.constant 0 : index
    %76 = vector.load %arg9[%c1_49, %c0_50, %c0_51] : memref<2x32x16xbf16, #tpu.memory_space<vmem>>, vector<1x32x16xbf16>
    %77 = vector.shape_cast %76 : vector<1x32x16xbf16> to vector<32x16xbf16>
    %cst_52 = arith.constant dense<0.000000e+00> : vector<6x16xf32>
    %78 = tpu.matmul %22, %77, %cst_52 {dimension_numbers = #tpu.dot_dimension_numbers<[1], [0], [0], [1], [0, 0, 1, 1], [], []>} : vector<6x32xbf16>, vector<32x16xbf16>, vector<6x16xf32> -> vector<6x16xf32>
    %c1_53 = arith.constant 1 : index
    %c0_54 = arith.constant 0 : index
    %c0_55 = arith.constant 0 : index
    %79 = vector.load %arg12[%c1_53, %c0_54, %c0_55] : memref<2x1x16xf32, #tpu.memory_space<vmem>>, vector<1x1x16xf32>
    %80 = vector.shape_cast %79 : vector<1x1x16xf32> to vector<1x16xf32>
    %81 = vector.broadcast %80 : vector<1x16xf32> to vector<6x16xf32>
    %82 = arith.addf %78, %81 : vector<6x16xf32>
    %83 = vector.shape_cast %82 : vector<6x16xf32> to vector<2x3x16xf32>
    %c1_56 = arith.constant 1 : index
    %c0_57 = arith.constant 0 : index
    %c0_58 = arith.constant 0 : index
    %84 = vector.load %arg10[%c1_56, %c0_57, %c0_58] : memref<2x32x16xbf16, #tpu.memory_space<vmem>>, vector<1x32x16xbf16>
    %85 = vector.shape_cast %84 : vector<1x32x16xbf16> to vector<32x16xbf16>
    %cst_59 = arith.constant dense<0.000000e+00> : vector<6x16xf32>
    %86 = tpu.matmul %22, %85, %cst_59 {dimension_numbers = #tpu.dot_dimension_numbers<[1], [0], [0], [1], [0, 0, 1, 1], [], []>} : vector<6x32xbf16>, vector<32x16xbf16>, vector<6x16xf32> -> vector<6x16xf32>
    %c1_60 = arith.constant 1 : index
    %c0_61 = arith.constant 0 : index
    %c0_62 = arith.constant 0 : index
    %87 = vector.load %arg13[%c1_60, %c0_61, %c0_62] : memref<2x1x16xf32, #tpu.memory_space<vmem>>, vector<1x1x16xf32>
    %88 = vector.shape_cast %87 : vector<1x1x16xf32> to vector<1x16xf32>
    %89 = vector.broadcast %88 : vector<1x16xf32> to vector<6x16xf32>
    %90 = arith.addf %86, %89 : vector<6x16xf32>
    %91 = vector.shape_cast %90 : vector<6x16xf32> to vector<2x3x16xf32>
    %92 = arith.truncf %75 : vector<2x3x16xf32> to vector<2x3x16xbf16>
    %93 = arith.truncf %83 : vector<2x3x16xf32> to vector<2x3x16xbf16>
    "tpu.trace_start"() <{level = 10 : i32, message = "bqd,bkd->bqk"}> : () -> ()
    %cst_63 = arith.constant dense<0.000000e+00> : vector<2x3x3xf32>
    %94 = tpu.matmul %92, %93, %cst_63 {dimension_numbers = #tpu.dot_dimension_numbers<[2], [2], [1], [1], [0, 0, 0, 1, 1, 1], [0], [0]>} : vector<2x3x16xbf16>, vector<2x3x16xbf16>, vector<2x3x3xf32> -> vector<2x3x3xf32>
    "tpu.trace_stop"() : () -> ()
    %cst_64 = arith.constant dense<0xFF800000> : vector<2x3xf32>
    %95 = vector.multi_reduction <maximumf>, %94, %cst_64 [2] : vector<2x3x3xf32> to vector<2x3xf32>
    %96 = vector.shape_cast %95 : vector<2x3xf32> to vector<2x3x1xf32>
    %97 = vector.broadcast %96 : vector<2x3x1xf32> to vector<2x3x3xf32>
    %98 = arith.subf %94, %97 : vector<2x3x3xf32>
    %99 = math.exp %98 : vector<2x3x3xf32>
    %cst_65 = arith.constant dense<0.000000e+00> : vector<2x3xf32>
    %100 = vector.multi_reduction <add>, %99, %cst_65 [2] : vector<2x3x3xf32> to vector<2x3xf32>
    %101 = vector.shape_cast %100 : vector<2x3xf32> to vector<2x3x1xf32>
    %102 = tpu.reciprocal %101 {approx = true} : vector<2x3x1xf32> -> vector<2x3x1xf32>
    %103 = vector.broadcast %102 : vector<2x3x1xf32> to vector<2x3x3xf32>
    %104 = arith.mulf %99, %103 : vector<2x3x3xf32>
    %105 = arith.truncf %104 : vector<2x3x3xf32> to vector<2x3x3xbf16>
    %106 = arith.truncf %91 : vector<2x3x16xf32> to vector<2x3x16xbf16>
    "tpu.trace_start"() <{level = 10 : i32, message = "bqk,bkd->bqd"}> : () -> ()
    %cst_66 = arith.constant dense<0.000000e+00> : vector<2x3x16xf32>
    %107 = tpu.matmul %105, %106, %cst_66 {dimension_numbers = #tpu.dot_dimension_numbers<[2], [1], [1], [2], [0, 0, 0, 1, 1, 2], [0], [0]>} : vector<2x3x3xbf16>, vector<2x3x16xbf16>, vector<2x3x16xf32> -> vector<2x3x16xf32>
    "tpu.trace_stop"() : () -> ()
    %108 = vector.shape_cast %107 : vector<2x3x16xf32> to vector<6x16xf32>
    %109 = arith.truncf %108 : vector<6x16xf32> to vector<6x16xbf16>
    %c1_67 = arith.constant 1 : index
    %c0_68 = arith.constant 0 : index
    %c0_69 = arith.constant 0 : index
    %110 = vector.load %arg14[%c1_67, %c0_68, %c0_69] : memref<2x16x32xbf16, #tpu.memory_space<vmem>>, vector<1x16x32xbf16>
    %111 = vector.shape_cast %110 : vector<1x16x32xbf16> to vector<16x32xbf16>
    %cst_70 = arith.constant dense<0.000000e+00> : vector<6x32xf32>
    %112 = tpu.matmul %109, %111, %cst_70 {dimension_numbers = #tpu.dot_dimension_numbers<[1], [0], [0], [1], [0, 0, 1, 1], [], []>} : vector<6x16xbf16>, vector<16x32xbf16>, vector<6x32xf32> -> vector<6x32xf32>
    %113 = arith.addf %67, %112 : vector<6x32xf32>
    %c0_71 = arith.constant 0 : index
    %c0_72 = arith.constant 0 : index
    %114 = vector.load %arg15[%c0_71, %c0_72] : memref<1x32xf32, #tpu.memory_space<vmem>>, vector<1x32xf32>
    %115 = vector.broadcast %114 : vector<1x32xf32> to vector<6x32xf32>
    %116 = arith.addf %113, %115 : vector<6x32xf32>
    %117 = vector.shape_cast %18 : vector<2x3x32xf32> to vector<6x32xf32>
    %118 = arith.addf %117, %116 : vector<6x32xf32>
    %c0_73 = arith.constant 0 : index
    %c0_74 = arith.constant 0 : index
    %119 = vector.load %arg16[%c0_73, %c0_74] : memref<1x32xf32, #tpu.memory_space<vmem>>, vector<1x32xf32>
    %c0_75 = arith.constant 0 : index
    %c0_76 = arith.constant 0 : index
    %120 = vector.load %arg17[%c0_75, %c0_76] : memref<1x32xf32, #tpu.memory_space<vmem>>, vector<1x32xf32>
    %cst_77 = arith.constant dense<0.000000e+00> : vector<6xf32>
    %121 = vector.multi_reduction <add>, %118, %cst_77 [1] : vector<6x32xf32> to vector<6xf32>
    %122 = vector.shape_cast %121 : vector<6xf32> to vector<6x1xf32>
    %cst_78 = arith.constant 3.200000e+01 : f32
    %123 = vector.broadcast %cst_78 : f32 to vector<6x1xf32>
    %124 = arith.divf %122, %123 : vector<6x1xf32>
    %125 = vector.broadcast %124 : vector<6x1xf32> to vector<6x32xf32>
    %126 = arith.subf %118, %125 : vector<6x32xf32>
    %127 = arith.mulf %126, %126 : vector<6x32xf32>
    %cst_79 = arith.constant dense<0.000000e+00> : vector<6xf32>
    %128 = vector.multi_reduction <add>, %127, %cst_79 [1] : vector<6x32xf32> to vector<6xf32>
    %129 = vector.shape_cast %128 : vector<6xf32> to vector<6x1xf32>
    %cst_80 = arith.constant 3.200000e+01 : f32
    %130 = vector.broadcast %cst_80 : f32 to vector<6x1xf32>
    %131 = arith.divf %129, %130 : vector<6x1xf32>
    %cst_81 = arith.constant 9.99999974E-6 : f32
    %132 = vector.broadcast %cst_81 : f32 to vector<6x1xf32>
    %133 = arith.addf %131, %132 : vector<6x1xf32>
    %134 = math.rsqrt %133 : vector<6x1xf32>
    %135 = vector.broadcast %134 : vector<6x1xf32> to vector<6x32xf32>
    %136 = arith.mulf %126, %135 : vector<6x32xf32>
    %137 = vector.broadcast %119 : vector<1x32xf32> to vector<6x32xf32>
    %138 = arith.mulf %136, %137 : vector<6x32xf32>
    %139 = vector.broadcast %120 : vector<1x32xf32> to vector<6x32xf32>
    %140 = arith.addf %138, %139 : vector<6x32xf32>
    %141 = arith.truncf %140 : vector<6x32xf32> to vector<6x32xbf16>
    %c0_82 = arith.constant 0 : index
    %c0_83 = arith.constant 0 : index
    %142 = vector.load %arg18[%c0_82, %c0_83] : memref<32x64xbf16, #tpu.memory_space<vmem>>, vector<32x64xbf16>
    %cst_84 = arith.constant dense<0.000000e+00> : vector<6x64xf32>
    %143 = tpu.matmul %141, %142, %cst_84 {dimension_numbers = #tpu.dot_dimension_numbers<[1], [0], [0], [1], [0, 0, 1, 1], [], []>} : vector<6x32xbf16>, vector<32x64xbf16>, vector<6x64xf32> -> vector<6x64xf32>
    %c0_85 = arith.constant 0 : index
    %c0_86 = arith.constant 0 : index
    %144 = vector.load %arg19[%c0_85, %c0_86] : memref<1x64xf32, #tpu.memory_space<vmem>>, vector<1x64xf32>
    %145 = vector.broadcast %144 : vector<1x64xf32> to vector<6x64xf32>
    %146 = arith.addf %143, %145 : vector<6x64xf32>
    %cst_87 = arith.constant 0.000000e+00 : f32
    %147 = vector.broadcast %cst_87 : f32 to vector<6x64xf32>
    %148 = arith.maximumf %146, %147 : vector<6x64xf32>
    %149 = arith.truncf %148 : vector<6x64xf32> to vector<6x64xbf16>
    %c0_88 = arith.constant 0 : index
    %c0_89 = arith.constant 0 : index
    %150 = vector.load %arg20[%c0_88, %c0_89] : memref<64x32xbf16, #tpu.memory_space<vmem>>, vector<64x32xbf16>
    %cst_90 = arith.constant dense<0.000000e+00> : vector<6x32xf32>
    %151 = tpu.matmul %149, %150, %cst_90 {dimension_numbers = #tpu.dot_dimension_numbers<[1], [0], [0], [1], [0, 0, 1, 1], [], []>} : vector<6x64xbf16>, vector<64x32xbf16>, vector<6x32xf32> -> vector<6x32xf32>
    %c0_91 = arith.constant 0 : index
    %c0_92 = arith.constant 0 : index
    %152 = vector.load %arg21[%c0_91, %c0_92] : memref<1x32xf32, #tpu.memory_space<vmem>>, vector<1x32xf32>
    %153 = vector.broadcast %152 : vector<1x32xf32> to vector<6x32xf32>
    %154 = arith.addf %151, %153 : vector<6x32xf32>
    %155 = arith.addf %140, %154 : vector<6x32xf32>
    %c0_93 = arith.constant 0 : index
    %c0_94 = arith.constant 0 : index
    %156 = vector.load %arg22[%c0_93, %c0_94] : memref<1x32xf32, #tpu.memory_space<vmem>>, vector<1x32xf32>
    %c0_95 = arith.constant 0 : index
    %c0_96 = arith.constant 0 : index
    %157 = vector.load %arg23[%c0_95, %c0_96] : memref<1x32xf32, #tpu.memory_space<vmem>>, vector<1x32xf32>
    %cst_97 = arith.constant dense<0.000000e+00> : vector<6xf32>
    %158 = vector.multi_reduction <add>, %155, %cst_97 [1] : vector<6x32xf32> to vector<6xf32>
    %159 = vector.shape_cast %158 : vector<6xf32> to vector<6x1xf32>
    %cst_98 = arith.constant 3.200000e+01 : f32
    %160 = vector.broadcast %cst_98 : f32 to vector<6x1xf32>
    %161 = arith.divf %159, %160 : vector<6x1xf32>
    %162 = vector.broadcast %161 : vector<6x1xf32> to vector<6x32xf32>
    %163 = arith.subf %155, %162 : vector<6x32xf32>
    %164 = arith.mulf %163, %163 : vector<6x32xf32>
    %cst_99 = arith.constant dense<0.000000e+00> : vector<6xf32>
    %165 = vector.multi_reduction <add>, %164, %cst_99 [1] : vector<6x32xf32> to vector<6xf32>
    %166 = vector.shape_cast %165 : vector<6xf32> to vector<6x1xf32>
    %cst_100 = arith.constant 3.200000e+01 : f32
    %167 = vector.broadcast %cst_100 : f32 to vector<6x1xf32>
    %168 = arith.divf %166, %167 : vector<6x1xf32>
    %cst_101 = arith.constant 9.99999974E-6 : f32
    %169 = vector.broadcast %cst_101 : f32 to vector<6x1xf32>
    %170 = arith.addf %168, %169 : vector<6x1xf32>
    %171 = math.rsqrt %170 : vector<6x1xf32>
    %172 = vector.broadcast %171 : vector<6x1xf32> to vector<6x32xf32>
    %173 = arith.mulf %163, %172 : vector<6x32xf32>
    %174 = vector.broadcast %156 : vector<1x32xf32> to vector<6x32xf32>
    %175 = arith.mulf %173, %174 : vector<6x32xf32>
    %176 = vector.broadcast %157 : vector<1x32xf32> to vector<6x32xf32>
    %177 = arith.addf %175, %176 : vector<6x32xf32>
    %178 = vector.shape_cast %177 : vector<6x32xf32> to vector<2x3x32xf32>
    %179 = vector.shape_cast %13 : vector<16x32xf32> to vector<2x8x32xf32>
    %c0_102 = arith.constant 0 : index
    %c0_103 = arith.constant 0 : index
    %180 = vector.load %arg3[%c0_102, %c0_103] : memref<8x32xf32, #tpu.memory_space<vmem>>, vector<8x32xf32>
    %181 = vector.shape_cast %180 : vector<8x32xf32> to vector<1x8x32xf32>
    %182 = vector.broadcast %181 : vector<1x8x32xf32> to vector<2x8x32xf32>
    %183 = arith.addf %179, %182 : vector<2x8x32xf32>
    %184 = vector.shape_cast %183 : vector<2x8x32xf32> to vector<16x32xf32>
    %185 = arith.truncf %184 : vector<16x32xf32> to vector<16x32xbf16>
    %186 = vector.shape_cast %183 : vector<2x8x32xf32> to vector<16x32xf32>
    %187 = arith.truncf %186 : vector<16x32xf32> to vector<16x32xbf16>
    %c0_104 = arith.constant 0 : index
    %c0_105 = arith.constant 0 : index
    %c0_106 = arith.constant 0 : index
    %188 = vector.load %arg24[%c0_104, %c0_105, %c0_106] : memref<2x32x16xbf16, #tpu.memory_space<vmem>>, vector<1x32x16xbf16>
    %189 = vector.shape_cast %188 : vector<1x32x16xbf16> to vector<32x16xbf16>
    %cst_107 = arith.constant dense<0.000000e+00> : vector<16x16xf32>
    %190 = tpu.matmul %185, %189, %cst_107 {dimension_numbers = #tpu.dot_dimension_numbers<[1], [0], [0], [1], [0, 0, 1, 1], [], []>} : vector<16x32xbf16>, vector<32x16xbf16>, vector<16x16xf32> -> vector<16x16xf32>
    %c0_108 = arith.constant 0 : index
    %c0_109 = arith.constant 0 : index
    %c0_110 = arith.constant 0 : index
    %191 = vector.load %arg27[%c0_108, %c0_109, %c0_110] : memref<2x1x16xf32, #tpu.memory_space<vmem>>, vector<1x1x16xf32>
    %192 = vector.shape_cast %191 : vector<1x1x16xf32> to vector<1x16xf32>
    %193 = vector.broadcast %192 : vector<1x16xf32> to vector<16x16xf32>
    %194 = arith.addf %190, %193 : vector<16x16xf32>
    %195 = vector.shape_cast %194 : vector<16x16xf32> to vector<2x8x16xf32>
    %c0_111 = arith.constant 0 : index
    %c0_112 = arith.constant 0 : index
    %c0_113 = arith.constant 0 : index
    %196 = vector.load %arg25[%c0_111, %c0_112, %c0_113] : memref<2x32x16xbf16, #tpu.memory_space<vmem>>, vector<1x32x16xbf16>
    %197 = vector.shape_cast %196 : vector<1x32x16xbf16> to vector<32x16xbf16>
    %cst_114 = arith.constant dense<0.000000e+00> : vector<16x16xf32>
    %198 = tpu.matmul %187, %197, %cst_114 {dimension_numbers = #tpu.dot_dimension_numbers<[1], [0], [0], [1], [0, 0, 1, 1], [], []>} : vector<16x32xbf16>, vector<32x16xbf16>, vector<16x16xf32> -> vector<16x16xf32>
    %c0_115 = arith.constant 0 : index
    %c0_116 = arith.constant 0 : index
    %c0_117 = arith.constant 0 : index
    %199 = vector.load %arg28[%c0_115, %c0_116, %c0_117] : memref<2x1x16xf32, #tpu.memory_space<vmem>>, vector<1x1x16xf32>
    %200 = vector.shape_cast %199 : vector<1x1x16xf32> to vector<1x16xf32>
    %201 = vector.broadcast %200 : vector<1x16xf32> to vector<16x16xf32>
    %202 = arith.addf %198, %201 : vector<16x16xf32>
    %203 = vector.shape_cast %202 : vector<16x16xf32> to vector<2x8x16xf32>
    %c0_118 = arith.constant 0 : index
    %c0_119 = arith.constant 0 : index
    %c0_120 = arith.constant 0 : index
    %204 = vector.load %arg26[%c0_118, %c0_119, %c0_120] : memref<2x32x16xbf16, #tpu.memory_space<vmem>>, vector<1x32x16xbf16>
    %205 = vector.shape_cast %204 : vector<1x32x16xbf16> to vector<32x16xbf16>
    %cst_121 = arith.constant dense<0.000000e+00> : vector<16x16xf32>
    %206 = tpu.matmul %187, %205, %cst_121 {dimension_numbers = #tpu.dot_dimension_numbers<[1], [0], [0], [1], [0, 0, 1, 1], [], []>} : vector<16x32xbf16>, vector<32x16xbf16>, vector<16x16xf32> -> vector<16x16xf32>
    %c0_122 = arith.constant 0 : index
    %c0_123 = arith.constant 0 : index
    %c0_124 = arith.constant 0 : index
    %207 = vector.load %arg29[%c0_122, %c0_123, %c0_124] : memref<2x1x16xf32, #tpu.memory_space<vmem>>, vector<1x1x16xf32>
    %208 = vector.shape_cast %207 : vector<1x1x16xf32> to vector<1x16xf32>
    %209 = vector.broadcast %208 : vector<1x16xf32> to vector<16x16xf32>
    %210 = arith.addf %206, %209 : vector<16x16xf32>
    %211 = vector.shape_cast %210 : vector<16x16xf32> to vector<2x8x16xf32>
    %212 = arith.truncf %195 : vector<2x8x16xf32> to vector<2x8x16xbf16>
    %213 = arith.truncf %203 : vector<2x8x16xf32> to vector<2x8x16xbf16>
    "tpu.trace_start"() <{level = 10 : i32, message = "bqd,bkd->bqk"}> : () -> ()
    %cst_125 = arith.constant dense<0.000000e+00> : vector<2x8x8xf32>
    %214 = tpu.matmul %212, %213, %cst_125 {dimension_numbers = #tpu.dot_dimension_numbers<[2], [2], [1], [1], [0, 0, 0, 1, 1, 1], [0], [0]>} : vector<2x8x16xbf16>, vector<2x8x16xbf16>, vector<2x8x8xf32> -> vector<2x8x8xf32>
    "tpu.trace_stop"() : () -> ()
    %cst_126 = arith.constant dense<0xFF800000> : vector<2x8xf32>
    %215 = vector.multi_reduction <maximumf>, %214, %cst_126 [2] : vector<2x8x8xf32> to vector<2x8xf32>
    %216 = vector.shape_cast %215 : vector<2x8xf32> to vector<2x8x1xf32>
    %217 = vector.broadcast %216 : vector<2x8x1xf32> to vector<2x8x8xf32>
    %218 = arith.subf %214, %217 : vector<2x8x8xf32>
    %219 = math.exp %218 : vector<2x8x8xf32>
    %cst_127 = arith.constant dense<0.000000e+00> : vector<2x8xf32>
    %220 = vector.multi_reduction <add>, %219, %cst_127 [2] : vector<2x8x8xf32> to vector<2x8xf32>
    %221 = vector.shape_cast %220 : vector<2x8xf32> to vector<2x8x1xf32>
    %222 = tpu.reciprocal %221 {approx = true} : vector<2x8x1xf32> -> vector<2x8x1xf32>
    %223 = vector.broadcast %222 : vector<2x8x1xf32> to vector<2x8x8xf32>
    %224 = arith.mulf %219, %223 : vector<2x8x8xf32>
    %225 = arith.truncf %224 : vector<2x8x8xf32> to vector<2x8x8xbf16>
    %226 = arith.truncf %211 : vector<2x8x16xf32> to vector<2x8x16xbf16>
    "tpu.trace_start"() <{level = 10 : i32, message = "bqk,bkd->bqd"}> : () -> ()
    %cst_128 = arith.constant dense<0.000000e+00> : vector<2x8x16xf32>
    %227 = tpu.matmul %225, %226, %cst_128 {dimension_numbers = #tpu.dot_dimension_numbers<[2], [1], [1], [2], [0, 0, 0, 1, 1, 2], [0], [0]>} : vector<2x8x8xbf16>, vector<2x8x16xbf16>, vector<2x8x16xf32> -> vector<2x8x16xf32>
    "tpu.trace_stop"() : () -> ()
    %228 = vector.shape_cast %227 : vector<2x8x16xf32> to vector<16x16xf32>
    %229 = arith.truncf %228 : vector<16x16xf32> to vector<16x16xbf16>
    %c0_129 = arith.constant 0 : index
    %c0_130 = arith.constant 0 : index
    %c0_131 = arith.constant 0 : index
    %230 = vector.load %arg30[%c0_129, %c0_130, %c0_131] : memref<2x16x32xbf16, #tpu.memory_space<vmem>>, vector<1x16x32xbf16>
    %231 = vector.shape_cast %230 : vector<1x16x32xbf16> to vector<16x32xbf16>
    %cst_132 = arith.constant dense<0.000000e+00> : vector<16x32xf32>
    %232 = tpu.matmul %229, %231, %cst_132 {dimension_numbers = #tpu.dot_dimension_numbers<[1], [0], [0], [1], [0, 0, 1, 1], [], []>} : vector<16x16xbf16>, vector<16x32xbf16>, vector<16x32xf32> -> vector<16x32xf32>
    %c1_133 = arith.constant 1 : index
    %c0_134 = arith.constant 0 : index
    %c0_135 = arith.constant 0 : index
    %233 = vector.load %arg24[%c1_133, %c0_134, %c0_135] : memref<2x32x16xbf16, #tpu.memory_space<vmem>>, vector<1x32x16xbf16>
    %234 = vector.shape_cast %233 : vector<1x32x16xbf16> to vector<32x16xbf16>
    %cst_136 = arith.constant dense<0.000000e+00> : vector<16x16xf32>
    %235 = tpu.matmul %185, %234, %cst_136 {dimension_numbers = #tpu.dot_dimension_numbers<[1], [0], [0], [1], [0, 0, 1, 1], [], []>} : vector<16x32xbf16>, vector<32x16xbf16>, vector<16x16xf32> -> vector<16x16xf32>
    %c1_137 = arith.constant 1 : index
    %c0_138 = arith.constant 0 : index
    %c0_139 = arith.constant 0 : index
    %236 = vector.load %arg27[%c1_137, %c0_138, %c0_139] : memref<2x1x16xf32, #tpu.memory_space<vmem>>, vector<1x1x16xf32>
    %237 = vector.shape_cast %236 : vector<1x1x16xf32> to vector<1x16xf32>
    %238 = vector.broadcast %237 : vector<1x16xf32> to vector<16x16xf32>
    %239 = arith.addf %235, %238 : vector<16x16xf32>
    %240 = vector.shape_cast %239 : vector<16x16xf32> to vector<2x8x16xf32>
    %c1_140 = arith.constant 1 : index
    %c0_141 = arith.constant 0 : index
    %c0_142 = arith.constant 0 : index
    %241 = vector.load %arg25[%c1_140, %c0_141, %c0_142] : memref<2x32x16xbf16, #tpu.memory_space<vmem>>, vector<1x32x16xbf16>
    %242 = vector.shape_cast %241 : vector<1x32x16xbf16> to vector<32x16xbf16>
    %cst_143 = arith.constant dense<0.000000e+00> : vector<16x16xf32>
    %243 = tpu.matmul %187, %242, %cst_143 {dimension_numbers = #tpu.dot_dimension_numbers<[1], [0], [0], [1], [0, 0, 1, 1], [], []>} : vector<16x32xbf16>, vector<32x16xbf16>, vector<16x16xf32> -> vector<16x16xf32>
    %c1_144 = arith.constant 1 : index
    %c0_145 = arith.constant 0 : index
    %c0_146 = arith.constant 0 : index
    %244 = vector.load %arg28[%c1_144, %c0_145, %c0_146] : memref<2x1x16xf32, #tpu.memory_space<vmem>>, vector<1x1x16xf32>
    %245 = vector.shape_cast %244 : vector<1x1x16xf32> to vector<1x16xf32>
    %246 = vector.broadcast %245 : vector<1x16xf32> to vector<16x16xf32>
    %247 = arith.addf %243, %246 : vector<16x16xf32>
    %248 = vector.shape_cast %247 : vector<16x16xf32> to vector<2x8x16xf32>
    %c1_147 = arith.constant 1 : index
    %c0_148 = arith.constant 0 : index
    %c0_149 = arith.constant 0 : index
    %249 = vector.load %arg26[%c1_147, %c0_148, %c0_149] : memref<2x32x16xbf16, #tpu.memory_space<vmem>>, vector<1x32x16xbf16>
    %250 = vector.shape_cast %249 : vector<1x32x16xbf16> to vector<32x16xbf16>
    %cst_150 = arith.constant dense<0.000000e+00> : vector<16x16xf32>
    %251 = tpu.matmul %187, %250, %cst_150 {dimension_numbers = #tpu.dot_dimension_numbers<[1], [0], [0], [1], [0, 0, 1, 1], [], []>} : vector<16x32xbf16>, vector<32x16xbf16>, vector<16x16xf32> -> vector<16x16xf32>
    %c1_151 = arith.constant 1 : index
    %c0_152 = arith.constant 0 : index
    %c0_153 = arith.constant 0 : index
    %252 = vector.load %arg29[%c1_151, %c0_152, %c0_153] : memref<2x1x16xf32, #tpu.memory_space<vmem>>, vector<1x1x16xf32>
    %253 = vector.shape_cast %252 : vector<1x1x16xf32> to vector<1x16xf32>
    %254 = vector.broadcast %253 : vector<1x16xf32> to vector<16x16xf32>
    %255 = arith.addf %251, %254 : vector<16x16xf32>
    %256 = vector.shape_cast %255 : vector<16x16xf32> to vector<2x8x16xf32>
    %257 = arith.truncf %240 : vector<2x8x16xf32> to vector<2x8x16xbf16>
    %258 = arith.truncf %248 : vector<2x8x16xf32> to vector<2x8x16xbf16>
    "tpu.trace_start"() <{level = 10 : i32, message = "bqd,bkd->bqk"}> : () -> ()
    %cst_154 = arith.constant dense<0.000000e+00> : vector<2x8x8xf32>
    %259 = tpu.matmul %257, %258, %cst_154 {dimension_numbers = #tpu.dot_dimension_numbers<[2], [2], [1], [1], [0, 0, 0, 1, 1, 1], [0], [0]>} : vector<2x8x16xbf16>, vector<2x8x16xbf16>, vector<2x8x8xf32> -> vector<2x8x8xf32>
    "tpu.trace_stop"() : () -> ()
    %cst_155 = arith.constant dense<0xFF800000> : vector<2x8xf32>
    %260 = vector.multi_reduction <maximumf>, %259, %cst_155 [2] : vector<2x8x8xf32> to vector<2x8xf32>
    %261 = vector.shape_cast %260 : vector<2x8xf32> to vector<2x8x1xf32>
    %262 = vector.broadcast %261 : vector<2x8x1xf32> to vector<2x8x8xf32>
    %263 = arith.subf %259, %262 : vector<2x8x8xf32>
    %264 = math.exp %263 : vector<2x8x8xf32>
    %cst_156 = arith.constant dense<0.000000e+00> : vector<2x8xf32>
    %265 = vector.multi_reduction <add>, %264, %cst_156 [2] : vector<2x8x8xf32> to vector<2x8xf32>
    %266 = vector.shape_cast %265 : vector<2x8xf32> to vector<2x8x1xf32>
    %267 = tpu.reciprocal %266 {approx = true} : vector<2x8x1xf32> -> vector<2x8x1xf32>
    %268 = vector.broadcast %267 : vector<2x8x1xf32> to vector<2x8x8xf32>
    %269 = arith.mulf %264, %268 : vector<2x8x8xf32>
    %270 = arith.truncf %269 : vector<2x8x8xf32> to vector<2x8x8xbf16>
    %271 = arith.truncf %256 : vector<2x8x16xf32> to vector<2x8x16xbf16>
    "tpu.trace_start"() <{level = 10 : i32, message = "bqk,bkd->bqd"}> : () -> ()
    %cst_157 = arith.constant dense<0.000000e+00> : vector<2x8x16xf32>
    %272 = tpu.matmul %270, %271, %cst_157 {dimension_numbers = #tpu.dot_dimension_numbers<[2], [1], [1], [2], [0, 0, 0, 1, 1, 2], [0], [0]>} : vector<2x8x8xbf16>, vector<2x8x16xbf16>, vector<2x8x16xf32> -> vector<2x8x16xf32>
    "tpu.trace_stop"() : () -> ()
    %273 = vector.shape_cast %272 : vector<2x8x16xf32> to vector<16x16xf32>
    %274 = arith.truncf %273 : vector<16x16xf32> to vector<16x16xbf16>
    %c1_158 = arith.constant 1 : index
    %c0_159 = arith.constant 0 : index
    %c0_160 = arith.constant 0 : index
    %275 = vector.load %arg30[%c1_158, %c0_159, %c0_160] : memref<2x16x32xbf16, #tpu.memory_space<vmem>>, vector<1x16x32xbf16>
    %276 = vector.shape_cast %275 : vector<1x16x32xbf16> to vector<16x32xbf16>
    %cst_161 = arith.constant dense<0.000000e+00> : vector<16x32xf32>
    %277 = tpu.matmul %274, %276, %cst_161 {dimension_numbers = #tpu.dot_dimension_numbers<[1], [0], [0], [1], [0, 0, 1, 1], [], []>} : vector<16x16xbf16>, vector<16x32xbf16>, vector<16x32xf32> -> vector<16x32xf32>
    %278 = arith.addf %232, %277 : vector<16x32xf32>
    %c0_162 = arith.constant 0 : index
    %c0_163 = arith.constant 0 : index
    %279 = vector.load %arg31[%c0_162, %c0_163] : memref<1x32xf32, #tpu.memory_space<vmem>>, vector<1x32xf32>
    %280 = vector.broadcast %279 : vector<1x32xf32> to vector<16x32xf32>
    %281 = arith.addf %278, %280 : vector<16x32xf32>
    %282 = vector.shape_cast %183 : vector<2x8x32xf32> to vector<16x32xf32>
    %283 = arith.addf %282, %281 : vector<16x32xf32>
    %c0_164 = arith.constant 0 : index
    %c0_165 = arith.constant 0 : index
    %284 = vector.load %arg40[%c0_164, %c0_165] : memref<1x32xf32, #tpu.memory_space<vmem>>, vector<1x32xf32>
    %c0_166 = arith.constant 0 : index
    %c0_167 = arith.constant 0 : index
    %285 = vector.load %arg41[%c0_166, %c0_167] : memref<1x32xf32, #tpu.memory_space<vmem>>, vector<1x32xf32>
    %cst_168 = arith.constant dense<0.000000e+00> : vector<16xf32>
    %286 = vector.multi_reduction <add>, %283, %cst_168 [1] : vector<16x32xf32> to vector<16xf32>
    %287 = vector.shape_cast %286 : vector<16xf32> to vector<16x1xf32>
    %cst_169 = arith.constant 3.200000e+01 : f32
    %288 = vector.broadcast %cst_169 : f32 to vector<16x1xf32>
    %289 = arith.divf %287, %288 : vector<16x1xf32>
    %290 = vector.broadcast %289 : vector<16x1xf32> to vector<16x32xf32>
    %291 = arith.subf %283, %290 : vector<16x32xf32>
    %292 = arith.mulf %291, %291 : vector<16x32xf32>
    %cst_170 = arith.constant dense<0.000000e+00> : vector<16xf32>
    %293 = vector.multi_reduction <add>, %292, %cst_170 [1] : vector<16x32xf32> to vector<16xf32>
    %294 = vector.shape_cast %293 : vector<16xf32> to vector<16x1xf32>
    %cst_171 = arith.constant 3.200000e+01 : f32
    %295 = vector.broadcast %cst_171 : f32 to vector<16x1xf32>
    %296 = arith.divf %294, %295 : vector<16x1xf32>
    %cst_172 = arith.constant 9.99999974E-6 : f32
    %297 = vector.broadcast %cst_172 : f32 to vector<16x1xf32>
    %298 = arith.addf %296, %297 : vector<16x1xf32>
    %299 = math.rsqrt %298 : vector<16x1xf32>
    %300 = vector.broadcast %299 : vector<16x1xf32> to vector<16x32xf32>
    %301 = arith.mulf %291, %300 : vector<16x32xf32>
    %302 = vector.broadcast %284 : vector<1x32xf32> to vector<16x32xf32>
    %303 = arith.mulf %301, %302 : vector<16x32xf32>
    %304 = vector.broadcast %285 : vector<1x32xf32> to vector<16x32xf32>
    %305 = arith.addf %303, %304 : vector<16x32xf32>
    %306 = vector.shape_cast %305 : vector<16x32xf32> to vector<2x8x32xf32>
    %307 = vector.shape_cast %306 : vector<2x8x32xf32> to vector<16x32xf32>
    %308 = arith.truncf %307 : vector<16x32xf32> to vector<16x32xbf16>
    %309 = vector.shape_cast %178 : vector<2x3x32xf32> to vector<6x32xf32>
    %310 = arith.truncf %309 : vector<6x32xf32> to vector<6x32xbf16>
    %c0_173 = arith.constant 0 : index
    %c0_174 = arith.constant 0 : index
    %c0_175 = arith.constant 0 : index
    %311 = vector.load %arg32[%c0_173, %c0_174, %c0_175] : memref<2x32x16xbf16, #tpu.memory_space<vmem>>, vector<1x32x16xbf16>
    %312 = vector.shape_cast %311 : vector<1x32x16xbf16> to vector<32x16xbf16>
    %cst_176 = arith.constant dense<0.000000e+00> : vector<16x16xf32>
    %313 = tpu.matmul %308, %312, %cst_176 {dimension_numbers = #tpu.dot_dimension_numbers<[1], [0], [0], [1], [0, 0, 1, 1], [], []>} : vector<16x32xbf16>, vector<32x16xbf16>, vector<16x16xf32> -> vector<16x16xf32>
    %c0_177 = arith.constant 0 : index
    %c0_178 = arith.constant 0 : index
    %c0_179 = arith.constant 0 : index
    %314 = vector.load %arg35[%c0_177, %c0_178, %c0_179] : memref<2x1x16xf32, #tpu.memory_space<vmem>>, vector<1x1x16xf32>
    %315 = vector.shape_cast %314 : vector<1x1x16xf32> to vector<1x16xf32>
    %316 = vector.broadcast %315 : vector<1x16xf32> to vector<16x16xf32>
    %317 = arith.addf %313, %316 : vector<16x16xf32>
    %318 = vector.shape_cast %317 : vector<16x16xf32> to vector<2x8x16xf32>
    %c0_180 = arith.constant 0 : index
    %c0_181 = arith.constant 0 : index
    %c0_182 = arith.constant 0 : index
    %319 = vector.load %arg33[%c0_180, %c0_181, %c0_182] : memref<2x32x16xbf16, #tpu.memory_space<vmem>>, vector<1x32x16xbf16>
    %320 = vector.shape_cast %319 : vector<1x32x16xbf16> to vector<32x16xbf16>
    %cst_183 = arith.constant dense<0.000000e+00> : vector<6x16xf32>
    %321 = tpu.matmul %310, %320, %cst_183 {dimension_numbers = #tpu.dot_dimension_numbers<[1], [0], [0], [1], [0, 0, 1, 1], [], []>} : vector<6x32xbf16>, vector<32x16xbf16>, vector<6x16xf32> -> vector<6x16xf32>
    %c0_184 = arith.constant 0 : index
    %c0_185 = arith.constant 0 : index
    %c0_186 = arith.constant 0 : index
    %322 = vector.load %arg36[%c0_184, %c0_185, %c0_186] : memref<2x1x16xf32, #tpu.memory_space<vmem>>, vector<1x1x16xf32>
    %323 = vector.shape_cast %322 : vector<1x1x16xf32> to vector<1x16xf32>
    %324 = vector.broadcast %323 : vector<1x16xf32> to vector<6x16xf32>
    %325 = arith.addf %321, %324 : vector<6x16xf32>
    %326 = vector.shape_cast %325 : vector<6x16xf32> to vector<2x3x16xf32>
    %c0_187 = arith.constant 0 : index
    %c0_188 = arith.constant 0 : index
    %c0_189 = arith.constant 0 : index
    %327 = vector.load %arg34[%c0_187, %c0_188, %c0_189] : memref<2x32x16xbf16, #tpu.memory_space<vmem>>, vector<1x32x16xbf16>
    %328 = vector.shape_cast %327 : vector<1x32x16xbf16> to vector<32x16xbf16>
    %cst_190 = arith.constant dense<0.000000e+00> : vector<6x16xf32>
    %329 = tpu.matmul %310, %328, %cst_190 {dimension_numbers = #tpu.dot_dimension_numbers<[1], [0], [0], [1], [0, 0, 1, 1], [], []>} : vector<6x32xbf16>, vector<32x16xbf16>, vector<6x16xf32> -> vector<6x16xf32>
    %c0_191 = arith.constant 0 : index
    %c0_192 = arith.constant 0 : index
    %c0_193 = arith.constant 0 : index
    %330 = vector.load %arg37[%c0_191, %c0_192, %c0_193] : memref<2x1x16xf32, #tpu.memory_space<vmem>>, vector<1x1x16xf32>
    %331 = vector.shape_cast %330 : vector<1x1x16xf32> to vector<1x16xf32>
    %332 = vector.broadcast %331 : vector<1x16xf32> to vector<6x16xf32>
    %333 = arith.addf %329, %332 : vector<6x16xf32>
    %334 = vector.shape_cast %333 : vector<6x16xf32> to vector<2x3x16xf32>
    %335 = arith.truncf %318 : vector<2x8x16xf32> to vector<2x8x16xbf16>
    %336 = arith.truncf %326 : vector<2x3x16xf32> to vector<2x3x16xbf16>
    "tpu.trace_start"() <{level = 10 : i32, message = "bqd,bkd->bqk"}> : () -> ()
    %cst_194 = arith.constant dense<0.000000e+00> : vector<2x8x3xf32>
    %337 = tpu.matmul %335, %336, %cst_194 {dimension_numbers = #tpu.dot_dimension_numbers<[2], [2], [1], [1], [0, 0, 0, 1, 1, 1], [0], [0]>} : vector<2x8x16xbf16>, vector<2x3x16xbf16>, vector<2x8x3xf32> -> vector<2x8x3xf32>
    "tpu.trace_stop"() : () -> ()
    %cst_195 = arith.constant dense<0xFF800000> : vector<2x8xf32>
    %338 = vector.multi_reduction <maximumf>, %337, %cst_195 [2] : vector<2x8x3xf32> to vector<2x8xf32>
    %339 = vector.shape_cast %338 : vector<2x8xf32> to vector<2x8x1xf32>
    %340 = vector.broadcast %339 : vector<2x8x1xf32> to vector<2x8x3xf32>
    %341 = arith.subf %337, %340 : vector<2x8x3xf32>
    %342 = math.exp %341 : vector<2x8x3xf32>
    %cst_196 = arith.constant dense<0.000000e+00> : vector<2x8xf32>
    %343 = vector.multi_reduction <add>, %342, %cst_196 [2] : vector<2x8x3xf32> to vector<2x8xf32>
    %344 = vector.shape_cast %343 : vector<2x8xf32> to vector<2x8x1xf32>
    %345 = tpu.reciprocal %344 {approx = true} : vector<2x8x1xf32> -> vector<2x8x1xf32>
    %346 = vector.broadcast %345 : vector<2x8x1xf32> to vector<2x8x3xf32>
    %347 = arith.mulf %342, %346 : vector<2x8x3xf32>
    %348 = arith.truncf %347 : vector<2x8x3xf32> to vector<2x8x3xbf16>
    %349 = arith.truncf %334 : vector<2x3x16xf32> to vector<2x3x16xbf16>
    "tpu.trace_start"() <{level = 10 : i32, message = "bqk,bkd->bqd"}> : () -> ()
    %cst_197 = arith.constant dense<0.000000e+00> : vector<2x8x16xf32>
    %350 = tpu.matmul %348, %349, %cst_197 {dimension_numbers = #tpu.dot_dimension_numbers<[2], [1], [1], [2], [0, 0, 0, 1, 1, 2], [0], [0]>} : vector<2x8x3xbf16>, vector<2x3x16xbf16>, vector<2x8x16xf32> -> vector<2x8x16xf32>
    "tpu.trace_stop"() : () -> ()
    %351 = vector.shape_cast %350 : vector<2x8x16xf32> to vector<16x16xf32>
    %352 = arith.truncf %351 : vector<16x16xf32> to vector<16x16xbf16>
    %c0_198 = arith.constant 0 : index
    %c0_199 = arith.constant 0 : index
    %c0_200 = arith.constant 0 : index
    %353 = vector.load %arg38[%c0_198, %c0_199, %c0_200] : memref<2x16x32xbf16, #tpu.memory_space<vmem>>, vector<1x16x32xbf16>
    %354 = vector.shape_cast %353 : vector<1x16x32xbf16> to vector<16x32xbf16>
    %cst_201 = arith.constant dense<0.000000e+00> : vector<16x32xf32>
    %355 = tpu.matmul %352, %354, %cst_201 {dimension_numbers = #tpu.dot_dimension_numbers<[1], [0], [0], [1], [0, 0, 1, 1], [], []>} : vector<16x16xbf16>, vector<16x32xbf16>, vector<16x32xf32> -> vector<16x32xf32>
    %c1_202 = arith.constant 1 : index
    %c0_203 = arith.constant 0 : index
    %c0_204 = arith.constant 0 : index
    %356 = vector.load %arg32[%c1_202, %c0_203, %c0_204] : memref<2x32x16xbf16, #tpu.memory_space<vmem>>, vector<1x32x16xbf16>
    %357 = vector.shape_cast %356 : vector<1x32x16xbf16> to vector<32x16xbf16>
    %cst_205 = arith.constant dense<0.000000e+00> : vector<16x16xf32>
    %358 = tpu.matmul %308, %357, %cst_205 {dimension_numbers = #tpu.dot_dimension_numbers<[1], [0], [0], [1], [0, 0, 1, 1], [], []>} : vector<16x32xbf16>, vector<32x16xbf16>, vector<16x16xf32> -> vector<16x16xf32>
    %c1_206 = arith.constant 1 : index
    %c0_207 = arith.constant 0 : index
    %c0_208 = arith.constant 0 : index
    %359 = vector.load %arg35[%c1_206, %c0_207, %c0_208] : memref<2x1x16xf32, #tpu.memory_space<vmem>>, vector<1x1x16xf32>
    %360 = vector.shape_cast %359 : vector<1x1x16xf32> to vector<1x16xf32>
    %361 = vector.broadcast %360 : vector<1x16xf32> to vector<16x16xf32>
    %362 = arith.addf %358, %361 : vector<16x16xf32>
    %363 = vector.shape_cast %362 : vector<16x16xf32> to vector<2x8x16xf32>
    %c1_209 = arith.constant 1 : index
    %c0_210 = arith.constant 0 : index
    %c0_211 = arith.constant 0 : index
    %364 = vector.load %arg33[%c1_209, %c0_210, %c0_211] : memref<2x32x16xbf16, #tpu.memory_space<vmem>>, vector<1x32x16xbf16>
    %365 = vector.shape_cast %364 : vector<1x32x16xbf16> to vector<32x16xbf16>
    %cst_212 = arith.constant dense<0.000000e+00> : vector<6x16xf32>
    %366 = tpu.matmul %310, %365, %cst_212 {dimension_numbers = #tpu.dot_dimension_numbers<[1], [0], [0], [1], [0, 0, 1, 1], [], []>} : vector<6x32xbf16>, vector<32x16xbf16>, vector<6x16xf32> -> vector<6x16xf32>
    %c1_213 = arith.constant 1 : index
    %c0_214 = arith.constant 0 : index
    %c0_215 = arith.constant 0 : index
    %367 = vector.load %arg36[%c1_213, %c0_214, %c0_215] : memref<2x1x16xf32, #tpu.memory_space<vmem>>, vector<1x1x16xf32>
    %368 = vector.shape_cast %367 : vector<1x1x16xf32> to vector<1x16xf32>
    %369 = vector.broadcast %368 : vector<1x16xf32> to vector<6x16xf32>
    %370 = arith.addf %366, %369 : vector<6x16xf32>
    %371 = vector.shape_cast %370 : vector<6x16xf32> to vector<2x3x16xf32>
    %c1_216 = arith.constant 1 : index
    %c0_217 = arith.constant 0 : index
    %c0_218 = arith.constant 0 : index
    %372 = vector.load %arg34[%c1_216, %c0_217, %c0_218] : memref<2x32x16xbf16, #tpu.memory_space<vmem>>, vector<1x32x16xbf16>
    %373 = vector.shape_cast %372 : vector<1x32x16xbf16> to vector<32x16xbf16>
    %cst_219 = arith.constant dense<0.000000e+00> : vector<6x16xf32>
    %374 = tpu.matmul %310, %373, %cst_219 {dimension_numbers = #tpu.dot_dimension_numbers<[1], [0], [0], [1], [0, 0, 1, 1], [], []>} : vector<6x32xbf16>, vector<32x16xbf16>, vector<6x16xf32> -> vector<6x16xf32>
    %c1_220 = arith.constant 1 : index
    %c0_221 = arith.constant 0 : index
    %c0_222 = arith.constant 0 : index
    %375 = vector.load %arg37[%c1_220, %c0_221, %c0_222] : memref<2x1x16xf32, #tpu.memory_space<vmem>>, vector<1x1x16xf32>
    %376 = vector.shape_cast %375 : vector<1x1x16xf32> to vector<1x16xf32>
    %377 = vector.broadcast %376 : vector<1x16xf32> to vector<6x16xf32>
    %378 = arith.addf %374, %377 : vector<6x16xf32>
    %379 = vector.shape_cast %378 : vector<6x16xf32> to vector<2x3x16xf32>
    %380 = arith.truncf %363 : vector<2x8x16xf32> to vector<2x8x16xbf16>
    %381 = arith.truncf %371 : vector<2x3x16xf32> to vector<2x3x16xbf16>
    "tpu.trace_start"() <{level = 10 : i32, message = "bqd,bkd->bqk"}> : () -> ()
    %cst_223 = arith.constant dense<0.000000e+00> : vector<2x8x3xf32>
    %382 = tpu.matmul %380, %381, %cst_223 {dimension_numbers = #tpu.dot_dimension_numbers<[2], [2], [1], [1], [0, 0, 0, 1, 1, 1], [0], [0]>} : vector<2x8x16xbf16>, vector<2x3x16xbf16>, vector<2x8x3xf32> -> vector<2x8x3xf32>
    "tpu.trace_stop"() : () -> ()
    %cst_224 = arith.constant dense<0xFF800000> : vector<2x8xf32>
    %383 = vector.multi_reduction <maximumf>, %382, %cst_224 [2] : vector<2x8x3xf32> to vector<2x8xf32>
    %384 = vector.shape_cast %383 : vector<2x8xf32> to vector<2x8x1xf32>
    %385 = vector.broadcast %384 : vector<2x8x1xf32> to vector<2x8x3xf32>
    %386 = arith.subf %382, %385 : vector<2x8x3xf32>
    %387 = math.exp %386 : vector<2x8x3xf32>
    %cst_225 = arith.constant dense<0.000000e+00> : vector<2x8xf32>
    %388 = vector.multi_reduction <add>, %387, %cst_225 [2] : vector<2x8x3xf32> to vector<2x8xf32>
    %389 = vector.shape_cast %388 : vector<2x8xf32> to vector<2x8x1xf32>
    %390 = tpu.reciprocal %389 {approx = true} : vector<2x8x1xf32> -> vector<2x8x1xf32>
    %391 = vector.broadcast %390 : vector<2x8x1xf32> to vector<2x8x3xf32>
    %392 = arith.mulf %387, %391 : vector<2x8x3xf32>
    %393 = arith.truncf %392 : vector<2x8x3xf32> to vector<2x8x3xbf16>
    %394 = arith.truncf %379 : vector<2x3x16xf32> to vector<2x3x16xbf16>
    "tpu.trace_start"() <{level = 10 : i32, message = "bqk,bkd->bqd"}> : () -> ()
    %cst_226 = arith.constant dense<0.000000e+00> : vector<2x8x16xf32>
    %395 = tpu.matmul %393, %394, %cst_226 {dimension_numbers = #tpu.dot_dimension_numbers<[2], [1], [1], [2], [0, 0, 0, 1, 1, 2], [0], [0]>} : vector<2x8x3xbf16>, vector<2x3x16xbf16>, vector<2x8x16xf32> -> vector<2x8x16xf32>
    "tpu.trace_stop"() : () -> ()
    %396 = vector.shape_cast %395 : vector<2x8x16xf32> to vector<16x16xf32>
    %397 = arith.truncf %396 : vector<16x16xf32> to vector<16x16xbf16>
    %c1_227 = arith.constant 1 : index
    %c0_228 = arith.constant 0 : index
    %c0_229 = arith.constant 0 : index
    %398 = vector.load %arg38[%c1_227, %c0_228, %c0_229] : memref<2x16x32xbf16, #tpu.memory_space<vmem>>, vector<1x16x32xbf16>
    %399 = vector.shape_cast %398 : vector<1x16x32xbf16> to vector<16x32xbf16>
    %cst_230 = arith.constant dense<0.000000e+00> : vector<16x32xf32>
    %400 = tpu.matmul %397, %399, %cst_230 {dimension_numbers = #tpu.dot_dimension_numbers<[1], [0], [0], [1], [0, 0, 1, 1], [], []>} : vector<16x16xbf16>, vector<16x32xbf16>, vector<16x32xf32> -> vector<16x32xf32>
    %401 = arith.addf %355, %400 : vector<16x32xf32>
    %c0_231 = arith.constant 0 : index
    %c0_232 = arith.constant 0 : index
    %402 = vector.load %arg39[%c0_231, %c0_232] : memref<1x32xf32, #tpu.memory_space<vmem>>, vector<1x32xf32>
    %403 = vector.broadcast %402 : vector<1x32xf32> to vector<16x32xf32>
    %404 = arith.addf %401, %403 : vector<16x32xf32>
    %405 = arith.addf %305, %404 : vector<16x32xf32>
    %c0_233 = arith.constant 0 : index
    %c0_234 = arith.constant 0 : index
    %406 = vector.load %arg42[%c0_233, %c0_234] : memref<1x32xf32, #tpu.memory_space<vmem>>, vector<1x32xf32>
    %c0_235 = arith.constant 0 : index
    %c0_236 = arith.constant 0 : index
    %407 = vector.load %arg43[%c0_235, %c0_236] : memref<1x32xf32, #tpu.memory_space<vmem>>, vector<1x32xf32>
    %cst_237 = arith.constant dense<0.000000e+00> : vector<16xf32>
    %408 = vector.multi_reduction <add>, %405, %cst_237 [1] : vector<16x32xf32> to vector<16xf32>
    %409 = vector.shape_cast %408 : vector<16xf32> to vector<16x1xf32>
    %cst_238 = arith.constant 3.200000e+01 : f32
    %410 = vector.broadcast %cst_238 : f32 to vector<16x1xf32>
    %411 = arith.divf %409, %410 : vector<16x1xf32>
    %412 = vector.broadcast %411 : vector<16x1xf32> to vector<16x32xf32>
    %413 = arith.subf %405, %412 : vector<16x32xf32>
    %414 = arith.mulf %413, %413 : vector<16x32xf32>
    %cst_239 = arith.constant dense<0.000000e+00> : vector<16xf32>
    %415 = vector.multi_reduction <add>, %414, %cst_239 [1] : vector<16x32xf32> to vector<16xf32>
    %416 = vector.shape_cast %415 : vector<16xf32> to vector<16x1xf32>
    %cst_240 = arith.constant 3.200000e+01 : f32
    %417 = vector.broadcast %cst_240 : f32 to vector<16x1xf32>
    %418 = arith.divf %416, %417 : vector<16x1xf32>
    %cst_241 = arith.constant 9.99999974E-6 : f32
    %419 = vector.broadcast %cst_241 : f32 to vector<16x1xf32>
    %420 = arith.addf %418, %419 : vector<16x1xf32>
    %421 = math.rsqrt %420 : vector<16x1xf32>
    %422 = vector.broadcast %421 : vector<16x1xf32> to vector<16x32xf32>
    %423 = arith.mulf %413, %422 : vector<16x32xf32>
    %424 = vector.broadcast %406 : vector<1x32xf32> to vector<16x32xf32>
    %425 = arith.mulf %423, %424 : vector<16x32xf32>
    %426 = vector.broadcast %407 : vector<1x32xf32> to vector<16x32xf32>
    %427 = arith.addf %425, %426 : vector<16x32xf32>
    %428 = arith.truncf %427 : vector<16x32xf32> to vector<16x32xbf16>
    %c0_242 = arith.constant 0 : index
    %c0_243 = arith.constant 0 : index
    %429 = vector.load %arg44[%c0_242, %c0_243] : memref<32x64xbf16, #tpu.memory_space<vmem>>, vector<32x64xbf16>
    %cst_244 = arith.constant dense<0.000000e+00> : vector<16x64xf32>
    %430 = tpu.matmul %428, %429, %cst_244 {dimension_numbers = #tpu.dot_dimension_numbers<[1], [0], [0], [1], [0, 0, 1, 1], [], []>} : vector<16x32xbf16>, vector<32x64xbf16>, vector<16x64xf32> -> vector<16x64xf32>
    %c0_245 = arith.constant 0 : index
    %c0_246 = arith.constant 0 : index
    %431 = vector.load %arg45[%c0_245, %c0_246] : memref<1x64xf32, #tpu.memory_space<vmem>>, vector<1x64xf32>
    %432 = vector.broadcast %431 : vector<1x64xf32> to vector<16x64xf32>
    %433 = arith.addf %430, %432 : vector<16x64xf32>
    %cst_247 = arith.constant 0.000000e+00 : f32
    %434 = vector.broadcast %cst_247 : f32 to vector<16x64xf32>
    %435 = arith.maximumf %433, %434 : vector<16x64xf32>
    %436 = arith.truncf %435 : vector<16x64xf32> to vector<16x64xbf16>
    %c0_248 = arith.constant 0 : index
    %c0_249 = arith.constant 0 : index
    %437 = vector.load %arg46[%c0_248, %c0_249] : memref<64x32xbf16, #tpu.memory_space<vmem>>, vector<64x32xbf16>
    %cst_250 = arith.constant dense<0.000000e+00> : vector<16x32xf32>
    %438 = tpu.matmul %436, %437, %cst_250 {dimension_numbers = #tpu.dot_dimension_numbers<[1], [0], [0], [1], [0, 0, 1, 1], [], []>} : vector<16x64xbf16>, vector<64x32xbf16>, vector<16x32xf32> -> vector<16x32xf32>
    %c0_251 = arith.constant 0 : index
    %c0_252 = arith.constant 0 : index
    %439 = vector.load %arg47[%c0_251, %c0_252] : memref<1x32xf32, #tpu.memory_space<vmem>>, vector<1x32xf32>
    %440 = vector.broadcast %439 : vector<1x32xf32> to vector<16x32xf32>
    %441 = arith.addf %438, %440 : vector<16x32xf32>
    %442 = arith.addf %427, %441 : vector<16x32xf32>
    %c0_253 = arith.constant 0 : index
    %c0_254 = arith.constant 0 : index
    %443 = vector.load %arg48[%c0_253, %c0_254] : memref<1x32xf32, #tpu.memory_space<vmem>>, vector<1x32xf32>
    %c0_255 = arith.constant 0 : index
    %c0_256 = arith.constant 0 : index
    %444 = vector.load %arg49[%c0_255, %c0_256] : memref<1x32xf32, #tpu.memory_space<vmem>>, vector<1x32xf32>
    %cst_257 = arith.constant dense<0.000000e+00> : vector<16xf32>
    %445 = vector.multi_reduction <add>, %442, %cst_257 [1] : vector<16x32xf32> to vector<16xf32>
    %446 = vector.shape_cast %445 : vector<16xf32> to vector<16x1xf32>
    %cst_258 = arith.constant 3.200000e+01 : f32
    %447 = vector.broadcast %cst_258 : f32 to vector<16x1xf32>
    %448 = arith.divf %446, %447 : vector<16x1xf32>
    %449 = vector.broadcast %448 : vector<16x1xf32> to vector<16x32xf32>
    %450 = arith.subf %442, %449 : vector<16x32xf32>
    %451 = arith.mulf %450, %450 : vector<16x32xf32>
    %cst_259 = arith.constant dense<0.000000e+00> : vector<16xf32>
    %452 = vector.multi_reduction <add>, %451, %cst_259 [1] : vector<16x32xf32> to vector<16xf32>
    %453 = vector.shape_cast %452 : vector<16xf32> to vector<16x1xf32>
    %cst_260 = arith.constant 3.200000e+01 : f32
    %454 = vector.broadcast %cst_260 : f32 to vector<16x1xf32>
    %455 = arith.divf %453, %454 : vector<16x1xf32>
    %cst_261 = arith.constant 9.99999974E-6 : f32
    %456 = vector.broadcast %cst_261 : f32 to vector<16x1xf32>
    %457 = arith.addf %455, %456 : vector<16x1xf32>
    %458 = math.rsqrt %457 : vector<16x1xf32>
    %459 = vector.broadcast %458 : vector<16x1xf32> to vector<16x32xf32>
    %460 = arith.mulf %450, %459 : vector<16x32xf32>
    %461 = vector.broadcast %443 : vector<1x32xf32> to vector<16x32xf32>
    %462 = arith.mulf %460, %461 : vector<16x32xf32>
    %463 = vector.broadcast %444 : vector<1x32xf32> to vector<16x32xf32>
    %464 = arith.addf %462, %463 : vector<16x32xf32>
    %465 = arith.truncf %464 : vector<16x32xf32> to vector<16x32xbf16>
    %c0_262 = arith.constant 0 : index
    %c0_263 = arith.constant 0 : index
    %466 = vector.load %arg50[%c0_262, %c0_263] : memref<32x128xbf16, #tpu.memory_space<vmem>>, vector<32x128xbf16>
    %cst_264 = arith.constant dense<0.000000e+00> : vector<16x128xf32>
    %467 = tpu.matmul %465, %466, %cst_264 {dimension_numbers = #tpu.dot_dimension_numbers<[1], [0], [0], [1], [0, 0, 1, 1], [], []>} : vector<16x32xbf16>, vector<32x128xbf16>, vector<16x128xf32> -> vector<16x128xf32>
    %c0_265 = arith.constant 0 : index
    %c0_266 = arith.constant 0 : index
    %468 = vector.load %arg51[%c0_265, %c0_266] : memref<1x128xf32, #tpu.memory_space<vmem>>, vector<1x128xf32>
    %469 = vector.broadcast %468 : vector<1x128xf32> to vector<16x128xf32>
    %470 = arith.addf %467, %469 : vector<16x128xf32>
    %c0_267 = arith.constant 0 : index
    %c0_268 = arith.constant 0 : index
    %471 = vector.load %arg52[%c0_267, %c0_268] : memref<16x128xf32, #tpu.memory_space<vmem>>, vector<16x128xf32>
    tpu.vector_store %arg52[%c0_267, %c0_268], %470 {strides = array<i32>} : memref<16x128xf32, #tpu.memory_space<vmem>>, vector<16x128xf32>,
    return
  }
}

</mosaic_0001>

<llo_original>
// kernel: temporal_transformer_forward.1
$region0: #{temporal_transformer_forward.1}
  #allocation0 [shape = 'u32[]', space=smem, size = 0x4, offset = 0x4, fixed_abs, tag = 'smem constant byte address 0x4 - core index']
  #allocation1 [shape = 'u32[144,128]{1,0:T(1,128)}', space=vmem, size = 0x12000, scoped, tag = 'internal scratch']
  %s0 = inlined_call_operand.smem [shape: u32[53], index: -1, kind: input, shape index: {}]
  %s1 = sld [smem:[%s0]]
  %s2 = scalar_lea.smem %s0, 1
  %s3 = sld [smem:[%s2]]
  %s4 = scalar_lea.smem %s0, 2
  %s5 = sld [smem:[%s4]]
  %s6 = scalar_lea.smem %s0, 3
  %s7 = sld [smem:[%s6]]
  %s8 = scalar_lea.smem %s0, 4
  %s9 = sld [smem:[%s8]]
  %s10 = scalar_lea.smem %s0, 5
  %s11 = sld [smem:[%s10]]
  %s12 = scalar_lea.smem %s0, 6
  %s13 = sld [smem:[%s12]]
  %s14 = scalar_lea.smem %s0, 7
  %s15 = sld [smem:[%s14]]
  %s16 = scalar_lea.smem %s0, 8
  %s17 = sld [smem:[%s16]]
  %s18 = scalar_lea.smem %s0, 9
  %s19 = sld [smem:[%s18]]
  %s20 = scalar_lea.smem %s0, 10
  %s21 = sld [smem:[%s20]]
  %s22 = scalar_lea.smem %s0, 11
  %s23 = sld [smem:[%s22]]
  %s24 = scalar_lea.smem %s0, 12
  %s25 = sld [smem:[%s24]]
  %s26 = scalar_lea.smem %s0, 13
  %s27 = sld [smem:[%s26]]
  %s28 = scalar_lea.smem %s0, 14
  %s29 = sld [smem:[%s28]]
  %s30 = scalar_lea.smem %s0, 15
  %s31 = sld [smem:[%s30]]
  %s32 = scalar_lea.smem %s0, 16
  %s33 = sld [smem:[%s32]]
  %s34 = scalar_lea.smem %s0, 17
  %s35 = sld [smem:[%s34]]
  %s36 = scalar_lea.smem %s0, 18
  %s37 = sld [smem:[%s36]]
  %s38 = scalar_lea.smem %s0, 19
  %s39 = sld [smem:[%s38]]
  %s40 = scalar_lea.smem %s0, 20
  %s41 = sld [smem:[%s40]]
  %s42 = scalar_lea.smem %s0, 21
  %s43 = sld [smem:[%s42]]
  %s44 = scalar_lea.smem %s0, 22
  %s45 = sld [smem:[%s44]]
  %s46 = scalar_lea.smem %s0, 23
  %s47 = sld [smem:[%s46]]
  %s48 = scalar_lea.smem %s0, 24
  %s49 = sld [smem:[%s48]]
  %s50 = scalar_lea.smem %s0, 25
  %s51 = sld [smem:[%s50]]
  %s52 = scalar_lea.smem %s0, 26
  %s53 = sld [smem:[%s52]]
  %s54 = scalar_lea.smem %s0, 27
  %s55 = sld [smem:[%s54]]
  %s56 = scalar_lea.smem %s0, 28
  %s57 = sld [smem:[%s56]]
  %s58 = scalar_lea.smem %s0, 29
  %s59 = sld [smem:[%s58]]
  %s60 = scalar_lea.smem %s0, 30
  %s61 = sld [smem:[%s60]]
  %s62 = scalar_lea.smem %s0, 31
  %s63 = sld [smem:[%s62]]
  %s64 = scalar_lea.smem %s0, 32
  %s65 = sld [smem:[%s64]]
  %s66 = scalar_lea.smem %s0, 33
  %s67 = sld [smem:[%s66]]
  %s68 = scalar_lea.smem %s0, 34
  %s69 = sld [smem:[%s68]]
  %s70 = scalar_lea.smem %s0, 35
  %s71 = sld [smem:[%s70]]
  %s72 = scalar_lea.smem %s0, 36
  %s73 = sld [smem:[%s72]]
  %s74 = scalar_lea.smem %s0, 37
  %s75 = sld [smem:[%s74]]
  %s76 = scalar_lea.smem %s0, 38
  %s77 = sld [smem:[%s76]]
  %s78 = scalar_lea.smem %s0, 39
  %s79 = sld [smem:[%s78]]
  %s80 = scalar_lea.smem %s0, 40
  %s81 = sld [smem:[%s80]]
  %s82 = scalar_lea.smem %s0, 41
  %s83 = sld [smem:[%s82]]
  %s84 = scalar_lea.smem %s0, 42
  %s85 = sld [smem:[%s84]]
  %s86 = scalar_lea.smem %s0, 43
  %s87 = sld [smem:[%s86]]
  %s88 = scalar_lea.smem %s0, 44
  %s89 = sld [smem:[%s88]]
  %s90 = scalar_lea.smem %s0, 45
  %s91 = sld [smem:[%s90]]
  %s92 = scalar_lea.smem %s0, 46
  %s93 = sld [smem:[%s92]]
  %s94 = scalar_lea.smem %s0, 47
  %s95 = sld [smem:[%s94]]
  %s96 = scalar_lea.smem %s0, 48
  %s97 = sld [smem:[%s96]]
  %s98 = scalar_lea.smem %s0, 49
  %s99 = sld [smem:[%s98]]
  %s100 = scalar_lea.smem %s0, 50
  %s101 = sld [smem:[%s100]]
  %s102 = scalar_lea.smem %s0, 51
  %s103 = sld [smem:[%s102]]
  %s104 = scalar_lea.smem %s0, 52
  %s105 = sld [smem:[%s104]]
  %s106 = sld [smem:[#allocation0]]
  $region218: #{temporal_transformer_forward.1} parent=0
    _
  %s108 = ssub.s32 1, %s106
  %s109 = scalar_select 0, %s108, %s106
  // Predicated region
  $region2: #{temporal_transformer_forward.1} parent=0 // pred_check
    _
  $region3: #{temporal_transformer_forward.1} parent=0 // pred_check_branch
    %111 = sbr.rel (0) target = $region5
  $region4: #{temporal_transformer_forward.1} parent=0 // pred_region
    _
  $region5: #{temporal_transformer_forward.1} parent=0 // pred_fallthru
    _
  // Predicated region
  $region6: #{temporal_transformer_forward.1} parent=0 // pred_check
    _
  $region7: #{temporal_transformer_forward.1} parent=0 // pred_check_branch
    %113 = sbr.rel (0) target = $region9
  $region8: #{temporal_transformer_forward.1} parent=0 // pred_region
    _
  $region9: #{temporal_transformer_forward.1} parent=0 // pred_fallthru
    _
  // Predicated region
  $region10: #{temporal_transformer_forward.1} parent=0 // pred_check
    _
  $region11: #{temporal_transformer_forward.1} parent=0 // pred_check_branch
    %115 = sbr.rel (0) target = $region13
  $region12: #{temporal_transformer_forward.1} parent=0 // pred_region
    _
  $region13: #{temporal_transformer_forward.1} parent=0 // pred_fallthru
    _
  // Predicated region
  $region14: #{temporal_transformer_forward.1} parent=0 // pred_check
    _
  $region15: #{temporal_transformer_forward.1} parent=0 // pred_check_branch
    %117 = sbr.rel (0) target = $region17
  $region16: #{temporal_transformer_forward.1} parent=0 // pred_region
    _
  $region17: #{temporal_transformer_forward.1} parent=0 // pred_fallthru
    _
  // Predicated region
  $region18: #{temporal_transformer_forward.1} parent=0 // pred_check
    _
  $region19: #{temporal_transformer_forward.1} parent=0 // pred_check_branch
    %119 = sbr.rel (0) target = $region21
  $region20: #{temporal_transformer_forward.1} parent=0 // pred_region
    _
  $region21: #{temporal_transformer_forward.1} parent=0 // pred_fallthru
    _
  // Predicated region
  $region22: #{temporal_transformer_forward.1} parent=0 // pred_check
    _
  $region23: #{temporal_transformer_forward.1} parent=0 // pred_check_branch
    %121 = sbr.rel (0) target = $region25
  $region24: #{temporal_transformer_forward.1} parent=0 // pred_region
    _
  $region25: #{temporal_transformer_forward.1} parent=0 // pred_fallthru
    _
  // Predicated region
  $region26: #{temporal_transformer_forward.1} parent=0 // pred_check
    _
  $region27: #{temporal_transformer_forward.1} parent=0 // pred_check_branch
    %123 = sbr.rel (0) target = $region29
  $region28: #{temporal_transformer_forward.1} parent=0 // pred_region
    _
  $region29: #{temporal_transformer_forward.1} parent=0 // pred_fallthru
    _
  // Predicated region
  $region30: #{temporal_transformer_forward.1} parent=0 // pred_check
    _
  $region31: #{temporal_transformer_forward.1} parent=0 // pred_check_branch
    %125 = sbr.rel (0) target = $region33
  $region32: #{temporal_transformer_forward.1} parent=0 // pred_region
    _
  $region33: #{temporal_transformer_forward.1} parent=0 // pred_fallthru
    _
  // Predicated region
  $region34: #{temporal_transformer_forward.1} parent=0 // pred_check
    _
  $region35: #{temporal_transformer_forward.1} parent=0 // pred_check_branch
    %127 = sbr.rel (0) target = $region37
  $region36: #{temporal_transformer_forward.1} parent=0 // pred_region
    _
  $region37: #{temporal_transformer_forward.1} parent=0 // pred_fallthru
    _
  // Predicated region
  $region38: #{temporal_transformer_forward.1} parent=0 // pred_check
    _
  $region39: #{temporal_transformer_forward.1} parent=0 // pred_check_branch
    %129 = sbr.rel (0) target = $region41
  $region40: #{temporal_transformer_forward.1} parent=0 // pred_region
    _
  $region41: #{temporal_transformer_forward.1} parent=0 // pred_fallthru
    _
  // Predicated region
  $region42: #{temporal_transformer_forward.1} parent=0 // pred_check
    _
  $region43: #{temporal_transformer_forward.1} parent=0 // pred_check_branch
    %131 = sbr.rel (0) target = $region45
  $region44: #{temporal_transformer_forward.1} parent=0 // pred_region
    _
  $region45: #{temporal_transformer_forward.1} parent=0 // pred_fallthru
    _
  // Predicated region
  $region46: #{temporal_transformer_forward.1} parent=0 // pred_check
    _
  $region47: #{temporal_transformer_forward.1} parent=0 // pred_check_branch
    %133 = sbr.rel (0) target = $region49
  $region48: #{temporal_transformer_forward.1} parent=0 // pred_region
    _
  $region49: #{temporal_transformer_forward.1} parent=0 // pred_fallthru
    _
  // Predicated region
  $region50: #{temporal_transformer_forward.1} parent=0 // pred_check
    _
  $region51: #{temporal_transformer_forward.1} parent=0 // pred_check_branch
    %135 = sbr.rel (0) target = $region53
  $region52: #{temporal_transformer_forward.1} parent=0 // pred_region
    _
  $region53: #{temporal_transformer_forward.1} parent=0 // pred_fallthru
    _
  // Predicated region
  $region54: #{temporal_transformer_forward.1} parent=0 // pred_check
    _
  $region55: #{temporal_transformer_forward.1} parent=0 // pred_check_branch
    %137 = sbr.rel (0) target = $region57
  $region56: #{temporal_transformer_forward.1} parent=0 // pred_region
    _
  $region57: #{temporal_transformer_forward.1} parent=0 // pred_fallthru
    _
  // Predicated region
  $region58: #{temporal_transformer_forward.1} parent=0 // pred_check
    _
  $region59: #{temporal_transformer_forward.1} parent=0 // pred_check_branch
    %139 = sbr.rel (0) target = $region61
  $region60: #{temporal_transformer_forward.1} parent=0 // pred_region
    _
  $region61: #{temporal_transformer_forward.1} parent=0 // pred_fallthru
    _
  // Predicated region
  $region62: #{temporal_transformer_forward.1} parent=0 // pred_check
    _
  $region63: #{temporal_transformer_forward.1} parent=0 // pred_check_branch
    %141 = sbr.rel (0) target = $region65
  $region64: #{temporal_transformer_forward.1} parent=0 // pred_region
    _
  $region65: #{temporal_transformer_forward.1} parent=0 // pred_fallthru
    _
  // Predicated region
  $region66: #{temporal_transformer_forward.1} parent=0 // pred_check
    _
  $region67: #{temporal_transformer_forward.1} parent=0 // pred_check_branch
    %143 = sbr.rel (0) target = $region69
  $region68: #{temporal_transformer_forward.1} parent=0 // pred_region
    _
  $region69: #{temporal_transformer_forward.1} parent=0 // pred_fallthru
    _
  // Predicated region
  $region70: #{temporal_transformer_forward.1} parent=0 // pred_check
    _
  $region71: #{temporal_transformer_forward.1} parent=0 // pred_check_branch
    %145 = sbr.rel (0) target = $region73
  $region72: #{temporal_transformer_forward.1} parent=0 // pred_region
    _
  $region73: #{temporal_transformer_forward.1} parent=0 // pred_fallthru
    _
  // Predicated region
  $region74: #{temporal_transformer_forward.1} parent=0 // pred_check
    _
  $region75: #{temporal_transformer_forward.1} parent=0 // pred_check_branch
    %147 = sbr.rel (0) target = $region77
  $region76: #{temporal_transformer_forward.1} parent=0 // pred_region
    _
  $region77: #{temporal_transformer_forward.1} parent=0 // pred_fallthru
    _
  // Predicated region
  $region78: #{temporal_transformer_forward.1} parent=0 // pred_check
    _
  $region79: #{temporal_transformer_forward.1} parent=0 // pred_check_branch
    %149 = sbr.rel (0) target = $region81
  $region80: #{temporal_transformer_forward.1} parent=0 // pred_region
    _
  $region81: #{temporal_transformer_forward.1} parent=0 // pred_fallthru
    _
  // Predicated region
  $region82: #{temporal_transformer_forward.1} parent=0 // pred_check
    _
  $region83: #{temporal_transformer_forward.1} parent=0 // pred_check_branch
    %151 = sbr.rel (0) target = $region85
  $region84: #{temporal_transformer_forward.1} parent=0 // pred_region
    _
  $region85: #{temporal_transformer_forward.1} parent=0 // pred_fallthru
    _
  // Predicated region
  $region86: #{temporal_transformer_forward.1} parent=0 // pred_check
    _
  $region87: #{temporal_transformer_forward.1} parent=0 // pred_check_branch
    %153 = sbr.rel (0) target = $region89
  $region88: #{temporal_transformer_forward.1} parent=0 // pred_region
    _
  $region89: #{temporal_transformer_forward.1} parent=0 // pred_fallthru
    _
  // Predicated region
  $region90: #{temporal_transformer_forward.1} parent=0 // pred_check
    _
  $region91: #{temporal_transformer_forward.1} parent=0 // pred_check_branch
    %155 = sbr.rel (0) target = $region93
  $region92: #{temporal_transformer_forward.1} parent=0 // pred_region
    _
  $region93: #{temporal_transformer_forward.1} parent=0 // pred_fallthru
    _
  // Predicated region
  $region94: #{temporal_transformer_forward.1} parent=0 // pred_check
    _
  $region95: #{temporal_transformer_forward.1} parent=0 // pred_check_branch
    %157 = sbr.rel (0) target = $region97
  $region96: #{temporal_transformer_forward.1} parent=0 // pred_region
    _
  $region97: #{temporal_transformer_forward.1} parent=0 // pred_fallthru
    _
  // Predicated region
  $region98: #{temporal_transformer_forward.1} parent=0 // pred_check
    _
  $region99: #{temporal_transformer_forward.1} parent=0 // pred_check_branch
    %159 = sbr.rel (0) target = $region101
  $region100: #{temporal_transformer_forward.1} parent=0 // pred_region
    _
  $region101: #{temporal_transformer_forward.1} parent=0 // pred_fallthru
    _
  // Predicated region
  $region102: #{temporal_transformer_forward.1} parent=0 // pred_check
    _
  $region103: #{temporal_transformer_forward.1} parent=0 // pred_check_branch
    %161 = sbr.rel (0) target = $region105
  $region104: #{temporal_transformer_forward.1} parent=0 // pred_region
    _
  $region105: #{temporal_transformer_forward.1} parent=0 // pred_fallthru
    _
  // Predicated region
  $region106: #{temporal_transformer_forward.1} parent=0 // pred_check
    _
  $region107: #{temporal_transformer_forward.1} parent=0 // pred_check_branch
    %163 = sbr.rel (0) target = $region109
  $region108: #{temporal_transformer_forward.1} parent=0 // pred_region
    _
  $region109: #{temporal_transformer_forward.1} parent=0 // pred_fallthru
    _
  // Predicated region
  $region110: #{temporal_transformer_forward.1} parent=0 // pred_check
    _
  $region111: #{temporal_transformer_forward.1} parent=0 // pred_check_branch
    %165 = sbr.rel (0) target = $region113
  $region112: #{temporal_transformer_forward.1} parent=0 // pred_region
    _
  $region113: #{temporal_transformer_forward.1} parent=0 // pred_fallthru
    _
  // Predicated region
  $region114: #{temporal_transformer_forward.1} parent=0 // pred_check
    _
  $region115: #{temporal_transformer_forward.1} parent=0 // pred_check_branch
    %167 = sbr.rel (0) target = $region117
  $region116: #{temporal_transformer_forward.1} parent=0 // pred_region
    _
  $region117: #{temporal_transformer_forward.1} parent=0 // pred_fallthru
    _
  // Predicated region
  $region118: #{temporal_transformer_forward.1} parent=0 // pred_check
    _
  $region119: #{temporal_transformer_forward.1} parent=0 // pred_check_branch
    %169 = sbr.rel (0) target = $region121
  $region120: #{temporal_transformer_forward.1} parent=0 // pred_region
    _
  $region121: #{temporal_transformer_forward.1} parent=0 // pred_fallthru
    _
  // Predicated region
  $region122: #{temporal_transformer_forward.1} parent=0 // pred_check
    _
  $region123: #{temporal_transformer_forward.1} parent=0 // pred_check_branch
    %171 = sbr.rel (0) target = $region125
  $region124: #{temporal_transformer_forward.1} parent=0 // pred_region
    _
  $region125: #{temporal_transformer_forward.1} parent=0 // pred_fallthru
    _
  // Predicated region
  $region126: #{temporal_transformer_forward.1} parent=0 // pred_check
    _
  $region127: #{temporal_transformer_forward.1} parent=0 // pred_check_branch
    %173 = sbr.rel (0) target = $region129
  $region128: #{temporal_transformer_forward.1} parent=0 // pred_region
    _
  $region129: #{temporal_transformer_forward.1} parent=0 // pred_fallthru
    _
  // Predicated region
  $region130: #{temporal_transformer_forward.1} parent=0 // pred_check
    _
  $region131: #{temporal_transformer_forward.1} parent=0 // pred_check_branch
    %175 = sbr.rel (0) target = $region133
  $region132: #{temporal_transformer_forward.1} parent=0 // pred_region
    _
  $region133: #{temporal_transformer_forward.1} parent=0 // pred_fallthru
    _
  // Predicated region
  $region134: #{temporal_transformer_forward.1} parent=0 // pred_check
    _
  $region135: #{temporal_transformer_forward.1} parent=0 // pred_check_branch
    %177 = sbr.rel (0) target = $region137
  $region136: #{temporal_transformer_forward.1} parent=0 // pred_region
    _
  $region137: #{temporal_transformer_forward.1} parent=0 // pred_fallthru
    _
  // Predicated region
  $region138: #{temporal_transformer_forward.1} parent=0 // pred_check
    _
  $region139: #{temporal_transformer_forward.1} parent=0 // pred_check_branch
    %179 = sbr.rel (0) target = $region141
  $region140: #{temporal_transformer_forward.1} parent=0 // pred_region
    _
  $region141: #{temporal_transformer_forward.1} parent=0 // pred_fallthru
    _
  // Predicated region
  $region142: #{temporal_transformer_forward.1} parent=0 // pred_check
    _
  $region143: #{temporal_transformer_forward.1} parent=0 // pred_check_branch
    %181 = sbr.rel (0) target = $region145
  $region144: #{temporal_transformer_forward.1} parent=0 // pred_region
    _
  $region145: #{temporal_transformer_forward.1} parent=0 // pred_fallthru
    _
  // Predicated region
  $region146: #{temporal_transformer_forward.1} parent=0 // pred_check
    _
  $region147: #{temporal_transformer_forward.1} parent=0 // pred_check_branch
    %183 = sbr.rel (0) target = $region149
  $region148: #{temporal_transformer_forward.1} parent=0 // pred_region
    _
  $region149: #{temporal_transformer_forward.1} parent=0 // pred_fallthru
    _
  // Predicated region
  $region150: #{temporal_transformer_forward.1} parent=0 // pred_check
    _
  $region151: #{temporal_transformer_forward.1} parent=0 // pred_check_branch
    %185 = sbr.rel (0) target = $region153
  $region152: #{temporal_transformer_forward.1} parent=0 // pred_region
    _
  $region153: #{temporal_transformer_forward.1} parent=0 // pred_fallthru
    _
  // Predicated region
  $region154: #{temporal_transformer_forward.1} parent=0 // pred_check
    _
  $region155: #{temporal_transformer_forward.1} parent=0 // pred_check_branch
    %187 = sbr.rel (0) target = $region157
  $region156: #{temporal_transformer_forward.1} parent=0 // pred_region
    _
  $region157: #{temporal_transformer_forward.1} parent=0 // pred_fallthru
    _
  // Predicated region
  $region158: #{temporal_transformer_forward.1} parent=0 // pred_check
    _
  $region159: #{temporal_transformer_forward.1} parent=0 // pred_check_branch
    %189 = sbr.rel (0) target = $region161
  $region160: #{temporal_transformer_forward.1} parent=0 // pred_region
    _
  $region161: #{temporal_transformer_forward.1} parent=0 // pred_fallthru
    _
  // Predicated region
  $region162: #{temporal_transformer_forward.1} parent=0 // pred_check
    _
  $region163: #{temporal_transformer_forward.1} parent=0 // pred_check_branch
    %191 = sbr.rel (0) target = $region165
  $region164: #{temporal_transformer_forward.1} parent=0 // pred_region
    _
  $region165: #{temporal_transformer_forward.1} parent=0 // pred_fallthru
    _
  // Predicated region
  $region166: #{temporal_transformer_forward.1} parent=0 // pred_check
    _
  $region167: #{temporal_transformer_forward.1} parent=0 // pred_check_branch
    %193 = sbr.rel (0) target = $region169
  $region168: #{temporal_transformer_forward.1} parent=0 // pred_region
    _
  $region169: #{temporal_transformer_forward.1} parent=0 // pred_fallthru
    _
  // Predicated region
  $region170: #{temporal_transformer_forward.1} parent=0 // pred_check
    _
  $region171: #{temporal_transformer_forward.1} parent=0 // pred_check_branch
    %195 = sbr.rel (0) target = $region173
  $region172: #{temporal_transformer_forward.1} parent=0 // pred_region
    _
  $region173: #{temporal_transformer_forward.1} parent=0 // pred_fallthru
    _
  // Predicated region
  $region174: #{temporal_transformer_forward.1} parent=0 // pred_check
    _
  $region175: #{temporal_transformer_forward.1} parent=0 // pred_check_branch
    %197 = sbr.rel (0) target = $region177
  $region176: #{temporal_transformer_forward.1} parent=0 // pred_region
    _
  $region177: #{temporal_transformer_forward.1} parent=0 // pred_fallthru
    _
  // Predicated region
  $region178: #{temporal_transformer_forward.1} parent=0 // pred_check
    _
  $region179: #{temporal_transformer_forward.1} parent=0 // pred_check_branch
    %199 = sbr.rel (0) target = $region181
  $region180: #{temporal_transformer_forward.1} parent=0 // pred_region
    _
  $region181: #{temporal_transformer_forward.1} parent=0 // pred_fallthru
    _
  // Predicated region
  $region182: #{temporal_transformer_forward.1} parent=0 // pred_check
    _
  $region183: #{temporal_transformer_forward.1} parent=0 // pred_check_branch
    %201 = sbr.rel (0) target = $region185
  $region184: #{temporal_transformer_forward.1} parent=0 // pred_region
    _
  $region185: #{temporal_transformer_forward.1} parent=0 // pred_fallthru
    _
  // Predicated region
  $region186: #{temporal_transformer_forward.1} parent=0 // pred_check
    _
  $region187: #{temporal_transformer_forward.1} parent=0 // pred_check_branch
    %203 = sbr.rel (0) target = $region189
  $region188: #{temporal_transformer_forward.1} parent=0 // pred_region
    _
  $region189: #{temporal_transformer_forward.1} parent=0 // pred_fallthru
    _
  // Predicated region
  $region190: #{temporal_transformer_forward.1} parent=0 // pred_check
    _
  $region191: #{temporal_transformer_forward.1} parent=0 // pred_check_branch
    %205 = sbr.rel (0) target = $region193
  $region192: #{temporal_transformer_forward.1} parent=0 // pred_region
    _
  $region193: #{temporal_transformer_forward.1} parent=0 // pred_fallthru
    _
  // Predicated region
  $region194: #{temporal_transformer_forward.1} parent=0 // pred_check
    _
  $region195: #{temporal_transformer_forward.1} parent=0 // pred_check_branch
    %207 = sbr.rel (0) target = $region197
  $region196: #{temporal_transformer_forward.1} parent=0 // pred_region
    _
  $region197: #{temporal_transformer_forward.1} parent=0 // pred_fallthru
    _
  // Predicated region
  $region198: #{temporal_transformer_forward.1} parent=0 // pred_check
    _
  $region199: #{temporal_transformer_forward.1} parent=0 // pred_check_branch
    %209 = sbr.rel (0) target = $region201
  $region200: #{temporal_transformer_forward.1} parent=0 // pred_region
    _
  $region201: #{temporal_transformer_forward.1} parent=0 // pred_fallthru
    _
  // Predicated region
  $region202: #{temporal_transformer_forward.1} parent=0 // pred_check
    _
  $region203: #{temporal_transformer_forward.1} parent=0 // pred_check_branch
    %211 = sbr.rel (0) target = $region205
  $region204: #{temporal_transformer_forward.1} parent=0 // pred_region
    _
  $region205: #{temporal_transformer_forward.1} parent=0 // pred_fallthru
    _
  // Predicated region
  $region206: #{temporal_transformer_forward.1} parent=0 // pred_check
    _
  $region207: #{temporal_transformer_forward.1} parent=0 // pred_check_branch
    %213 = sbr.rel (0) target = $region209
  $region208: #{temporal_transformer_forward.1} parent=0 // pred_region
    _
  $region209: #{temporal_transformer_forward.1} parent=0 // pred_fallthru
    _
  %v215 = vld [vmem:[%s1] sm:$0x3f]
  %v216 = vpack.c.bf16 %v215, %v215
  %v217 = vld [vmem:[%s9] sm:$0xf]
  %v218 = vld [vmem:[%s9 + $0x4] sm:$0xf]
  %v219 = vld [vmem:[%s9 + $0x8] sm:$0xf]
  %v220 = vld [vmem:[%s9 + $0xc] sm:$0xf]
  %v221 = vld [vmem:[%s9 + $0x10] sm:$0xf]
  %v222 = vld [vmem:[%s9 + $0x14] sm:$0xf]
  %v223 = vld [vmem:[%s9 + $0x18] sm:$0xf]
  %v224 = vld [vmem:[%s9 + $0x1c] sm:$0xf]
  %v225 = vld [vmem:[%s9 + $0x20] sm:$0xf]
  %v226 = vld [vmem:[%s9 + $0x24] sm:$0xf]
  %v227 = vld [vmem:[%s9 + $0x28] sm:$0xf]
  %v228 = vld [vmem:[%s9 + $0x2c] sm:$0xf]
  %v229 = vld [vmem:[%s9 + $0x30] sm:$0xf]
  %v230 = vld [vmem:[%s9 + $0x34] sm:$0xf]
  %v231 = vld [vmem:[%s9 + $0x38] sm:$0xf]
  %v232 = vld [vmem:[%s9 + $0x3c] sm:$0xf]
  %v233 = vld [vmem:[%s11] sm:$0x1]
  %v235 = vlaneseq
  %v236 = vshrl.u32 %v235, 7
  %v237 = vsub.s32 0, %v236
  %v238 = vrot.slane %v233, %v237
  %v256 = vunpack.c.l.b16 %v217
  %v257 = vunpack.c.l.b16 %v218
  %v258 = vunpack.c.l.b16 %v219
  %v259 = vunpack.c.l.b16 %v220
  %v260 = vunpack.c.l.b16 %v221
  %v261 = vunpack.c.l.b16 %v222
  %v262 = vunpack.c.l.b16 %v223
  %v263 = vunpack.c.l.b16 %v224
  %v264 = vunpack.c.l.b16 %v225
  %v265 = vunpack.c.l.b16 %v226
  %v266 = vunpack.c.l.b16 %v227
  %v267 = vunpack.c.l.b16 %v228
  %v268 = vunpack.c.l.b16 %v229
  %v269 = vunpack.c.l.b16 %v230
  %v270 = vunpack.c.l.b16 %v231
  %v271 = vunpack.c.l.b16 %v232
  %v272 = vpack.c.b16 %v257, %v256
  %v273 = vpack.c.b16 %v259, %v258
  %v274 = vpack.c.b16 %v261, %v260
  %v275 = vpack.c.b16 %v263, %v262
  %v276 = vpack.c.b16 %v265, %v264
  %v277 = vpack.c.b16 %v267, %v266
  %v278 = vpack.c.b16 %v269, %v268
  %v279 = vpack.c.b16 %v271, %v270
  %288 = vmatprep.subr.bf16.mxu0 0
  %289 = vmatpush1.bf16.msra.mxu0 %v272
  %290 = vmatprep.subr.bf16.mxu0 0
  %291 = vmatpush1.bf16.msra.mxu0 %v273
  %292 = vmatprep.subr.bf16.mxu0 0
  %293 = vmatpush1.bf16.msra.mxu0 %v274
  %294 = vmatprep.subr.bf16.mxu0 0
  %295 = vmatpush1.bf16.msra.mxu0 %v275
  %296 = vmatprep.subr.bf16.mxu0 0
  %297 = vmatpush1.bf16.msra.mxu0 %v276
  %298 = vmatprep.subr.bf16.mxu0 0
  %299 = vmatpush1.bf16.msra.mxu0 %v277
  %300 = vmatprep.subr.bf16.mxu0 0
  %301 = vmatpush1.bf16.msra.mxu0 %v278
  %302 = vmatprep.subr.bf16.mxu0 0
  %303 = vmatpush1.bf16.msra.mxu0 %v279
  %304 = vmatprep.subr.bf16.mxu0 0
  %305 = vmatpush1.bf16.msra.mxu0 0
  %306 = vmatprep.subr.bf16.mxu0 0
  %307 = vmatpush1.bf16.msra.mxu0 0
  %308 = vmatprep.subr.bf16.mxu0 0
  %309 = vmatpush1.bf16.msra.mxu0 0
  %310 = vmatprep.subr.bf16.mxu0 0
  %311 = vmatpush1.bf16.msra.mxu0 0
  %312 = vmatprep.subr.bf16.mxu0 0
  %313 = vmatpush1.bf16.msra.mxu0 0
  %314 = vmatprep.subr.bf16.mxu0 0
  %315 = vmatpush1.bf16.msra.mxu0 0
  %316 = vmatprep.subr.bf16.mxu0 0
  %317 = vmatpush1.bf16.msra.mxu0 0
  %318 = vmatprep.subr.bf16.mxu0 0
  %319 = vmatpush1.bf16.msra.mxu0 0
  %320 = vmatprep.mubr.bf16.mxu0 0
  %321 = vmatmul.mubr.bf16.gmra.mrb[0].mxu0 %v216
  %v322 = vpop.f32.mrb[0].mxu0
  %v323 = vadd.f32 %v238, %v322
  %v324 = vpop.f32.mrb[0].mxu0
  %v325 = vpop.f32.mrb[0].mxu0
  %v326 = vpop.f32.mrb[0].mxu0
  %327 = vdwg.mxu0
  %v328 = vld [vmem:[%s3] sm:$0xff]
  %v329 = vld [vmem:[%s3 + $0x8] sm:$0xff]
  %v330 = vpack.c.bf16 %v329, %v328
  %v331 = vld [vmem:[%s13] sm:$0x3]
  %v332 = vld [vmem:[%s15] sm:$0x1]
  %v334 = vlaneseq
  %v335 = vshrl.u32 %v334, 7
  %v336 = vsub.s32 0, %v335
  %v337 = vrot.slane %v332, %v336
  %vm339 = vcmask 31744
  %v341 = vsel %vm339, %v330, 0
  %vm343 = vcmask 1041408
  %v345 = vsel %vm343, %v331, 0
  %347 = vmatprep.subr.bf16.mxu0 0
  %348 = vmatpush1.bf16.msra.mxu0 %v345
  %349 = vmatprep.subr.bf16.mxu0 0
  %350 = vmatpush1.bf16.msra.mxu0 0
  %351 = vmatprep.subr.bf16.mxu0 0
  %352 = vmatpush1.bf16.msra.mxu0 0
  %353 = vmatprep.subr.bf16.mxu0 0
  %354 = vmatpush1.bf16.msra.mxu0 0
  %355 = vmatprep.subr.bf16.mxu0 0
  %356 = vmatpush1.bf16.msra.mxu0 0
  %357 = vmatprep.subr.bf16.mxu0 0
  %358 = vmatpush1.bf16.msra.mxu0 0
  %359 = vmatprep.subr.bf16.mxu0 0
  %360 = vmatpush1.bf16.msra.mxu0 0
  %361 = vmatprep.subr.bf16.mxu0 0
  %362 = vmatpush1.bf16.msra.mxu0 0
  %363 = vmatprep.subr.bf16.mxu0 0
  %364 = vmatpush1.bf16.msra.mxu0 0
  %365 = vmatprep.subr.bf16.mxu0 0
  %366 = vmatpush1.bf16.msra.mxu0 0
  %367 = vmatprep.subr.bf16.mxu0 0
  %368 = vmatpush1.bf16.msra.mxu0 0
  %369 = vmatprep.subr.bf16.mxu0 0
  %370 = vmatpush1.bf16.msra.mxu0 0
  %371 = vmatprep.subr.bf16.mxu0 0
  %372 = vmatpush1.bf16.msra.mxu0 0
  %373 = vmatprep.subr.bf16.mxu0 0
  %374 = vmatpush1.bf16.msra.mxu0 0
  %375 = vmatprep.subr.bf16.mxu0 0
  %376 = vmatpush1.bf16.msra.mxu0 0
  %377 = vmatprep.subr.bf16.mxu0 0
  %378 = vmatpush1.bf16.msra.mxu0 0
  %379 = vmatprep.mubr.bf16.mxu0 0
  %380 = vmatmul.mubr.bf16.gmra.mrb[0].mxu0 %v341
  %v381 = vpop.f32.mrb[0].mxu0
  %v382 = vadd.f32 %v337, %v381
  %v383 = vpop.f32.mrb[0].mxu0
  %v384 = vpop.f32.mrb[0].mxu0
  %v385 = vadd.f32 %v337, %v384
  %v386 = vpop.f32.mrb[0].mxu0
  %387 = vdwg.mxu0
  %v389 = vcombine.high %v323, %v323
  %v391 = vunpack.c.l.s4 1966171168
  %v392 = vunpack.c.0.s8 %v391
  %v393 = vlaneseq
  %v394 = vshrl.u32 %v393, 7
  %v395 = vsub.s32 %v392, %v394
  %v396 = vrot.slane %v323, %v395
  %v398 = vunpack.c.l.s4 1966171168
  %v399 = vunpack.c.0.s8 %v398
  %v400 = vlaneseq
  %v401 = vshrl.u32 %v400, 7
  %v402 = vsub.s32 %v399, %v401
  %v403 = vrot.slane %v389, %v402
  %v404 = vcombine.high %v396, %v396
  %v405 = vcombine.high %v403, %v403
  %v407 = vunpack.c.l.s4 1966171168
  %v408 = vunpack.c.0.s8 %v407
  %v409 = vlaneseq
  %v410 = vshrl.u32 %v409, 7
  %v411 = vsub.s32 %v408, %v410
  %v412 = vrot.slane %v396, %v411
  %v414 = vunpack.c.l.s4 1966171168
  %v415 = vunpack.c.0.s8 %v414
  %v416 = vlaneseq
  %v417 = vshrl.u32 %v416, 7
  %v418 = vsub.s32 %v415, %v417
  %v419 = vrot.slane %v403, %v418
  %v421 = vunpack.c.l.s4 1966171168
  %v422 = vunpack.c.0.s8 %v421
  %v423 = vlaneseq
  %v424 = vshrl.u32 %v423, 7
  %v425 = vsub.s32 %v422, %v424
  %v426 = vrot.slane %v404, %v425
  %v428 = vunpack.c.l.s4 1966171168
  %v429 = vunpack.c.0.s8 %v428
  %v430 = vlaneseq
  %v431 = vshrl.u32 %v430, 7
  %v432 = vsub.s32 %v429, %v431
  %v433 = vrot.slane %v405, %v432
  %v434 = vcombine.high %v412, %v412
  %v435 = vcombine.high %v426, %v426
  %v442 = vld [vmem:[%s5] sm:$0x7]
  %v445 = vunpack.c.l.s4 1966171168
  %v446 = vunpack.c.0.s8 %v445
  %v447 = vlaneseq
  %v448 = vshrl.u32 %v447, 7
  %v449 = vsub.s32 %v446, %v448
  %v450 = vrot.slane %v442, %v449
  %v451 = vcombine.high %v450, %v450
  %v453 = vunpack.c.l.s4 1966171168
  %v454 = vunpack.c.0.s8 %v453
  %v455 = vlaneseq
  %v456 = vshrl.u32 %v455, 7
  %v457 = vsub.s32 %v454, %v456
  %v458 = vrot.slane %v450, %v457
  %v460 = vunpack.c.l.s4 1966171168
  %v461 = vunpack.c.0.s8 %v460
  %v462 = vlaneseq
  %v463 = vshrl.u32 %v462, 7
  %v464 = vsub.s32 %v461, %v463
  %v465 = vrot.slane %v451, %v464
  %v466 = vcombine.high %v458, %v458
  %v470 = vadd.f32 %v412, %v458
  %v471 = vadd.f32 %v426, %v465
  %v472 = vadd.f32 %v434, %v466
  %v473 = vadd.f32 %v435, %v458
  %v474 = vadd.f32 %v419, %v465
  %v475 = vadd.f32 %v433, %v466
  %v482 = vcombine.low %v470, %v471
  %v483 = vcombine.low %v472, %v473
  %v484 = vcombine.low %v474, %v475
  %v486 = vunpack.c.l.s4 1966171168
  %v487 = vunpack.c.0.s8 %v486
  %v488 = vlaneseq
  %v489 = vshrl.u32 %v488, 7
  %v490 = vsub.s32 %v487, %v489
  %v491 = vrot.slane %v482, %v490
  %v493 = vunpack.c.l.s4 1966171168
  %v494 = vunpack.c.0.s8 %v493
  %v495 = vlaneseq
  %v496 = vshrl.u32 %v495, 7
  %v497 = vsub.s32 %v494, %v496
  %v498 = vrot.slane %v483, %v497
  %v500 = vunpack.c.l.s4 1966171168
  %v501 = vunpack.c.0.s8 %v500
  %v502 = vlaneseq
  %v503 = vshrl.u32 %v502, 7
  %v504 = vsub.s32 %v501, %v503
  %v505 = vrot.slane %v484, %v504
  %v506 = vcombine.low %v491, %v498
  %v508 = vunpack.c.l.s4 1966171168
  %v509 = vunpack.c.0.s8 %v508
  %v510 = vlaneseq
  %v511 = vshrl.u32 %v510, 7
  %v512 = vsub.s32 %v509, %v511
  %v513 = vrot.slane %v506, %v512
  %v515 = vunpack.c.l.s4 1966171168
  %v516 = vunpack.c.0.s8 %v515
  %v517 = vlaneseq
  %v518 = vshrl.u32 %v517, 7
  %v519 = vsub.s32 %v516, %v518
  %v520 = vrot.slane %v505, %v519
  %v521 = vcombine.low %v513, %v520
  %v523 = vpack.c.bf16 %v521, %v521
  %v524 = vld [vmem:[%s17] sm:$0xf]
  %v525 = vld [vmem:[%s17 + $0x4] sm:$0xf]
  %v526 = vld [vmem:[%s17 + $0x8] sm:$0xf]
  %v527 = vld [vmem:[%s17 + $0xc] sm:$0xf]
  %v528 = vld [vmem:[%s23] sm:$0x1]
  %v530 = vlaneseq
  %v531 = vshrl.u32 %v530, 7
  %v532 = vsub.s32 0, %v531
  %v533 = vrot.slane %v528, %v532
  %v539 = vunpack.c.l.b16 %v524
  %v540 = vunpack.c.l.b16 %v525
  %v541 = vunpack.c.l.b16 %v526
  %v542 = vunpack.c.l.b16 %v527
  %v543 = vpack.c.b16 %v540, %v539
  %v544 = vpack.c.b16 %v542, %v541
  %vm547 = vcmask 261120
  %v549 = vsel %vm547, %v523, 0
  %551 = vmatprep.subr.bf16.mxu0 0
  %552 = vmatpush1.bf16.msra.mxu0 %v543
  %553 = vmatprep.subr.bf16.mxu0 0
  %554 = vmatpush1.bf16.msra.mxu0 %v544
  %555 = vmatprep.subr.bf16.mxu0 0
  %556 = vmatpush1.bf16.msra.mxu0 0
  %557 = vmatprep.subr.bf16.mxu0 0
  %558 = vmatpush1.bf16.msra.mxu0 0
  %559 = vmatprep.subr.bf16.mxu0 0
  %560 = vmatpush1.bf16.msra.mxu0 0
  %561 = vmatprep.subr.bf16.mxu0 0
  %562 = vmatpush1.bf16.msra.mxu0 0
  %563 = vmatprep.subr.bf16.mxu0 0
  %564 = vmatpush1.bf16.msra.mxu0 0
  %565 = vmatprep.subr.bf16.mxu0 0
  %566 = vmatpush1.bf16.msra.mxu0 0
  %567 = vmatprep.subr.bf16.mxu0 0
  %568 = vmatpush1.bf16.msra.mxu0 0
  %569 = vmatprep.subr.bf16.mxu0 0
  %570 = vmatpush1.bf16.msra.mxu0 0
  %571 = vmatprep.subr.bf16.mxu0 0
  %572 = vmatpush1.bf16.msra.mxu0 0
  %573 = vmatprep.subr.bf16.mxu0 0
  %574 = vmatpush1.bf16.msra.mxu0 0
  %575 = vmatprep.subr.bf16.mxu0 0
  %576 = vmatpush1.bf16.msra.mxu0 0
  %577 = vmatprep.subr.bf16.mxu0 0
  %578 = vmatpush1.bf16.msra.mxu0 0
  %579 = vmatprep.subr.bf16.mxu0 0
  %580 = vmatpush1.bf16.msra.mxu0 0
  %581 = vmatprep.subr.bf16.mxu0 0
  %582 = vmatpush1.bf16.msra.mxu0 0
  %583 = vmatprep.mubr.bf16.mxu0 0
  %584 = vmatmul.mubr.bf16.gmra.mrb[0].mxu0 %v549
  %v585 = vpop.f32.mrb[0].mxu0
  %v586 = vadd.f32 %v533, %v585
  %v587 = vpop.f32.mrb[0].mxu0
  %v588 = vpop.f32.mrb[0].mxu0
  %v589 = vpop.f32.mrb[0].mxu0
  %590 = vdwg.mxu0
  %v592 = vcombine.high %v586, %v586
  %v594 = vunpack.c.l.s4 1966171168
  %v595 = vunpack.c.0.s8 %v594
  %v596 = vlaneseq
  %v597 = vshrl.u32 %v596, 7
  %v598 = vsub.s32 %v595, %v597
  %v599 = vrot.slane %v586, %v598
  %v601 = vunpack.c.l.s4 1966171168
  %v602 = vunpack.c.0.s8 %v601
  %v603 = vlaneseq
  %v604 = vshrl.u32 %v603, 7
  %v605 = vsub.s32 %v602, %v604
  %v606 = vrot.slane %v592, %v605
  %v607 = vcombine.high %v599, %v599
  %v608 = vcombine.high %v606, %v606
  %v610 = vunpack.c.l.s4 1966171168
  %v611 = vunpack.c.0.s8 %v610
  %v612 = vlaneseq
  %v613 = vshrl.u32 %v612, 7
  %v614 = vsub.s32 %v611, %v613
  %v615 = vrot.slane %v599, %v614
  %v617 = vunpack.c.l.s4 1966171168
  %v618 = vunpack.c.0.s8 %v617
  %v619 = vlaneseq
  %v620 = vshrl.u32 %v619, 7
  %v621 = vsub.s32 %v618, %v620
  %v622 = vrot.slane %v606, %v621
  %v624 = vunpack.c.l.s4 1966171168
  %v625 = vunpack.c.0.s8 %v624
  %v626 = vlaneseq
  %v627 = vshrl.u32 %v626, 7
  %v628 = vsub.s32 %v625, %v627
  %v629 = vrot.slane %v607, %v628
  %v631 = vunpack.c.l.s4 1966171168
  %v632 = vunpack.c.0.s8 %v631
  %v633 = vlaneseq
  %v634 = vshrl.u32 %v633, 7
  %v635 = vsub.s32 %v632, %v634
  %v636 = vrot.slane %v608, %v635
  %v637 = vcombine.high %v615, %v615
  %v638 = vcombine.high %v629, %v629
  %v639 = vld [vmem:[%s19] sm:$0xf]
  %v640 = vld [vmem:[%s19 + $0x4] sm:$0xf]
  %v641 = vld [vmem:[%s19 + $0x8] sm:$0xf]
  %v642 = vld [vmem:[%s19 + $0xc] sm:$0xf]
  %v643 = vld [vmem:[%s25] sm:$0x1]
  %v645 = vlaneseq
  %v646 = vshrl.u32 %v645, 7
  %v647 = vsub.s32 0, %v646
  %v648 = vrot.slane %v643, %v647
  %v654 = vunpack.c.l.b16 %v639
  %v655 = vunpack.c.l.b16 %v640
  %v656 = vunpack.c.l.b16 %v641
  %v657 = vunpack.c.l.b16 %v642
  %v658 = vpack.c.b16 %v655, %v654
  %v659 = vpack.c.b16 %v657, %v656
  %662 = vmatprep.subr.bf16.mxu0 0
  %663 = vmatpush1.bf16.msra.mxu0 %v658
  %664 = vmatprep.subr.bf16.mxu0 0
  %665 = vmatpush1.bf16.msra.mxu0 %v659
  %666 = vmatprep.subr.bf16.mxu0 0
  %667 = vmatpush1.bf16.msra.mxu0 0
  %668 = vmatprep.subr.bf16.mxu0 0
  %669 = vmatpush1.bf16.msra.mxu0 0
  %670 = vmatprep.subr.bf16.mxu0 0
  %671 = vmatpush1.bf16.msra.mxu0 0
  %672 = vmatprep.subr.bf16.mxu0 0
  %673 = vmatpush1.bf16.msra.mxu0 0
  %674 = vmatprep.subr.bf16.mxu0 0
  %675 = vmatpush1.bf16.msra.mxu0 0
  %676 = vmatprep.subr.bf16.mxu0 0
  %677 = vmatpush1.bf16.msra.mxu0 0
  %678 = vmatprep.subr.bf16.mxu0 0
  %679 = vmatpush1.bf16.msra.mxu0 0
  %680 = vmatprep.subr.bf16.mxu0 0
  %681 = vmatpush1.bf16.msra.mxu0 0
  %682 = vmatprep.subr.bf16.mxu0 0
  %683 = vmatpush1.bf16.msra.mxu0 0
  %684 = vmatprep.subr.bf16.mxu0 0
  %685 = vmatpush1.bf16.msra.mxu0 0
  %686 = vmatprep.subr.bf16.mxu0 0
  %687 = vmatpush1.bf16.msra.mxu0 0
  %688 = vmatprep.subr.bf16.mxu0 0
  %689 = vmatpush1.bf16.msra.mxu0 0
  %690 = vmatprep.subr.bf16.mxu0 0
  %691 = vmatpush1.bf16.msra.mxu0 0
  %692 = vmatprep.subr.bf16.mxu0 0
  %693 = vmatpush1.bf16.msra.mxu0 0
  %694 = vmatprep.mubr.bf16.mxu0 0
  %695 = vmatmul.mubr.bf16.gmra.mrb[0].mxu0 %v549
  %v696 = vpop.f32.mrb[0].mxu0
  %v697 = vadd.f32 %v648, %v696
  %v698 = vpop.f32.mrb[0].mxu0
  %v699 = vpop.f32.mrb[0].mxu0
  %v700 = vpop.f32.mrb[0].mxu0
  %701 = vdwg.mxu0
  %v703 = vcombine.high %v697, %v697
  %v705 = vunpack.c.l.s4 1966171168
  %v706 = vunpack.c.0.s8 %v705
  %v707 = vlaneseq
  %v708 = vshrl.u32 %v707, 7
  %v709 = vsub.s32 %v706, %v708
  %v710 = vrot.slane %v697, %v709
  %v712 = vunpack.c.l.s4 1966171168
  %v713 = vunpack.c.0.s8 %v712
  %v714 = vlaneseq
  %v715 = vshrl.u32 %v714, 7
  %v716 = vsub.s32 %v713, %v715
  %v717 = vrot.slane %v703, %v716
  %v718 = vcombine.high %v710, %v710
  %v719 = vcombine.high %v717, %v717
  %v721 = vunpack.c.l.s4 1966171168
  %v722 = vunpack.c.0.s8 %v721
  %v723 = vlaneseq
  %v724 = vshrl.u32 %v723, 7
  %v725 = vsub.s32 %v722, %v724
  %v726 = vrot.slane %v710, %v725
  %v728 = vunpack.c.l.s4 1966171168
  %v729 = vunpack.c.0.s8 %v728
  %v730 = vlaneseq
  %v731 = vshrl.u32 %v730, 7
  %v732 = vsub.s32 %v729, %v731
  %v733 = vrot.slane %v717, %v732
  %v735 = vunpack.c.l.s4 1966171168
  %v736 = vunpack.c.0.s8 %v735
  %v737 = vlaneseq
  %v738 = vshrl.u32 %v737, 7
  %v739 = vsub.s32 %v736, %v738
  %v740 = vrot.slane %v718, %v739
  %v742 = vunpack.c.l.s4 1966171168
  %v743 = vunpack.c.0.s8 %v742
  %v744 = vlaneseq
  %v745 = vshrl.u32 %v744, 7
  %v746 = vsub.s32 %v743, %v745
  %v747 = vrot.slane %v719, %v746
  %v748 = vcombine.high %v726, %v726
  %v749 = vcombine.high %v740, %v740
  %v750 = vld [vmem:[%s21] sm:$0xf]
  %v751 = vld [vmem:[%s21 + $0x4] sm:$0xf]
  %v752 = vld [vmem:[%s21 + $0x8] sm:$0xf]
  %v753 = vld [vmem:[%s21 + $0xc] sm:$0xf]
  %v754 = vld [vmem:[%s27] sm:$0x1]
  %v756 = vlaneseq
  %v757 = vshrl.u32 %v756, 7
  %v758 = vsub.s32 0, %v757
  %v759 = vrot.slane %v754, %v758
  %v765 = vunpack.c.l.b16 %v750
  %v766 = vunpack.c.l.b16 %v751
  %v767 = vunpack.c.l.b16 %v752
  %v768 = vunpack.c.l.b16 %v753
  %v769 = vpack.c.b16 %v766, %v765
  %v770 = vpack.c.b16 %v768, %v767
  %773 = vmatprep.subr.bf16.mxu0 0
  %774 = vmatpush1.bf16.msra.mxu0 %v769
  %775 = vmatprep.subr.bf16.mxu0 0
  %776 = vmatpush1.bf16.msra.mxu0 %v770
  %777 = vmatprep.subr.bf16.mxu0 0
  %778 = vmatpush1.bf16.msra.mxu0 0
  %779 = vmatprep.subr.bf16.mxu0 0
  %780 = vmatpush1.bf16.msra.mxu0 0
  %781 = vmatprep.subr.bf16.mxu0 0
  %782 = vmatpush1.bf16.msra.mxu0 0
  %783 = vmatprep.subr.bf16.mxu0 0
  %784 = vmatpush1.bf16.msra.mxu0 0
  %785 = vmatprep.subr.bf16.mxu0 0
  %786 = vmatpush1.bf16.msra.mxu0 0
  %787 = vmatprep.subr.bf16.mxu0 0
  %788 = vmatpush1.bf16.msra.mxu0 0
  %789 = vmatprep.subr.bf16.mxu0 0
  %790 = vmatpush1.bf16.msra.mxu0 0
  %791 = vmatprep.subr.bf16.mxu0 0
  %792 = vmatpush1.bf16.msra.mxu0 0
  %793 = vmatprep.subr.bf16.mxu0 0
  %794 = vmatpush1.bf16.msra.mxu0 0
  %795 = vmatprep.subr.bf16.mxu0 0
  %796 = vmatpush1.bf16.msra.mxu0 0
  %797 = vmatprep.subr.bf16.mxu0 0
  %798 = vmatpush1.bf16.msra.mxu0 0
  %799 = vmatprep.subr.bf16.mxu0 0
  %800 = vmatpush1.bf16.msra.mxu0 0
  %801 = vmatprep.subr.bf16.mxu0 0
  %802 = vmatpush1.bf16.msra.mxu0 0
  %803 = vmatprep.subr.bf16.mxu0 0
  %804 = vmatpush1.bf16.msra.mxu0 0
  %805 = vmatprep.mubr.bf16.mxu0 0
  %806 = vmatmul.mubr.bf16.gmra.mrb[0].mxu0 %v549
  %v807 = vpop.f32.mrb[0].mxu0
  %v808 = vadd.f32 %v759, %v807
  %v809 = vpop.f32.mrb[0].mxu0
  %v810 = vpop.f32.mrb[0].mxu0
  %v811 = vpop.f32.mrb[0].mxu0
  %812 = vdwg.mxu0
  %v814 = vcombine.high %v808, %v808
  %v816 = vunpack.c.l.s4 1966171168
  %v817 = vunpack.c.0.s8 %v816
  %v818 = vlaneseq
  %v819 = vshrl.u32 %v818, 7
  %v820 = vsub.s32 %v817, %v819
  %v821 = vrot.slane %v808, %v820
  %v823 = vunpack.c.l.s4 1966171168
  %v824 = vunpack.c.0.s8 %v823
  %v825 = vlaneseq
  %v826 = vshrl.u32 %v825, 7
  %v827 = vsub.s32 %v824, %v826
  %v828 = vrot.slane %v814, %v827
  %v829 = vcombine.high %v821, %v821
  %v830 = vcombine.high %v828, %v828
  %v832 = vunpack.c.l.s4 1966171168
  %v833 = vunpack.c.0.s8 %v832
  %v834 = vlaneseq
  %v835 = vshrl.u32 %v834, 7
  %v836 = vsub.s32 %v833, %v835
  %v837 = vrot.slane %v821, %v836
  %v839 = vunpack.c.l.s4 1966171168
  %v840 = vunpack.c.0.s8 %v839
  %v841 = vlaneseq
  %v842 = vshrl.u32 %v841, 7
  %v843 = vsub.s32 %v840, %v842
  %v844 = vrot.slane %v828, %v843
  %v846 = vunpack.c.l.s4 1966171168
  %v847 = vunpack.c.0.s8 %v846
  %v848 = vlaneseq
  %v849 = vshrl.u32 %v848, 7
  %v850 = vsub.s32 %v847, %v849
  %v851 = vrot.slane %v829, %v850
  %v853 = vunpack.c.l.s4 1966171168
  %v854 = vunpack.c.0.s8 %v853
  %v855 = vlaneseq
  %v856 = vshrl.u32 %v855, 7
  %v857 = vsub.s32 %v854, %v856
  %v858 = vrot.slane %v830, %v857
  %v859 = vcombine.high %v837, %v837
  %v860 = vcombine.high %v851, %v851
  %v861 = vcombine.low %v615, %v629
  %v863 = vunpack.c.l.s4 1966171168
  %v864 = vunpack.c.0.s8 %v863
  %v865 = vlaneseq
  %v866 = vshrl.u32 %v865, 7
  %v867 = vsub.s32 %v864, %v866
  %v868 = vrot.slane %v861, %v867
  %v870 = vunpack.c.l.s4 1966171168
  %v871 = vunpack.c.0.s8 %v870
  %v872 = vlaneseq
  %v873 = vshrl.u32 %v872, 7
  %v874 = vsub.s32 %v871, %v873
  %v875 = vrot.slane %v637, %v874
  %v876 = vcombine.low %v868, %v875
  %v878 = vunpack.c.l.s4 1966171168
  %v879 = vunpack.c.0.s8 %v878
  %v880 = vlaneseq
  %v881 = vshrl.u32 %v880, 7
  %v882 = vsub.s32 %v879, %v881
  %v883 = vrot.slane %v876, %v882
  %v884 = vcombine.low %v638, %v622
  %v886 = vunpack.c.l.s4 1966171168
  %v887 = vunpack.c.0.s8 %v886
  %v888 = vlaneseq
  %v889 = vshrl.u32 %v888, 7
  %v890 = vsub.s32 %v887, %v889
  %v891 = vrot.slane %v884, %v890
  %v893 = vunpack.c.l.s4 1966171168
  %v894 = vunpack.c.0.s8 %v893
  %v895 = vlaneseq
  %v896 = vshrl.u32 %v895, 7
  %v897 = vsub.s32 %v894, %v896
  %v898 = vrot.slane %v636, %v897
  %v899 = vcombine.low %v891, %v898
  %v901 = vunpack.c.l.s4 1966171168
  %v902 = vunpack.c.0.s8 %v901
  %v903 = vlaneseq
  %v904 = vshrl.u32 %v903, 7
  %v905 = vsub.s32 %v902, %v904
  %v906 = vrot.slane %v899, %v905
  %v909 = vpack.c.bf16 %v883, %v883
  %v910 = vpack.c.bf16 %v906, %v906
  %v911 = vcombine.low %v726, %v740
  %v913 = vunpack.c.l.s4 1966171168
  %v914 = vunpack.c.0.s8 %v913
  %v915 = vlaneseq
  %v916 = vshrl.u32 %v915, 7
  %v917 = vsub.s32 %v914, %v916
  %v918 = vrot.slane %v911, %v917
  %v920 = vunpack.c.l.s4 1966171168
  %v921 = vunpack.c.0.s8 %v920
  %v922 = vlaneseq
  %v923 = vshrl.u32 %v922, 7
  %v924 = vsub.s32 %v921, %v923
  %v925 = vrot.slane %v748, %v924
  %v926 = vcombine.low %v918, %v925
  %v928 = vunpack.c.l.s4 1966171168
  %v929 = vunpack.c.0.s8 %v928
  %v930 = vlaneseq
  %v931 = vshrl.u32 %v930, 7
  %v932 = vsub.s32 %v929, %v931
  %v933 = vrot.slane %v926, %v932
  %v934 = vcombine.low %v749, %v733
  %v936 = vunpack.c.l.s4 1966171168
  %v937 = vunpack.c.0.s8 %v936
  %v938 = vlaneseq
  %v939 = vshrl.u32 %v938, 7
  %v940 = vsub.s32 %v937, %v939
  %v941 = vrot.slane %v934, %v940
  %v943 = vunpack.c.l.s4 1966171168
  %v944 = vunpack.c.0.s8 %v943
  %v945 = vlaneseq
  %v946 = vshrl.u32 %v945, 7
  %v947 = vsub.s32 %v944, %v946
  %v948 = vrot.slane %v747, %v947
  %v949 = vcombine.low %v941, %v948
  %v951 = vunpack.c.l.s4 1966171168
  %v952 = vunpack.c.0.s8 %v951
  %v953 = vlaneseq
  %v954 = vshrl.u32 %v953, 7
  %v955 = vsub.s32 %v952, %v954
  %v956 = vrot.slane %v949, %v955
  %v959 = vpack.c.bf16 %v933, %v933
  %v960 = vpack.c.bf16 %v956, %v956
  %vm961 = vcmask 130048
  %v963 = vsel %vm961, %v909, 0
  %v966 = vsel %vm961, %v959, 0
  %968 = vmatprep.subr.bf16.mxu0 0
  %969 = vmatpush1.bf16.xpose.msra.mxu0 %v966
  %970 = vmatprep.subr.bf16.mxu0 0
  %971 = vmatpush1.bf16.xpose.msra.mxu0 0
  %972 = vmatprep.subr.bf16.mxu0 0
  %973 = vmatpush1.bf16.xpose.msra.mxu0 0
  %974 = vmatprep.subr.bf16.mxu0 0
  %975 = vmatpush1.bf16.xpose.msra.mxu0 0
  %976 = vmatprep.subr.bf16.mxu0 0
  %977 = vmatpush1.bf16.xpose.msra.mxu0 0
  %978 = vmatprep.subr.bf16.mxu0 0
  %979 = vmatpush1.bf16.xpose.msra.mxu0 0
  %980 = vmatprep.subr.bf16.mxu0 0
  %981 = vmatpush1.bf16.xpose.msra.mxu0 0
  %982 = vmatprep.subr.bf16.mxu0 0
  %983 = vmatpush1.bf16.xpose.msra.mxu0 0
  %984 = vmatprep.subr.bf16.mxu0 0
  %985 = vmatpush1.bf16.xpose.msra.mxu0 0
  %986 = vmatprep.subr.bf16.mxu0 0
  %987 = vmatpush1.bf16.xpose.msra.mxu0 0
  %988 = vmatprep.subr.bf16.mxu0 0
  %989 = vmatpush1.bf16.xpose.msra.mxu0 0
  %990 = vmatprep.subr.bf16.mxu0 0
  %991 = vmatpush1.bf16.xpose.msra.mxu0 0
  %992 = vmatprep.subr.bf16.mxu0 0
  %993 = vmatpush1.bf16.xpose.msra.mxu0 0
  %994 = vmatprep.subr.bf16.mxu0 0
  %995 = vmatpush1.bf16.xpose.msra.mxu0 0
  %996 = vmatprep.subr.bf16.mxu0 0
  %997 = vmatpush1.bf16.xpose.msra.mxu0 0
  %998 = vmatprep.subr.bf16.mxu0 0
  %999 = vmatpush1.bf16.xpose.msra.mxu0 0
  %1000 = vmatprep.mubr.bf16.mxu0 0
  %1001 = vmatmul.mubr.bf16.gmra.mrb[0].mxu0 %v963
  %v1002 = vpop.f32.mrb[0].mxu0
  %v1003 = vadd.f32 0.0, %v1002
  %v1004 = vpop.f32.mrb[0].mxu0
  %v1005 = vpop.f32.mrb[0].mxu0
  %v1006 = vpop.f32.mrb[0].mxu0
  %1007 = vdwg.mxu0
  %v1009 = vsel %vm961, %v910, 0
  %v1012 = vsel %vm961, %v960, 0
  %1014 = vmatprep.subr.bf16.mxu0 0
  %1015 = vmatpush1.bf16.xpose.msra.mxu0 %v1012
  %1016 = vmatprep.subr.bf16.mxu0 0
  %1017 = vmatpush1.bf16.xpose.msra.mxu0 0
  %1018 = vmatprep.subr.bf16.mxu0 0
  %1019 = vmatpush1.bf16.xpose.msra.mxu0 0
  %1020 = vmatprep.subr.bf16.mxu0 0
  %1021 = vmatpush1.bf16.xpose.msra.mxu0 0
  %1022 = vmatprep.subr.bf16.mxu0 0
  %1023 = vmatpush1.bf16.xpose.msra.mxu0 0
  %1024 = vmatprep.subr.bf16.mxu0 0
  %1025 = vmatpush1.bf16.xpose.msra.mxu0 0
  %1026 = vmatprep.subr.bf16.mxu0 0
  %1027 = vmatpush1.bf16.xpose.msra.mxu0 0
  %1028 = vmatprep.subr.bf16.mxu0 0
  %1029 = vmatpush1.bf16.xpose.msra.mxu0 0
  %1030 = vmatprep.subr.bf16.mxu0 0
  %1031 = vmatpush1.bf16.xpose.msra.mxu0 0
  %1032 = vmatprep.subr.bf16.mxu0 0
  %1033 = vmatpush1.bf16.xpose.msra.mxu0 0
  %1034 = vmatprep.subr.bf16.mxu0 0
  %1035 = vmatpush1.bf16.xpose.msra.mxu0 0
  %1036 = vmatprep.subr.bf16.mxu0 0
  %1037 = vmatpush1.bf16.xpose.msra.mxu0 0
  %1038 = vmatprep.subr.bf16.mxu0 0
  %1039 = vmatpush1.bf16.xpose.msra.mxu0 0
  %1040 = vmatprep.subr.bf16.mxu0 0
  %1041 = vmatpush1.bf16.xpose.msra.mxu0 0
  %1042 = vmatprep.subr.bf16.mxu0 0
  %1043 = vmatpush1.bf16.xpose.msra.mxu0 0
  %1044 = vmatprep.subr.bf16.mxu0 0
  %1045 = vmatpush1.bf16.xpose.msra.mxu0 0
  %1046 = vmatprep.mubr.bf16.mxu0 0
  %1047 = vmatmul.mubr.bf16.gmra.mrb[0].mxu0 %v1009
  %v1048 = vpop.f32.mrb[0].mxu0
  %v1049 = vadd.f32 0.0, %v1048
  %v1050 = vpop.f32.mrb[0].mxu0
  %v1051 = vpop.f32.mrb[0].mxu0
  %v1052 = vpop.f32.mrb[0].mxu0
  %1053 = vdwg.mxu0
  %vm1054 = vcmask 18432
  %v1055 = vsel %vm1054, %v1003, -inf
  %1056 = vmax.xlane.f32.xlu0 %v1055
  %v1057 = vpop.xlane.xlu0 %1056
  %v1058 = vsel %vm1054, %v1049, -inf
  %1059 = vmax.xlane.f32.xlu0 %v1058
  %v1060 = vpop.xlane.xlu0 %1059
  %v1061 = vsub.f32 %v1003, %v1057
  %v1062 = vsub.f32 %v1049, %v1060
  %v1063 = vmul.f32 %v1061, 1.442695
  %v1064 = vpow.pop %v1063
  %v1065 = vmul.f32 %v1062, 1.442695
  %v1066 = vpow.pop %v1065
  %v1067 = vsel %vm1054, %v1064, 0.0
  %1068 = vadd.xlane.f32.xlu0 %v1067
  %v1069 = vpop.xlane.xlu0 %1068
  %v1070 = vsel %vm1054, %v1066, 0.0
  %1071 = vadd.xlane.f32.xlu0 %v1070
  %v1072 = vpop.xlane.xlu0 %1071
  %v1073 = vrcp.pop %v1069
  %v1074 = vrcp.pop %v1072
  %v1075 = vmul.f32 %v1064, %v1073
  %v1076 = vmul.f32 %v1066, %v1074
  %v1077 = vpack.c.bf16 %v1075, %v1075
  %v1078 = vpack.c.bf16 %v1076, %v1076
  %v1079 = vcombine.low %v837, %v851
  %v1081 = vunpack.c.l.s4 1966171168
  %v1082 = vunpack.c.0.s8 %v1081
  %v1083 = vlaneseq
  %v1084 = vshrl.u32 %v1083, 7
  %v1085 = vsub.s32 %v1082, %v1084
  %v1086 = vrot.slane %v1079, %v1085
  %v1088 = vunpack.c.l.s4 1966171168
  %v1089 = vunpack.c.0.s8 %v1088
  %v1090 = vlaneseq
  %v1091 = vshrl.u32 %v1090, 7
  %v1092 = vsub.s32 %v1089, %v1091
  %v1093 = vrot.slane %v859, %v1092
  %v1094 = vcombine.low %v1086, %v1093
  %v1096 = vunpack.c.l.s4 1966171168
  %v1097 = vunpack.c.0.s8 %v1096
  %v1098 = vlaneseq
  %v1099 = vshrl.u32 %v1098, 7
  %v1100 = vsub.s32 %v1097, %v1099
  %v1101 = vrot.slane %v1094, %v1100
  %v1102 = vcombine.low %v860, %v844
  %v1104 = vunpack.c.l.s4 1966171168
  %v1105 = vunpack.c.0.s8 %v1104
  %v1106 = vlaneseq
  %v1107 = vshrl.u32 %v1106, 7
  %v1108 = vsub.s32 %v1105, %v1107
  %v1109 = vrot.slane %v1102, %v1108
  %v1111 = vunpack.c.l.s4 1966171168
  %v1112 = vunpack.c.0.s8 %v1111
  %v1113 = vlaneseq
  %v1114 = vshrl.u32 %v1113, 7
  %v1115 = vsub.s32 %v1112, %v1114
  %v1116 = vrot.slane %v858, %v1115
  %v1117 = vcombine.low %v1109, %v1116
  %v1119 = vunpack.c.l.s4 1966171168
  %v1120 = vunpack.c.0.s8 %v1119
  %v1121 = vlaneseq
  %v1122 = vshrl.u32 %v1121, 7
  %v1123 = vsub.s32 %v1120, %v1122
  %v1124 = vrot.slane %v1117, %v1123
  %v1127 = vpack.c.bf16 %v1101, %v1101
  %v1128 = vpack.c.bf16 %v1124, %v1124
  %vm1129 = vcmask 23552
  %v1131 = vsel %vm1129, %v1077, 0
  %vm1133 = vcmask 1040384
  %v1134 = vsel %vm1133, 4294967295, 65535
  %v1135 = vsel %vm343, %v1134, 0
  %v1137 = vand.u32 %v1127, %v1135
  %1139 = vmatprep.subr.bf16.mxu0 0
  %1140 = vmatpush1.bf16.msra.mxu0 %v1137
  %1141 = vmatprep.subr.bf16.mxu0 0
  %1142 = vmatpush1.bf16.msra.mxu0 0
  %1143 = vmatprep.subr.bf16.mxu0 0
  %1144 = vmatpush1.bf16.msra.mxu0 0
  %1145 = vmatprep.subr.bf16.mxu0 0
  %1146 = vmatpush1.bf16.msra.mxu0 0
  %1147 = vmatprep.subr.bf16.mxu0 0
  %1148 = vmatpush1.bf16.msra.mxu0 0
  %1149 = vmatprep.subr.bf16.mxu0 0
  %1150 = vmatpush1.bf16.msra.mxu0 0
  %1151 = vmatprep.subr.bf16.mxu0 0
  %1152 = vmatpush1.bf16.msra.mxu0 0
  %1153 = vmatprep.subr.bf16.mxu0 0
  %1154 = vmatpush1.bf16.msra.mxu0 0
  %1155 = vmatprep.subr.bf16.mxu0 0
  %1156 = vmatpush1.bf16.msra.mxu0 0
  %1157 = vmatprep.subr.bf16.mxu0 0
  %1158 = vmatpush1.bf16.msra.mxu0 0
  %1159 = vmatprep.subr.bf16.mxu0 0
  %1160 = vmatpush1.bf16.msra.mxu0 0
  %1161 = vmatprep.subr.bf16.mxu0 0
  %1162 = vmatpush1.bf16.msra.mxu0 0
  %1163 = vmatprep.subr.bf16.mxu0 0
  %1164 = vmatpush1.bf16.msra.mxu0 0
  %1165 = vmatprep.subr.bf16.mxu0 0
  %1166 = vmatpush1.bf16.msra.mxu0 0
  %1167 = vmatprep.subr.bf16.mxu0 0
  %1168 = vmatpush1.bf16.msra.mxu0 0
  %1169 = vmatprep.subr.bf16.mxu0 0
  %1170 = vmatpush1.bf16.msra.mxu0 0
  %1171 = vmatprep.mubr.bf16.mxu0 0
  %1172 = vmatmul.mubr.bf16.gmra.mrb[0].mxu0 %v1131
  %v1173 = vpop.f32.mrb[0].mxu0
  %v1174 = vadd.f32 0.0, %v1173
  %v1175 = vpop.f32.mrb[0].mxu0
  %v1176 = vpop.f32.mrb[0].mxu0
  %v1177 = vpop.f32.mrb[0].mxu0
  %1178 = vdwg.mxu0
  %v1180 = vsel %vm1129, %v1078, 0
  %v1183 = vand.u32 %v1128, %v1135
  %1185 = vmatprep.subr.bf16.mxu0 0
  %1186 = vmatpush1.bf16.msra.mxu0 %v1183
  %1187 = vmatprep.subr.bf16.mxu0 0
  %1188 = vmatpush1.bf16.msra.mxu0 0
  %1189 = vmatprep.subr.bf16.mxu0 0
  %1190 = vmatpush1.bf16.msra.mxu0 0
  %1191 = vmatprep.subr.bf16.mxu0 0
  %1192 = vmatpush1.bf16.msra.mxu0 0
  %1193 = vmatprep.subr.bf16.mxu0 0
  %1194 = vmatpush1.bf16.msra.mxu0 0
  %1195 = vmatprep.subr.bf16.mxu0 0
  %1196 = vmatpush1.bf16.msra.mxu0 0
  %1197 = vmatprep.subr.bf16.mxu0 0
  %1198 = vmatpush1.bf16.msra.mxu0 0
  %1199 = vmatprep.subr.bf16.mxu0 0
  %1200 = vmatpush1.bf16.msra.mxu0 0
  %1201 = vmatprep.subr.bf16.mxu0 0
  %1202 = vmatpush1.bf16.msra.mxu0 0
  %1203 = vmatprep.subr.bf16.mxu0 0
  %1204 = vmatpush1.bf16.msra.mxu0 0
  %1205 = vmatprep.subr.bf16.mxu0 0
  %1206 = vmatpush1.bf16.msra.mxu0 0
  %1207 = vmatprep.subr.bf16.mxu0 0
  %1208 = vmatpush1.bf16.msra.mxu0 0
  %1209 = vmatprep.subr.bf16.mxu0 0
  %1210 = vmatpush1.bf16.msra.mxu0 0
  %1211 = vmatprep.subr.bf16.mxu0 0
  %1212 = vmatpush1.bf16.msra.mxu0 0
  %1213 = vmatprep.subr.bf16.mxu0 0
  %1214 = vmatpush1.bf16.msra.mxu0 0
  %1215 = vmatprep.subr.bf16.mxu0 0
  %1216 = vmatpush1.bf16.msra.mxu0 0
  %1217 = vmatprep.mubr.bf16.mxu0 0
  %1218 = vmatmul.mubr.bf16.gmra.mrb[0].mxu0 %v1180
  %v1219 = vpop.f32.mrb[0].mxu0
  %v1220 = vadd.f32 0.0, %v1219
  %v1221 = vpop.f32.mrb[0].mxu0
  %v1222 = vpop.f32.mrb[0].mxu0
  %v1223 = vpop.f32.mrb[0].mxu0
  %1224 = vdwg.mxu0
  %v1228 = vunpack.c.l.s4 1966171168
  %v1229 = vunpack.c.0.s8 %v1228
  %v1230 = vlaneseq
  %v1231 = vshrl.u32 %v1230, 7
  %v1232 = vsub.s32 %v1229, %v1231
  %v1233 = vrot.slane %v1174, %v1232
  %v1234 = vcombine.high %v1233, %v1233
  %v1236 = vunpack.c.l.s4 1966171168
  %v1237 = vunpack.c.0.s8 %v1236
  %v1238 = vlaneseq
  %v1239 = vshrl.u32 %v1238, 7
  %v1240 = vsub.s32 %v1237, %v1239
  %v1241 = vrot.slane %v1233, %v1240
  %v1243 = vunpack.c.l.s4 1966171168
  %v1244 = vunpack.c.0.s8 %v1243
  %v1245 = vlaneseq
  %v1246 = vshrl.u32 %v1245, 7
  %v1247 = vsub.s32 %v1244, %v1246
  %v1248 = vrot.slane %v1234, %v1247
  %v1249 = vcombine.high %v1241, %v1241
  %v1251 = vunpack.c.l.s4 1966171168
  %v1252 = vunpack.c.0.s8 %v1251
  %v1253 = vlaneseq
  %v1254 = vshrl.u32 %v1253, 7
  %v1255 = vsub.s32 %v1252, %v1254
  %v1256 = vrot.slane %v1220, %v1255
  %v1257 = vcombine.high %v1256, %v1256
  %v1259 = vunpack.c.l.s4 1966171168
  %v1260 = vunpack.c.0.s8 %v1259
  %v1261 = vlaneseq
  %v1262 = vshrl.u32 %v1261, 7
  %v1263 = vsub.s32 %v1260, %v1262
  %v1264 = vrot.slane %v1256, %v1263
  %v1266 = vunpack.c.l.s4 1966171168
  %v1267 = vunpack.c.0.s8 %v1266
  %v1268 = vlaneseq
  %v1269 = vshrl.u32 %v1268, 7
  %v1270 = vsub.s32 %v1267, %v1269
  %v1271 = vrot.slane %v1257, %v1270
  %v1272 = vcombine.high %v1264, %v1264
  %v1273 = vcombine.low %v1241, %v1248
  %v1274 = vcombine.low %v1249, %v1264
  %v1275 = vcombine.low %v1271, %v1272
  %v1277 = vunpack.c.l.s4 1966171168
  %v1278 = vunpack.c.0.s8 %v1277
  %v1279 = vlaneseq
  %v1280 = vshrl.u32 %v1279, 7
  %v1281 = vsub.s32 %v1278, %v1280
  %v1282 = vrot.slane %v1273, %v1281
  %v1284 = vunpack.c.l.s4 1966171168
  %v1285 = vunpack.c.0.s8 %v1284
  %v1286 = vlaneseq
  %v1287 = vshrl.u32 %v1286, 7
  %v1288 = vsub.s32 %v1285, %v1287
  %v1289 = vrot.slane %v1274, %v1288
  %v1291 = vunpack.c.l.s4 1966171168
  %v1292 = vunpack.c.0.s8 %v1291
  %v1293 = vlaneseq
  %v1294 = vshrl.u32 %v1293, 7
  %v1295 = vsub.s32 %v1292, %v1294
  %v1296 = vrot.slane %v1275, %v1295
  %v1297 = vcombine.low %v1282, %v1289
  %v1299 = vunpack.c.l.s4 1966171168
  %v1300 = vunpack.c.0.s8 %v1299
  %v1301 = vlaneseq
  %v1302 = vshrl.u32 %v1301, 7
  %v1303 = vsub.s32 %v1300, %v1302
  %v1304 = vrot.slane %v1297, %v1303
  %v1306 = vunpack.c.l.s4 1966171168
  %v1307 = vunpack.c.0.s8 %v1306
  %v1308 = vlaneseq
  %v1309 = vshrl.u32 %v1308, 7
  %v1310 = vsub.s32 %v1307, %v1309
  %v1311 = vrot.slane %v1296, %v1310
  %v1312 = vcombine.low %v1304, %v1311
  %v1314 = vpack.c.bf16 %v1312, %v1312
  %v1315 = vld [vmem:[%s29] sm:$0xf]
  %v1316 = vld [vmem:[%s29 + $0x4] sm:$0xf]
  %s1317 = scalar_lea.vmem %s17, 16
  %v1318 = vld [vmem:[%s1317] sm:$0xf]
  %v1319 = vld [vmem:[%s1317 + $0x4] sm:$0xf]
  %v1320 = vld [vmem:[%s1317 + $0x8] sm:$0xf]
  %v1321 = vld [vmem:[%s1317 + $0xc] sm:$0xf]
  %s1322 = scalar_lea.vmem %s23, 1
  %v1323 = vld [vmem:[%s1322] sm:$0x1]
  %v1325 = vlaneseq
  %v1326 = vshrl.u32 %v1325, 7
  %v1327 = vsub.s32 0, %v1326
  %v1328 = vrot.slane %v1323, %v1327
  %v1334 = vunpack.c.l.b16 %v1318
  %v1335 = vunpack.c.l.b16 %v1319
  %v1336 = vunpack.c.l.b16 %v1320
  %v1337 = vunpack.c.l.b16 %v1321
  %v1338 = vpack.c.b16 %v1335, %v1334
  %v1339 = vpack.c.b16 %v1337, %v1336
  %1342 = vmatprep.subr.bf16.mxu0 0
  %1343 = vmatpush1.bf16.msra.mxu0 %v1338
  %1344 = vmatprep.subr.bf16.mxu0 0
  %1345 = vmatpush1.bf16.msra.mxu0 %v1339
  %1346 = vmatprep.subr.bf16.mxu0 0
  %1347 = vmatpush1.bf16.msra.mxu0 0
  %1348 = vmatprep.subr.bf16.mxu0 0
  %1349 = vmatpush1.bf16.msra.mxu0 0
  %1350 = vmatprep.subr.bf16.mxu0 0
  %1351 = vmatpush1.bf16.msra.mxu0 0
  %1352 = vmatprep.subr.bf16.mxu0 0
  %1353 = vmatpush1.bf16.msra.mxu0 0
  %1354 = vmatprep.subr.bf16.mxu0 0
  %1355 = vmatpush1.bf16.msra.mxu0 0
  %1356 = vmatprep.subr.bf16.mxu0 0
  %1357 = vmatpush1.bf16.msra.mxu0 0
  %1358 = vmatprep.subr.bf16.mxu0 0
  %1359 = vmatpush1.bf16.msra.mxu0 0
  %1360 = vmatprep.subr.bf16.mxu0 0
  %1361 = vmatpush1.bf16.msra.mxu0 0
  %1362 = vmatprep.subr.bf16.mxu0 0
  %1363 = vmatpush1.bf16.msra.mxu0 0
  %1364 = vmatprep.subr.bf16.mxu0 0
  %1365 = vmatpush1.bf16.msra.mxu0 0
  %1366 = vmatprep.subr.bf16.mxu0 0
  %1367 = vmatpush1.bf16.msra.mxu0 0
  %1368 = vmatprep.subr.bf16.mxu0 0
  %1369 = vmatpush1.bf16.msra.mxu0 0
  %1370 = vmatprep.subr.bf16.mxu0 0
  %1371 = vmatpush1.bf16.msra.mxu0 0
  %1372 = vmatprep.subr.bf16.mxu0 0
  %1373 = vmatpush1.bf16.msra.mxu0 0
  %1374 = vmatprep.mubr.bf16.mxu0 0
  %1375 = vmatmul.mubr.bf16.gmra.mrb[0].mxu0 %v549
  %v1376 = vpop.f32.mrb[0].mxu0
  %v1377 = vadd.f32 %v1328, %v1376
  %v1378 = vpop.f32.mrb[0].mxu0
  %v1379 = vpop.f32.mrb[0].mxu0
  %v1380 = vpop.f32.mrb[0].mxu0
  %1381 = vdwg.mxu0
  %v1383 = vcombine.high %v1377, %v1377
  %v1385 = vunpack.c.l.s4 1966171168
  %v1386 = vunpack.c.0.s8 %v1385
  %v1387 = vlaneseq
  %v1388 = vshrl.u32 %v1387, 7
  %v1389 = vsub.s32 %v1386, %v1388
  %v1390 = vrot.slane %v1377, %v1389
  %v1392 = vunpack.c.l.s4 1966171168
  %v1393 = vunpack.c.0.s8 %v1392
  %v1394 = vlaneseq
  %v1395 = vshrl.u32 %v1394, 7
  %v1396 = vsub.s32 %v1393, %v1395
  %v1397 = vrot.slane %v1383, %v1396
  %v1398 = vcombine.high %v1390, %v1390
  %v1399 = vcombine.high %v1397, %v1397
  %v1401 = vunpack.c.l.s4 1966171168
  %v1402 = vunpack.c.0.s8 %v1401
  %v1403 = vlaneseq
  %v1404 = vshrl.u32 %v1403, 7
  %v1405 = vsub.s32 %v1402, %v1404
  %v1406 = vrot.slane %v1390, %v1405
  %v1408 = vunpack.c.l.s4 1966171168
  %v1409 = vunpack.c.0.s8 %v1408
  %v1410 = vlaneseq
  %v1411 = vshrl.u32 %v1410, 7
  %v1412 = vsub.s32 %v1409, %v1411
  %v1413 = vrot.slane %v1397, %v1412
  %v1415 = vunpack.c.l.s4 1966171168
  %v1416 = vunpack.c.0.s8 %v1415
  %v1417 = vlaneseq
  %v1418 = vshrl.u32 %v1417, 7
  %v1419 = vsub.s32 %v1416, %v1418
  %v1420 = vrot.slane %v1398, %v1419
  %v1422 = vunpack.c.l.s4 1966171168
  %v1423 = vunpack.c.0.s8 %v1422
  %v1424 = vlaneseq
  %v1425 = vshrl.u32 %v1424, 7
  %v1426 = vsub.s32 %v1423, %v1425
  %v1427 = vrot.slane %v1399, %v1426
  %v1428 = vcombine.high %v1406, %v1406
  %v1429 = vcombine.high %v1420, %v1420
  %s1430 = scalar_lea.vmem %s19, 16
  %v1431 = vld [vmem:[%s1430] sm:$0xf]
  %v1432 = vld [vmem:[%s1430 + $0x4] sm:$0xf]
  %v1433 = vld [vmem:[%s1430 + $0x8] sm:$0xf]
  %v1434 = vld [vmem:[%s1430 + $0xc] sm:$0xf]
  %s1435 = scalar_lea.vmem %s25, 1
  %v1436 = vld [vmem:[%s1435] sm:$0x1]
  %v1438 = vlaneseq
  %v1439 = vshrl.u32 %v1438, 7
  %v1440 = vsub.s32 0, %v1439
  %v1441 = vrot.slane %v1436, %v1440
  %v1447 = vunpack.c.l.b16 %v1431
  %v1448 = vunpack.c.l.b16 %v1432
  %v1449 = vunpack.c.l.b16 %v1433
  %v1450 = vunpack.c.l.b16 %v1434
  %v1451 = vpack.c.b16 %v1448, %v1447
  %v1452 = vpack.c.b16 %v1450, %v1449
  %1455 = vmatprep.subr.bf16.mxu0 0
  %1456 = vmatpush1.bf16.msra.mxu0 %v1451
  %1457 = vmatprep.subr.bf16.mxu0 0
  %1458 = vmatpush1.bf16.msra.mxu0 %v1452
  %1459 = vmatprep.subr.bf16.mxu0 0
  %1460 = vmatpush1.bf16.msra.mxu0 0
  %1461 = vmatprep.subr.bf16.mxu0 0
  %1462 = vmatpush1.bf16.msra.mxu0 0
  %1463 = vmatprep.subr.bf16.mxu0 0
  %1464 = vmatpush1.bf16.msra.mxu0 0
  %1465 = vmatprep.subr.bf16.mxu0 0
  %1466 = vmatpush1.bf16.msra.mxu0 0
  %1467 = vmatprep.subr.bf16.mxu0 0
  %1468 = vmatpush1.bf16.msra.mxu0 0
  %1469 = vmatprep.subr.bf16.mxu0 0
  %1470 = vmatpush1.bf16.msra.mxu0 0
  %1471 = vmatprep.subr.bf16.mxu0 0
  %1472 = vmatpush1.bf16.msra.mxu0 0
  %1473 = vmatprep.subr.bf16.mxu0 0
  %1474 = vmatpush1.bf16.msra.mxu0 0
  %1475 = vmatprep.subr.bf16.mxu0 0
  %1476 = vmatpush1.bf16.msra.mxu0 0
  %1477 = vmatprep.subr.bf16.mxu0 0
  %1478 = vmatpush1.bf16.msra.mxu0 0
  %1479 = vmatprep.subr.bf16.mxu0 0
  %1480 = vmatpush1.bf16.msra.mxu0 0
  %1481 = vmatprep.subr.bf16.mxu0 0
  %1482 = vmatpush1.bf16.msra.mxu0 0
  %1483 = vmatprep.subr.bf16.mxu0 0
  %1484 = vmatpush1.bf16.msra.mxu0 0
  %1485 = vmatprep.subr.bf16.mxu0 0
  %1486 = vmatpush1.bf16.msra.mxu0 0
  %1487 = vmatprep.mubr.bf16.mxu0 0
  %1488 = vmatmul.mubr.bf16.gmra.mrb[0].mxu0 %v549
  %v1489 = vpop.f32.mrb[0].mxu0
  %v1490 = vadd.f32 %v1441, %v1489
  %v1491 = vpop.f32.mrb[0].mxu0
  %v1492 = vpop.f32.mrb[0].mxu0
  %v1493 = vpop.f32.mrb[0].mxu0
  %1494 = vdwg.mxu0
  %v1496 = vcombine.high %v1490, %v1490
  %v1498 = vunpack.c.l.s4 1966171168
  %v1499 = vunpack.c.0.s8 %v1498
  %v1500 = vlaneseq
  %v1501 = vshrl.u32 %v1500, 7
  %v1502 = vsub.s32 %v1499, %v1501
  %v1503 = vrot.slane %v1490, %v1502
  %v1505 = vunpack.c.l.s4 1966171168
  %v1506 = vunpack.c.0.s8 %v1505
  %v1507 = vlaneseq
  %v1508 = vshrl.u32 %v1507, 7
  %v1509 = vsub.s32 %v1506, %v1508
  %v1510 = vrot.slane %v1496, %v1509
  %v1511 = vcombine.high %v1503, %v1503
  %v1512 = vcombine.high %v1510, %v1510
  %v1514 = vunpack.c.l.s4 1966171168
  %v1515 = vunpack.c.0.s8 %v1514
  %v1516 = vlaneseq
  %v1517 = vshrl.u32 %v1516, 7
  %v1518 = vsub.s32 %v1515, %v1517
  %v1519 = vrot.slane %v1503, %v1518
  %v1521 = vunpack.c.l.s4 1966171168
  %v1522 = vunpack.c.0.s8 %v1521
  %v1523 = vlaneseq
  %v1524 = vshrl.u32 %v1523, 7
  %v1525 = vsub.s32 %v1522, %v1524
  %v1526 = vrot.slane %v1510, %v1525
  %v1528 = vunpack.c.l.s4 1966171168
  %v1529 = vunpack.c.0.s8 %v1528
  %v1530 = vlaneseq
  %v1531 = vshrl.u32 %v1530, 7
  %v1532 = vsub.s32 %v1529, %v1531
  %v1533 = vrot.slane %v1511, %v1532
  %v1535 = vunpack.c.l.s4 1966171168
  %v1536 = vunpack.c.0.s8 %v1535
  %v1537 = vlaneseq
  %v1538 = vshrl.u32 %v1537, 7
  %v1539 = vsub.s32 %v1536, %v1538
  %v1540 = vrot.slane %v1512, %v1539
  %v1541 = vcombine.high %v1519, %v1519
  %v1542 = vcombine.high %v1533, %v1533
  %s1543 = scalar_lea.vmem %s21, 16
  %v1544 = vld [vmem:[%s1543] sm:$0xf]
  %v1545 = vld [vmem:[%s1543 + $0x4] sm:$0xf]
  %v1546 = vld [vmem:[%s1543 + $0x8] sm:$0xf]
  %v1547 = vld [vmem:[%s1543 + $0xc] sm:$0xf]
  %s1548 = scalar_lea.vmem %s27, 1
  %v1549 = vld [vmem:[%s1548] sm:$0x1]
  %v1551 = vlaneseq
  %v1552 = vshrl.u32 %v1551, 7
  %v1553 = vsub.s32 0, %v1552
  %v1554 = vrot.slane %v1549, %v1553
  %v1560 = vunpack.c.l.b16 %v1544
  %v1561 = vunpack.c.l.b16 %v1545
  %v1562 = vunpack.c.l.b16 %v1546
  %v1563 = vunpack.c.l.b16 %v1547
  %v1564 = vpack.c.b16 %v1561, %v1560
  %v1565 = vpack.c.b16 %v1563, %v1562
  %1568 = vmatprep.subr.bf16.mxu0 0
  %1569 = vmatpush1.bf16.msra.mxu0 %v1564
  %1570 = vmatprep.subr.bf16.mxu0 0
  %1571 = vmatpush1.bf16.msra.mxu0 %v1565
  %1572 = vmatprep.subr.bf16.mxu0 0
  %1573 = vmatpush1.bf16.msra.mxu0 0
  %1574 = vmatprep.subr.bf16.mxu0 0
  %1575 = vmatpush1.bf16.msra.mxu0 0
  %1576 = vmatprep.subr.bf16.mxu0 0
  %1577 = vmatpush1.bf16.msra.mxu0 0
  %1578 = vmatprep.subr.bf16.mxu0 0
  %1579 = vmatpush1.bf16.msra.mxu0 0
  %1580 = vmatprep.subr.bf16.mxu0 0
  %1581 = vmatpush1.bf16.msra.mxu0 0
  %1582 = vmatprep.subr.bf16.mxu0 0
  %1583 = vmatpush1.bf16.msra.mxu0 0
  %1584 = vmatprep.subr.bf16.mxu0 0
  %1585 = vmatpush1.bf16.msra.mxu0 0
  %1586 = vmatprep.subr.bf16.mxu0 0
  %1587 = vmatpush1.bf16.msra.mxu0 0
  %1588 = vmatprep.subr.bf16.mxu0 0
  %1589 = vmatpush1.bf16.msra.mxu0 0
  %1590 = vmatprep.subr.bf16.mxu0 0
  %1591 = vmatpush1.bf16.msra.mxu0 0
  %1592 = vmatprep.subr.bf16.mxu0 0
  %1593 = vmatpush1.bf16.msra.mxu0 0
  %1594 = vmatprep.subr.bf16.mxu0 0
  %1595 = vmatpush1.bf16.msra.mxu0 0
  %1596 = vmatprep.subr.bf16.mxu0 0
  %1597 = vmatpush1.bf16.msra.mxu0 0
  %1598 = vmatprep.subr.bf16.mxu0 0
  %1599 = vmatpush1.bf16.msra.mxu0 0
  %1600 = vmatprep.mubr.bf16.mxu0 0
  %1601 = vmatmul.mubr.bf16.gmra.mrb[0].mxu0 %v549
  %v1602 = vpop.f32.mrb[0].mxu0
  %v1603 = vadd.f32 %v1554, %v1602
  %v1604 = vpop.f32.mrb[0].mxu0
  %v1605 = vpop.f32.mrb[0].mxu0
  %v1606 = vpop.f32.mrb[0].mxu0
  %1607 = vdwg.mxu0
  %v1609 = vcombine.high %v1603, %v1603
  %v1611 = vunpack.c.l.s4 1966171168
  %v1612 = vunpack.c.0.s8 %v1611
  %v1613 = vlaneseq
  %v1614 = vshrl.u32 %v1613, 7
  %v1615 = vsub.s32 %v1612, %v1614
  %v1616 = vrot.slane %v1603, %v1615
  %v1618 = vunpack.c.l.s4 1966171168
  %v1619 = vunpack.c.0.s8 %v1618
  %v1620 = vlaneseq
  %v1621 = vshrl.u32 %v1620, 7
  %v1622 = vsub.s32 %v1619, %v1621
  %v1623 = vrot.slane %v1609, %v1622
  %v1624 = vcombine.high %v1616, %v1616
  %v1625 = vcombine.high %v1623, %v1623
  %v1627 = vunpack.c.l.s4 1966171168
  %v1628 = vunpack.c.0.s8 %v1627
  %v1629 = vlaneseq
  %v1630 = vshrl.u32 %v1629, 7
  %v1631 = vsub.s32 %v1628, %v1630
  %v1632 = vrot.slane %v1616, %v1631
  %v1634 = vunpack.c.l.s4 1966171168
  %v1635 = vunpack.c.0.s8 %v1634
  %v1636 = vlaneseq
  %v1637 = vshrl.u32 %v1636, 7
  %v1638 = vsub.s32 %v1635, %v1637
  %v1639 = vrot.slane %v1623, %v1638
  %v1641 = vunpack.c.l.s4 1966171168
  %v1642 = vunpack.c.0.s8 %v1641
  %v1643 = vlaneseq
  %v1644 = vshrl.u32 %v1643, 7
  %v1645 = vsub.s32 %v1642, %v1644
  %v1646 = vrot.slane %v1624, %v1645
  %v1648 = vunpack.c.l.s4 1966171168
  %v1649 = vunpack.c.0.s8 %v1648
  %v1650 = vlaneseq
  %v1651 = vshrl.u32 %v1650, 7
  %v1652 = vsub.s32 %v1649, %v1651
  %v1653 = vrot.slane %v1625, %v1652
  %v1654 = vcombine.high %v1632, %v1632
  %v1655 = vcombine.high %v1646, %v1646
  %v1656 = vcombine.low %v1406, %v1420
  %v1658 = vunpack.c.l.s4 1966171168
  %v1659 = vunpack.c.0.s8 %v1658
  %v1660 = vlaneseq
  %v1661 = vshrl.u32 %v1660, 7
  %v1662 = vsub.s32 %v1659, %v1661
  %v1663 = vrot.slane %v1656, %v1662
  %v1665 = vunpack.c.l.s4 1966171168
  %v1666 = vunpack.c.0.s8 %v1665
  %v1667 = vlaneseq
  %v1668 = vshrl.u32 %v1667, 7
  %v1669 = vsub.s32 %v1666, %v1668
  %v1670 = vrot.slane %v1428, %v1669
  %v1671 = vcombine.low %v1663, %v1670
  %v1673 = vunpack.c.l.s4 1966171168
  %v1674 = vunpack.c.0.s8 %v1673
  %v1675 = vlaneseq
  %v1676 = vshrl.u32 %v1675, 7
  %v1677 = vsub.s32 %v1674, %v1676
  %v1678 = vrot.slane %v1671, %v1677
  %v1679 = vcombine.low %v1429, %v1413
  %v1681 = vunpack.c.l.s4 1966171168
  %v1682 = vunpack.c.0.s8 %v1681
  %v1683 = vlaneseq
  %v1684 = vshrl.u32 %v1683, 7
  %v1685 = vsub.s32 %v1682, %v1684
  %v1686 = vrot.slane %v1679, %v1685
  %v1688 = vunpack.c.l.s4 1966171168
  %v1689 = vunpack.c.0.s8 %v1688
  %v1690 = vlaneseq
  %v1691 = vshrl.u32 %v1690, 7
  %v1692 = vsub.s32 %v1689, %v1691
  %v1693 = vrot.slane %v1427, %v1692
  %v1694 = vcombine.low %v1686, %v1693
  %v1696 = vunpack.c.l.s4 1966171168
  %v1697 = vunpack.c.0.s8 %v1696
  %v1698 = vlaneseq
  %v1699 = vshrl.u32 %v1698, 7
  %v1700 = vsub.s32 %v1697, %v1699
  %v1701 = vrot.slane %v1694, %v1700
  %v1704 = vpack.c.bf16 %v1678, %v1678
  %v1705 = vpack.c.bf16 %v1701, %v1701
  %v1706 = vcombine.low %v1519, %v1533
  %v1708 = vunpack.c.l.s4 1966171168
  %v1709 = vunpack.c.0.s8 %v1708
  %v1710 = vlaneseq
  %v1711 = vshrl.u32 %v1710, 7
  %v1712 = vsub.s32 %v1709, %v1711
  %v1713 = vrot.slane %v1706, %v1712
  %v1715 = vunpack.c.l.s4 1966171168
  %v1716 = vunpack.c.0.s8 %v1715
  %v1717 = vlaneseq
  %v1718 = vshrl.u32 %v1717, 7
  %v1719 = vsub.s32 %v1716, %v1718
  %v1720 = vrot.slane %v1541, %v1719
  %v1721 = vcombine.low %v1713, %v1720
  %v1723 = vunpack.c.l.s4 1966171168
  %v1724 = vunpack.c.0.s8 %v1723
  %v1725 = vlaneseq
  %v1726 = vshrl.u32 %v1725, 7
  %v1727 = vsub.s32 %v1724, %v1726
  %v1728 = vrot.slane %v1721, %v1727
  %v1729 = vcombine.low %v1542, %v1526
  %v1731 = vunpack.c.l.s4 1966171168
  %v1732 = vunpack.c.0.s8 %v1731
  %v1733 = vlaneseq
  %v1734 = vshrl.u32 %v1733, 7
  %v1735 = vsub.s32 %v1732, %v1734
  %v1736 = vrot.slane %v1729, %v1735
  %v1738 = vunpack.c.l.s4 1966171168
  %v1739 = vunpack.c.0.s8 %v1738
  %v1740 = vlaneseq
  %v1741 = vshrl.u32 %v1740, 7
  %v1742 = vsub.s32 %v1739, %v1741
  %v1743 = vrot.slane %v1540, %v1742
  %v1744 = vcombine.low %v1736, %v1743
  %v1746 = vunpack.c.l.s4 1966171168
  %v1747 = vunpack.c.0.s8 %v1746
  %v1748 = vlaneseq
  %v1749 = vshrl.u32 %v1748, 7
  %v1750 = vsub.s32 %v1747, %v1749
  %v1751 = vrot.slane %v1744, %v1750
  %v1754 = vpack.c.bf16 %v1728, %v1728
  %v1755 = vpack.c.bf16 %v1751, %v1751
  %v1757 = vsel %vm961, %v1704, 0
  %v1760 = vsel %vm961, %v1754, 0
  %1762 = vmatprep.subr.bf16.mxu0 0
  %1763 = vmatpush1.bf16.xpose.msra.mxu0 %v1760
  %1764 = vmatprep.subr.bf16.mxu0 0
  %1765 = vmatpush1.bf16.xpose.msra.mxu0 0
  %1766 = vmatprep.subr.bf16.mxu0 0
  %1767 = vmatpush1.bf16.xpose.msra.mxu0 0
  %1768 = vmatprep.subr.bf16.mxu0 0
  %1769 = vmatpush1.bf16.xpose.msra.mxu0 0
  %1770 = vmatprep.subr.bf16.mxu0 0
  %1771 = vmatpush1.bf16.xpose.msra.mxu0 0
  %1772 = vmatprep.subr.bf16.mxu0 0
  %1773 = vmatpush1.bf16.xpose.msra.mxu0 0
  %1774 = vmatprep.subr.bf16.mxu0 0
  %1775 = vmatpush1.bf16.xpose.msra.mxu0 0
  %1776 = vmatprep.subr.bf16.mxu0 0
  %1777 = vmatpush1.bf16.xpose.msra.mxu0 0
  %1778 = vmatprep.subr.bf16.mxu0 0
  %1779 = vmatpush1.bf16.xpose.msra.mxu0 0
  %1780 = vmatprep.subr.bf16.mxu0 0
  %1781 = vmatpush1.bf16.xpose.msra.mxu0 0
  %1782 = vmatprep.subr.bf16.mxu0 0
  %1783 = vmatpush1.bf16.xpose.msra.mxu0 0
  %1784 = vmatprep.subr.bf16.mxu0 0
  %1785 = vmatpush1.bf16.xpose.msra.mxu0 0
  %1786 = vmatprep.subr.bf16.mxu0 0
  %1787 = vmatpush1.bf16.xpose.msra.mxu0 0
  %1788 = vmatprep.subr.bf16.mxu0 0
  %1789 = vmatpush1.bf16.xpose.msra.mxu0 0
  %1790 = vmatprep.subr.bf16.mxu0 0
  %1791 = vmatpush1.bf16.xpose.msra.mxu0 0
  %1792 = vmatprep.subr.bf16.mxu0 0
  %1793 = vmatpush1.bf16.xpose.msra.mxu0 0
  %1794 = vmatprep.mubr.bf16.mxu0 0
  %1795 = vmatmul.mubr.bf16.gmra.mrb[0].mxu0 %v1757
  %v1796 = vpop.f32.mrb[0].mxu0
  %v1797 = vadd.f32 0.0, %v1796
  %v1798 = vpop.f32.mrb[0].mxu0
  %v1799 = vpop.f32.mrb[0].mxu0
  %v1800 = vpop.f32.mrb[0].mxu0
  %1801 = vdwg.mxu0
  %v1803 = vsel %vm961, %v1705, 0
  %v1806 = vsel %vm961, %v1755, 0
  %1808 = vmatprep.subr.bf16.mxu0 0
  %1809 = vmatpush1.bf16.xpose.msra.mxu0 %v1806
  %1810 = vmatprep.subr.bf16.mxu0 0
  %1811 = vmatpush1.bf16.xpose.msra.mxu0 0
  %1812 = vmatprep.subr.bf16.mxu0 0
  %1813 = vmatpush1.bf16.xpose.msra.mxu0 0
  %1814 = vmatprep.subr.bf16.mxu0 0
  %1815 = vmatpush1.bf16.xpose.msra.mxu0 0
  %1816 = vmatprep.subr.bf16.mxu0 0
  %1817 = vmatpush1.bf16.xpose.msra.mxu0 0
  %1818 = vmatprep.subr.bf16.mxu0 0
  %1819 = vmatpush1.bf16.xpose.msra.mxu0 0
  %1820 = vmatprep.subr.bf16.mxu0 0
  %1821 = vmatpush1.bf16.xpose.msra.mxu0 0
  %1822 = vmatprep.subr.bf16.mxu0 0
  %1823 = vmatpush1.bf16.xpose.msra.mxu0 0
  %1824 = vmatprep.subr.bf16.mxu0 0
  %1825 = vmatpush1.bf16.xpose.msra.mxu0 0
  %1826 = vmatprep.subr.bf16.mxu0 0
  %1827 = vmatpush1.bf16.xpose.msra.mxu0 0
  %1828 = vmatprep.subr.bf16.mxu0 0
  %1829 = vmatpush1.bf16.xpose.msra.mxu0 0
  %1830 = vmatprep.subr.bf16.mxu0 0
  %1831 = vmatpush1.bf16.xpose.msra.mxu0 0
  %1832 = vmatprep.subr.bf16.mxu0 0
  %1833 = vmatpush1.bf16.xpose.msra.mxu0 0
  %1834 = vmatprep.subr.bf16.mxu0 0
  %1835 = vmatpush1.bf16.xpose.msra.mxu0 0
  %1836 = vmatprep.subr.bf16.mxu0 0
  %1837 = vmatpush1.bf16.xpose.msra.mxu0 0
  %1838 = vmatprep.subr.bf16.mxu0 0
  %1839 = vmatpush1.bf16.xpose.msra.mxu0 0
  %1840 = vmatprep.mubr.bf16.mxu0 0
  %1841 = vmatmul.mubr.bf16.gmra.mrb[0].mxu0 %v1803
  %v1842 = vpop.f32.mrb[0].mxu0
  %v1843 = vadd.f32 0.0, %v1842
  %v1844 = vpop.f32.mrb[0].mxu0
  %v1845 = vpop.f32.mrb[0].mxu0
  %v1846 = vpop.f32.mrb[0].mxu0
  %1847 = vdwg.mxu0
  %v1848 = vsel %vm1054, %v1797, -inf
  %1849 = vmax.xlane.f32.xlu0 %v1848
  %v1850 = vpop.xlane.xlu0 %1849
  %v1851 = vsel %vm1054, %v1843, -inf
  %1852 = vmax.xlane.f32.xlu0 %v1851
  %v1853 = vpop.xlane.xlu0 %1852
  %v1854 = vsub.f32 %v1797, %v1850
  %v1855 = vsub.f32 %v1843, %v1853
  %v1856 = vmul.f32 %v1854, 1.442695
  %v1857 = vpow.pop %v1856
  %v1858 = vmul.f32 %v1855, 1.442695
  %v1859 = vpow.pop %v1858
  %v1860 = vsel %vm1054, %v1857, 0.0
  %1861 = vadd.xlane.f32.xlu0 %v1860
  %v1862 = vpop.xlane.xlu0 %1861
  %v1863 = vsel %vm1054, %v1859, 0.0
  %1864 = vadd.xlane.f32.xlu0 %v1863
  %v1865 = vpop.xlane.xlu0 %1864
  %v1866 = vrcp.pop %v1862
  %v1867 = vrcp.pop %v1865
  %v1868 = vmul.f32 %v1857, %v1866
  %v1869 = vmul.f32 %v1859, %v1867
  %v1870 = vpack.c.bf16 %v1868, %v1868
  %v1871 = vpack.c.bf16 %v1869, %v1869
  %v1872 = vcombine.low %v1632, %v1646
  %v1874 = vunpack.c.l.s4 1966171168
  %v1875 = vunpack.c.0.s8 %v1874
  %v1876 = vlaneseq
  %v1877 = vshrl.u32 %v1876, 7
  %v1878 = vsub.s32 %v1875, %v1877
  %v1879 = vrot.slane %v1872, %v1878
  %v1881 = vunpack.c.l.s4 1966171168
  %v1882 = vunpack.c.0.s8 %v1881
  %v1883 = vlaneseq
  %v1884 = vshrl.u32 %v1883, 7
  %v1885 = vsub.s32 %v1882, %v1884
  %v1886 = vrot.slane %v1654, %v1885
  %v1887 = vcombine.low %v1879, %v1886
  %v1889 = vunpack.c.l.s4 1966171168
  %v1890 = vunpack.c.0.s8 %v1889
  %v1891 = vlaneseq
  %v1892 = vshrl.u32 %v1891, 7
  %v1893 = vsub.s32 %v1890, %v1892
  %v1894 = vrot.slane %v1887, %v1893
  %v1895 = vcombine.low %v1655, %v1639
  %v1897 = vunpack.c.l.s4 1966171168
  %v1898 = vunpack.c.0.s8 %v1897
  %v1899 = vlaneseq
  %v1900 = vshrl.u32 %v1899, 7
  %v1901 = vsub.s32 %v1898, %v1900
  %v1902 = vrot.slane %v1895, %v1901
  %v1904 = vunpack.c.l.s4 1966171168
  %v1905 = vunpack.c.0.s8 %v1904
  %v1906 = vlaneseq
  %v1907 = vshrl.u32 %v1906, 7
  %v1908 = vsub.s32 %v1905, %v1907
  %v1909 = vrot.slane %v1653, %v1908
  %v1910 = vcombine.low %v1902, %v1909
  %v1912 = vunpack.c.l.s4 1966171168
  %v1913 = vunpack.c.0.s8 %v1912
  %v1914 = vlaneseq
  %v1915 = vshrl.u32 %v1914, 7
  %v1916 = vsub.s32 %v1913, %v1915
  %v1917 = vrot.slane %v1910, %v1916
  %v1920 = vpack.c.bf16 %v1894, %v1894
  %v1921 = vpack.c.bf16 %v1917, %v1917
  %v1923 = vsel %vm1129, %v1870, 0
  %v1926 = vand.u32 %v1920, %v1135
  %1928 = vmatprep.subr.bf16.mxu0 0
  %1929 = vmatpush1.bf16.msra.mxu0 %v1926
  %1930 = vmatprep.subr.bf16.mxu0 0
  %1931 = vmatpush1.bf16.msra.mxu0 0
  %1932 = vmatprep.subr.bf16.mxu0 0
  %1933 = vmatpush1.bf16.msra.mxu0 0
  %1934 = vmatprep.subr.bf16.mxu0 0
  %1935 = vmatpush1.bf16.msra.mxu0 0
  %1936 = vmatprep.subr.bf16.mxu0 0
  %1937 = vmatpush1.bf16.msra.mxu0 0
  %1938 = vmatprep.subr.bf16.mxu0 0
  %1939 = vmatpush1.bf16.msra.mxu0 0
  %1940 = vmatprep.subr.bf16.mxu0 0
  %1941 = vmatpush1.bf16.msra.mxu0 0
  %1942 = vmatprep.subr.bf16.mxu0 0
  %1943 = vmatpush1.bf16.msra.mxu0 0
  %1944 = vmatprep.subr.bf16.mxu0 0
  %1945 = vmatpush1.bf16.msra.mxu0 0
  %1946 = vmatprep.subr.bf16.mxu0 0
  %1947 = vmatpush1.bf16.msra.mxu0 0
  %1948 = vmatprep.subr.bf16.mxu0 0
  %1949 = vmatpush1.bf16.msra.mxu0 0
  %1950 = vmatprep.subr.bf16.mxu0 0
  %1951 = vmatpush1.bf16.msra.mxu0 0
  %1952 = vmatprep.subr.bf16.mxu0 0
  %1953 = vmatpush1.bf16.msra.mxu0 0
  %1954 = vmatprep.subr.bf16.mxu0 0
  %1955 = vmatpush1.bf16.msra.mxu0 0
  %1956 = vmatprep.subr.bf16.mxu0 0
  %1957 = vmatpush1.bf16.msra.mxu0 0
  %1958 = vmatprep.subr.bf16.mxu0 0
  %1959 = vmatpush1.bf16.msra.mxu0 0
  %1960 = vmatprep.mubr.bf16.mxu0 0
  %1961 = vmatmul.mubr.bf16.gmra.mrb[0].mxu0 %v1923
  %v1962 = vpop.f32.mrb[0].mxu0
  %v1963 = vadd.f32 0.0, %v1962
  %v1964 = vpop.f32.mrb[0].mxu0
  %v1965 = vpop.f32.mrb[0].mxu0
  %v1966 = vpop.f32.mrb[0].mxu0
  %1967 = vdwg.mxu0
  %v1969 = vsel %vm1129, %v1871, 0
  %v1972 = vand.u32 %v1921, %v1135
  %1974 = vmatprep.subr.bf16.mxu0 0
  %1975 = vmatpush1.bf16.msra.mxu0 %v1972
  %1976 = vmatprep.subr.bf16.mxu0 0
  %1977 = vmatpush1.bf16.msra.mxu0 0
  %1978 = vmatprep.subr.bf16.mxu0 0
  %1979 = vmatpush1.bf16.msra.mxu0 0
  %1980 = vmatprep.subr.bf16.mxu0 0
  %1981 = vmatpush1.bf16.msra.mxu0 0
  %1982 = vmatprep.subr.bf16.mxu0 0
  %1983 = vmatpush1.bf16.msra.mxu0 0
  %1984 = vmatprep.subr.bf16.mxu0 0
  %1985 = vmatpush1.bf16.msra.mxu0 0
  %1986 = vmatprep.subr.bf16.mxu0 0
  %1987 = vmatpush1.bf16.msra.mxu0 0
  %1988 = vmatprep.subr.bf16.mxu0 0
  %1989 = vmatpush1.bf16.msra.mxu0 0
  %1990 = vmatprep.subr.bf16.mxu0 0
  %1991 = vmatpush1.bf16.msra.mxu0 0
  %1992 = vmatprep.subr.bf16.mxu0 0
  %1993 = vmatpush1.bf16.msra.mxu0 0
  %1994 = vmatprep.subr.bf16.mxu0 0
  %1995 = vmatpush1.bf16.msra.mxu0 0
  %1996 = vmatprep.subr.bf16.mxu0 0
  %1997 = vmatpush1.bf16.msra.mxu0 0
  %1998 = vmatprep.subr.bf16.mxu0 0
  %1999 = vmatpush1.bf16.msra.mxu0 0
  %2000 = vmatprep.subr.bf16.mxu0 0
  %2001 = vmatpush1.bf16.msra.mxu0 0
  %2002 = vmatprep.subr.bf16.mxu0 0
  %2003 = vmatpush1.bf16.msra.mxu0 0
  %2004 = vmatprep.subr.bf16.mxu0 0
  %2005 = vmatpush1.bf16.msra.mxu0 0
  %2006 = vmatprep.mubr.bf16.mxu0 0
  %2007 = vmatmul.mubr.bf16.gmra.mrb[0].mxu0 %v1969
  %v2008 = vpop.f32.mrb[0].mxu0
  %v2009 = vadd.f32 0.0, %v2008
  %v2010 = vpop.f32.mrb[0].mxu0
  %v2011 = vpop.f32.mrb[0].mxu0
  %v2012 = vpop.f32.mrb[0].mxu0
  %2013 = vdwg.mxu0
  %v2017 = vunpack.c.l.s4 1966171168
  %v2018 = vunpack.c.0.s8 %v2017
  %v2019 = vlaneseq
  %v2020 = vshrl.u32 %v2019, 7
  %v2021 = vsub.s32 %v2018, %v2020
  %v2022 = vrot.slane %v1963, %v2021
  %v2023 = vcombine.high %v2022, %v2022
  %v2025 = vunpack.c.l.s4 1966171168
  %v2026 = vunpack.c.0.s8 %v2025
  %v2027 = vlaneseq
  %v2028 = vshrl.u32 %v2027, 7
  %v2029 = vsub.s32 %v2026, %v2028
  %v2030 = vrot.slane %v2022, %v2029
  %v2032 = vunpack.c.l.s4 1966171168
  %v2033 = vunpack.c.0.s8 %v2032
  %v2034 = vlaneseq
  %v2035 = vshrl.u32 %v2034, 7
  %v2036 = vsub.s32 %v2033, %v2035
  %v2037 = vrot.slane %v2023, %v2036
  %v2038 = vcombine.high %v2030, %v2030
  %v2040 = vunpack.c.l.s4 1966171168
  %v2041 = vunpack.c.0.s8 %v2040
  %v2042 = vlaneseq
  %v2043 = vshrl.u32 %v2042, 7
  %v2044 = vsub.s32 %v2041, %v2043
  %v2045 = vrot.slane %v2009, %v2044
  %v2046 = vcombine.high %v2045, %v2045
  %v2048 = vunpack.c.l.s4 1966171168
  %v2049 = vunpack.c.0.s8 %v2048
  %v2050 = vlaneseq
  %v2051 = vshrl.u32 %v2050, 7
  %v2052 = vsub.s32 %v2049, %v2051
  %v2053 = vrot.slane %v2045, %v2052
  %v2055 = vunpack.c.l.s4 1966171168
  %v2056 = vunpack.c.0.s8 %v2055
  %v2057 = vlaneseq
  %v2058 = vshrl.u32 %v2057, 7
  %v2059 = vsub.s32 %v2056, %v2058
  %v2060 = vrot.slane %v2046, %v2059
  %v2061 = vcombine.high %v2053, %v2053
  %v2062 = vcombine.low %v2030, %v2037
  %v2063 = vcombine.low %v2038, %v2053
  %v2064 = vcombine.low %v2060, %v2061
  %v2066 = vunpack.c.l.s4 1966171168
  %v2067 = vunpack.c.0.s8 %v2066
  %v2068 = vlaneseq
  %v2069 = vshrl.u32 %v2068, 7
  %v2070 = vsub.s32 %v2067, %v2069
  %v2071 = vrot.slane %v2062, %v2070
  %v2073 = vunpack.c.l.s4 1966171168
  %v2074 = vunpack.c.0.s8 %v2073
  %v2075 = vlaneseq
  %v2076 = vshrl.u32 %v2075, 7
  %v2077 = vsub.s32 %v2074, %v2076
  %v2078 = vrot.slane %v2063, %v2077
  %v2080 = vunpack.c.l.s4 1966171168
  %v2081 = vunpack.c.0.s8 %v2080
  %v2082 = vlaneseq
  %v2083 = vshrl.u32 %v2082, 7
  %v2084 = vsub.s32 %v2081, %v2083
  %v2085 = vrot.slane %v2064, %v2084
  %v2086 = vcombine.low %v2071, %v2078
  %v2088 = vunpack.c.l.s4 1966171168
  %v2089 = vunpack.c.0.s8 %v2088
  %v2090 = vlaneseq
  %v2091 = vshrl.u32 %v2090, 7
  %v2092 = vsub.s32 %v2089, %v2091
  %v2093 = vrot.slane %v2086, %v2092
  %v2095 = vunpack.c.l.s4 1966171168
  %v2096 = vunpack.c.0.s8 %v2095
  %v2097 = vlaneseq
  %v2098 = vshrl.u32 %v2097, 7
  %v2099 = vsub.s32 %v2096, %v2098
  %v2100 = vrot.slane %v2085, %v2099
  %v2101 = vcombine.low %v2093, %v2100
  %v2103 = vpack.c.bf16 %v2101, %v2101
  %s2104 = scalar_lea.vmem %s29, 8
  %v2105 = vld [vmem:[%s2104] sm:$0xf]
  %v2106 = vld [vmem:[%s2104 + $0x4] sm:$0xf]
  %v2109 = vunpack.c.l.b16 %v2105
  %v2110 = vunpack.c.l.b16 %v2106
  %v2111 = vpack.c.b16 %v2110, %v2109
  %v2114 = vsel %vm961, %v2103, 0
  %2116 = vmatprep.subr.bf16.mxu0 0
  %2117 = vmatpush1.bf16.msra.mxu0 %v2111
  %2118 = vmatprep.subr.bf16.mxu0 0
  %2119 = vmatpush1.bf16.msra.mxu0 0
  %2120 = vmatprep.subr.bf16.mxu0 0
  %2121 = vmatpush1.bf16.msra.mxu0 0
  %2122 = vmatprep.subr.bf16.mxu0 0
  %2123 = vmatpush1.bf16.msra.mxu0 0
  %2124 = vmatprep.subr.bf16.mxu0 0
  %2125 = vmatpush1.bf16.msra.mxu0 0
  %2126 = vmatprep.subr.bf16.mxu0 0
  %2127 = vmatpush1.bf16.msra.mxu0 0
  %2128 = vmatprep.subr.bf16.mxu0 0
  %2129 = vmatpush1.bf16.msra.mxu0 0
  %2130 = vmatprep.subr.bf16.mxu0 0
  %2131 = vmatpush1.bf16.msra.mxu0 0
  %2132 = vmatprep.subr.bf16.mxu0 0
  %2133 = vmatpush1.bf16.msra.mxu0 0
  %2134 = vmatprep.subr.bf16.mxu0 0
  %2135 = vmatpush1.bf16.msra.mxu0 0
  %2136 = vmatprep.subr.bf16.mxu0 0
  %2137 = vmatpush1.bf16.msra.mxu0 0
  %2138 = vmatprep.subr.bf16.mxu0 0
  %2139 = vmatpush1.bf16.msra.mxu0 0
  %2140 = vmatprep.subr.bf16.mxu0 0
  %2141 = vmatpush1.bf16.msra.mxu0 0
  %2142 = vmatprep.subr.bf16.mxu0 0
  %2143 = vmatpush1.bf16.msra.mxu0 0
  %2144 = vmatprep.subr.bf16.mxu0 0
  %2145 = vmatpush1.bf16.msra.mxu0 0
  %2146 = vmatprep.subr.bf16.mxu0 0
  %2147 = vmatpush1.bf16.msra.mxu0 0
  %2148 = vmatprep.mubr.bf16.mxu0 0
  %2149 = vmatmul.mubr.bf16.gmra.mrb[0].mxu0 %v2114
  %v2150 = vpop.f32.mrb[0].mxu0
  %v2151 = vadd.f32 0.0, %v2150
  %v2152 = vpop.f32.mrb[0].mxu0
  %v2153 = vpop.f32.mrb[0].mxu0
  %v2154 = vpop.f32.mrb[0].mxu0
  %2155 = vdwg.mxu0
  %v2158 = vunpack.c.l.b16 %v1315
  %v2159 = vunpack.c.l.b16 %v1316
  %v2160 = vpack.c.b16 %v2159, %v2158
  %v2163 = vsel %vm961, %v1314, 0
  %2165 = vmatprep.subr.bf16.mxu0 0
  %2166 = vmatpush1.bf16.msra.mxu0 %v2160
  %2167 = vmatprep.subr.bf16.mxu0 0
  %2168 = vmatpush1.bf16.msra.mxu0 0
  %2169 = vmatprep.subr.bf16.mxu0 0
  %2170 = vmatpush1.bf16.msra.mxu0 0
  %2171 = vmatprep.subr.bf16.mxu0 0
  %2172 = vmatpush1.bf16.msra.mxu0 0
  %2173 = vmatprep.subr.bf16.mxu0 0
  %2174 = vmatpush1.bf16.msra.mxu0 0
  %2175 = vmatprep.subr.bf16.mxu0 0
  %2176 = vmatpush1.bf16.msra.mxu0 0
  %2177 = vmatprep.subr.bf16.mxu0 0
  %2178 = vmatpush1.bf16.msra.mxu0 0
  %2179 = vmatprep.subr.bf16.mxu0 0
  %2180 = vmatpush1.bf16.msra.mxu0 0
  %2181 = vmatprep.subr.bf16.mxu0 0
  %2182 = vmatpush1.bf16.msra.mxu0 0
  %2183 = vmatprep.subr.bf16.mxu0 0
  %2184 = vmatpush1.bf16.msra.mxu0 0
  %2185 = vmatprep.subr.bf16.mxu0 0
  %2186 = vmatpush1.bf16.msra.mxu0 0
  %2187 = vmatprep.subr.bf16.mxu0 0
  %2188 = vmatpush1.bf16.msra.mxu0 0
  %2189 = vmatprep.subr.bf16.mxu0 0
  %2190 = vmatpush1.bf16.msra.mxu0 0
  %2191 = vmatprep.subr.bf16.mxu0 0
  %2192 = vmatpush1.bf16.msra.mxu0 0
  %2193 = vmatprep.subr.bf16.mxu0 0
  %2194 = vmatpush1.bf16.msra.mxu0 0
  %2195 = vmatprep.subr.bf16.mxu0 0
  %2196 = vmatpush1.bf16.msra.mxu0 0
  %2197 = vmatprep.mubr.bf16.mxu0 0
  %2198 = vmatmul.mubr.bf16.gmra.mrb[0].mxu0 %v2163
  %v2199 = vpop.f32.mrb[0].mxu0
  %v2200 = vadd.f32 %v2151, %v2199
  %v2201 = vpop.f32.mrb[0].mxu0
  %v2202 = vpop.f32.mrb[0].mxu0
  %v2203 = vpop.f32.mrb[0].mxu0
  %2204 = vdwg.mxu0
  %v2205 = vld [vmem:[%s31] sm:$0x1]
  %v2207 = vlaneseq
  %v2208 = vshrl.u32 %v2207, 7
  %v2209 = vsub.s32 0, %v2208
  %v2210 = vrot.slane %v2205, %v2209
  %v2212 = vadd.f32 %v2200, %v2210
  %v2214 = vcombine.high %v2212, %v2212
  %v2216 = vunpack.c.l.s4 1966171168
  %v2217 = vunpack.c.0.s8 %v2216
  %v2218 = vlaneseq
  %v2219 = vshrl.u32 %v2218, 7
  %v2220 = vsub.s32 %v2217, %v2219
  %v2221 = vrot.slane %v2212, %v2220
  %v2223 = vunpack.c.l.s4 1966171168
  %v2224 = vunpack.c.0.s8 %v2223
  %v2225 = vlaneseq
  %v2226 = vshrl.u32 %v2225, 7
  %v2227 = vsub.s32 %v2224, %v2226
  %v2228 = vrot.slane %v2214, %v2227
  %v2229 = vcombine.high %v2221, %v2221
  %v2230 = vcombine.high %v2228, %v2228
  %v2232 = vunpack.c.l.s4 1966171168
  %v2233 = vunpack.c.0.s8 %v2232
  %v2234 = vlaneseq
  %v2235 = vshrl.u32 %v2234, 7
  %v2236 = vsub.s32 %v2233, %v2235
  %v2237 = vrot.slane %v2221, %v2236
  %v2239 = vunpack.c.l.s4 1966171168
  %v2240 = vunpack.c.0.s8 %v2239
  %v2241 = vlaneseq
  %v2242 = vshrl.u32 %v2241, 7
  %v2243 = vsub.s32 %v2240, %v2242
  %v2244 = vrot.slane %v2228, %v2243
  %v2246 = vunpack.c.l.s4 1966171168
  %v2247 = vunpack.c.0.s8 %v2246
  %v2248 = vlaneseq
  %v2249 = vshrl.u32 %v2248, 7
  %v2250 = vsub.s32 %v2247, %v2249
  %v2251 = vrot.slane %v2229, %v2250
  %v2253 = vunpack.c.l.s4 1966171168
  %v2254 = vunpack.c.0.s8 %v2253
  %v2255 = vlaneseq
  %v2256 = vshrl.u32 %v2255, 7
  %v2257 = vsub.s32 %v2254, %v2256
  %v2258 = vrot.slane %v2230, %v2257
  %v2259 = vcombine.high %v2237, %v2237
  %v2260 = vcombine.high %v2251, %v2251
  %v2267 = vadd.f32 %v470, %v2237
  %v2268 = vadd.f32 %v471, %v2251
  %v2269 = vadd.f32 %v472, %v2259
  %v2270 = vadd.f32 %v473, %v2260
  %v2271 = vadd.f32 %v474, %v2244
  %v2272 = vadd.f32 %v475, %v2258
  %v2273 = vld [vmem:[%s33] sm:$0x1]
  %v2274 = vld [vmem:[%s35] sm:$0x1]
  %v2281 = vcombine.low %v2267, %v2268
  %v2282 = vcombine.low %v2269, %v2270
  %v2283 = vcombine.low %v2271, %v2272
  %v2285 = vunpack.c.l.s4 1966171168
  %v2286 = vunpack.c.0.s8 %v2285
  %v2287 = vlaneseq
  %v2288 = vshrl.u32 %v2287, 7
  %v2289 = vsub.s32 %v2286, %v2288
  %v2290 = vrot.slane %v2281, %v2289
  %v2292 = vunpack.c.l.s4 1966171168
  %v2293 = vunpack.c.0.s8 %v2292
  %v2294 = vlaneseq
  %v2295 = vshrl.u32 %v2294, 7
  %v2296 = vsub.s32 %v2293, %v2295
  %v2297 = vrot.slane %v2282, %v2296
  %v2299 = vunpack.c.l.s4 1966171168
  %v2300 = vunpack.c.0.s8 %v2299
  %v2301 = vlaneseq
  %v2302 = vshrl.u32 %v2301, 7
  %v2303 = vsub.s32 %v2300, %v2302
  %v2304 = vrot.slane %v2283, %v2303
  %v2305 = vcombine.low %v2290, %v2297
  %v2307 = vunpack.c.l.s4 1966171168
  %v2308 = vunpack.c.0.s8 %v2307
  %v2309 = vlaneseq
  %v2310 = vshrl.u32 %v2309, 7
  %v2311 = vsub.s32 %v2308, %v2310
  %v2312 = vrot.slane %v2305, %v2311
  %v2314 = vunpack.c.l.s4 1966171168
  %v2315 = vunpack.c.0.s8 %v2314
  %v2316 = vlaneseq
  %v2317 = vshrl.u32 %v2316, 7
  %v2318 = vsub.s32 %v2315, %v2317
  %v2319 = vrot.slane %v2304, %v2318
  %v2320 = vcombine.low %v2312, %v2319
  %vm2322 = vcmask 259072
  %v2323 = vsel %vm2322, %v2320, 0.0
  %2324 = vadd.xlane.f32.xlu0 %v2323
  %v2325 = vpop.xlane.xlu0 %2324
  %v2326 = vrcp.pop 32.0
  %v2327 = vmul.f32 %v2325, %v2326
  %v2329 = vlaneseq
  %v2330 = vshrl.u32 %v2329, 7
  %v2331 = vsub.s32 0, %v2330
  %v2332 = vrot.slane %v2327, %v2331
  %v2333 = vlaneseq
  %v2334 = vshrl.u32 %v2333, 7
  %v2335 = vsub.s32 1, %v2334
  %v2336 = vrot.slane %v2327, %v2335
  %v2337 = vlaneseq
  %v2338 = vshrl.u32 %v2337, 7
  %v2339 = vsub.s32 2, %v2338
  %v2340 = vrot.slane %v2327, %v2339
  %v2341 = vlaneseq
  %v2342 = vshrl.u32 %v2341, 7
  %v2343 = vsub.s32 3, %v2342
  %v2344 = vrot.slane %v2327, %v2343
  %v2345 = vlaneseq
  %v2346 = vshrl.u32 %v2345, 7
  %v2347 = vsub.s32 4, %v2346
  %v2348 = vrot.slane %v2327, %v2347
  %v2349 = vlaneseq
  %v2350 = vshrl.u32 %v2349, 7
  %v2351 = vsub.s32 5, %v2350
  %v2352 = vrot.slane %v2327, %v2351
  %v2359 = vsub.f32 %v2267, %v2332
  %v2360 = vsub.f32 %v2268, %v2336
  %v2361 = vsub.f32 %v2269, %v2340
  %v2362 = vsub.f32 %v2270, %v2344
  %v2363 = vsub.f32 %v2271, %v2348
  %v2364 = vsub.f32 %v2272, %v2352
  %v2365 = vmul.f32 %v2359, %v2359
  %v2366 = vmul.f32 %v2360, %v2360
  %v2367 = vmul.f32 %v2361, %v2361
  %v2368 = vmul.f32 %v2362, %v2362
  %v2369 = vmul.f32 %v2363, %v2363
  %v2370 = vmul.f32 %v2364, %v2364
  %v2377 = vcombine.low %v2365, %v2366
  %v2378 = vcombine.low %v2367, %v2368
  %v2379 = vcombine.low %v2369, %v2370
  %v2381 = vunpack.c.l.s4 1966171168
  %v2382 = vunpack.c.0.s8 %v2381
  %v2383 = vlaneseq
  %v2384 = vshrl.u32 %v2383, 7
  %v2385 = vsub.s32 %v2382, %v2384
  %v2386 = vrot.slane %v2377, %v2385
  %v2388 = vunpack.c.l.s4 1966171168
  %v2389 = vunpack.c.0.s8 %v2388
  %v2390 = vlaneseq
  %v2391 = vshrl.u32 %v2390, 7
  %v2392 = vsub.s32 %v2389, %v2391
  %v2393 = vrot.slane %v2378, %v2392
  %v2395 = vunpack.c.l.s4 1966171168
  %v2396 = vunpack.c.0.s8 %v2395
  %v2397 = vlaneseq
  %v2398 = vshrl.u32 %v2397, 7
  %v2399 = vsub.s32 %v2396, %v2398
  %v2400 = vrot.slane %v2379, %v2399
  %v2401 = vcombine.low %v2386, %v2393
  %v2403 = vunpack.c.l.s4 1966171168
  %v2404 = vunpack.c.0.s8 %v2403
  %v2405 = vlaneseq
  %v2406 = vshrl.u32 %v2405, 7
  %v2407 = vsub.s32 %v2404, %v2406
  %v2408 = vrot.slane %v2401, %v2407
  %v2410 = vunpack.c.l.s4 1966171168
  %v2411 = vunpack.c.0.s8 %v2410
  %v2412 = vlaneseq
  %v2413 = vshrl.u32 %v2412, 7
  %v2414 = vsub.s32 %v2411, %v2413
  %v2415 = vrot.slane %v2400, %v2414
  %v2416 = vcombine.low %v2408, %v2415
  %v2418 = vsel %vm2322, %v2416, 0.0
  %2419 = vadd.xlane.f32.xlu0 %v2418
  %v2420 = vpop.xlane.xlu0 %2419
  %v2421 = vmul.f32 %v2420, %v2326
  %v2422 = vadd.f32 %v2421, 1e-05
  %v2423 = vrsqrt.pop %v2422
  %v2425 = vlaneseq
  %v2426 = vshrl.u32 %v2425, 7
  %v2427 = vsub.s32 0, %v2426
  %v2428 = vrot.slane %v2423, %v2427
  %v2429 = vlaneseq
  %v2430 = vshrl.u32 %v2429, 7
  %v2431 = vsub.s32 1, %v2430
  %v2432 = vrot.slane %v2423, %v2431
  %v2433 = vlaneseq
  %v2434 = vshrl.u32 %v2433, 7
  %v2435 = vsub.s32 2, %v2434
  %v2436 = vrot.slane %v2423, %v2435
  %v2437 = vlaneseq
  %v2438 = vshrl.u32 %v2437, 7
  %v2439 = vsub.s32 3, %v2438
  %v2440 = vrot.slane %v2423, %v2439
  %v2441 = vlaneseq
  %v2442 = vshrl.u32 %v2441, 7
  %v2443 = vsub.s32 4, %v2442
  %v2444 = vrot.slane %v2423, %v2443
  %v2445 = vlaneseq
  %v2446 = vshrl.u32 %v2445, 7
  %v2447 = vsub.s32 5, %v2446
  %v2448 = vrot.slane %v2423, %v2447
  %v2455 = vmul.f32 %v2359, %v2428
  %v2456 = vmul.f32 %v2360, %v2432
  %v2457 = vmul.f32 %v2361, %v2436
  %v2458 = vmul.f32 %v2362, %v2440
  %v2459 = vmul.f32 %v2363, %v2444
  %v2460 = vmul.f32 %v2364, %v2448
  %v2462 = vlaneseq
  %v2463 = vshrl.u32 %v2462, 7
  %v2464 = vsub.s32 0, %v2463
  %v2465 = vrot.slane %v2273, %v2464
  %v2466 = vcombine.high %v2465, %v2465
  %v2468 = vunpack.c.l.s4 1966171168
  %v2469 = vunpack.c.0.s8 %v2468
  %v2470 = vlaneseq
  %v2471 = vshrl.u32 %v2470, 7
  %v2472 = vsub.s32 %v2469, %v2471
  %v2473 = vrot.slane %v2465, %v2472
  %v2475 = vunpack.c.l.s4 1966171168
  %v2476 = vunpack.c.0.s8 %v2475
  %v2477 = vlaneseq
  %v2478 = vshrl.u32 %v2477, 7
  %v2479 = vsub.s32 %v2476, %v2478
  %v2480 = vrot.slane %v2466, %v2479
  %v2481 = vcombine.high %v2473, %v2473
  %v2482 = vcombine.high %v2480, %v2480
  %v2484 = vunpack.c.l.s4 1966171168
  %v2485 = vunpack.c.0.s8 %v2484
  %v2486 = vlaneseq
  %v2487 = vshrl.u32 %v2486, 7
  %v2488 = vsub.s32 %v2485, %v2487
  %v2489 = vrot.slane %v2473, %v2488
  %v2491 = vunpack.c.l.s4 1966171168
  %v2492 = vunpack.c.0.s8 %v2491
  %v2493 = vlaneseq
  %v2494 = vshrl.u32 %v2493, 7
  %v2495 = vsub.s32 %v2492, %v2494
  %v2496 = vrot.slane %v2480, %v2495
  %v2498 = vunpack.c.l.s4 1966171168
  %v2499 = vunpack.c.0.s8 %v2498
  %v2500 = vlaneseq
  %v2501 = vshrl.u32 %v2500, 7
  %v2502 = vsub.s32 %v2499, %v2501
  %v2503 = vrot.slane %v2481, %v2502
  %v2505 = vunpack.c.l.s4 1966171168
  %v2506 = vunpack.c.0.s8 %v2505
  %v2507 = vlaneseq
  %v2508 = vshrl.u32 %v2507, 7
  %v2509 = vsub.s32 %v2506, %v2508
  %v2510 = vrot.slane %v2482, %v2509
  %v2511 = vcombine.high %v2489, %v2489
  %v2512 = vcombine.high %v2503, %v2503
  %v2519 = vmul.f32 %v2455, %v2489
  %v2520 = vmul.f32 %v2456, %v2503
  %v2521 = vmul.f32 %v2457, %v2511
  %v2522 = vmul.f32 %v2458, %v2512
  %v2523 = vmul.f32 %v2459, %v2496
  %v2524 = vmul.f32 %v2460, %v2510
  %v2526 = vlaneseq
  %v2527 = vshrl.u32 %v2526, 7
  %v2528 = vsub.s32 0, %v2527
  %v2529 = vrot.slane %v2274, %v2528
  %v2530 = vcombine.high %v2529, %v2529
  %v2532 = vunpack.c.l.s4 1966171168
  %v2533 = vunpack.c.0.s8 %v2532
  %v2534 = vlaneseq
  %v2535 = vshrl.u32 %v2534, 7
  %v2536 = vsub.s32 %v2533, %v2535
  %v2537 = vrot.slane %v2529, %v2536
  %v2539 = vunpack.c.l.s4 1966171168
  %v2540 = vunpack.c.0.s8 %v2539
  %v2541 = vlaneseq
  %v2542 = vshrl.u32 %v2541, 7
  %v2543 = vsub.s32 %v2540, %v2542
  %v2544 = vrot.slane %v2530, %v2543
  %v2545 = vcombine.high %v2537, %v2537
  %v2546 = vcombine.high %v2544, %v2544
  %v2548 = vunpack.c.l.s4 1966171168
  %v2549 = vunpack.c.0.s8 %v2548
  %v2550 = vlaneseq
  %v2551 = vshrl.u32 %v2550, 7
  %v2552 = vsub.s32 %v2549, %v2551
  %v2553 = vrot.slane %v2537, %v2552
  %v2555 = vunpack.c.l.s4 1966171168
  %v2556 = vunpack.c.0.s8 %v2555
  %v2557 = vlaneseq
  %v2558 = vshrl.u32 %v2557, 7
  %v2559 = vsub.s32 %v2556, %v2558
  %v2560 = vrot.slane %v2544, %v2559
  %v2562 = vunpack.c.l.s4 1966171168
  %v2563 = vunpack.c.0.s8 %v2562
  %v2564 = vlaneseq
  %v2565 = vshrl.u32 %v2564, 7
  %v2566 = vsub.s32 %v2563, %v2565
  %v2567 = vrot.slane %v2545, %v2566
  %v2569 = vunpack.c.l.s4 1966171168
  %v2570 = vunpack.c.0.s8 %v2569
  %v2571 = vlaneseq
  %v2572 = vshrl.u32 %v2571, 7
  %v2573 = vsub.s32 %v2570, %v2572
  %v2574 = vrot.slane %v2546, %v2573
  %v2575 = vcombine.high %v2553, %v2553
  %v2576 = vcombine.high %v2567, %v2567
  %v2583 = vadd.f32 %v2519, %v2553
  %v2584 = vadd.f32 %v2520, %v2567
  %v2585 = vadd.f32 %v2521, %v2575
  %v2586 = vadd.f32 %v2522, %v2576
  %v2587 = vadd.f32 %v2523, %v2560
  %v2588 = vadd.f32 %v2524, %v2574
  %v2595 = vcombine.low %v2583, %v2584
  %v2596 = vcombine.low %v2585, %v2586
  %v2597 = vcombine.low %v2587, %v2588
  %v2599 = vunpack.c.l.s4 1966171168
  %v2600 = vunpack.c.0.s8 %v2599
  %v2601 = vlaneseq
  %v2602 = vshrl.u32 %v2601, 7
  %v2603 = vsub.s32 %v2600, %v2602
  %v2604 = vrot.slane %v2595, %v2603
  %v2606 = vunpack.c.l.s4 1966171168
  %v2607 = vunpack.c.0.s8 %v2606
  %v2608 = vlaneseq
  %v2609 = vshrl.u32 %v2608, 7
  %v2610 = vsub.s32 %v2607, %v2609
  %v2611 = vrot.slane %v2596, %v2610
  %v2613 = vunpack.c.l.s4 1966171168
  %v2614 = vunpack.c.0.s8 %v2613
  %v2615 = vlaneseq
  %v2616 = vshrl.u32 %v2615, 7
  %v2617 = vsub.s32 %v2614, %v2616
  %v2618 = vrot.slane %v2597, %v2617
  %v2619 = vcombine.low %v2604, %v2611
  %v2621 = vunpack.c.l.s4 1966171168
  %v2622 = vunpack.c.0.s8 %v2621
  %v2623 = vlaneseq
  %v2624 = vshrl.u32 %v2623, 7
  %v2625 = vsub.s32 %v2622, %v2624
  %v2626 = vrot.slane %v2619, %v2625
  %v2628 = vunpack.c.l.s4 1966171168
  %v2629 = vunpack.c.0.s8 %v2628
  %v2630 = vlaneseq
  %v2631 = vshrl.u32 %v2630, 7
  %v2632 = vsub.s32 %v2629, %v2631
  %v2633 = vrot.slane %v2618, %v2632
  %v2634 = vcombine.low %v2626, %v2633
  %v2636 = vpack.c.bf16 %v2634, %v2634
  %v2637 = vld [vmem:[%s37] sm:$0xf]
  %v2638 = vld [vmem:[%s37 + $0x4] sm:$0xf]
  %v2639 = vld [vmem:[%s37 + $0x8] sm:$0xf]
  %v2640 = vld [vmem:[%s37 + $0xc] sm:$0xf]
  %v2641 = vld [vmem:[%s39] sm:$0x1]
  %v2643 = vlaneseq
  %v2644 = vshrl.u32 %v2643, 7
  %v2645 = vsub.s32 0, %v2644
  %v2646 = vrot.slane %v2641, %v2645
  %v2652 = vunpack.c.l.b16 %v2637
  %v2653 = vunpack.c.l.b16 %v2638
  %v2654 = vunpack.c.l.b16 %v2639
  %v2655 = vunpack.c.l.b16 %v2640
  %v2656 = vpack.c.b16 %v2653, %v2652
  %v2657 = vpack.c.b16 %v2655, %v2654
  %v2661 = vsel %vm547, %v2636, 0
  %2663 = vmatprep.subr.bf16.mxu0 0
  %2664 = vmatpush1.bf16.msra.mxu0 %v2656
  %2665 = vmatprep.subr.bf16.mxu0 0
  %2666 = vmatpush1.bf16.msra.mxu0 %v2657
  %2667 = vmatprep.subr.bf16.mxu0 0
  %2668 = vmatpush1.bf16.msra.mxu0 0
  %2669 = vmatprep.subr.bf16.mxu0 0
  %2670 = vmatpush1.bf16.msra.mxu0 0
  %2671 = vmatprep.subr.bf16.mxu0 0
  %2672 = vmatpush1.bf16.msra.mxu0 0
  %2673 = vmatprep.subr.bf16.mxu0 0
  %2674 = vmatpush1.bf16.msra.mxu0 0
  %2675 = vmatprep.subr.bf16.mxu0 0
  %2676 = vmatpush1.bf16.msra.mxu0 0
  %2677 = vmatprep.subr.bf16.mxu0 0
  %2678 = vmatpush1.bf16.msra.mxu0 0
  %2679 = vmatprep.subr.bf16.mxu0 0
  %2680 = vmatpush1.bf16.msra.mxu0 0
  %2681 = vmatprep.subr.bf16.mxu0 0
  %2682 = vmatpush1.bf16.msra.mxu0 0
  %2683 = vmatprep.subr.bf16.mxu0 0
  %2684 = vmatpush1.bf16.msra.mxu0 0
  %2685 = vmatprep.subr.bf16.mxu0 0
  %2686 = vmatpush1.bf16.msra.mxu0 0
  %2687 = vmatprep.subr.bf16.mxu0 0
  %2688 = vmatpush1.bf16.msra.mxu0 0
  %2689 = vmatprep.subr.bf16.mxu0 0
  %2690 = vmatpush1.bf16.msra.mxu0 0
  %2691 = vmatprep.subr.bf16.mxu0 0
  %2692 = vmatpush1.bf16.msra.mxu0 0
  %2693 = vmatprep.subr.bf16.mxu0 0
  %2694 = vmatpush1.bf16.msra.mxu0 0
  %2695 = vmatprep.mubr.bf16.mxu0 0
  %2696 = vmatmul.mubr.bf16.gmra.mrb[0].mxu0 %v2661
  %v2697 = vpop.f32.mrb[0].mxu0
  %v2698 = vadd.f32 %v2646, %v2697
  %v2699 = vpop.f32.mrb[0].mxu0
  %v2700 = vpop.f32.mrb[0].mxu0
  %v2701 = vpop.f32.mrb[0].mxu0
  %2702 = vdwg.mxu0
  %v2703 = vmax.f32 %v2698, 0.0
  %v2704 = vpack.c.bf16 %v2703, %v2703
  %v2705 = vld [vmem:[%s41] sm:$0xf]
  %v2706 = vld [vmem:[%s41 + $0x4] sm:$0xf]
  %v2707 = vld [vmem:[%s41 + $0x8] sm:$0xf]
  %v2708 = vld [vmem:[%s41 + $0xc] sm:$0xf]
  %v2709 = vld [vmem:[%s41 + $0x10] sm:$0xf]
  %v2710 = vld [vmem:[%s41 + $0x14] sm:$0xf]
  %v2711 = vld [vmem:[%s41 + $0x18] sm:$0xf]
  %v2712 = vld [vmem:[%s41 + $0x1c] sm:$0xf]
  %v2713 = vld [vmem:[%s43] sm:$0x1]
  %v2715 = vlaneseq
  %v2716 = vshrl.u32 %v2715, 7
  %v2717 = vsub.s32 0, %v2716
  %v2718 = vrot.slane %v2713, %v2717
  %v2728 = vunpack.c.l.b16 %v2705
  %v2729 = vunpack.c.l.b16 %v2706
  %v2730 = vunpack.c.l.b16 %v2707
  %v2731 = vunpack.c.l.b16 %v2708
  %v2732 = vunpack.c.l.b16 %v2709
  %v2733 = vunpack.c.l.b16 %v2710
  %v2734 = vunpack.c.l.b16 %v2711
  %v2735 = vunpack.c.l.b16 %v2712
  %v2736 = vpack.c.b16 %v2729, %v2728
  %v2737 = vpack.c.b16 %v2731, %v2730
  %v2738 = vpack.c.b16 %v2733, %v2732
  %v2739 = vpack.c.b16 %v2735, %v2734
  %vm2744 = vcmask 523264
  %v2746 = vsel %vm2744, %v2704, 0
  %2748 = vmatprep.subr.bf16.mxu0 0
  %2749 = vmatpush1.bf16.msra.mxu0 %v2736
  %2750 = vmatprep.subr.bf16.mxu0 0
  %2751 = vmatpush1.bf16.msra.mxu0 %v2737
  %2752 = vmatprep.subr.bf16.mxu0 0
  %2753 = vmatpush1.bf16.msra.mxu0 %v2738
  %2754 = vmatprep.subr.bf16.mxu0 0
  %2755 = vmatpush1.bf16.msra.mxu0 %v2739
  %2756 = vmatprep.subr.bf16.mxu0 0
  %2757 = vmatpush1.bf16.msra.mxu0 0
  %2758 = vmatprep.subr.bf16.mxu0 0
  %2759 = vmatpush1.bf16.msra.mxu0 0
  %2760 = vmatprep.subr.bf16.mxu0 0
  %2761 = vmatpush1.bf16.msra.mxu0 0
  %2762 = vmatprep.subr.bf16.mxu0 0
  %2763 = vmatpush1.bf16.msra.mxu0 0
  %2764 = vmatprep.subr.bf16.mxu0 0
  %2765 = vmatpush1.bf16.msra.mxu0 0
  %2766 = vmatprep.subr.bf16.mxu0 0
  %2767 = vmatpush1.bf16.msra.mxu0 0
  %2768 = vmatprep.subr.bf16.mxu0 0
  %2769 = vmatpush1.bf16.msra.mxu0 0
  %2770 = vmatprep.subr.bf16.mxu0 0
  %2771 = vmatpush1.bf16.msra.mxu0 0
  %2772 = vmatprep.subr.bf16.mxu0 0
  %2773 = vmatpush1.bf16.msra.mxu0 0
  %2774 = vmatprep.subr.bf16.mxu0 0
  %2775 = vmatpush1.bf16.msra.mxu0 0
  %2776 = vmatprep.subr.bf16.mxu0 0
  %2777 = vmatpush1.bf16.msra.mxu0 0
  %2778 = vmatprep.subr.bf16.mxu0 0
  %2779 = vmatpush1.bf16.msra.mxu0 0
  %2780 = vmatprep.mubr.bf16.mxu0 0
  %2781 = vmatmul.mubr.bf16.gmra.mrb[0].mxu0 %v2746
  %v2782 = vpop.f32.mrb[0].mxu0
  %v2783 = vadd.f32 %v2718, %v2782
  %v2784 = vpop.f32.mrb[0].mxu0
  %v2785 = vpop.f32.mrb[0].mxu0
  %v2786 = vpop.f32.mrb[0].mxu0
  %2787 = vdwg.mxu0
  %v2789 = vcombine.high %v2783, %v2783
  %v2791 = vunpack.c.l.s4 1966171168
  %v2792 = vunpack.c.0.s8 %v2791
  %v2793 = vlaneseq
  %v2794 = vshrl.u32 %v2793, 7
  %v2795 = vsub.s32 %v2792, %v2794
  %v2796 = vrot.slane %v2783, %v2795
  %v2798 = vunpack.c.l.s4 1966171168
  %v2799 = vunpack.c.0.s8 %v2798
  %v2800 = vlaneseq
  %v2801 = vshrl.u32 %v2800, 7
  %v2802 = vsub.s32 %v2799, %v2801
  %v2803 = vrot.slane %v2789, %v2802
  %v2804 = vcombine.high %v2796, %v2796
  %v2805 = vcombine.high %v2803, %v2803
  %v2807 = vunpack.c.l.s4 1966171168
  %v2808 = vunpack.c.0.s8 %v2807
  %v2809 = vlaneseq
  %v2810 = vshrl.u32 %v2809, 7
  %v2811 = vsub.s32 %v2808, %v2810
  %v2812 = vrot.slane %v2796, %v2811
  %v2814 = vunpack.c.l.s4 1966171168
  %v2815 = vunpack.c.0.s8 %v2814
  %v2816 = vlaneseq
  %v2817 = vshrl.u32 %v2816, 7
  %v2818 = vsub.s32 %v2815, %v2817
  %v2819 = vrot.slane %v2803, %v2818
  %v2821 = vunpack.c.l.s4 1966171168
  %v2822 = vunpack.c.0.s8 %v2821
  %v2823 = vlaneseq
  %v2824 = vshrl.u32 %v2823, 7
  %v2825 = vsub.s32 %v2822, %v2824
  %v2826 = vrot.slane %v2804, %v2825
  %v2828 = vunpack.c.l.s4 1966171168
  %v2829 = vunpack.c.0.s8 %v2828
  %v2830 = vlaneseq
  %v2831 = vshrl.u32 %v2830, 7
  %v2832 = vsub.s32 %v2829, %v2831
  %v2833 = vrot.slane %v2805, %v2832
  %v2834 = vcombine.high %v2812, %v2812
  %v2835 = vcombine.high %v2826, %v2826
  %v2842 = vadd.f32 %v2583, %v2812
  %v2843 = vadd.f32 %v2584, %v2826
  %v2844 = vadd.f32 %v2585, %v2834
  %v2845 = vadd.f32 %v2586, %v2835
  %v2846 = vadd.f32 %v2587, %v2819
  %v2847 = vadd.f32 %v2588, %v2833
  %v2848 = vld [vmem:[%s45] sm:$0x1]
  %v2849 = vld [vmem:[%s47] sm:$0x1]
  %v2856 = vcombine.low %v2842, %v2843
  %v2857 = vcombine.low %v2844, %v2845
  %v2858 = vcombine.low %v2846, %v2847
  %v2860 = vunpack.c.l.s4 1966171168
  %v2861 = vunpack.c.0.s8 %v2860
  %v2862 = vlaneseq
  %v2863 = vshrl.u32 %v2862, 7
  %v2864 = vsub.s32 %v2861, %v2863
  %v2865 = vrot.slane %v2856, %v2864
  %v2867 = vunpack.c.l.s4 1966171168
  %v2868 = vunpack.c.0.s8 %v2867
  %v2869 = vlaneseq
  %v2870 = vshrl.u32 %v2869, 7
  %v2871 = vsub.s32 %v2868, %v2870
  %v2872 = vrot.slane %v2857, %v2871
  %v2874 = vunpack.c.l.s4 1966171168
  %v2875 = vunpack.c.0.s8 %v2874
  %v2876 = vlaneseq
  %v2877 = vshrl.u32 %v2876, 7
  %v2878 = vsub.s32 %v2875, %v2877
  %v2879 = vrot.slane %v2858, %v2878
  %v2880 = vcombine.low %v2865, %v2872
  %v2882 = vunpack.c.l.s4 1966171168
  %v2883 = vunpack.c.0.s8 %v2882
  %v2884 = vlaneseq
  %v2885 = vshrl.u32 %v2884, 7
  %v2886 = vsub.s32 %v2883, %v2885
  %v2887 = vrot.slane %v2880, %v2886
  %v2889 = vunpack.c.l.s4 1966171168
  %v2890 = vunpack.c.0.s8 %v2889
  %v2891 = vlaneseq
  %v2892 = vshrl.u32 %v2891, 7
  %v2893 = vsub.s32 %v2890, %v2892
  %v2894 = vrot.slane %v2879, %v2893
  %v2895 = vcombine.low %v2887, %v2894
  %v2897 = vsel %vm2322, %v2895, 0.0
  %2898 = vadd.xlane.f32.xlu0 %v2897
  %v2899 = vpop.xlane.xlu0 %2898
  %v2900 = vmul.f32 %v2899, %v2326
  %v2902 = vlaneseq
  %v2903 = vshrl.u32 %v2902, 7
  %v2904 = vsub.s32 0, %v2903
  %v2905 = vrot.slane %v2900, %v2904
  %v2906 = vlaneseq
  %v2907 = vshrl.u32 %v2906, 7
  %v2908 = vsub.s32 1, %v2907
  %v2909 = vrot.slane %v2900, %v2908
  %v2910 = vlaneseq
  %v2911 = vshrl.u32 %v2910, 7
  %v2912 = vsub.s32 2, %v2911
  %v2913 = vrot.slane %v2900, %v2912
  %v2914 = vlaneseq
  %v2915 = vshrl.u32 %v2914, 7
  %v2916 = vsub.s32 3, %v2915
  %v2917 = vrot.slane %v2900, %v2916
  %v2918 = vlaneseq
  %v2919 = vshrl.u32 %v2918, 7
  %v2920 = vsub.s32 4, %v2919
  %v2921 = vrot.slane %v2900, %v2920
  %v2922 = vlaneseq
  %v2923 = vshrl.u32 %v2922, 7
  %v2924 = vsub.s32 5, %v2923
  %v2925 = vrot.slane %v2900, %v2924
  %v2932 = vsub.f32 %v2842, %v2905
  %v2933 = vsub.f32 %v2843, %v2909
  %v2934 = vsub.f32 %v2844, %v2913
  %v2935 = vsub.f32 %v2845, %v2917
  %v2936 = vsub.f32 %v2846, %v2921
  %v2937 = vsub.f32 %v2847, %v2925
  %v2938 = vmul.f32 %v2932, %v2932
  %v2939 = vmul.f32 %v2933, %v2933
  %v2940 = vmul.f32 %v2934, %v2934
  %v2941 = vmul.f32 %v2935, %v2935
  %v2942 = vmul.f32 %v2936, %v2936
  %v2943 = vmul.f32 %v2937, %v2937
  %v2950 = vcombine.low %v2938, %v2939
  %v2951 = vcombine.low %v2940, %v2941
  %v2952 = vcombine.low %v2942, %v2943
  %v2954 = vunpack.c.l.s4 1966171168
  %v2955 = vunpack.c.0.s8 %v2954
  %v2956 = vlaneseq
  %v2957 = vshrl.u32 %v2956, 7
  %v2958 = vsub.s32 %v2955, %v2957
  %v2959 = vrot.slane %v2950, %v2958
  %v2961 = vunpack.c.l.s4 1966171168
  %v2962 = vunpack.c.0.s8 %v2961
  %v2963 = vlaneseq
  %v2964 = vshrl.u32 %v2963, 7
  %v2965 = vsub.s32 %v2962, %v2964
  %v2966 = vrot.slane %v2951, %v2965
  %v2968 = vunpack.c.l.s4 1966171168
  %v2969 = vunpack.c.0.s8 %v2968
  %v2970 = vlaneseq
  %v2971 = vshrl.u32 %v2970, 7
  %v2972 = vsub.s32 %v2969, %v2971
  %v2973 = vrot.slane %v2952, %v2972
  %v2974 = vcombine.low %v2959, %v2966
  %v2976 = vunpack.c.l.s4 1966171168
  %v2977 = vunpack.c.0.s8 %v2976
  %v2978 = vlaneseq
  %v2979 = vshrl.u32 %v2978, 7
  %v2980 = vsub.s32 %v2977, %v2979
  %v2981 = vrot.slane %v2974, %v2980
  %v2983 = vunpack.c.l.s4 1966171168
  %v2984 = vunpack.c.0.s8 %v2983
  %v2985 = vlaneseq
  %v2986 = vshrl.u32 %v2985, 7
  %v2987 = vsub.s32 %v2984, %v2986
  %v2988 = vrot.slane %v2973, %v2987
  %v2989 = vcombine.low %v2981, %v2988
  %v2991 = vsel %vm2322, %v2989, 0.0
  %2992 = vadd.xlane.f32.xlu0 %v2991
  %v2993 = vpop.xlane.xlu0 %2992
  %v2994 = vmul.f32 %v2993, %v2326
  %v2995 = vadd.f32 %v2994, 1e-05
  %v2996 = vrsqrt.pop %v2995
  %v2998 = vlaneseq
  %v2999 = vshrl.u32 %v2998, 7
  %v3000 = vsub.s32 0, %v2999
  %v3001 = vrot.slane %v2996, %v3000
  %v3002 = vlaneseq
  %v3003 = vshrl.u32 %v3002, 7
  %v3004 = vsub.s32 1, %v3003
  %v3005 = vrot.slane %v2996, %v3004
  %v3006 = vlaneseq
  %v3007 = vshrl.u32 %v3006, 7
  %v3008 = vsub.s32 2, %v3007
  %v3009 = vrot.slane %v2996, %v3008
  %v3010 = vlaneseq
  %v3011 = vshrl.u32 %v3010, 7
  %v3012 = vsub.s32 3, %v3011
  %v3013 = vrot.slane %v2996, %v3012
  %v3014 = vlaneseq
  %v3015 = vshrl.u32 %v3014, 7
  %v3016 = vsub.s32 4, %v3015
  %v3017 = vrot.slane %v2996, %v3016
  %v3018 = vlaneseq
  %v3019 = vshrl.u32 %v3018, 7
  %v3020 = vsub.s32 5, %v3019
  %v3021 = vrot.slane %v2996, %v3020
  %v3028 = vmul.f32 %v2932, %v3001
  %v3029 = vmul.f32 %v2933, %v3005
  %v3030 = vmul.f32 %v2934, %v3009
  %v3031 = vmul.f32 %v2935, %v3013
  %v3032 = vmul.f32 %v2936, %v3017
  %v3033 = vmul.f32 %v2937, %v3021
  %v3035 = vlaneseq
  %v3036 = vshrl.u32 %v3035, 7
  %v3037 = vsub.s32 0, %v3036
  %v3038 = vrot.slane %v2848, %v3037
  %v3039 = vcombine.high %v3038, %v3038
  %v3041 = vunpack.c.l.s4 1966171168
  %v3042 = vunpack.c.0.s8 %v3041
  %v3043 = vlaneseq
  %v3044 = vshrl.u32 %v3043, 7
  %v3045 = vsub.s32 %v3042, %v3044
  %v3046 = vrot.slane %v3038, %v3045
  %v3048 = vunpack.c.l.s4 1966171168
  %v3049 = vunpack.c.0.s8 %v3048
  %v3050 = vlaneseq
  %v3051 = vshrl.u32 %v3050, 7
  %v3052 = vsub.s32 %v3049, %v3051
  %v3053 = vrot.slane %v3039, %v3052
  %v3054 = vcombine.high %v3046, %v3046
  %v3055 = vcombine.high %v3053, %v3053
  %v3057 = vunpack.c.l.s4 1966171168
  %v3058 = vunpack.c.0.s8 %v3057
  %v3059 = vlaneseq
  %v3060 = vshrl.u32 %v3059, 7
  %v3061 = vsub.s32 %v3058, %v3060
  %v3062 = vrot.slane %v3046, %v3061
  %v3064 = vunpack.c.l.s4 1966171168
  %v3065 = vunpack.c.0.s8 %v3064
  %v3066 = vlaneseq
  %v3067 = vshrl.u32 %v3066, 7
  %v3068 = vsub.s32 %v3065, %v3067
  %v3069 = vrot.slane %v3053, %v3068
  %v3071 = vunpack.c.l.s4 1966171168
  %v3072 = vunpack.c.0.s8 %v3071
  %v3073 = vlaneseq
  %v3074 = vshrl.u32 %v3073, 7
  %v3075 = vsub.s32 %v3072, %v3074
  %v3076 = vrot.slane %v3054, %v3075
  %v3078 = vunpack.c.l.s4 1966171168
  %v3079 = vunpack.c.0.s8 %v3078
  %v3080 = vlaneseq
  %v3081 = vshrl.u32 %v3080, 7
  %v3082 = vsub.s32 %v3079, %v3081
  %v3083 = vrot.slane %v3055, %v3082
  %v3084 = vcombine.high %v3062, %v3062
  %v3085 = vcombine.high %v3076, %v3076
  %v3092 = vmul.f32 %v3028, %v3062
  %v3093 = vmul.f32 %v3029, %v3076
  %v3094 = vmul.f32 %v3030, %v3084
  %v3095 = vmul.f32 %v3031, %v3085
  %v3096 = vmul.f32 %v3032, %v3069
  %v3097 = vmul.f32 %v3033, %v3083
  %v3099 = vlaneseq
  %v3100 = vshrl.u32 %v3099, 7
  %v3101 = vsub.s32 0, %v3100
  %v3102 = vrot.slane %v2849, %v3101
  %v3103 = vcombine.high %v3102, %v3102
  %v3105 = vunpack.c.l.s4 1966171168
  %v3106 = vunpack.c.0.s8 %v3105
  %v3107 = vlaneseq
  %v3108 = vshrl.u32 %v3107, 7
  %v3109 = vsub.s32 %v3106, %v3108
  %v3110 = vrot.slane %v3102, %v3109
  %v3112 = vunpack.c.l.s4 1966171168
  %v3113 = vunpack.c.0.s8 %v3112
  %v3114 = vlaneseq
  %v3115 = vshrl.u32 %v3114, 7
  %v3116 = vsub.s32 %v3113, %v3115
  %v3117 = vrot.slane %v3103, %v3116
  %v3118 = vcombine.high %v3110, %v3110
  %v3119 = vcombine.high %v3117, %v3117
  %v3121 = vunpack.c.l.s4 1966171168
  %v3122 = vunpack.c.0.s8 %v3121
  %v3123 = vlaneseq
  %v3124 = vshrl.u32 %v3123, 7
  %v3125 = vsub.s32 %v3122, %v3124
  %v3126 = vrot.slane %v3110, %v3125
  %v3128 = vunpack.c.l.s4 1966171168
  %v3129 = vunpack.c.0.s8 %v3128
  %v3130 = vlaneseq
  %v3131 = vshrl.u32 %v3130, 7
  %v3132 = vsub.s32 %v3129, %v3131
  %v3133 = vrot.slane %v3117, %v3132
  %v3135 = vunpack.c.l.s4 1966171168
  %v3136 = vunpack.c.0.s8 %v3135
  %v3137 = vlaneseq
  %v3138 = vshrl.u32 %v3137, 7
  %v3139 = vsub.s32 %v3136, %v3138
  %v3140 = vrot.slane %v3118, %v3139
  %v3142 = vunpack.c.l.s4 1966171168
  %v3143 = vunpack.c.0.s8 %v3142
  %v3144 = vlaneseq
  %v3145 = vshrl.u32 %v3144, 7
  %v3146 = vsub.s32 %v3143, %v3145
  %v3147 = vrot.slane %v3119, %v3146
  %v3148 = vcombine.high %v3126, %v3126
  %v3149 = vcombine.high %v3140, %v3140
  %v3156 = vadd.f32 %v3092, %v3126
  %v3157 = vadd.f32 %v3093, %v3140
  %v3158 = vadd.f32 %v3094, %v3148
  %v3159 = vadd.f32 %v3095, %v3149
  %v3160 = vadd.f32 %v3096, %v3133
  %v3161 = vadd.f32 %v3097, %v3147
  %v3162 = vld [vmem:[%s7] sm:$0xff]
  %v3163 = vadd.f32 %v382, %v3162
  %v3164 = vadd.f32 %v385, %v3162
  %v3165 = vpack.c.bf16 %v3164, %v3163
  %v3166 = vld [vmem:[%s49] sm:$0xf]
  %v3167 = vld [vmem:[%s49 + $0x4] sm:$0xf]
  %v3168 = vld [vmem:[%s49 + $0x8] sm:$0xf]
  %v3169 = vld [vmem:[%s49 + $0xc] sm:$0xf]
  %v3170 = vld [vmem:[%s55] sm:$0x1]
  %v3172 = vlaneseq
  %v3173 = vshrl.u32 %v3172, 7
  %v3174 = vsub.s32 0, %v3173
  %v3175 = vrot.slane %v3170, %v3174
  %v3181 = vunpack.c.l.b16 %v3166
  %v3182 = vunpack.c.l.b16 %v3167
  %v3183 = vunpack.c.l.b16 %v3168
  %v3184 = vunpack.c.l.b16 %v3169
  %v3185 = vpack.c.b16 %v3182, %v3181
  %v3186 = vpack.c.b16 %v3184, %v3183
  %v3190 = vsel %vm547, %v3165, 0
  %3192 = vmatprep.subr.bf16.mxu0 0
  %3193 = vmatpush1.bf16.msra.mxu0 %v3185
  %3194 = vmatprep.subr.bf16.mxu0 0
  %3195 = vmatpush1.bf16.msra.mxu0 %v3186
  %3196 = vmatprep.subr.bf16.mxu0 0
  %3197 = vmatpush1.bf16.msra.mxu0 0
  %3198 = vmatprep.subr.bf16.mxu0 0
  %3199 = vmatpush1.bf16.msra.mxu0 0
  %3200 = vmatprep.subr.bf16.mxu0 0
  %3201 = vmatpush1.bf16.msra.mxu0 0
  %3202 = vmatprep.subr.bf16.mxu0 0
  %3203 = vmatpush1.bf16.msra.mxu0 0
  %3204 = vmatprep.subr.bf16.mxu0 0
  %3205 = vmatpush1.bf16.msra.mxu0 0
  %3206 = vmatprep.subr.bf16.mxu0 0
  %3207 = vmatpush1.bf16.msra.mxu0 0
  %3208 = vmatprep.subr.bf16.mxu0 0
  %3209 = vmatpush1.bf16.msra.mxu0 0
  %3210 = vmatprep.subr.bf16.mxu0 0
  %3211 = vmatpush1.bf16.msra.mxu0 0
  %3212 = vmatprep.subr.bf16.mxu0 0
  %3213 = vmatpush1.bf16.msra.mxu0 0
  %3214 = vmatprep.subr.bf16.mxu0 0
  %3215 = vmatpush1.bf16.msra.mxu0 0
  %3216 = vmatprep.subr.bf16.mxu0 0
  %3217 = vmatpush1.bf16.msra.mxu0 0
  %3218 = vmatprep.subr.bf16.mxu0 0
  %3219 = vmatpush1.bf16.msra.mxu0 0
  %3220 = vmatprep.subr.bf16.mxu0 0
  %3221 = vmatpush1.bf16.msra.mxu0 0
  %3222 = vmatprep.subr.bf16.mxu0 0
  %3223 = vmatpush1.bf16.msra.mxu0 0
  %3224 = vmatprep.mubr.bf16.mxu0 0
  %3225 = vmatmul.mubr.bf16.gmra.mrb[0].mxu0 %v3190
  %v3226 = vpop.f32.mrb[0].mxu0
  %v3227 = vadd.f32 %v3175, %v3226
  %v3228 = vpop.f32.mrb[0].mxu0
  %v3229 = vpop.f32.mrb[0].mxu0
  %v3230 = vadd.f32 %v3175, %v3229
  %v3231 = vpop.f32.mrb[0].mxu0
  %3232 = vdwg.mxu0
  %v3233 = vld [vmem:[%s51] sm:$0xf]
  %v3234 = vld [vmem:[%s51 + $0x4] sm:$0xf]
  %v3235 = vld [vmem:[%s51 + $0x8] sm:$0xf]
  %v3236 = vld [vmem:[%s51 + $0xc] sm:$0xf]
  %v3237 = vld [vmem:[%s57] sm:$0x1]
  %v3239 = vlaneseq
  %v3240 = vshrl.u32 %v3239, 7
  %v3241 = vsub.s32 0, %v3240
  %v3242 = vrot.slane %v3237, %v3241
  %v3248 = vunpack.c.l.b16 %v3233
  %v3249 = vunpack.c.l.b16 %v3234
  %v3250 = vunpack.c.l.b16 %v3235
  %v3251 = vunpack.c.l.b16 %v3236
  %v3252 = vpack.c.b16 %v3249, %v3248
  %v3253 = vpack.c.b16 %v3251, %v3250
  %3256 = vmatprep.subr.bf16.mxu0 0
  %3257 = vmatpush1.bf16.msra.mxu0 %v3252
  %3258 = vmatprep.subr.bf16.mxu0 0
  %3259 = vmatpush1.bf16.msra.mxu0 %v3253
  %3260 = vmatprep.subr.bf16.mxu0 0
  %3261 = vmatpush1.bf16.msra.mxu0 0
  %3262 = vmatprep.subr.bf16.mxu0 0
  %3263 = vmatpush1.bf16.msra.mxu0 0
  %3264 = vmatprep.subr.bf16.mxu0 0
  %3265 = vmatpush1.bf16.msra.mxu0 0
  %3266 = vmatprep.subr.bf16.mxu0 0
  %3267 = vmatpush1.bf16.msra.mxu0 0
  %3268 = vmatprep.subr.bf16.mxu0 0
  %3269 = vmatpush1.bf16.msra.mxu0 0
  %3270 = vmatprep.subr.bf16.mxu0 0
  %3271 = vmatpush1.bf16.msra.mxu0 0
  %3272 = vmatprep.subr.bf16.mxu0 0
  %3273 = vmatpush1.bf16.msra.mxu0 0
  %3274 = vmatprep.subr.bf16.mxu0 0
  %3275 = vmatpush1.bf16.msra.mxu0 0
  %3276 = vmatprep.subr.bf16.mxu0 0
  %3277 = vmatpush1.bf16.msra.mxu0 0
  %3278 = vmatprep.subr.bf16.mxu0 0
  %3279 = vmatpush1.bf16.msra.mxu0 0
  %3280 = vmatprep.subr.bf16.mxu0 0
  %3281 = vmatpush1.bf16.msra.mxu0 0
  %3282 = vmatprep.subr.bf16.mxu0 0
  %3283 = vmatpush1.bf16.msra.mxu0 0
  %3284 = vmatprep.subr.bf16.mxu0 0
  %3285 = vmatpush1.bf16.msra.mxu0 0
  %3286 = vmatprep.subr.bf16.mxu0 0
  %3287 = vmatpush1.bf16.msra.mxu0 0
  %3288 = vmatprep.mubr.bf16.mxu0 0
  %3289 = vmatmul.mubr.bf16.gmra.mrb[0].mxu0 %v3190
  %v3290 = vpop.f32.mrb[0].mxu0
  %v3291 = vadd.f32 %v3242, %v3290
  %v3292 = vpop.f32.mrb[0].mxu0
  %v3293 = vpop.f32.mrb[0].mxu0
  %v3294 = vadd.f32 %v3242, %v3293
  %v3295 = vpop.f32.mrb[0].mxu0
  %3296 = vdwg.mxu0
  %v3297 = vld [vmem:[%s53] sm:$0xf]
  %v3298 = vld [vmem:[%s53 + $0x4] sm:$0xf]
  %v3299 = vld [vmem:[%s53 + $0x8] sm:$0xf]
  %v3300 = vld [vmem:[%s53 + $0xc] sm:$0xf]
  %v3301 = vld [vmem:[%s59] sm:$0x1]
  %v3303 = vlaneseq
  %v3304 = vshrl.u32 %v3303, 7
  %v3305 = vsub.s32 0, %v3304
  %v3306 = vrot.slane %v3301, %v3305
  %v3312 = vunpack.c.l.b16 %v3297
  %v3313 = vunpack.c.l.b16 %v3298
  %v3314 = vunpack.c.l.b16 %v3299
  %v3315 = vunpack.c.l.b16 %v3300
  %v3316 = vpack.c.b16 %v3313, %v3312
  %v3317 = vpack.c.b16 %v3315, %v3314
  %3320 = vmatprep.subr.bf16.mxu0 0
  %3321 = vmatpush1.bf16.msra.mxu0 %v3316
  %3322 = vmatprep.subr.bf16.mxu0 0
  %3323 = vmatpush1.bf16.msra.mxu0 %v3317
  %3324 = vmatprep.subr.bf16.mxu0 0
  %3325 = vmatpush1.bf16.msra.mxu0 0
  %3326 = vmatprep.subr.bf16.mxu0 0
  %3327 = vmatpush1.bf16.msra.mxu0 0
  %3328 = vmatprep.subr.bf16.mxu0 0
  %3329 = vmatpush1.bf16.msra.mxu0 0
  %3330 = vmatprep.subr.bf16.mxu0 0
  %3331 = vmatpush1.bf16.msra.mxu0 0
  %3332 = vmatprep.subr.bf16.mxu0 0
  %3333 = vmatpush1.bf16.msra.mxu0 0
  %3334 = vmatprep.subr.bf16.mxu0 0
  %3335 = vmatpush1.bf16.msra.mxu0 0
  %3336 = vmatprep.subr.bf16.mxu0 0
  %3337 = vmatpush1.bf16.msra.mxu0 0
  %3338 = vmatprep.subr.bf16.mxu0 0
  %3339 = vmatpush1.bf16.msra.mxu0 0
  %3340 = vmatprep.subr.bf16.mxu0 0
  %3341 = vmatpush1.bf16.msra.mxu0 0
  %3342 = vmatprep.subr.bf16.mxu0 0
  %3343 = vmatpush1.bf16.msra.mxu0 0
  %3344 = vmatprep.subr.bf16.mxu0 0
  %3345 = vmatpush1.bf16.msra.mxu0 0
  %3346 = vmatprep.subr.bf16.mxu0 0
  %3347 = vmatpush1.bf16.msra.mxu0 0
  %3348 = vmatprep.subr.bf16.mxu0 0
  %3349 = vmatpush1.bf16.msra.mxu0 0
  %3350 = vmatprep.subr.bf16.mxu0 0
  %3351 = vmatpush1.bf16.msra.mxu0 0
  %3352 = vmatprep.mubr.bf16.mxu0 0
  %3353 = vmatmul.mubr.bf16.gmra.mrb[0].mxu0 %v3190
  %v3354 = vpop.f32.mrb[0].mxu0
  %v3355 = vadd.f32 %v3306, %v3354
  %v3356 = vpop.f32.mrb[0].mxu0
  %v3357 = vpop.f32.mrb[0].mxu0
  %v3358 = vadd.f32 %v3306, %v3357
  %v3359 = vpop.f32.mrb[0].mxu0
  %3360 = vdwg.mxu0
  %v3361 = vpack.c.bf16 %v3227, %v3227
  %v3362 = vpack.c.bf16 %v3230, %v3230
  %v3363 = vpack.c.bf16 %v3291, %v3291
  %v3364 = vpack.c.bf16 %v3294, %v3294
  %v3366 = vsel %vm961, %v3361, 0
  %v3369 = vsel %vm961, %v3363, 0
  %3371 = vmatprep.subr.bf16.mxu0 0
  %3372 = vmatpush1.bf16.xpose.msra.mxu0 %v3369
  %3373 = vmatprep.subr.bf16.mxu0 0
  %3374 = vmatpush1.bf16.xpose.msra.mxu0 0
  %3375 = vmatprep.subr.bf16.mxu0 0
  %3376 = vmatpush1.bf16.xpose.msra.mxu0 0
  %3377 = vmatprep.subr.bf16.mxu0 0
  %3378 = vmatpush1.bf16.xpose.msra.mxu0 0
  %3379 = vmatprep.subr.bf16.mxu0 0
  %3380 = vmatpush1.bf16.xpose.msra.mxu0 0
  %3381 = vmatprep.subr.bf16.mxu0 0
  %3382 = vmatpush1.bf16.xpose.msra.mxu0 0
  %3383 = vmatprep.subr.bf16.mxu0 0
  %3384 = vmatpush1.bf16.xpose.msra.mxu0 0
  %3385 = vmatprep.subr.bf16.mxu0 0
  %3386 = vmatpush1.bf16.xpose.msra.mxu0 0
  %3387 = vmatprep.subr.bf16.mxu0 0
  %3388 = vmatpush1.bf16.xpose.msra.mxu0 0
  %3389 = vmatprep.subr.bf16.mxu0 0
  %3390 = vmatpush1.bf16.xpose.msra.mxu0 0
  %3391 = vmatprep.subr.bf16.mxu0 0
  %3392 = vmatpush1.bf16.xpose.msra.mxu0 0
  %3393 = vmatprep.subr.bf16.mxu0 0
  %3394 = vmatpush1.bf16.xpose.msra.mxu0 0
  %3395 = vmatprep.subr.bf16.mxu0 0
  %3396 = vmatpush1.bf16.xpose.msra.mxu0 0
  %3397 = vmatprep.subr.bf16.mxu0 0
  %3398 = vmatpush1.bf16.xpose.msra.mxu0 0
  %3399 = vmatprep.subr.bf16.mxu0 0
  %3400 = vmatpush1.bf16.xpose.msra.mxu0 0
  %3401 = vmatprep.subr.bf16.mxu0 0
  %3402 = vmatpush1.bf16.xpose.msra.mxu0 0
  %3403 = vmatprep.mubr.bf16.mxu0 0
  %3404 = vmatmul.mubr.bf16.gmra.mrb[0].mxu0 %v3366
  %v3405 = vpop.f32.mrb[0].mxu0
  %v3406 = vadd.f32 0.0, %v3405
  %v3407 = vpop.f32.mrb[0].mxu0
  %v3408 = vpop.f32.mrb[0].mxu0
  %v3409 = vpop.f32.mrb[0].mxu0
  %3410 = vdwg.mxu0
  %v3412 = vsel %vm961, %v3362, 0
  %v3415 = vsel %vm961, %v3364, 0
  %3417 = vmatprep.subr.bf16.mxu0 0
  %3418 = vmatpush1.bf16.xpose.msra.mxu0 %v3415
  %3419 = vmatprep.subr.bf16.mxu0 0
  %3420 = vmatpush1.bf16.xpose.msra.mxu0 0
  %3421 = vmatprep.subr.bf16.mxu0 0
  %3422 = vmatpush1.bf16.xpose.msra.mxu0 0
  %3423 = vmatprep.subr.bf16.mxu0 0
  %3424 = vmatpush1.bf16.xpose.msra.mxu0 0
  %3425 = vmatprep.subr.bf16.mxu0 0
  %3426 = vmatpush1.bf16.xpose.msra.mxu0 0
  %3427 = vmatprep.subr.bf16.mxu0 0
  %3428 = vmatpush1.bf16.xpose.msra.mxu0 0
  %3429 = vmatprep.subr.bf16.mxu0 0
  %3430 = vmatpush1.bf16.xpose.msra.mxu0 0
  %3431 = vmatprep.subr.bf16.mxu0 0
  %3432 = vmatpush1.bf16.xpose.msra.mxu0 0
  %3433 = vmatprep.subr.bf16.mxu0 0
  %3434 = vmatpush1.bf16.xpose.msra.mxu0 0
  %3435 = vmatprep.subr.bf16.mxu0 0
  %3436 = vmatpush1.bf16.xpose.msra.mxu0 0
  %3437 = vmatprep.subr.bf16.mxu0 0
  %3438 = vmatpush1.bf16.xpose.msra.mxu0 0
  %3439 = vmatprep.subr.bf16.mxu0 0
  %3440 = vmatpush1.bf16.xpose.msra.mxu0 0
  %3441 = vmatprep.subr.bf16.mxu0 0
  %3442 = vmatpush1.bf16.xpose.msra.mxu0 0
  %3443 = vmatprep.subr.bf16.mxu0 0
  %3444 = vmatpush1.bf16.xpose.msra.mxu0 0
  %3445 = vmatprep.subr.bf16.mxu0 0
  %3446 = vmatpush1.bf16.xpose.msra.mxu0 0
  %3447 = vmatprep.subr.bf16.mxu0 0
  %3448 = vmatpush1.bf16.xpose.msra.mxu0 0
  %3449 = vmatprep.mubr.bf16.mxu0 0
  %3450 = vmatmul.mubr.bf16.gmra.mrb[0].mxu0 %v3412
  %v3451 = vpop.f32.mrb[0].mxu0
  %v3452 = vadd.f32 0.0, %v3451
  %v3453 = vpop.f32.mrb[0].mxu0
  %v3454 = vpop.f32.mrb[0].mxu0
  %v3455 = vpop.f32.mrb[0].mxu0
  %3456 = vdwg.mxu0
  %vm3457 = vcmask 64512
  %v3458 = vsel %vm3457, %v3406, -inf
  %3459 = vmax.xlane.f32.xlu0 %v3458
  %v3460 = vpop.xlane.xlu0 %3459
  %v3461 = vsel %vm3457, %v3452, -inf
  %3462 = vmax.xlane.f32.xlu0 %v3461
  %v3463 = vpop.xlane.xlu0 %3462
  %v3464 = vsub.f32 %v3406, %v3460
  %v3465 = vsub.f32 %v3452, %v3463
  %v3466 = vmul.f32 %v3464, 1.442695
  %v3467 = vpow.pop %v3466
  %v3468 = vmul.f32 %v3465, 1.442695
  %v3469 = vpow.pop %v3468
  %v3470 = vsel %vm3457, %v3467, 0.0
  %3471 = vadd.xlane.f32.xlu0 %v3470
  %v3472 = vpop.xlane.xlu0 %3471
  %v3473 = vsel %vm3457, %v3469, 0.0
  %3474 = vadd.xlane.f32.xlu0 %v3473
  %v3475 = vpop.xlane.xlu0 %3474
  %v3476 = vrcp.pop %v3472
  %v3477 = vrcp.pop %v3475
  %v3478 = vmul.f32 %v3467, %v3476
  %v3479 = vmul.f32 %v3469, %v3477
  %v3480 = vpack.c.bf16 %v3478, %v3478
  %v3481 = vpack.c.bf16 %v3479, %v3479
  %v3482 = vpack.c.bf16 %v3355, %v3355
  %v3483 = vpack.c.bf16 %v3358, %v3358
  %v3485 = vsel %vm3457, %v3480, 0
  %vm3487 = vcmask 1043456
  %v3489 = vsel %vm3487, %v3482, 0
  %3491 = vmatprep.subr.bf16.mxu0 0
  %3492 = vmatpush1.bf16.msra.mxu0 %v3489
  %3493 = vmatprep.subr.bf16.mxu0 0
  %3494 = vmatpush1.bf16.msra.mxu0 0
  %3495 = vmatprep.subr.bf16.mxu0 0
  %3496 = vmatpush1.bf16.msra.mxu0 0
  %3497 = vmatprep.subr.bf16.mxu0 0
  %3498 = vmatpush1.bf16.msra.mxu0 0
  %3499 = vmatprep.subr.bf16.mxu0 0
  %3500 = vmatpush1.bf16.msra.mxu0 0
  %3501 = vmatprep.subr.bf16.mxu0 0
  %3502 = vmatpush1.bf16.msra.mxu0 0
  %3503 = vmatprep.subr.bf16.mxu0 0
  %3504 = vmatpush1.bf16.msra.mxu0 0
  %3505 = vmatprep.subr.bf16.mxu0 0
  %3506 = vmatpush1.bf16.msra.mxu0 0
  %3507 = vmatprep.subr.bf16.mxu0 0
  %3508 = vmatpush1.bf16.msra.mxu0 0
  %3509 = vmatprep.subr.bf16.mxu0 0
  %3510 = vmatpush1.bf16.msra.mxu0 0
  %3511 = vmatprep.subr.bf16.mxu0 0
  %3512 = vmatpush1.bf16.msra.mxu0 0
  %3513 = vmatprep.subr.bf16.mxu0 0
  %3514 = vmatpush1.bf16.msra.mxu0 0
  %3515 = vmatprep.subr.bf16.mxu0 0
  %3516 = vmatpush1.bf16.msra.mxu0 0
  %3517 = vmatprep.subr.bf16.mxu0 0
  %3518 = vmatpush1.bf16.msra.mxu0 0
  %3519 = vmatprep.subr.bf16.mxu0 0
  %3520 = vmatpush1.bf16.msra.mxu0 0
  %3521 = vmatprep.subr.bf16.mxu0 0
  %3522 = vmatpush1.bf16.msra.mxu0 0
  %3523 = vmatprep.mubr.bf16.mxu0 0
  %3524 = vmatmul.mubr.bf16.gmra.mrb[0].mxu0 %v3485
  %v3525 = vpop.f32.mrb[0].mxu0
  %v3526 = vadd.f32 0.0, %v3525
  %v3527 = vpop.f32.mrb[0].mxu0
  %v3528 = vpop.f32.mrb[0].mxu0
  %v3529 = vpop.f32.mrb[0].mxu0
  %3530 = vdwg.mxu0
  %v3532 = vsel %vm3457, %v3481, 0
  %v3535 = vsel %vm3487, %v3483, 0
  %3537 = vmatprep.subr.bf16.mxu0 0
  %3538 = vmatpush1.bf16.msra.mxu0 %v3535
  %3539 = vmatprep.subr.bf16.mxu0 0
  %3540 = vmatpush1.bf16.msra.mxu0 0
  %3541 = vmatprep.subr.bf16.mxu0 0
  %3542 = vmatpush1.bf16.msra.mxu0 0
  %3543 = vmatprep.subr.bf16.mxu0 0
  %3544 = vmatpush1.bf16.msra.mxu0 0
  %3545 = vmatprep.subr.bf16.mxu0 0
  %3546 = vmatpush1.bf16.msra.mxu0 0
  %3547 = vmatprep.subr.bf16.mxu0 0
  %3548 = vmatpush1.bf16.msra.mxu0 0
  %3549 = vmatprep.subr.bf16.mxu0 0
  %3550 = vmatpush1.bf16.msra.mxu0 0
  %3551 = vmatprep.subr.bf16.mxu0 0
  %3552 = vmatpush1.bf16.msra.mxu0 0
  %3553 = vmatprep.subr.bf16.mxu0 0
  %3554 = vmatpush1.bf16.msra.mxu0 0
  %3555 = vmatprep.subr.bf16.mxu0 0
  %3556 = vmatpush1.bf16.msra.mxu0 0
  %3557 = vmatprep.subr.bf16.mxu0 0
  %3558 = vmatpush1.bf16.msra.mxu0 0
  %3559 = vmatprep.subr.bf16.mxu0 0
  %3560 = vmatpush1.bf16.msra.mxu0 0
  %3561 = vmatprep.subr.bf16.mxu0 0
  %3562 = vmatpush1.bf16.msra.mxu0 0
  %3563 = vmatprep.subr.bf16.mxu0 0
  %3564 = vmatpush1.bf16.msra.mxu0 0
  %3565 = vmatprep.subr.bf16.mxu0 0
  %3566 = vmatpush1.bf16.msra.mxu0 0
  %3567 = vmatprep.subr.bf16.mxu0 0
  %3568 = vmatpush1.bf16.msra.mxu0 0
  %3569 = vmatprep.mubr.bf16.mxu0 0
  %3570 = vmatmul.mubr.bf16.gmra.mrb[0].mxu0 %v3532
  %v3571 = vpop.f32.mrb[0].mxu0
  %v3572 = vadd.f32 0.0, %v3571
  %v3573 = vpop.f32.mrb[0].mxu0
  %v3574 = vpop.f32.mrb[0].mxu0
  %v3575 = vpop.f32.mrb[0].mxu0
  %3576 = vdwg.mxu0
  %v3577 = vpack.c.bf16 %v3572, %v3526
  %v3578 = vld [vmem:[%s61] sm:$0xf]
  %v3579 = vld [vmem:[%s61 + $0x4] sm:$0xf]
  %s3580 = scalar_lea.vmem %s49, 16
  %v3581 = vld [vmem:[%s3580] sm:$0xf]
  %v3582 = vld [vmem:[%s3580 + $0x4] sm:$0xf]
  %v3583 = vld [vmem:[%s3580 + $0x8] sm:$0xf]
  %v3584 = vld [vmem:[%s3580 + $0xc] sm:$0xf]
  %s3585 = scalar_lea.vmem %s55, 1
  %v3586 = vld [vmem:[%s3585] sm:$0x1]
  %v3588 = vlaneseq
  %v3589 = vshrl.u32 %v3588, 7
  %v3590 = vsub.s32 0, %v3589
  %v3591 = vrot.slane %v3586, %v3590
  %v3597 = vunpack.c.l.b16 %v3581
  %v3598 = vunpack.c.l.b16 %v3582
  %v3599 = vunpack.c.l.b16 %v3583
  %v3600 = vunpack.c.l.b16 %v3584
  %v3601 = vpack.c.b16 %v3598, %v3597
  %v3602 = vpack.c.b16 %v3600, %v3599
  %3605 = vmatprep.subr.bf16.mxu0 0
  %3606 = vmatpush1.bf16.msra.mxu0 %v3601
  %3607 = vmatprep.subr.bf16.mxu0 0
  %3608 = vmatpush1.bf16.msra.mxu0 %v3602
  %3609 = vmatprep.subr.bf16.mxu0 0
  %3610 = vmatpush1.bf16.msra.mxu0 0
  %3611 = vmatprep.subr.bf16.mxu0 0
  %3612 = vmatpush1.bf16.msra.mxu0 0
  %3613 = vmatprep.subr.bf16.mxu0 0
  %3614 = vmatpush1.bf16.msra.mxu0 0
  %3615 = vmatprep.subr.bf16.mxu0 0
  %3616 = vmatpush1.bf16.msra.mxu0 0
  %3617 = vmatprep.subr.bf16.mxu0 0
  %3618 = vmatpush1.bf16.msra.mxu0 0
  %3619 = vmatprep.subr.bf16.mxu0 0
  %3620 = vmatpush1.bf16.msra.mxu0 0
  %3621 = vmatprep.subr.bf16.mxu0 0
  %3622 = vmatpush1.bf16.msra.mxu0 0
  %3623 = vmatprep.subr.bf16.mxu0 0
  %3624 = vmatpush1.bf16.msra.mxu0 0
  %3625 = vmatprep.subr.bf16.mxu0 0
  %3626 = vmatpush1.bf16.msra.mxu0 0
  %3627 = vmatprep.subr.bf16.mxu0 0
  %3628 = vmatpush1.bf16.msra.mxu0 0
  %3629 = vmatprep.subr.bf16.mxu0 0
  %3630 = vmatpush1.bf16.msra.mxu0 0
  %3631 = vmatprep.subr.bf16.mxu0 0
  %3632 = vmatpush1.bf16.msra.mxu0 0
  %3633 = vmatprep.subr.bf16.mxu0 0
  %3634 = vmatpush1.bf16.msra.mxu0 0
  %3635 = vmatprep.subr.bf16.mxu0 0
  %3636 = vmatpush1.bf16.msra.mxu0 0
  %3637 = vmatprep.mubr.bf16.mxu0 0
  %3638 = vmatmul.mubr.bf16.gmra.mrb[0].mxu0 %v3190
  %v3639 = vpop.f32.mrb[0].mxu0
  %v3640 = vadd.f32 %v3591, %v3639
  %v3641 = vpop.f32.mrb[0].mxu0
  %v3642 = vpop.f32.mrb[0].mxu0
  %v3643 = vadd.f32 %v3591, %v3642
  %v3644 = vpop.f32.mrb[0].mxu0
  %3645 = vdwg.mxu0
  %s3646 = scalar_lea.vmem %s51, 16
  %v3647 = vld [vmem:[%s3646] sm:$0xf]
  %v3648 = vld [vmem:[%s3646 + $0x4] sm:$0xf]
  %v3649 = vld [vmem:[%s3646 + $0x8] sm:$0xf]
  %v3650 = vld [vmem:[%s3646 + $0xc] sm:$0xf]
  %s3651 = scalar_lea.vmem %s57, 1
  %v3652 = vld [vmem:[%s3651] sm:$0x1]
  %v3654 = vlaneseq
  %v3655 = vshrl.u32 %v3654, 7
  %v3656 = vsub.s32 0, %v3655
  %v3657 = vrot.slane %v3652, %v3656
  %v3663 = vunpack.c.l.b16 %v3647
  %v3664 = vunpack.c.l.b16 %v3648
  %v3665 = vunpack.c.l.b16 %v3649
  %v3666 = vunpack.c.l.b16 %v3650
  %v3667 = vpack.c.b16 %v3664, %v3663
  %v3668 = vpack.c.b16 %v3666, %v3665
  %3671 = vmatprep.subr.bf16.mxu0 0
  %3672 = vmatpush1.bf16.msra.mxu0 %v3667
  %3673 = vmatprep.subr.bf16.mxu0 0
  %3674 = vmatpush1.bf16.msra.mxu0 %v3668
  %3675 = vmatprep.subr.bf16.mxu0 0
  %3676 = vmatpush1.bf16.msra.mxu0 0
  %3677 = vmatprep.subr.bf16.mxu0 0
  %3678 = vmatpush1.bf16.msra.mxu0 0
  %3679 = vmatprep.subr.bf16.mxu0 0
  %3680 = vmatpush1.bf16.msra.mxu0 0
  %3681 = vmatprep.subr.bf16.mxu0 0
  %3682 = vmatpush1.bf16.msra.mxu0 0
  %3683 = vmatprep.subr.bf16.mxu0 0
  %3684 = vmatpush1.bf16.msra.mxu0 0
  %3685 = vmatprep.subr.bf16.mxu0 0
  %3686 = vmatpush1.bf16.msra.mxu0 0
  %3687 = vmatprep.subr.bf16.mxu0 0
  %3688 = vmatpush1.bf16.msra.mxu0 0
  %3689 = vmatprep.subr.bf16.mxu0 0
  %3690 = vmatpush1.bf16.msra.mxu0 0
  %3691 = vmatprep.subr.bf16.mxu0 0
  %3692 = vmatpush1.bf16.msra.mxu0 0
  %3693 = vmatprep.subr.bf16.mxu0 0
  %3694 = vmatpush1.bf16.msra.mxu0 0
  %3695 = vmatprep.subr.bf16.mxu0 0
  %3696 = vmatpush1.bf16.msra.mxu0 0
  %3697 = vmatprep.subr.bf16.mxu0 0
  %3698 = vmatpush1.bf16.msra.mxu0 0
  %3699 = vmatprep.subr.bf16.mxu0 0
  %3700 = vmatpush1.bf16.msra.mxu0 0
  %3701 = vmatprep.subr.bf16.mxu0 0
  %3702 = vmatpush1.bf16.msra.mxu0 0
  %3703 = vmatprep.mubr.bf16.mxu0 0
  %3704 = vmatmul.mubr.bf16.gmra.mrb[0].mxu0 %v3190
  %v3705 = vpop.f32.mrb[0].mxu0
  %v3706 = vadd.f32 %v3657, %v3705
  %v3707 = vpop.f32.mrb[0].mxu0
  %v3708 = vpop.f32.mrb[0].mxu0
  %v3709 = vadd.f32 %v3657, %v3708
  %v3710 = vpop.f32.mrb[0].mxu0
  %3711 = vdwg.mxu0
  %s3712 = scalar_lea.vmem %s53, 16
  %v3713 = vld [vmem:[%s3712] sm:$0xf]
  %v3714 = vld [vmem:[%s3712 + $0x4] sm:$0xf]
  %v3715 = vld [vmem:[%s3712 + $0x8] sm:$0xf]
  %v3716 = vld [vmem:[%s3712 + $0xc] sm:$0xf]
  %s3717 = scalar_lea.vmem %s59, 1
  %v3718 = vld [vmem:[%s3717] sm:$0x1]
  %v3720 = vlaneseq
  %v3721 = vshrl.u32 %v3720, 7
  %v3722 = vsub.s32 0, %v3721
  %v3723 = vrot.slane %v3718, %v3722
  %v3729 = vunpack.c.l.b16 %v3713
  %v3730 = vunpack.c.l.b16 %v3714
  %v3731 = vunpack.c.l.b16 %v3715
  %v3732 = vunpack.c.l.b16 %v3716
  %v3733 = vpack.c.b16 %v3730, %v3729
  %v3734 = vpack.c.b16 %v3732, %v3731
  %3737 = vmatprep.subr.bf16.mxu0 0
  %3738 = vmatpush1.bf16.msra.mxu0 %v3733
  %3739 = vmatprep.subr.bf16.mxu0 0
  %3740 = vmatpush1.bf16.msra.mxu0 %v3734
  %3741 = vmatprep.subr.bf16.mxu0 0
  %3742 = vmatpush1.bf16.msra.mxu0 0
  %3743 = vmatprep.subr.bf16.mxu0 0
  %3744 = vmatpush1.bf16.msra.mxu0 0
  %3745 = vmatprep.subr.bf16.mxu0 0
  %3746 = vmatpush1.bf16.msra.mxu0 0
  %3747 = vmatprep.subr.bf16.mxu0 0
  %3748 = vmatpush1.bf16.msra.mxu0 0
  %3749 = vmatprep.subr.bf16.mxu0 0
  %3750 = vmatpush1.bf16.msra.mxu0 0
  %3751 = vmatprep.subr.bf16.mxu0 0
  %3752 = vmatpush1.bf16.msra.mxu0 0
  %3753 = vmatprep.subr.bf16.mxu0 0
  %3754 = vmatpush1.bf16.msra.mxu0 0
  %3755 = vmatprep.subr.bf16.mxu0 0
  %3756 = vmatpush1.bf16.msra.mxu0 0
  %3757 = vmatprep.subr.bf16.mxu0 0
  %3758 = vmatpush1.bf16.msra.mxu0 0
  %3759 = vmatprep.subr.bf16.mxu0 0
  %3760 = vmatpush1.bf16.msra.mxu0 0
  %3761 = vmatprep.subr.bf16.mxu0 0
  %3762 = vmatpush1.bf16.msra.mxu0 0
  %3763 = vmatprep.subr.bf16.mxu0 0
  %3764 = vmatpush1.bf16.msra.mxu0 0
  %3765 = vmatprep.subr.bf16.mxu0 0
  %3766 = vmatpush1.bf16.msra.mxu0 0
  %3767 = vmatprep.subr.bf16.mxu0 0
  %3768 = vmatpush1.bf16.msra.mxu0 0
  %3769 = vmatprep.mubr.bf16.mxu0 0
  %3770 = vmatmul.mubr.bf16.gmra.mrb[0].mxu0 %v3190
  %v3771 = vpop.f32.mrb[0].mxu0
  %v3772 = vadd.f32 %v3723, %v3771
  %v3773 = vpop.f32.mrb[0].mxu0
  %v3774 = vpop.f32.mrb[0].mxu0
  %v3775 = vadd.f32 %v3723, %v3774
  %v3776 = vpop.f32.mrb[0].mxu0
  %3777 = vdwg.mxu0
  %v3778 = vpack.c.bf16 %v3640, %v3640
  %v3779 = vpack.c.bf16 %v3643, %v3643
  %v3780 = vpack.c.bf16 %v3706, %v3706
  %v3781 = vpack.c.bf16 %v3709, %v3709
  %v3783 = vsel %vm961, %v3778, 0
  %v3786 = vsel %vm961, %v3780, 0
  %3788 = vmatprep.subr.bf16.mxu0 0
  %3789 = vmatpush1.bf16.xpose.msra.mxu0 %v3786
  %3790 = vmatprep.subr.bf16.mxu0 0
  %3791 = vmatpush1.bf16.xpose.msra.mxu0 0
  %3792 = vmatprep.subr.bf16.mxu0 0
  %3793 = vmatpush1.bf16.xpose.msra.mxu0 0
  %3794 = vmatprep.subr.bf16.mxu0 0
  %3795 = vmatpush1.bf16.xpose.msra.mxu0 0
  %3796 = vmatprep.subr.bf16.mxu0 0
  %3797 = vmatpush1.bf16.xpose.msra.mxu0 0
  %3798 = vmatprep.subr.bf16.mxu0 0
  %3799 = vmatpush1.bf16.xpose.msra.mxu0 0
  %3800 = vmatprep.subr.bf16.mxu0 0
  %3801 = vmatpush1.bf16.xpose.msra.mxu0 0
  %3802 = vmatprep.subr.bf16.mxu0 0
  %3803 = vmatpush1.bf16.xpose.msra.mxu0 0
  %3804 = vmatprep.subr.bf16.mxu0 0
  %3805 = vmatpush1.bf16.xpose.msra.mxu0 0
  %3806 = vmatprep.subr.bf16.mxu0 0
  %3807 = vmatpush1.bf16.xpose.msra.mxu0 0
  %3808 = vmatprep.subr.bf16.mxu0 0
  %3809 = vmatpush1.bf16.xpose.msra.mxu0 0
  %3810 = vmatprep.subr.bf16.mxu0 0
  %3811 = vmatpush1.bf16.xpose.msra.mxu0 0
  %3812 = vmatprep.subr.bf16.mxu0 0
  %3813 = vmatpush1.bf16.xpose.msra.mxu0 0
  %3814 = vmatprep.subr.bf16.mxu0 0
  %3815 = vmatpush1.bf16.xpose.msra.mxu0 0
  %3816 = vmatprep.subr.bf16.mxu0 0
  %3817 = vmatpush1.bf16.xpose.msra.mxu0 0
  %3818 = vmatprep.subr.bf16.mxu0 0
  %3819 = vmatpush1.bf16.xpose.msra.mxu0 0
  %3820 = vmatprep.mubr.bf16.mxu0 0
  %3821 = vmatmul.mubr.bf16.gmra.mrb[0].mxu0 %v3783
  %v3822 = vpop.f32.mrb[0].mxu0
  %v3823 = vadd.f32 0.0, %v3822
  %v3824 = vpop.f32.mrb[0].mxu0
  %v3825 = vpop.f32.mrb[0].mxu0
  %v3826 = vpop.f32.mrb[0].mxu0
  %3827 = vdwg.mxu0
  %v3829 = vsel %vm961, %v3779, 0
  %v3832 = vsel %vm961, %v3781, 0
  %3834 = vmatprep.subr.bf16.mxu0 0
  %3835 = vmatpush1.bf16.xpose.msra.mxu0 %v3832
  %3836 = vmatprep.subr.bf16.mxu0 0
  %3837 = vmatpush1.bf16.xpose.msra.mxu0 0
  %3838 = vmatprep.subr.bf16.mxu0 0
  %3839 = vmatpush1.bf16.xpose.msra.mxu0 0
  %3840 = vmatprep.subr.bf16.mxu0 0
  %3841 = vmatpush1.bf16.xpose.msra.mxu0 0
  %3842 = vmatprep.subr.bf16.mxu0 0
  %3843 = vmatpush1.bf16.xpose.msra.mxu0 0
  %3844 = vmatprep.subr.bf16.mxu0 0
  %3845 = vmatpush1.bf16.xpose.msra.mxu0 0
  %3846 = vmatprep.subr.bf16.mxu0 0
  %3847 = vmatpush1.bf16.xpose.msra.mxu0 0
  %3848 = vmatprep.subr.bf16.mxu0 0
  %3849 = vmatpush1.bf16.xpose.msra.mxu0 0
  %3850 = vmatprep.subr.bf16.mxu0 0
  %3851 = vmatpush1.bf16.xpose.msra.mxu0 0
  %3852 = vmatprep.subr.bf16.mxu0 0
  %3853 = vmatpush1.bf16.xpose.msra.mxu0 0
  %3854 = vmatprep.subr.bf16.mxu0 0
  %3855 = vmatpush1.bf16.xpose.msra.mxu0 0
  %3856 = vmatprep.subr.bf16.mxu0 0
  %3857 = vmatpush1.bf16.xpose.msra.mxu0 0
  %3858 = vmatprep.subr.bf16.mxu0 0
  %3859 = vmatpush1.bf16.xpose.msra.mxu0 0
  %3860 = vmatprep.subr.bf16.mxu0 0
  %3861 = vmatpush1.bf16.xpose.msra.mxu0 0
  %3862 = vmatprep.subr.bf16.mxu0 0
  %3863 = vmatpush1.bf16.xpose.msra.mxu0 0
  %3864 = vmatprep.subr.bf16.mxu0 0
  %3865 = vmatpush1.bf16.xpose.msra.mxu0 0
  %3866 = vmatprep.mubr.bf16.mxu0 0
  %3867 = vmatmul.mubr.bf16.gmra.mrb[0].mxu0 %v3829
  %v3868 = vpop.f32.mrb[0].mxu0
  %v3869 = vadd.f32 0.0, %v3868
  %v3870 = vpop.f32.mrb[0].mxu0
  %v3871 = vpop.f32.mrb[0].mxu0
  %v3872 = vpop.f32.mrb[0].mxu0
  %3873 = vdwg.mxu0
  %v3874 = vsel %vm3457, %v3823, -inf
  %3875 = vmax.xlane.f32.xlu0 %v3874
  %v3876 = vpop.xlane.xlu0 %3875
  %v3877 = vsel %vm3457, %v3869, -inf
  %3878 = vmax.xlane.f32.xlu0 %v3877
  %v3879 = vpop.xlane.xlu0 %3878
  %v3880 = vsub.f32 %v3823, %v3876
  %v3881 = vsub.f32 %v3869, %v3879
  %v3882 = vmul.f32 %v3880, 1.442695
  %v3883 = vpow.pop %v3882
  %v3884 = vmul.f32 %v3881, 1.442695
  %v3885 = vpow.pop %v3884
  %v3886 = vsel %vm3457, %v3883, 0.0
  %3887 = vadd.xlane.f32.xlu0 %v3886
  %v3888 = vpop.xlane.xlu0 %3887
  %v3889 = vsel %vm3457, %v3885, 0.0
  %3890 = vadd.xlane.f32.xlu0 %v3889
  %v3891 = vpop.xlane.xlu0 %3890
  %v3892 = vrcp.pop %v3888
  %v3893 = vrcp.pop %v3891
  %v3894 = vmul.f32 %v3883, %v3892
  %v3895 = vmul.f32 %v3885, %v3893
  %v3896 = vpack.c.bf16 %v3894, %v3894
  %v3897 = vpack.c.bf16 %v3895, %v3895
  %v3898 = vpack.c.bf16 %v3772, %v3772
  %v3899 = vpack.c.bf16 %v3775, %v3775
  %v3901 = vsel %vm3457, %v3896, 0
  %v3904 = vsel %vm3487, %v3898, 0
  %3906 = vmatprep.subr.bf16.mxu0 0
  %3907 = vmatpush1.bf16.msra.mxu0 %v3904
  %3908 = vmatprep.subr.bf16.mxu0 0
  %3909 = vmatpush1.bf16.msra.mxu0 0
  %3910 = vmatprep.subr.bf16.mxu0 0
  %3911 = vmatpush1.bf16.msra.mxu0 0
  %3912 = vmatprep.subr.bf16.mxu0 0
  %3913 = vmatpush1.bf16.msra.mxu0 0
  %3914 = vmatprep.subr.bf16.mxu0 0
  %3915 = vmatpush1.bf16.msra.mxu0 0
  %3916 = vmatprep.subr.bf16.mxu0 0
  %3917 = vmatpush1.bf16.msra.mxu0 0
  %3918 = vmatprep.subr.bf16.mxu0 0
  %3919 = vmatpush1.bf16.msra.mxu0 0
  %3920 = vmatprep.subr.bf16.mxu0 0
  %3921 = vmatpush1.bf16.msra.mxu0 0
  %3922 = vmatprep.subr.bf16.mxu0 0
  %3923 = vmatpush1.bf16.msra.mxu0 0
  %3924 = vmatprep.subr.bf16.mxu0 0
  %3925 = vmatpush1.bf16.msra.mxu0 0
  %3926 = vmatprep.subr.bf16.mxu0 0
  %3927 = vmatpush1.bf16.msra.mxu0 0
  %3928 = vmatprep.subr.bf16.mxu0 0
  %3929 = vmatpush1.bf16.msra.mxu0 0
  %3930 = vmatprep.subr.bf16.mxu0 0
  %3931 = vmatpush1.bf16.msra.mxu0 0
  %3932 = vmatprep.subr.bf16.mxu0 0
  %3933 = vmatpush1.bf16.msra.mxu0 0
  %3934 = vmatprep.subr.bf16.mxu0 0
  %3935 = vmatpush1.bf16.msra.mxu0 0
  %3936 = vmatprep.subr.bf16.mxu0 0
  %3937 = vmatpush1.bf16.msra.mxu0 0
  %3938 = vmatprep.mubr.bf16.mxu0 0
  %3939 = vmatmul.mubr.bf16.gmra.mrb[0].mxu0 %v3901
  %v3940 = vpop.f32.mrb[0].mxu0
  %v3941 = vadd.f32 0.0, %v3940
  %v3942 = vpop.f32.mrb[0].mxu0
  %v3943 = vpop.f32.mrb[0].mxu0
  %v3944 = vpop.f32.mrb[0].mxu0
  %3945 = vdwg.mxu0
  %v3947 = vsel %vm3457, %v3897, 0
  %v3950 = vsel %vm3487, %v3899, 0
  %3952 = vmatprep.subr.bf16.mxu0 0
  %3953 = vmatpush1.bf16.msra.mxu0 %v3950
  %3954 = vmatprep.subr.bf16.mxu0 0
  %3955 = vmatpush1.bf16.msra.mxu0 0
  %3956 = vmatprep.subr.bf16.mxu0 0
  %3957 = vmatpush1.bf16.msra.mxu0 0
  %3958 = vmatprep.subr.bf16.mxu0 0
  %3959 = vmatpush1.bf16.msra.mxu0 0
  %3960 = vmatprep.subr.bf16.mxu0 0
  %3961 = vmatpush1.bf16.msra.mxu0 0
  %3962 = vmatprep.subr.bf16.mxu0 0
  %3963 = vmatpush1.bf16.msra.mxu0 0
  %3964 = vmatprep.subr.bf16.mxu0 0
  %3965 = vmatpush1.bf16.msra.mxu0 0
  %3966 = vmatprep.subr.bf16.mxu0 0
  %3967 = vmatpush1.bf16.msra.mxu0 0
  %3968 = vmatprep.subr.bf16.mxu0 0
  %3969 = vmatpush1.bf16.msra.mxu0 0
  %3970 = vmatprep.subr.bf16.mxu0 0
  %3971 = vmatpush1.bf16.msra.mxu0 0
  %3972 = vmatprep.subr.bf16.mxu0 0
  %3973 = vmatpush1.bf16.msra.mxu0 0
  %3974 = vmatprep.subr.bf16.mxu0 0
  %3975 = vmatpush1.bf16.msra.mxu0 0
  %3976 = vmatprep.subr.bf16.mxu0 0
  %3977 = vmatpush1.bf16.msra.mxu0 0
  %3978 = vmatprep.subr.bf16.mxu0 0
  %3979 = vmatpush1.bf16.msra.mxu0 0
  %3980 = vmatprep.subr.bf16.mxu0 0
  %3981 = vmatpush1.bf16.msra.mxu0 0
  %3982 = vmatprep.subr.bf16.mxu0 0
  %3983 = vmatpush1.bf16.msra.mxu0 0
  %3984 = vmatprep.mubr.bf16.mxu0 0
  %3985 = vmatmul.mubr.bf16.gmra.mrb[0].mxu0 %v3947
  %v3986 = vpop.f32.mrb[0].mxu0
  %v3987 = vadd.f32 0.0, %v3986
  %v3988 = vpop.f32.mrb[0].mxu0
  %v3989 = vpop.f32.mrb[0].mxu0
  %v3990 = vpop.f32.mrb[0].mxu0
  %3991 = vdwg.mxu0
  %v3992 = vpack.c.bf16 %v3987, %v3941
  %s3993 = scalar_lea.vmem %s61, 8
  %v3994 = vld [vmem:[%s3993] sm:$0xf]
  %v3995 = vld [vmem:[%s3993 + $0x4] sm:$0xf]
  %v3998 = vunpack.c.l.b16 %v3994
  %v3999 = vunpack.c.l.b16 %v3995
  %v4000 = vpack.c.b16 %v3999, %v3998
  %v4003 = vsel %vm961, %v3992, 0
  %4005 = vmatprep.subr.bf16.mxu0 0
  %4006 = vmatpush1.bf16.msra.mxu0 %v4000
  %4007 = vmatprep.subr.bf16.mxu0 0
  %4008 = vmatpush1.bf16.msra.mxu0 0
  %4009 = vmatprep.subr.bf16.mxu0 0
  %4010 = vmatpush1.bf16.msra.mxu0 0
  %4011 = vmatprep.subr.bf16.mxu0 0
  %4012 = vmatpush1.bf16.msra.mxu0 0
  %4013 = vmatprep.subr.bf16.mxu0 0
  %4014 = vmatpush1.bf16.msra.mxu0 0
  %4015 = vmatprep.subr.bf16.mxu0 0
  %4016 = vmatpush1.bf16.msra.mxu0 0
  %4017 = vmatprep.subr.bf16.mxu0 0
  %4018 = vmatpush1.bf16.msra.mxu0 0
  %4019 = vmatprep.subr.bf16.mxu0 0
  %4020 = vmatpush1.bf16.msra.mxu0 0
  %4021 = vmatprep.subr.bf16.mxu0 0
  %4022 = vmatpush1.bf16.msra.mxu0 0
  %4023 = vmatprep.subr.bf16.mxu0 0
  %4024 = vmatpush1.bf16.msra.mxu0 0
  %4025 = vmatprep.subr.bf16.mxu0 0
  %4026 = vmatpush1.bf16.msra.mxu0 0
  %4027 = vmatprep.subr.bf16.mxu0 0
  %4028 = vmatpush1.bf16.msra.mxu0 0
  %4029 = vmatprep.subr.bf16.mxu0 0
  %4030 = vmatpush1.bf16.msra.mxu0 0
  %4031 = vmatprep.subr.bf16.mxu0 0
  %4032 = vmatpush1.bf16.msra.mxu0 0
  %4033 = vmatprep.subr.bf16.mxu0 0
  %4034 = vmatpush1.bf16.msra.mxu0 0
  %4035 = vmatprep.subr.bf16.mxu0 0
  %4036 = vmatpush1.bf16.msra.mxu0 0
  %4037 = vmatprep.mubr.bf16.mxu0 0
  %4038 = vmatmul.mubr.bf16.gmra.mrb[0].mxu0 %v4003
  %v4039 = vpop.f32.mrb[0].mxu0
  %v4040 = vadd.f32 0.0, %v4039
  %v4041 = vpop.f32.mrb[0].mxu0
  %v4042 = vpop.f32.mrb[0].mxu0
  %v4043 = vadd.f32 0.0, %v4042
  %v4044 = vpop.f32.mrb[0].mxu0
  %4045 = vdwg.mxu0
  %v4048 = vunpack.c.l.b16 %v3578
  %v4049 = vunpack.c.l.b16 %v3579
  %v4050 = vpack.c.b16 %v4049, %v4048
  %v4053 = vsel %vm961, %v3577, 0
  %4055 = vmatprep.subr.bf16.mxu0 0
  %4056 = vmatpush1.bf16.msra.mxu0 %v4050
  %4057 = vmatprep.subr.bf16.mxu0 0
  %4058 = vmatpush1.bf16.msra.mxu0 0
  %4059 = vmatprep.subr.bf16.mxu0 0
  %4060 = vmatpush1.bf16.msra.mxu0 0
  %4061 = vmatprep.subr.bf16.mxu0 0
  %4062 = vmatpush1.bf16.msra.mxu0 0
  %4063 = vmatprep.subr.bf16.mxu0 0
  %4064 = vmatpush1.bf16.msra.mxu0 0
  %4065 = vmatprep.subr.bf16.mxu0 0
  %4066 = vmatpush1.bf16.msra.mxu0 0
  %4067 = vmatprep.subr.bf16.mxu0 0
  %4068 = vmatpush1.bf16.msra.mxu0 0
  %4069 = vmatprep.subr.bf16.mxu0 0
  %4070 = vmatpush1.bf16.msra.mxu0 0
  %4071 = vmatprep.subr.bf16.mxu0 0
  %4072 = vmatpush1.bf16.msra.mxu0 0
  %4073 = vmatprep.subr.bf16.mxu0 0
  %4074 = vmatpush1.bf16.msra.mxu0 0
  %4075 = vmatprep.subr.bf16.mxu0 0
  %4076 = vmatpush1.bf16.msra.mxu0 0
  %4077 = vmatprep.subr.bf16.mxu0 0
  %4078 = vmatpush1.bf16.msra.mxu0 0
  %4079 = vmatprep.subr.bf16.mxu0 0
  %4080 = vmatpush1.bf16.msra.mxu0 0
  %4081 = vmatprep.subr.bf16.mxu0 0
  %4082 = vmatpush1.bf16.msra.mxu0 0
  %4083 = vmatprep.subr.bf16.mxu0 0
  %4084 = vmatpush1.bf16.msra.mxu0 0
  %4085 = vmatprep.subr.bf16.mxu0 0
  %4086 = vmatpush1.bf16.msra.mxu0 0
  %4087 = vmatprep.mubr.bf16.mxu0 0
  %4088 = vmatmul.mubr.bf16.gmra.mrb[0].mxu0 %v4053
  %v4089 = vpop.f32.mrb[0].mxu0
  %v4090 = vadd.f32 %v4040, %v4089
  %v4091 = vpop.f32.mrb[0].mxu0
  %v4092 = vpop.f32.mrb[0].mxu0
  %v4093 = vadd.f32 %v4043, %v4092
  %v4094 = vpop.f32.mrb[0].mxu0
  %4095 = vdwg.mxu0
  %v4096 = vld [vmem:[%s63] sm:$0x1]
  %v4098 = vlaneseq
  %v4099 = vshrl.u32 %v4098, 7
  %v4100 = vsub.s32 0, %v4099
  %v4101 = vrot.slane %v4096, %v4100
  %v4103 = vadd.f32 %v4090, %v4101
  %v4104 = vadd.f32 %v4093, %v4101
  %v4105 = vadd.f32 %v3163, %v4103
  %v4106 = vadd.f32 %v3164, %v4104
  %v4107 = vld [vmem:[%s81] sm:$0x1]
  %v4108 = vld [vmem:[%s83] sm:$0x1]
  %v4109 = vsel %vm547, %v4105, 0.0
  %4110 = vadd.xlane.f32.xlu0 %v4109
  %v4111 = vpop.xlane.xlu0 %4110
  %v4112 = vsel %vm547, %v4106, 0.0
  %4113 = vadd.xlane.f32.xlu0 %v4112
  %v4114 = vpop.xlane.xlu0 %4113
  %v4115 = vmul.f32 %v4111, %v2326
  %v4116 = vmul.f32 %v4114, %v2326
  %v4117 = vsub.f32 %v4105, %v4115
  %v4118 = vsub.f32 %v4106, %v4116
  %v4119 = vmul.f32 %v4117, %v4117
  %v4120 = vmul.f32 %v4118, %v4118
  %v4121 = vsel %vm547, %v4119, 0.0
  %4122 = vadd.xlane.f32.xlu0 %v4121
  %v4123 = vpop.xlane.xlu0 %4122
  %v4124 = vsel %vm547, %v4120, 0.0
  %4125 = vadd.xlane.f32.xlu0 %v4124
  %v4126 = vpop.xlane.xlu0 %4125
  %v4127 = vmul.f32 %v4123, %v2326
  %v4128 = vmul.f32 %v4126, %v2326
  %v4129 = vadd.f32 %v4127, 1e-05
  %v4130 = vadd.f32 %v4128, 1e-05
  %v4131 = vrsqrt.pop %v4129
  %v4132 = vrsqrt.pop %v4130
  %v4133 = vmul.f32 %v4117, %v4131
  %v4134 = vmul.f32 %v4118, %v4132
  %v4136 = vlaneseq
  %v4137 = vshrl.u32 %v4136, 7
  %v4138 = vsub.s32 0, %v4137
  %v4139 = vrot.slane %v4107, %v4138
  %v4141 = vmul.f32 %v4133, %v4139
  %v4142 = vmul.f32 %v4134, %v4139
  %v4144 = vlaneseq
  %v4145 = vshrl.u32 %v4144, 7
  %v4146 = vsub.s32 0, %v4145
  %v4147 = vrot.slane %v4108, %v4146
  %v4149 = vadd.f32 %v4141, %v4147
  %v4150 = vadd.f32 %v4142, %v4147
  %v4151 = vpack.c.bf16 %v4150, %v4149
  %v4158 = vcombine.low %v3156, %v3157
  %v4159 = vcombine.low %v3158, %v3159
  %v4160 = vcombine.low %v3160, %v3161
  %v4162 = vunpack.c.l.s4 1966171168
  %v4163 = vunpack.c.0.s8 %v4162
  %v4164 = vlaneseq
  %v4165 = vshrl.u32 %v4164, 7
  %v4166 = vsub.s32 %v4163, %v4165
  %v4167 = vrot.slane %v4158, %v4166
  %v4169 = vunpack.c.l.s4 1966171168
  %v4170 = vunpack.c.0.s8 %v4169
  %v4171 = vlaneseq
  %v4172 = vshrl.u32 %v4171, 7
  %v4173 = vsub.s32 %v4170, %v4172
  %v4174 = vrot.slane %v4159, %v4173
  %v4176 = vunpack.c.l.s4 1966171168
  %v4177 = vunpack.c.0.s8 %v4176
  %v4178 = vlaneseq
  %v4179 = vshrl.u32 %v4178, 7
  %v4180 = vsub.s32 %v4177, %v4179
  %v4181 = vrot.slane %v4160, %v4180
  %v4182 = vcombine.low %v4167, %v4174
  %v4184 = vunpack.c.l.s4 1966171168
  %v4185 = vunpack.c.0.s8 %v4184
  %v4186 = vlaneseq
  %v4187 = vshrl.u32 %v4186, 7
  %v4188 = vsub.s32 %v4185, %v4187
  %v4189 = vrot.slane %v4182, %v4188
  %v4191 = vunpack.c.l.s4 1966171168
  %v4192 = vunpack.c.0.s8 %v4191
  %v4193 = vlaneseq
  %v4194 = vshrl.u32 %v4193, 7
  %v4195 = vsub.s32 %v4192, %v4194
  %v4196 = vrot.slane %v4181, %v4195
  %v4197 = vcombine.low %v4189, %v4196
  %v4199 = vpack.c.bf16 %v4197, %v4197
  %v4200 = vld [vmem:[%s65] sm:$0xf]
  %v4201 = vld [vmem:[%s65 + $0x4] sm:$0xf]
  %v4202 = vld [vmem:[%s65 + $0x8] sm:$0xf]
  %v4203 = vld [vmem:[%s65 + $0xc] sm:$0xf]
  %v4204 = vld [vmem:[%s71] sm:$0x1]
  %v4206 = vlaneseq
  %v4207 = vshrl.u32 %v4206, 7
  %v4208 = vsub.s32 0, %v4207
  %v4209 = vrot.slane %v4204, %v4208
  %v4215 = vunpack.c.l.b16 %v4200
  %v4216 = vunpack.c.l.b16 %v4201
  %v4217 = vunpack.c.l.b16 %v4202
  %v4218 = vunpack.c.l.b16 %v4203
  %v4219 = vpack.c.b16 %v4216, %v4215
  %v4220 = vpack.c.b16 %v4218, %v4217
  %v4224 = vsel %vm547, %v4151, 0
  %4226 = vmatprep.subr.bf16.mxu0 0
  %4227 = vmatpush1.bf16.msra.mxu0 %v4219
  %4228 = vmatprep.subr.bf16.mxu0 0
  %4229 = vmatpush1.bf16.msra.mxu0 %v4220
  %4230 = vmatprep.subr.bf16.mxu0 0
  %4231 = vmatpush1.bf16.msra.mxu0 0
  %4232 = vmatprep.subr.bf16.mxu0 0
  %4233 = vmatpush1.bf16.msra.mxu0 0
  %4234 = vmatprep.subr.bf16.mxu0 0
  %4235 = vmatpush1.bf16.msra.mxu0 0
  %4236 = vmatprep.subr.bf16.mxu0 0
  %4237 = vmatpush1.bf16.msra.mxu0 0
  %4238 = vmatprep.subr.bf16.mxu0 0
  %4239 = vmatpush1.bf16.msra.mxu0 0
  %4240 = vmatprep.subr.bf16.mxu0 0
  %4241 = vmatpush1.bf16.msra.mxu0 0
  %4242 = vmatprep.subr.bf16.mxu0 0
  %4243 = vmatpush1.bf16.msra.mxu0 0
  %4244 = vmatprep.subr.bf16.mxu0 0
  %4245 = vmatpush1.bf16.msra.mxu0 0
  %4246 = vmatprep.subr.bf16.mxu0 0
  %4247 = vmatpush1.bf16.msra.mxu0 0
  %4248 = vmatprep.subr.bf16.mxu0 0
  %4249 = vmatpush1.bf16.msra.mxu0 0
  %4250 = vmatprep.subr.bf16.mxu0 0
  %4251 = vmatpush1.bf16.msra.mxu0 0
  %4252 = vmatprep.subr.bf16.mxu0 0
  %4253 = vmatpush1.bf16.msra.mxu0 0
  %4254 = vmatprep.subr.bf16.mxu0 0
  %4255 = vmatpush1.bf16.msra.mxu0 0
  %4256 = vmatprep.subr.bf16.mxu0 0
  %4257 = vmatpush1.bf16.msra.mxu0 0
  %4258 = vmatprep.mubr.bf16.mxu0 0
  %4259 = vmatmul.mubr.bf16.gmra.mrb[0].mxu0 %v4224
  %v4260 = vpop.f32.mrb[0].mxu0
  %v4261 = vadd.f32 %v4209, %v4260
  %v4262 = vpop.f32.mrb[0].mxu0
  %v4263 = vpop.f32.mrb[0].mxu0
  %v4264 = vadd.f32 %v4209, %v4263
  %v4265 = vpop.f32.mrb[0].mxu0
  %4266 = vdwg.mxu0
  %v4267 = vld [vmem:[%s67] sm:$0xf]
  %v4268 = vld [vmem:[%s67 + $0x4] sm:$0xf]
  %v4269 = vld [vmem:[%s67 + $0x8] sm:$0xf]
  %v4270 = vld [vmem:[%s67 + $0xc] sm:$0xf]
  %v4271 = vld [vmem:[%s73] sm:$0x1]
  %v4273 = vlaneseq
  %v4274 = vshrl.u32 %v4273, 7
  %v4275 = vsub.s32 0, %v4274
  %v4276 = vrot.slane %v4271, %v4275
  %v4282 = vunpack.c.l.b16 %v4267
  %v4283 = vunpack.c.l.b16 %v4268
  %v4284 = vunpack.c.l.b16 %v4269
  %v4285 = vunpack.c.l.b16 %v4270
  %v4286 = vpack.c.b16 %v4283, %v4282
  %v4287 = vpack.c.b16 %v4285, %v4284
  %v4291 = vsel %vm547, %v4199, 0
  %4293 = vmatprep.subr.bf16.mxu0 0
  %4294 = vmatpush1.bf16.msra.mxu0 %v4286
  %4295 = vmatprep.subr.bf16.mxu0 0
  %4296 = vmatpush1.bf16.msra.mxu0 %v4287
  %4297 = vmatprep.subr.bf16.mxu0 0
  %4298 = vmatpush1.bf16.msra.mxu0 0
  %4299 = vmatprep.subr.bf16.mxu0 0
  %4300 = vmatpush1.bf16.msra.mxu0 0
  %4301 = vmatprep.subr.bf16.mxu0 0
  %4302 = vmatpush1.bf16.msra.mxu0 0
  %4303 = vmatprep.subr.bf16.mxu0 0
  %4304 = vmatpush1.bf16.msra.mxu0 0
  %4305 = vmatprep.subr.bf16.mxu0 0
  %4306 = vmatpush1.bf16.msra.mxu0 0
  %4307 = vmatprep.subr.bf16.mxu0 0
  %4308 = vmatpush1.bf16.msra.mxu0 0
  %4309 = vmatprep.subr.bf16.mxu0 0
  %4310 = vmatpush1.bf16.msra.mxu0 0
  %4311 = vmatprep.subr.bf16.mxu0 0
  %4312 = vmatpush1.bf16.msra.mxu0 0
  %4313 = vmatprep.subr.bf16.mxu0 0
  %4314 = vmatpush1.bf16.msra.mxu0 0
  %4315 = vmatprep.subr.bf16.mxu0 0
  %4316 = vmatpush1.bf16.msra.mxu0 0
  %4317 = vmatprep.subr.bf16.mxu0 0
  %4318 = vmatpush1.bf16.msra.mxu0 0
  %4319 = vmatprep.subr.bf16.mxu0 0
  %4320 = vmatpush1.bf16.msra.mxu0 0
  %4321 = vmatprep.subr.bf16.mxu0 0
  %4322 = vmatpush1.bf16.msra.mxu0 0
  %4323 = vmatprep.subr.bf16.mxu0 0
  %4324 = vmatpush1.bf16.msra.mxu0 0
  %4325 = vmatprep.mubr.bf16.mxu0 0
  %4326 = vmatmul.mubr.bf16.gmra.mrb[0].mxu0 %v4291
  %v4327 = vpop.f32.mrb[0].mxu0
  %v4328 = vadd.f32 %v4276, %v4327
  %v4329 = vpop.f32.mrb[0].mxu0
  %v4330 = vpop.f32.mrb[0].mxu0
  %v4331 = vpop.f32.mrb[0].mxu0
  %4332 = vdwg.mxu0
  %v4334 = vcombine.high %v4328, %v4328
  %v4336 = vunpack.c.l.s4 1966171168
  %v4337 = vunpack.c.0.s8 %v4336
  %v4338 = vlaneseq
  %v4339 = vshrl.u32 %v4338, 7
  %v4340 = vsub.s32 %v4337, %v4339
  %v4341 = vrot.slane %v4328, %v4340
  %v4343 = vunpack.c.l.s4 1966171168
  %v4344 = vunpack.c.0.s8 %v4343
  %v4345 = vlaneseq
  %v4346 = vshrl.u32 %v4345, 7
  %v4347 = vsub.s32 %v4344, %v4346
  %v4348 = vrot.slane %v4334, %v4347
  %v4349 = vcombine.high %v4341, %v4341
  %v4350 = vcombine.high %v4348, %v4348
  %v4352 = vunpack.c.l.s4 1966171168
  %v4353 = vunpack.c.0.s8 %v4352
  %v4354 = vlaneseq
  %v4355 = vshrl.u32 %v4354, 7
  %v4356 = vsub.s32 %v4353, %v4355
  %v4357 = vrot.slane %v4341, %v4356
  %v4359 = vunpack.c.l.s4 1966171168
  %v4360 = vunpack.c.0.s8 %v4359
  %v4361 = vlaneseq
  %v4362 = vshrl.u32 %v4361, 7
  %v4363 = vsub.s32 %v4360, %v4362
  %v4364 = vrot.slane %v4348, %v4363
  %v4366 = vunpack.c.l.s4 1966171168
  %v4367 = vunpack.c.0.s8 %v4366
  %v4368 = vlaneseq
  %v4369 = vshrl.u32 %v4368, 7
  %v4370 = vsub.s32 %v4367, %v4369
  %v4371 = vrot.slane %v4349, %v4370
  %v4373 = vunpack.c.l.s4 1966171168
  %v4374 = vunpack.c.0.s8 %v4373
  %v4375 = vlaneseq
  %v4376 = vshrl.u32 %v4375, 7
  %v4377 = vsub.s32 %v4374, %v4376
  %v4378 = vrot.slane %v4350, %v4377
  %v4379 = vcombine.high %v4357, %v4357
  %v4380 = vcombine.high %v4371, %v4371
  %v4381 = vld [vmem:[%s69] sm:$0xf]
  %v4382 = vld [vmem:[%s69 + $0x4] sm:$0xf]
  %v4383 = vld [vmem:[%s69 + $0x8] sm:$0xf]
  %v4384 = vld [vmem:[%s69 + $0xc] sm:$0xf]
  %v4385 = vld [vmem:[%s75] sm:$0x1]
  %v4387 = vlaneseq
  %v4388 = vshrl.u32 %v4387, 7
  %v4389 = vsub.s32 0, %v4388
  %v4390 = vrot.slane %v4385, %v4389
  %v4396 = vunpack.c.l.b16 %v4381
  %v4397 = vunpack.c.l.b16 %v4382
  %v4398 = vunpack.c.l.b16 %v4383
  %v4399 = vunpack.c.l.b16 %v4384
  %v4400 = vpack.c.b16 %v4397, %v4396
  %v4401 = vpack.c.b16 %v4399, %v4398
  %4404 = vmatprep.subr.bf16.mxu0 0
  %4405 = vmatpush1.bf16.msra.mxu0 %v4400
  %4406 = vmatprep.subr.bf16.mxu0 0
  %4407 = vmatpush1.bf16.msra.mxu0 %v4401
  %4408 = vmatprep.subr.bf16.mxu0 0
  %4409 = vmatpush1.bf16.msra.mxu0 0
  %4410 = vmatprep.subr.bf16.mxu0 0
  %4411 = vmatpush1.bf16.msra.mxu0 0
  %4412 = vmatprep.subr.bf16.mxu0 0
  %4413 = vmatpush1.bf16.msra.mxu0 0
  %4414 = vmatprep.subr.bf16.mxu0 0
  %4415 = vmatpush1.bf16.msra.mxu0 0
  %4416 = vmatprep.subr.bf16.mxu0 0
  %4417 = vmatpush1.bf16.msra.mxu0 0
  %4418 = vmatprep.subr.bf16.mxu0 0
  %4419 = vmatpush1.bf16.msra.mxu0 0
  %4420 = vmatprep.subr.bf16.mxu0 0
  %4421 = vmatpush1.bf16.msra.mxu0 0
  %4422 = vmatprep.subr.bf16.mxu0 0
  %4423 = vmatpush1.bf16.msra.mxu0 0
  %4424 = vmatprep.subr.bf16.mxu0 0
  %4425 = vmatpush1.bf16.msra.mxu0 0
  %4426 = vmatprep.subr.bf16.mxu0 0
  %4427 = vmatpush1.bf16.msra.mxu0 0
  %4428 = vmatprep.subr.bf16.mxu0 0
  %4429 = vmatpush1.bf16.msra.mxu0 0
  %4430 = vmatprep.subr.bf16.mxu0 0
  %4431 = vmatpush1.bf16.msra.mxu0 0
  %4432 = vmatprep.subr.bf16.mxu0 0
  %4433 = vmatpush1.bf16.msra.mxu0 0
  %4434 = vmatprep.subr.bf16.mxu0 0
  %4435 = vmatpush1.bf16.msra.mxu0 0
  %4436 = vmatprep.mubr.bf16.mxu0 0
  %4437 = vmatmul.mubr.bf16.gmra.mrb[0].mxu0 %v4291
  %v4438 = vpop.f32.mrb[0].mxu0
  %v4439 = vadd.f32 %v4390, %v4438
  %v4440 = vpop.f32.mrb[0].mxu0
  %v4441 = vpop.f32.mrb[0].mxu0
  %v4442 = vpop.f32.mrb[0].mxu0
  %4443 = vdwg.mxu0
  %v4445 = vcombine.high %v4439, %v4439
  %v4447 = vunpack.c.l.s4 1966171168
  %v4448 = vunpack.c.0.s8 %v4447
  %v4449 = vlaneseq
  %v4450 = vshrl.u32 %v4449, 7
  %v4451 = vsub.s32 %v4448, %v4450
  %v4452 = vrot.slane %v4439, %v4451
  %v4454 = vunpack.c.l.s4 1966171168
  %v4455 = vunpack.c.0.s8 %v4454
  %v4456 = vlaneseq
  %v4457 = vshrl.u32 %v4456, 7
  %v4458 = vsub.s32 %v4455, %v4457
  %v4459 = vrot.slane %v4445, %v4458
  %v4460 = vcombine.high %v4452, %v4452
  %v4461 = vcombine.high %v4459, %v4459
  %v4463 = vunpack.c.l.s4 1966171168
  %v4464 = vunpack.c.0.s8 %v4463
  %v4465 = vlaneseq
  %v4466 = vshrl.u32 %v4465, 7
  %v4467 = vsub.s32 %v4464, %v4466
  %v4468 = vrot.slane %v4452, %v4467
  %v4470 = vunpack.c.l.s4 1966171168
  %v4471 = vunpack.c.0.s8 %v4470
  %v4472 = vlaneseq
  %v4473 = vshrl.u32 %v4472, 7
  %v4474 = vsub.s32 %v4471, %v4473
  %v4475 = vrot.slane %v4459, %v4474
  %v4477 = vunpack.c.l.s4 1966171168
  %v4478 = vunpack.c.0.s8 %v4477
  %v4479 = vlaneseq
  %v4480 = vshrl.u32 %v4479, 7
  %v4481 = vsub.s32 %v4478, %v4480
  %v4482 = vrot.slane %v4460, %v4481
  %v4484 = vunpack.c.l.s4 1966171168
  %v4485 = vunpack.c.0.s8 %v4484
  %v4486 = vlaneseq
  %v4487 = vshrl.u32 %v4486, 7
  %v4488 = vsub.s32 %v4485, %v4487
  %v4489 = vrot.slane %v4461, %v4488
  %v4490 = vcombine.high %v4468, %v4468
  %v4491 = vcombine.high %v4482, %v4482
  %v4492 = vpack.c.bf16 %v4261, %v4261
  %v4493 = vpack.c.bf16 %v4264, %v4264
  %v4494 = vcombine.low %v4357, %v4371
  %v4496 = vunpack.c.l.s4 1966171168
  %v4497 = vunpack.c.0.s8 %v4496
  %v4498 = vlaneseq
  %v4499 = vshrl.u32 %v4498, 7
  %v4500 = vsub.s32 %v4497, %v4499
  %v4501 = vrot.slane %v4494, %v4500
  %v4503 = vunpack.c.l.s4 1966171168
  %v4504 = vunpack.c.0.s8 %v4503
  %v4505 = vlaneseq
  %v4506 = vshrl.u32 %v4505, 7
  %v4507 = vsub.s32 %v4504, %v4506
  %v4508 = vrot.slane %v4379, %v4507
  %v4509 = vcombine.low %v4501, %v4508
  %v4511 = vunpack.c.l.s4 1966171168
  %v4512 = vunpack.c.0.s8 %v4511
  %v4513 = vlaneseq
  %v4514 = vshrl.u32 %v4513, 7
  %v4515 = vsub.s32 %v4512, %v4514
  %v4516 = vrot.slane %v4509, %v4515
  %v4517 = vcombine.low %v4380, %v4364
  %v4519 = vunpack.c.l.s4 1966171168
  %v4520 = vunpack.c.0.s8 %v4519
  %v4521 = vlaneseq
  %v4522 = vshrl.u32 %v4521, 7
  %v4523 = vsub.s32 %v4520, %v4522
  %v4524 = vrot.slane %v4517, %v4523
  %v4526 = vunpack.c.l.s4 1966171168
  %v4527 = vunpack.c.0.s8 %v4526
  %v4528 = vlaneseq
  %v4529 = vshrl.u32 %v4528, 7
  %v4530 = vsub.s32 %v4527, %v4529
  %v4531 = vrot.slane %v4378, %v4530
  %v4532 = vcombine.low %v4524, %v4531
  %v4534 = vunpack.c.l.s4 1966171168
  %v4535 = vunpack.c.0.s8 %v4534
  %v4536 = vlaneseq
  %v4537 = vshrl.u32 %v4536, 7
  %v4538 = vsub.s32 %v4535, %v4537
  %v4539 = vrot.slane %v4532, %v4538
  %v4542 = vpack.c.bf16 %v4516, %v4516
  %v4543 = vpack.c.bf16 %v4539, %v4539
  %v4545 = vsel %vm961, %v4492, 0
  %v4548 = vsel %vm961, %v4542, 0
  %4550 = vmatprep.subr.bf16.mxu0 0
  %4551 = vmatpush1.bf16.xpose.msra.mxu0 %v4548
  %4552 = vmatprep.subr.bf16.mxu0 0
  %4553 = vmatpush1.bf16.xpose.msra.mxu0 0
  %4554 = vmatprep.subr.bf16.mxu0 0
  %4555 = vmatpush1.bf16.xpose.msra.mxu0 0
  %4556 = vmatprep.subr.bf16.mxu0 0
  %4557 = vmatpush1.bf16.xpose.msra.mxu0 0
  %4558 = vmatprep.subr.bf16.mxu0 0
  %4559 = vmatpush1.bf16.xpose.msra.mxu0 0
  %4560 = vmatprep.subr.bf16.mxu0 0
  %4561 = vmatpush1.bf16.xpose.msra.mxu0 0
  %4562 = vmatprep.subr.bf16.mxu0 0
  %4563 = vmatpush1.bf16.xpose.msra.mxu0 0
  %4564 = vmatprep.subr.bf16.mxu0 0
  %4565 = vmatpush1.bf16.xpose.msra.mxu0 0
  %4566 = vmatprep.subr.bf16.mxu0 0
  %4567 = vmatpush1.bf16.xpose.msra.mxu0 0
  %4568 = vmatprep.subr.bf16.mxu0 0
  %4569 = vmatpush1.bf16.xpose.msra.mxu0 0
  %4570 = vmatprep.subr.bf16.mxu0 0
  %4571 = vmatpush1.bf16.xpose.msra.mxu0 0
  %4572 = vmatprep.subr.bf16.mxu0 0
  %4573 = vmatpush1.bf16.xpose.msra.mxu0 0
  %4574 = vmatprep.subr.bf16.mxu0 0
  %4575 = vmatpush1.bf16.xpose.msra.mxu0 0
  %4576 = vmatprep.subr.bf16.mxu0 0
  %4577 = vmatpush1.bf16.xpose.msra.mxu0 0
  %4578 = vmatprep.subr.bf16.mxu0 0
  %4579 = vmatpush1.bf16.xpose.msra.mxu0 0
  %4580 = vmatprep.subr.bf16.mxu0 0
  %4581 = vmatpush1.bf16.xpose.msra.mxu0 0
  %4582 = vmatprep.mubr.bf16.mxu0 0
  %4583 = vmatmul.mubr.bf16.gmra.mrb[0].mxu0 %v4545
  %v4584 = vpop.f32.mrb[0].mxu0
  %v4585 = vadd.f32 0.0, %v4584
  %v4586 = vpop.f32.mrb[0].mxu0
  %v4587 = vpop.f32.mrb[0].mxu0
  %v4588 = vpop.f32.mrb[0].mxu0
  %4589 = vdwg.mxu0
  %v4591 = vsel %vm961, %v4493, 0
  %v4594 = vsel %vm961, %v4543, 0
  %4596 = vmatprep.subr.bf16.mxu0 0
  %4597 = vmatpush1.bf16.xpose.msra.mxu0 %v4594
  %4598 = vmatprep.subr.bf16.mxu0 0
  %4599 = vmatpush1.bf16.xpose.msra.mxu0 0
  %4600 = vmatprep.subr.bf16.mxu0 0
  %4601 = vmatpush1.bf16.xpose.msra.mxu0 0
  %4602 = vmatprep.subr.bf16.mxu0 0
  %4603 = vmatpush1.bf16.xpose.msra.mxu0 0
  %4604 = vmatprep.subr.bf16.mxu0 0
  %4605 = vmatpush1.bf16.xpose.msra.mxu0 0
  %4606 = vmatprep.subr.bf16.mxu0 0
  %4607 = vmatpush1.bf16.xpose.msra.mxu0 0
  %4608 = vmatprep.subr.bf16.mxu0 0
  %4609 = vmatpush1.bf16.xpose.msra.mxu0 0
  %4610 = vmatprep.subr.bf16.mxu0 0
  %4611 = vmatpush1.bf16.xpose.msra.mxu0 0
  %4612 = vmatprep.subr.bf16.mxu0 0
  %4613 = vmatpush1.bf16.xpose.msra.mxu0 0
  %4614 = vmatprep.subr.bf16.mxu0 0
  %4615 = vmatpush1.bf16.xpose.msra.mxu0 0
  %4616 = vmatprep.subr.bf16.mxu0 0
  %4617 = vmatpush1.bf16.xpose.msra.mxu0 0
  %4618 = vmatprep.subr.bf16.mxu0 0
  %4619 = vmatpush1.bf16.xpose.msra.mxu0 0
  %4620 = vmatprep.subr.bf16.mxu0 0
  %4621 = vmatpush1.bf16.xpose.msra.mxu0 0
  %4622 = vmatprep.subr.bf16.mxu0 0
  %4623 = vmatpush1.bf16.xpose.msra.mxu0 0
  %4624 = vmatprep.subr.bf16.mxu0 0
  %4625 = vmatpush1.bf16.xpose.msra.mxu0 0
  %4626 = vmatprep.subr.bf16.mxu0 0
  %4627 = vmatpush1.bf16.xpose.msra.mxu0 0
  %4628 = vmatprep.mubr.bf16.mxu0 0
  %4629 = vmatmul.mubr.bf16.gmra.mrb[0].mxu0 %v4591
  %v4630 = vpop.f32.mrb[0].mxu0
  %v4631 = vadd.f32 0.0, %v4630
  %v4632 = vpop.f32.mrb[0].mxu0
  %v4633 = vpop.f32.mrb[0].mxu0
  %v4634 = vpop.f32.mrb[0].mxu0
  %4635 = vdwg.mxu0
  %v4636 = vsel %vm1129, %v4585, -inf
  %4637 = vmax.xlane.f32.xlu0 %v4636
  %v4638 = vpop.xlane.xlu0 %4637
  %v4639 = vsel %vm1129, %v4631, -inf
  %4640 = vmax.xlane.f32.xlu0 %v4639
  %v4641 = vpop.xlane.xlu0 %4640
  %v4642 = vsub.f32 %v4585, %v4638
  %v4643 = vsub.f32 %v4631, %v4641
  %v4644 = vmul.f32 %v4642, 1.442695
  %v4645 = vpow.pop %v4644
  %v4646 = vmul.f32 %v4643, 1.442695
  %v4647 = vpow.pop %v4646
  %v4648 = vsel %vm1129, %v4645, 0.0
  %4649 = vadd.xlane.f32.xlu0 %v4648
  %v4650 = vpop.xlane.xlu0 %4649
  %v4651 = vsel %vm1129, %v4647, 0.0
  %4652 = vadd.xlane.f32.xlu0 %v4651
  %v4653 = vpop.xlane.xlu0 %4652
  %v4654 = vrcp.pop %v4650
  %v4655 = vrcp.pop %v4653
  %v4656 = vmul.f32 %v4645, %v4654
  %v4657 = vmul.f32 %v4647, %v4655
  %v4658 = vpack.c.bf16 %v4656, %v4656
  %v4659 = vpack.c.bf16 %v4657, %v4657
  %v4660 = vcombine.low %v4468, %v4482
  %v4662 = vunpack.c.l.s4 1966171168
  %v4663 = vunpack.c.0.s8 %v4662
  %v4664 = vlaneseq
  %v4665 = vshrl.u32 %v4664, 7
  %v4666 = vsub.s32 %v4663, %v4665
  %v4667 = vrot.slane %v4660, %v4666
  %v4669 = vunpack.c.l.s4 1966171168
  %v4670 = vunpack.c.0.s8 %v4669
  %v4671 = vlaneseq
  %v4672 = vshrl.u32 %v4671, 7
  %v4673 = vsub.s32 %v4670, %v4672
  %v4674 = vrot.slane %v4490, %v4673
  %v4675 = vcombine.low %v4667, %v4674
  %v4677 = vunpack.c.l.s4 1966171168
  %v4678 = vunpack.c.0.s8 %v4677
  %v4679 = vlaneseq
  %v4680 = vshrl.u32 %v4679, 7
  %v4681 = vsub.s32 %v4678, %v4680
  %v4682 = vrot.slane %v4675, %v4681
  %v4683 = vcombine.low %v4491, %v4475
  %v4685 = vunpack.c.l.s4 1966171168
  %v4686 = vunpack.c.0.s8 %v4685
  %v4687 = vlaneseq
  %v4688 = vshrl.u32 %v4687, 7
  %v4689 = vsub.s32 %v4686, %v4688
  %v4690 = vrot.slane %v4683, %v4689
  %v4692 = vunpack.c.l.s4 1966171168
  %v4693 = vunpack.c.0.s8 %v4692
  %v4694 = vlaneseq
  %v4695 = vshrl.u32 %v4694, 7
  %v4696 = vsub.s32 %v4693, %v4695
  %v4697 = vrot.slane %v4489, %v4696
  %v4698 = vcombine.low %v4690, %v4697
  %v4700 = vunpack.c.l.s4 1966171168
  %v4701 = vunpack.c.0.s8 %v4700
  %v4702 = vlaneseq
  %v4703 = vshrl.u32 %v4702, 7
  %v4704 = vsub.s32 %v4701, %v4703
  %v4705 = vrot.slane %v4698, %v4704
  %v4708 = vpack.c.bf16 %v4682, %v4682
  %v4709 = vpack.c.bf16 %v4705, %v4705
  %v4711 = vsel %vm1129, %v4658, 0
  %v4714 = vand.u32 %v4708, %v1135
  %4716 = vmatprep.subr.bf16.mxu0 0
  %4717 = vmatpush1.bf16.msra.mxu0 %v4714
  %4718 = vmatprep.subr.bf16.mxu0 0
  %4719 = vmatpush1.bf16.msra.mxu0 0
  %4720 = vmatprep.subr.bf16.mxu0 0
  %4721 = vmatpush1.bf16.msra.mxu0 0
  %4722 = vmatprep.subr.bf16.mxu0 0
  %4723 = vmatpush1.bf16.msra.mxu0 0
  %4724 = vmatprep.subr.bf16.mxu0 0
  %4725 = vmatpush1.bf16.msra.mxu0 0
  %4726 = vmatprep.subr.bf16.mxu0 0
  %4727 = vmatpush1.bf16.msra.mxu0 0
  %4728 = vmatprep.subr.bf16.mxu0 0
  %4729 = vmatpush1.bf16.msra.mxu0 0
  %4730 = vmatprep.subr.bf16.mxu0 0
  %4731 = vmatpush1.bf16.msra.mxu0 0
  %4732 = vmatprep.subr.bf16.mxu0 0
  %4733 = vmatpush1.bf16.msra.mxu0 0
  %4734 = vmatprep.subr.bf16.mxu0 0
  %4735 = vmatpush1.bf16.msra.mxu0 0
  %4736 = vmatprep.subr.bf16.mxu0 0
  %4737 = vmatpush1.bf16.msra.mxu0 0
  %4738 = vmatprep.subr.bf16.mxu0 0
  %4739 = vmatpush1.bf16.msra.mxu0 0
  %4740 = vmatprep.subr.bf16.mxu0 0
  %4741 = vmatpush1.bf16.msra.mxu0 0
  %4742 = vmatprep.subr.bf16.mxu0 0
  %4743 = vmatpush1.bf16.msra.mxu0 0
  %4744 = vmatprep.subr.bf16.mxu0 0
  %4745 = vmatpush1.bf16.msra.mxu0 0
  %4746 = vmatprep.subr.bf16.mxu0 0
  %4747 = vmatpush1.bf16.msra.mxu0 0
  %4748 = vmatprep.mubr.bf16.mxu0 0
  %4749 = vmatmul.mubr.bf16.gmra.mrb[0].mxu0 %v4711
  %v4750 = vpop.f32.mrb[0].mxu0
  %v4751 = vadd.f32 0.0, %v4750
  %v4752 = vpop.f32.mrb[0].mxu0
  %v4753 = vpop.f32.mrb[0].mxu0
  %v4754 = vpop.f32.mrb[0].mxu0
  %4755 = vdwg.mxu0
  %v4757 = vsel %vm1129, %v4659, 0
  %v4760 = vand.u32 %v4709, %v1135
  %4762 = vmatprep.subr.bf16.mxu0 0
  %4763 = vmatpush1.bf16.msra.mxu0 %v4760
  %4764 = vmatprep.subr.bf16.mxu0 0
  %4765 = vmatpush1.bf16.msra.mxu0 0
  %4766 = vmatprep.subr.bf16.mxu0 0
  %4767 = vmatpush1.bf16.msra.mxu0 0
  %4768 = vmatprep.subr.bf16.mxu0 0
  %4769 = vmatpush1.bf16.msra.mxu0 0
  %4770 = vmatprep.subr.bf16.mxu0 0
  %4771 = vmatpush1.bf16.msra.mxu0 0
  %4772 = vmatprep.subr.bf16.mxu0 0
  %4773 = vmatpush1.bf16.msra.mxu0 0
  %4774 = vmatprep.subr.bf16.mxu0 0
  %4775 = vmatpush1.bf16.msra.mxu0 0
  %4776 = vmatprep.subr.bf16.mxu0 0
  %4777 = vmatpush1.bf16.msra.mxu0 0
  %4778 = vmatprep.subr.bf16.mxu0 0
  %4779 = vmatpush1.bf16.msra.mxu0 0
  %4780 = vmatprep.subr.bf16.mxu0 0
  %4781 = vmatpush1.bf16.msra.mxu0 0
  %4782 = vmatprep.subr.bf16.mxu0 0
  %4783 = vmatpush1.bf16.msra.mxu0 0
  %4784 = vmatprep.subr.bf16.mxu0 0
  %4785 = vmatpush1.bf16.msra.mxu0 0
  %4786 = vmatprep.subr.bf16.mxu0 0
  %4787 = vmatpush1.bf16.msra.mxu0 0
  %4788 = vmatprep.subr.bf16.mxu0 0
  %4789 = vmatpush1.bf16.msra.mxu0 0
  %4790 = vmatprep.subr.bf16.mxu0 0
  %4791 = vmatpush1.bf16.msra.mxu0 0
  %4792 = vmatprep.subr.bf16.mxu0 0
  %4793 = vmatpush1.bf16.msra.mxu0 0
  %4794 = vmatprep.mubr.bf16.mxu0 0
  %4795 = vmatmul.mubr.bf16.gmra.mrb[0].mxu0 %v4757
  %v4796 = vpop.f32.mrb[0].mxu0
  %v4797 = vadd.f32 0.0, %v4796
  %v4798 = vpop.f32.mrb[0].mxu0
  %v4799 = vpop.f32.mrb[0].mxu0
  %v4800 = vpop.f32.mrb[0].mxu0
  %4801 = vdwg.mxu0
  %v4802 = vpack.c.bf16 %v4797, %v4751
  %v4803 = vld [vmem:[%s77] sm:$0xf]
  %v4804 = vld [vmem:[%s77 + $0x4] sm:$0xf]
  %s4805 = scalar_lea.vmem %s65, 16
  %v4806 = vld [vmem:[%s4805] sm:$0xf]
  %v4807 = vld [vmem:[%s4805 + $0x4] sm:$0xf]
  %v4808 = vld [vmem:[%s4805 + $0x8] sm:$0xf]
  %v4809 = vld [vmem:[%s4805 + $0xc] sm:$0xf]
  %s4810 = scalar_lea.vmem %s71, 1
  %v4811 = vld [vmem:[%s4810] sm:$0x1]
  %v4813 = vlaneseq
  %v4814 = vshrl.u32 %v4813, 7
  %v4815 = vsub.s32 0, %v4814
  %v4816 = vrot.slane %v4811, %v4815
  %v4822 = vunpack.c.l.b16 %v4806
  %v4823 = vunpack.c.l.b16 %v4807
  %v4824 = vunpack.c.l.b16 %v4808
  %v4825 = vunpack.c.l.b16 %v4809
  %v4826 = vpack.c.b16 %v4823, %v4822
  %v4827 = vpack.c.b16 %v4825, %v4824
  %4830 = vmatprep.subr.bf16.mxu0 0
  %4831 = vmatpush1.bf16.msra.mxu0 %v4826
  %4832 = vmatprep.subr.bf16.mxu0 0
  %4833 = vmatpush1.bf16.msra.mxu0 %v4827
  %4834 = vmatprep.subr.bf16.mxu0 0
  %4835 = vmatpush1.bf16.msra.mxu0 0
  %4836 = vmatprep.subr.bf16.mxu0 0
  %4837 = vmatpush1.bf16.msra.mxu0 0
  %4838 = vmatprep.subr.bf16.mxu0 0
  %4839 = vmatpush1.bf16.msra.mxu0 0
  %4840 = vmatprep.subr.bf16.mxu0 0
  %4841 = vmatpush1.bf16.msra.mxu0 0
  %4842 = vmatprep.subr.bf16.mxu0 0
  %4843 = vmatpush1.bf16.msra.mxu0 0
  %4844 = vmatprep.subr.bf16.mxu0 0
  %4845 = vmatpush1.bf16.msra.mxu0 0
  %4846 = vmatprep.subr.bf16.mxu0 0
  %4847 = vmatpush1.bf16.msra.mxu0 0
  %4848 = vmatprep.subr.bf16.mxu0 0
  %4849 = vmatpush1.bf16.msra.mxu0 0
  %4850 = vmatprep.subr.bf16.mxu0 0
  %4851 = vmatpush1.bf16.msra.mxu0 0
  %4852 = vmatprep.subr.bf16.mxu0 0
  %4853 = vmatpush1.bf16.msra.mxu0 0
  %4854 = vmatprep.subr.bf16.mxu0 0
  %4855 = vmatpush1.bf16.msra.mxu0 0
  %4856 = vmatprep.subr.bf16.mxu0 0
  %4857 = vmatpush1.bf16.msra.mxu0 0
  %4858 = vmatprep.subr.bf16.mxu0 0
  %4859 = vmatpush1.bf16.msra.mxu0 0
  %4860 = vmatprep.subr.bf16.mxu0 0
  %4861 = vmatpush1.bf16.msra.mxu0 0
  %4862 = vmatprep.mubr.bf16.mxu0 0
  %4863 = vmatmul.mubr.bf16.gmra.mrb[0].mxu0 %v4224
  %v4864 = vpop.f32.mrb[0].mxu0
  %v4865 = vadd.f32 %v4816, %v4864
  %v4866 = vpop.f32.mrb[0].mxu0
  %v4867 = vpop.f32.mrb[0].mxu0
  %v4868 = vadd.f32 %v4816, %v4867
  %v4869 = vpop.f32.mrb[0].mxu0
  %4870 = vdwg.mxu0
  %s4871 = scalar_lea.vmem %s67, 16
  %v4872 = vld [vmem:[%s4871] sm:$0xf]
  %v4873 = vld [vmem:[%s4871 + $0x4] sm:$0xf]
  %v4874 = vld [vmem:[%s4871 + $0x8] sm:$0xf]
  %v4875 = vld [vmem:[%s4871 + $0xc] sm:$0xf]
  %s4876 = scalar_lea.vmem %s73, 1
  %v4877 = vld [vmem:[%s4876] sm:$0x1]
  %v4879 = vlaneseq
  %v4880 = vshrl.u32 %v4879, 7
  %v4881 = vsub.s32 0, %v4880
  %v4882 = vrot.slane %v4877, %v4881
  %v4888 = vunpack.c.l.b16 %v4872
  %v4889 = vunpack.c.l.b16 %v4873
  %v4890 = vunpack.c.l.b16 %v4874
  %v4891 = vunpack.c.l.b16 %v4875
  %v4892 = vpack.c.b16 %v4889, %v4888
  %v4893 = vpack.c.b16 %v4891, %v4890
  %4896 = vmatprep.subr.bf16.mxu0 0
  %4897 = vmatpush1.bf16.msra.mxu0 %v4892
  %4898 = vmatprep.subr.bf16.mxu0 0
  %4899 = vmatpush1.bf16.msra.mxu0 %v4893
  %4900 = vmatprep.subr.bf16.mxu0 0
  %4901 = vmatpush1.bf16.msra.mxu0 0
  %4902 = vmatprep.subr.bf16.mxu0 0
  %4903 = vmatpush1.bf16.msra.mxu0 0
  %4904 = vmatprep.subr.bf16.mxu0 0
  %4905 = vmatpush1.bf16.msra.mxu0 0
  %4906 = vmatprep.subr.bf16.mxu0 0
  %4907 = vmatpush1.bf16.msra.mxu0 0
  %4908 = vmatprep.subr.bf16.mxu0 0
  %4909 = vmatpush1.bf16.msra.mxu0 0
  %4910 = vmatprep.subr.bf16.mxu0 0
  %4911 = vmatpush1.bf16.msra.mxu0 0
  %4912 = vmatprep.subr.bf16.mxu0 0
  %4913 = vmatpush1.bf16.msra.mxu0 0
  %4914 = vmatprep.subr.bf16.mxu0 0
  %4915 = vmatpush1.bf16.msra.mxu0 0
  %4916 = vmatprep.subr.bf16.mxu0 0
  %4917 = vmatpush1.bf16.msra.mxu0 0
  %4918 = vmatprep.subr.bf16.mxu0 0
  %4919 = vmatpush1.bf16.msra.mxu0 0
  %4920 = vmatprep.subr.bf16.mxu0 0
  %4921 = vmatpush1.bf16.msra.mxu0 0
  %4922 = vmatprep.subr.bf16.mxu0 0
  %4923 = vmatpush1.bf16.msra.mxu0 0
  %4924 = vmatprep.subr.bf16.mxu0 0
  %4925 = vmatpush1.bf16.msra.mxu0 0
  %4926 = vmatprep.subr.bf16.mxu0 0
  %4927 = vmatpush1.bf16.msra.mxu0 0
  %4928 = vmatprep.mubr.bf16.mxu0 0
  %4929 = vmatmul.mubr.bf16.gmra.mrb[0].mxu0 %v4291
  %v4930 = vpop.f32.mrb[0].mxu0
  %v4931 = vadd.f32 %v4882, %v4930
  %v4932 = vpop.f32.mrb[0].mxu0
  %v4933 = vpop.f32.mrb[0].mxu0
  %v4934 = vpop.f32.mrb[0].mxu0
  %4935 = vdwg.mxu0
  %v4937 = vcombine.high %v4931, %v4931
  %v4939 = vunpack.c.l.s4 1966171168
  %v4940 = vunpack.c.0.s8 %v4939
  %v4941 = vlaneseq
  %v4942 = vshrl.u32 %v4941, 7
  %v4943 = vsub.s32 %v4940, %v4942
  %v4944 = vrot.slane %v4931, %v4943
  %v4946 = vunpack.c.l.s4 1966171168
  %v4947 = vunpack.c.0.s8 %v4946
  %v4948 = vlaneseq
  %v4949 = vshrl.u32 %v4948, 7
  %v4950 = vsub.s32 %v4947, %v4949
  %v4951 = vrot.slane %v4937, %v4950
  %v4952 = vcombine.high %v4944, %v4944
  %v4953 = vcombine.high %v4951, %v4951
  %v4955 = vunpack.c.l.s4 1966171168
  %v4956 = vunpack.c.0.s8 %v4955
  %v4957 = vlaneseq
  %v4958 = vshrl.u32 %v4957, 7
  %v4959 = vsub.s32 %v4956, %v4958
  %v4960 = vrot.slane %v4944, %v4959
  %v4962 = vunpack.c.l.s4 1966171168
  %v4963 = vunpack.c.0.s8 %v4962
  %v4964 = vlaneseq
  %v4965 = vshrl.u32 %v4964, 7
  %v4966 = vsub.s32 %v4963, %v4965
  %v4967 = vrot.slane %v4951, %v4966
  %v4969 = vunpack.c.l.s4 1966171168
  %v4970 = vunpack.c.0.s8 %v4969
  %v4971 = vlaneseq
  %v4972 = vshrl.u32 %v4971, 7
  %v4973 = vsub.s32 %v4970, %v4972
  %v4974 = vrot.slane %v4952, %v4973
  %v4976 = vunpack.c.l.s4 1966171168
  %v4977 = vunpack.c.0.s8 %v4976
  %v4978 = vlaneseq
  %v4979 = vshrl.u32 %v4978, 7
  %v4980 = vsub.s32 %v4977, %v4979
  %v4981 = vrot.slane %v4953, %v4980
  %v4982 = vcombine.high %v4960, %v4960
  %v4983 = vcombine.high %v4974, %v4974
  %s4984 = scalar_lea.vmem %s69, 16
  %v4985 = vld [vmem:[%s4984] sm:$0xf]
  %v4986 = vld [vmem:[%s4984 + $0x4] sm:$0xf]
  %v4987 = vld [vmem:[%s4984 + $0x8] sm:$0xf]
  %v4988 = vld [vmem:[%s4984 + $0xc] sm:$0xf]
  %s4989 = scalar_lea.vmem %s75, 1
  %v4990 = vld [vmem:[%s4989] sm:$0x1]
  %v4992 = vlaneseq
  %v4993 = vshrl.u32 %v4992, 7
  %v4994 = vsub.s32 0, %v4993
  %v4995 = vrot.slane %v4990, %v4994
  %v5001 = vunpack.c.l.b16 %v4985
  %v5002 = vunpack.c.l.b16 %v4986
  %v5003 = vunpack.c.l.b16 %v4987
  %v5004 = vunpack.c.l.b16 %v4988
  %v5005 = vpack.c.b16 %v5002, %v5001
  %v5006 = vpack.c.b16 %v5004, %v5003
  %5009 = vmatprep.subr.bf16.mxu0 0
  %5010 = vmatpush1.bf16.msra.mxu0 %v5005
  %5011 = vmatprep.subr.bf16.mxu0 0
  %5012 = vmatpush1.bf16.msra.mxu0 %v5006
  %5013 = vmatprep.subr.bf16.mxu0 0
  %5014 = vmatpush1.bf16.msra.mxu0 0
  %5015 = vmatprep.subr.bf16.mxu0 0
  %5016 = vmatpush1.bf16.msra.mxu0 0
  %5017 = vmatprep.subr.bf16.mxu0 0
  %5018 = vmatpush1.bf16.msra.mxu0 0
  %5019 = vmatprep.subr.bf16.mxu0 0
  %5020 = vmatpush1.bf16.msra.mxu0 0
  %5021 = vmatprep.subr.bf16.mxu0 0
  %5022 = vmatpush1.bf16.msra.mxu0 0
  %5023 = vmatprep.subr.bf16.mxu0 0
  %5024 = vmatpush1.bf16.msra.mxu0 0
  %5025 = vmatprep.subr.bf16.mxu0 0
  %5026 = vmatpush1.bf16.msra.mxu0 0
  %5027 = vmatprep.subr.bf16.mxu0 0
  %5028 = vmatpush1.bf16.msra.mxu0 0
  %5029 = vmatprep.subr.bf16.mxu0 0
  %5030 = vmatpush1.bf16.msra.mxu0 0
  %5031 = vmatprep.subr.bf16.mxu0 0
  %5032 = vmatpush1.bf16.msra.mxu0 0
  %5033 = vmatprep.subr.bf16.mxu0 0
  %5034 = vmatpush1.bf16.msra.mxu0 0
  %5035 = vmatprep.subr.bf16.mxu0 0
  %5036 = vmatpush1.bf16.msra.mxu0 0
  %5037 = vmatprep.subr.bf16.mxu0 0
  %5038 = vmatpush1.bf16.msra.mxu0 0
  %5039 = vmatprep.subr.bf16.mxu0 0
  %5040 = vmatpush1.bf16.msra.mxu0 0
  %5041 = vmatprep.mubr.bf16.mxu0 0
  %5042 = vmatmul.mubr.bf16.gmra.mrb[0].mxu0 %v4291
  %v5043 = vpop.f32.mrb[0].mxu0
  %v5044 = vadd.f32 %v4995, %v5043
  %v5045 = vpop.f32.mrb[0].mxu0
  %v5046 = vpop.f32.mrb[0].mxu0
  %v5047 = vpop.f32.mrb[0].mxu0
  %5048 = vdwg.mxu0
  %v5050 = vcombine.high %v5044, %v5044
  %v5052 = vunpack.c.l.s4 1966171168
  %v5053 = vunpack.c.0.s8 %v5052
  %v5054 = vlaneseq
  %v5055 = vshrl.u32 %v5054, 7
  %v5056 = vsub.s32 %v5053, %v5055
  %v5057 = vrot.slane %v5044, %v5056
  %v5059 = vunpack.c.l.s4 1966171168
  %v5060 = vunpack.c.0.s8 %v5059
  %v5061 = vlaneseq
  %v5062 = vshrl.u32 %v5061, 7
  %v5063 = vsub.s32 %v5060, %v5062
  %v5064 = vrot.slane %v5050, %v5063
  %v5065 = vcombine.high %v5057, %v5057
  %v5066 = vcombine.high %v5064, %v5064
  %v5068 = vunpack.c.l.s4 1966171168
  %v5069 = vunpack.c.0.s8 %v5068
  %v5070 = vlaneseq
  %v5071 = vshrl.u32 %v5070, 7
  %v5072 = vsub.s32 %v5069, %v5071
  %v5073 = vrot.slane %v5057, %v5072
  %v5075 = vunpack.c.l.s4 1966171168
  %v5076 = vunpack.c.0.s8 %v5075
  %v5077 = vlaneseq
  %v5078 = vshrl.u32 %v5077, 7
  %v5079 = vsub.s32 %v5076, %v5078
  %v5080 = vrot.slane %v5064, %v5079
  %v5082 = vunpack.c.l.s4 1966171168
  %v5083 = vunpack.c.0.s8 %v5082
  %v5084 = vlaneseq
  %v5085 = vshrl.u32 %v5084, 7
  %v5086 = vsub.s32 %v5083, %v5085
  %v5087 = vrot.slane %v5065, %v5086
  %v5089 = vunpack.c.l.s4 1966171168
  %v5090 = vunpack.c.0.s8 %v5089
  %v5091 = vlaneseq
  %v5092 = vshrl.u32 %v5091, 7
  %v5093 = vsub.s32 %v5090, %v5092
  %v5094 = vrot.slane %v5066, %v5093
  %v5095 = vcombine.high %v5073, %v5073
  %v5096 = vcombine.high %v5087, %v5087
  %v5097 = vpack.c.bf16 %v4865, %v4865
  %v5098 = vpack.c.bf16 %v4868, %v4868
  %v5099 = vcombine.low %v4960, %v4974
  %v5101 = vunpack.c.l.s4 1966171168
  %v5102 = vunpack.c.0.s8 %v5101
  %v5103 = vlaneseq
  %v5104 = vshrl.u32 %v5103, 7
  %v5105 = vsub.s32 %v5102, %v5104
  %v5106 = vrot.slane %v5099, %v5105
  %v5108 = vunpack.c.l.s4 1966171168
  %v5109 = vunpack.c.0.s8 %v5108
  %v5110 = vlaneseq
  %v5111 = vshrl.u32 %v5110, 7
  %v5112 = vsub.s32 %v5109, %v5111
  %v5113 = vrot.slane %v4982, %v5112
  %v5114 = vcombine.low %v5106, %v5113
  %v5116 = vunpack.c.l.s4 1966171168
  %v5117 = vunpack.c.0.s8 %v5116
  %v5118 = vlaneseq
  %v5119 = vshrl.u32 %v5118, 7
  %v5120 = vsub.s32 %v5117, %v5119
  %v5121 = vrot.slane %v5114, %v5120
  %v5122 = vcombine.low %v4983, %v4967
  %v5124 = vunpack.c.l.s4 1966171168
  %v5125 = vunpack.c.0.s8 %v5124
  %v5126 = vlaneseq
  %v5127 = vshrl.u32 %v5126, 7
  %v5128 = vsub.s32 %v5125, %v5127
  %v5129 = vrot.slane %v5122, %v5128
  %v5131 = vunpack.c.l.s4 1966171168
  %v5132 = vunpack.c.0.s8 %v5131
  %v5133 = vlaneseq
  %v5134 = vshrl.u32 %v5133, 7
  %v5135 = vsub.s32 %v5132, %v5134
  %v5136 = vrot.slane %v4981, %v5135
  %v5137 = vcombine.low %v5129, %v5136
  %v5139 = vunpack.c.l.s4 1966171168
  %v5140 = vunpack.c.0.s8 %v5139
  %v5141 = vlaneseq
  %v5142 = vshrl.u32 %v5141, 7
  %v5143 = vsub.s32 %v5140, %v5142
  %v5144 = vrot.slane %v5137, %v5143
  %v5147 = vpack.c.bf16 %v5121, %v5121
  %v5148 = vpack.c.bf16 %v5144, %v5144
  %v5150 = vsel %vm961, %v5097, 0
  %v5153 = vsel %vm961, %v5147, 0
  %5155 = vmatprep.subr.bf16.mxu0 0
  %5156 = vmatpush1.bf16.xpose.msra.mxu0 %v5153
  %5157 = vmatprep.subr.bf16.mxu0 0
  %5158 = vmatpush1.bf16.xpose.msra.mxu0 0
  %5159 = vmatprep.subr.bf16.mxu0 0
  %5160 = vmatpush1.bf16.xpose.msra.mxu0 0
  %5161 = vmatprep.subr.bf16.mxu0 0
  %5162 = vmatpush1.bf16.xpose.msra.mxu0 0
  %5163 = vmatprep.subr.bf16.mxu0 0
  %5164 = vmatpush1.bf16.xpose.msra.mxu0 0
  %5165 = vmatprep.subr.bf16.mxu0 0
  %5166 = vmatpush1.bf16.xpose.msra.mxu0 0
  %5167 = vmatprep.subr.bf16.mxu0 0
  %5168 = vmatpush1.bf16.xpose.msra.mxu0 0
  %5169 = vmatprep.subr.bf16.mxu0 0
  %5170 = vmatpush1.bf16.xpose.msra.mxu0 0
  %5171 = vmatprep.subr.bf16.mxu0 0
  %5172 = vmatpush1.bf16.xpose.msra.mxu0 0
  %5173 = vmatprep.subr.bf16.mxu0 0
  %5174 = vmatpush1.bf16.xpose.msra.mxu0 0
  %5175 = vmatprep.subr.bf16.mxu0 0
  %5176 = vmatpush1.bf16.xpose.msra.mxu0 0
  %5177 = vmatprep.subr.bf16.mxu0 0
  %5178 = vmatpush1.bf16.xpose.msra.mxu0 0
  %5179 = vmatprep.subr.bf16.mxu0 0
  %5180 = vmatpush1.bf16.xpose.msra.mxu0 0
  %5181 = vmatprep.subr.bf16.mxu0 0
  %5182 = vmatpush1.bf16.xpose.msra.mxu0 0
  %5183 = vmatprep.subr.bf16.mxu0 0
  %5184 = vmatpush1.bf16.xpose.msra.mxu0 0
  %5185 = vmatprep.subr.bf16.mxu0 0
  %5186 = vmatpush1.bf16.xpose.msra.mxu0 0
  %5187 = vmatprep.mubr.bf16.mxu0 0
  %5188 = vmatmul.mubr.bf16.gmra.mrb[0].mxu0 %v5150
  %v5189 = vpop.f32.mrb[0].mxu0
  %v5190 = vadd.f32 0.0, %v5189
  %v5191 = vpop.f32.mrb[0].mxu0
  %v5192 = vpop.f32.mrb[0].mxu0
  %v5193 = vpop.f32.mrb[0].mxu0
  %5194 = vdwg.mxu0
  %v5196 = vsel %vm961, %v5098, 0
  %v5199 = vsel %vm961, %v5148, 0
  %5201 = vmatprep.subr.bf16.mxu0 0
  %5202 = vmatpush1.bf16.xpose.msra.mxu0 %v5199
  %5203 = vmatprep.subr.bf16.mxu0 0
  %5204 = vmatpush1.bf16.xpose.msra.mxu0 0
  %5205 = vmatprep.subr.bf16.mxu0 0
  %5206 = vmatpush1.bf16.xpose.msra.mxu0 0
  %5207 = vmatprep.subr.bf16.mxu0 0
  %5208 = vmatpush1.bf16.xpose.msra.mxu0 0
  %5209 = vmatprep.subr.bf16.mxu0 0
  %5210 = vmatpush1.bf16.xpose.msra.mxu0 0
  %5211 = vmatprep.subr.bf16.mxu0 0
  %5212 = vmatpush1.bf16.xpose.msra.mxu0 0
  %5213 = vmatprep.subr.bf16.mxu0 0
  %5214 = vmatpush1.bf16.xpose.msra.mxu0 0
  %5215 = vmatprep.subr.bf16.mxu0 0
  %5216 = vmatpush1.bf16.xpose.msra.mxu0 0
  %5217 = vmatprep.subr.bf16.mxu0 0
  %5218 = vmatpush1.bf16.xpose.msra.mxu0 0
  %5219 = vmatprep.subr.bf16.mxu0 0
  %5220 = vmatpush1.bf16.xpose.msra.mxu0 0
  %5221 = vmatprep.subr.bf16.mxu0 0
  %5222 = vmatpush1.bf16.xpose.msra.mxu0 0
  %5223 = vmatprep.subr.bf16.mxu0 0
  %5224 = vmatpush1.bf16.xpose.msra.mxu0 0
  %5225 = vmatprep.subr.bf16.mxu0 0
  %5226 = vmatpush1.bf16.xpose.msra.mxu0 0
  %5227 = vmatprep.subr.bf16.mxu0 0
  %5228 = vmatpush1.bf16.xpose.msra.mxu0 0
  %5229 = vmatprep.subr.bf16.mxu0 0
  %5230 = vmatpush1.bf16.xpose.msra.mxu0 0
  %5231 = vmatprep.subr.bf16.mxu0 0
  %5232 = vmatpush1.bf16.xpose.msra.mxu0 0
  %5233 = vmatprep.mubr.bf16.mxu0 0
  %5234 = vmatmul.mubr.bf16.gmra.mrb[0].mxu0 %v5196
  %v5235 = vpop.f32.mrb[0].mxu0
  %v5236 = vadd.f32 0.0, %v5235
  %v5237 = vpop.f32.mrb[0].mxu0
  %v5238 = vpop.f32.mrb[0].mxu0
  %v5239 = vpop.f32.mrb[0].mxu0
  %5240 = vdwg.mxu0
  %v5241 = vsel %vm1129, %v5190, -inf
  %5242 = vmax.xlane.f32.xlu0 %v5241
  %v5243 = vpop.xlane.xlu0 %5242
  %v5244 = vsel %vm1129, %v5236, -inf
  %5245 = vmax.xlane.f32.xlu0 %v5244
  %v5246 = vpop.xlane.xlu0 %5245
  %v5247 = vsub.f32 %v5190, %v5243
  %v5248 = vsub.f32 %v5236, %v5246
  %v5249 = vmul.f32 %v5247, 1.442695
  %v5250 = vpow.pop %v5249
  %v5251 = vmul.f32 %v5248, 1.442695
  %v5252 = vpow.pop %v5251
  %v5253 = vsel %vm1129, %v5250, 0.0
  %5254 = vadd.xlane.f32.xlu0 %v5253
  %v5255 = vpop.xlane.xlu0 %5254
  %v5256 = vsel %vm1129, %v5252, 0.0
  %5257 = vadd.xlane.f32.xlu0 %v5256
  %v5258 = vpop.xlane.xlu0 %5257
  %v5259 = vrcp.pop %v5255
  %v5260 = vrcp.pop %v5258
  %v5261 = vmul.f32 %v5250, %v5259
  %v5262 = vmul.f32 %v5252, %v5260
  %v5263 = vpack.c.bf16 %v5261, %v5261
  %v5264 = vpack.c.bf16 %v5262, %v5262
  %v5265 = vcombine.low %v5073, %v5087
  %v5267 = vunpack.c.l.s4 1966171168
  %v5268 = vunpack.c.0.s8 %v5267
  %v5269 = vlaneseq
  %v5270 = vshrl.u32 %v5269, 7
  %v5271 = vsub.s32 %v5268, %v5270
  %v5272 = vrot.slane %v5265, %v5271
  %v5274 = vunpack.c.l.s4 1966171168
  %v5275 = vunpack.c.0.s8 %v5274
  %v5276 = vlaneseq
  %v5277 = vshrl.u32 %v5276, 7
  %v5278 = vsub.s32 %v5275, %v5277
  %v5279 = vrot.slane %v5095, %v5278
  %v5280 = vcombine.low %v5272, %v5279
  %v5282 = vunpack.c.l.s4 1966171168
  %v5283 = vunpack.c.0.s8 %v5282
  %v5284 = vlaneseq
  %v5285 = vshrl.u32 %v5284, 7
  %v5286 = vsub.s32 %v5283, %v5285
  %v5287 = vrot.slane %v5280, %v5286
  %v5288 = vcombine.low %v5096, %v5080
  %v5290 = vunpack.c.l.s4 1966171168
  %v5291 = vunpack.c.0.s8 %v5290
  %v5292 = vlaneseq
  %v5293 = vshrl.u32 %v5292, 7
  %v5294 = vsub.s32 %v5291, %v5293
  %v5295 = vrot.slane %v5288, %v5294
  %v5297 = vunpack.c.l.s4 1966171168
  %v5298 = vunpack.c.0.s8 %v5297
  %v5299 = vlaneseq
  %v5300 = vshrl.u32 %v5299, 7
  %v5301 = vsub.s32 %v5298, %v5300
  %v5302 = vrot.slane %v5094, %v5301
  %v5303 = vcombine.low %v5295, %v5302
  %v5305 = vunpack.c.l.s4 1966171168
  %v5306 = vunpack.c.0.s8 %v5305
  %v5307 = vlaneseq
  %v5308 = vshrl.u32 %v5307, 7
  %v5309 = vsub.s32 %v5306, %v5308
  %v5310 = vrot.slane %v5303, %v5309
  %v5313 = vpack.c.bf16 %v5287, %v5287
  %v5314 = vpack.c.bf16 %v5310, %v5310
  %v5316 = vsel %vm1129, %v5263, 0
  %v5319 = vand.u32 %v5313, %v1135
  %5321 = vmatprep.subr.bf16.mxu0 0
  %5322 = vmatpush1.bf16.msra.mxu0 %v5319
  %5323 = vmatprep.subr.bf16.mxu0 0
  %5324 = vmatpush1.bf16.msra.mxu0 0
  %5325 = vmatprep.subr.bf16.mxu0 0
  %5326 = vmatpush1.bf16.msra.mxu0 0
  %5327 = vmatprep.subr.bf16.mxu0 0
  %5328 = vmatpush1.bf16.msra.mxu0 0
  %5329 = vmatprep.subr.bf16.mxu0 0
  %5330 = vmatpush1.bf16.msra.mxu0 0
  %5331 = vmatprep.subr.bf16.mxu0 0
  %5332 = vmatpush1.bf16.msra.mxu0 0
  %5333 = vmatprep.subr.bf16.mxu0 0
  %5334 = vmatpush1.bf16.msra.mxu0 0
  %5335 = vmatprep.subr.bf16.mxu0 0
  %5336 = vmatpush1.bf16.msra.mxu0 0
  %5337 = vmatprep.subr.bf16.mxu0 0
  %5338 = vmatpush1.bf16.msra.mxu0 0
  %5339 = vmatprep.subr.bf16.mxu0 0
  %5340 = vmatpush1.bf16.msra.mxu0 0
  %5341 = vmatprep.subr.bf16.mxu0 0
  %5342 = vmatpush1.bf16.msra.mxu0 0
  %5343 = vmatprep.subr.bf16.mxu0 0
  %5344 = vmatpush1.bf16.msra.mxu0 0
  %5345 = vmatprep.subr.bf16.mxu0 0
  %5346 = vmatpush1.bf16.msra.mxu0 0
  %5347 = vmatprep.subr.bf16.mxu0 0
  %5348 = vmatpush1.bf16.msra.mxu0 0
  %5349 = vmatprep.subr.bf16.mxu0 0
  %5350 = vmatpush1.bf16.msra.mxu0 0
  %5351 = vmatprep.subr.bf16.mxu0 0
  %5352 = vmatpush1.bf16.msra.mxu0 0
  %5353 = vmatprep.mubr.bf16.mxu0 0
  %5354 = vmatmul.mubr.bf16.gmra.mrb[0].mxu0 %v5316
  %v5355 = vpop.f32.mrb[0].mxu0
  %v5356 = vadd.f32 0.0, %v5355
  %v5357 = vpop.f32.mrb[0].mxu0
  %v5358 = vpop.f32.mrb[0].mxu0
  %v5359 = vpop.f32.mrb[0].mxu0
  %5360 = vdwg.mxu0
  %v5362 = vsel %vm1129, %v5264, 0
  %v5365 = vand.u32 %v5314, %v1135
  %5367 = vmatprep.subr.bf16.mxu0 0
  %5368 = vmatpush1.bf16.msra.mxu0 %v5365
  %5369 = vmatprep.subr.bf16.mxu0 0
  %5370 = vmatpush1.bf16.msra.mxu0 0
  %5371 = vmatprep.subr.bf16.mxu0 0
  %5372 = vmatpush1.bf16.msra.mxu0 0
  %5373 = vmatprep.subr.bf16.mxu0 0
  %5374 = vmatpush1.bf16.msra.mxu0 0
  %5375 = vmatprep.subr.bf16.mxu0 0
  %5376 = vmatpush1.bf16.msra.mxu0 0
  %5377 = vmatprep.subr.bf16.mxu0 0
  %5378 = vmatpush1.bf16.msra.mxu0 0
  %5379 = vmatprep.subr.bf16.mxu0 0
  %5380 = vmatpush1.bf16.msra.mxu0 0
  %5381 = vmatprep.subr.bf16.mxu0 0
  %5382 = vmatpush1.bf16.msra.mxu0 0
  %5383 = vmatprep.subr.bf16.mxu0 0
  %5384 = vmatpush1.bf16.msra.mxu0 0
  %5385 = vmatprep.subr.bf16.mxu0 0
  %5386 = vmatpush1.bf16.msra.mxu0 0
  %5387 = vmatprep.subr.bf16.mxu0 0
  %5388 = vmatpush1.bf16.msra.mxu0 0
  %5389 = vmatprep.subr.bf16.mxu0 0
  %5390 = vmatpush1.bf16.msra.mxu0 0
  %5391 = vmatprep.subr.bf16.mxu0 0
  %5392 = vmatpush1.bf16.msra.mxu0 0
  %5393 = vmatprep.subr.bf16.mxu0 0
  %5394 = vmatpush1.bf16.msra.mxu0 0
  %5395 = vmatprep.subr.bf16.mxu0 0
  %5396 = vmatpush1.bf16.msra.mxu0 0
  %5397 = vmatprep.subr.bf16.mxu0 0
  %5398 = vmatpush1.bf16.msra.mxu0 0
  %5399 = vmatprep.mubr.bf16.mxu0 0
  %5400 = vmatmul.mubr.bf16.gmra.mrb[0].mxu0 %v5362
  %v5401 = vpop.f32.mrb[0].mxu0
  %v5402 = vadd.f32 0.0, %v5401
  %v5403 = vpop.f32.mrb[0].mxu0
  %v5404 = vpop.f32.mrb[0].mxu0
  %v5405 = vpop.f32.mrb[0].mxu0
  %5406 = vdwg.mxu0
  %v5407 = vpack.c.bf16 %v5402, %v5356
  %s5408 = scalar_lea.vmem %s77, 8
  %v5409 = vld [vmem:[%s5408] sm:$0xf]
  %v5410 = vld [vmem:[%s5408 + $0x4] sm:$0xf]
  %v5413 = vunpack.c.l.b16 %v5409
  %v5414 = vunpack.c.l.b16 %v5410
  %v5415 = vpack.c.b16 %v5414, %v5413
  %v5418 = vsel %vm961, %v5407, 0
  %5420 = vmatprep.subr.bf16.mxu0 0
  %5421 = vmatpush1.bf16.msra.mxu0 %v5415
  %5422 = vmatprep.subr.bf16.mxu0 0
  %5423 = vmatpush1.bf16.msra.mxu0 0
  %5424 = vmatprep.subr.bf16.mxu0 0
  %5425 = vmatpush1.bf16.msra.mxu0 0
  %5426 = vmatprep.subr.bf16.mxu0 0
  %5427 = vmatpush1.bf16.msra.mxu0 0
  %5428 = vmatprep.subr.bf16.mxu0 0
  %5429 = vmatpush1.bf16.msra.mxu0 0
  %5430 = vmatprep.subr.bf16.mxu0 0
  %5431 = vmatpush1.bf16.msra.mxu0 0
  %5432 = vmatprep.subr.bf16.mxu0 0
  %5433 = vmatpush1.bf16.msra.mxu0 0
  %5434 = vmatprep.subr.bf16.mxu0 0
  %5435 = vmatpush1.bf16.msra.mxu0 0
  %5436 = vmatprep.subr.bf16.mxu0 0
  %5437 = vmatpush1.bf16.msra.mxu0 0
  %5438 = vmatprep.subr.bf16.mxu0 0
  %5439 = vmatpush1.bf16.msra.mxu0 0
  %5440 = vmatprep.subr.bf16.mxu0 0
  %5441 = vmatpush1.bf16.msra.mxu0 0
  %5442 = vmatprep.subr.bf16.mxu0 0
  %5443 = vmatpush1.bf16.msra.mxu0 0
  %5444 = vmatprep.subr.bf16.mxu0 0
  %5445 = vmatpush1.bf16.msra.mxu0 0
  %5446 = vmatprep.subr.bf16.mxu0 0
  %5447 = vmatpush1.bf16.msra.mxu0 0
  %5448 = vmatprep.subr.bf16.mxu0 0
  %5449 = vmatpush1.bf16.msra.mxu0 0
  %5450 = vmatprep.subr.bf16.mxu0 0
  %5451 = vmatpush1.bf16.msra.mxu0 0
  %5452 = vmatprep.mubr.bf16.mxu0 0
  %5453 = vmatmul.mubr.bf16.gmra.mrb[0].mxu0 %v5418
  %v5454 = vpop.f32.mrb[0].mxu0
  %v5455 = vadd.f32 0.0, %v5454
  %v5456 = vpop.f32.mrb[0].mxu0
  %v5457 = vpop.f32.mrb[0].mxu0
  %v5458 = vadd.f32 0.0, %v5457
  %v5459 = vpop.f32.mrb[0].mxu0
  %5460 = vdwg.mxu0
  %v5463 = vunpack.c.l.b16 %v4803
  %v5464 = vunpack.c.l.b16 %v4804
  %v5465 = vpack.c.b16 %v5464, %v5463
  %v5468 = vsel %vm961, %v4802, 0
  %5470 = vmatprep.subr.bf16.mxu0 0
  %5471 = vmatpush1.bf16.msra.mxu0 %v5465
  %5472 = vmatprep.subr.bf16.mxu0 0
  %5473 = vmatpush1.bf16.msra.mxu0 0
  %5474 = vmatprep.subr.bf16.mxu0 0
  %5475 = vmatpush1.bf16.msra.mxu0 0
  %5476 = vmatprep.subr.bf16.mxu0 0
  %5477 = vmatpush1.bf16.msra.mxu0 0
  %5478 = vmatprep.subr.bf16.mxu0 0
  %5479 = vmatpush1.bf16.msra.mxu0 0
  %5480 = vmatprep.subr.bf16.mxu0 0
  %5481 = vmatpush1.bf16.msra.mxu0 0
  %5482 = vmatprep.subr.bf16.mxu0 0
  %5483 = vmatpush1.bf16.msra.mxu0 0
  %5484 = vmatprep.subr.bf16.mxu0 0
  %5485 = vmatpush1.bf16.msra.mxu0 0
  %5486 = vmatprep.subr.bf16.mxu0 0
  %5487 = vmatpush1.bf16.msra.mxu0 0
  %5488 = vmatprep.subr.bf16.mxu0 0
  %5489 = vmatpush1.bf16.msra.mxu0 0
  %5490 = vmatprep.subr.bf16.mxu0 0
  %5491 = vmatpush1.bf16.msra.mxu0 0
  %5492 = vmatprep.subr.bf16.mxu0 0
  %5493 = vmatpush1.bf16.msra.mxu0 0
  %5494 = vmatprep.subr.bf16.mxu0 0
  %5495 = vmatpush1.bf16.msra.mxu0 0
  %5496 = vmatprep.subr.bf16.mxu0 0
  %5497 = vmatpush1.bf16.msra.mxu0 0
  %5498 = vmatprep.subr.bf16.mxu0 0
  %5499 = vmatpush1.bf16.msra.mxu0 0
  %5500 = vmatprep.subr.bf16.mxu0 0
  %5501 = vmatpush1.bf16.msra.mxu0 0
  %5502 = vmatprep.mubr.bf16.mxu0 0
  %5503 = vmatmul.mubr.bf16.gmra.mrb[0].mxu0 %v5468
  %v5504 = vpop.f32.mrb[0].mxu0
  %v5505 = vadd.f32 %v5455, %v5504
  %v5506 = vpop.f32.mrb[0].mxu0
  %v5507 = vpop.f32.mrb[0].mxu0
  %v5508 = vadd.f32 %v5458, %v5507
  %v5509 = vpop.f32.mrb[0].mxu0
  %5510 = vdwg.mxu0
  %v5511 = vld [vmem:[%s79] sm:$0x1]
  %v5513 = vlaneseq
  %v5514 = vshrl.u32 %v5513, 7
  %v5515 = vsub.s32 0, %v5514
  %v5516 = vrot.slane %v5511, %v5515
  %v5518 = vadd.f32 %v5505, %v5516
  %v5519 = vadd.f32 %v5508, %v5516
  %v5520 = vadd.f32 %v4149, %v5518
  %v5521 = vadd.f32 %v4150, %v5519
  %v5522 = vld [vmem:[%s85] sm:$0x1]
  %v5523 = vld [vmem:[%s87] sm:$0x1]
  %v5524 = vsel %vm547, %v5520, 0.0
  %5525 = vadd.xlane.f32.xlu0 %v5524
  %v5526 = vpop.xlane.xlu0 %5525
  %v5527 = vsel %vm547, %v5521, 0.0
  %5528 = vadd.xlane.f32.xlu0 %v5527
  %v5529 = vpop.xlane.xlu0 %5528
  %v5530 = vmul.f32 %v5526, %v2326
  %v5531 = vmul.f32 %v5529, %v2326
  %v5532 = vsub.f32 %v5520, %v5530
  %v5533 = vsub.f32 %v5521, %v5531
  %v5534 = vmul.f32 %v5532, %v5532
  %v5535 = vmul.f32 %v5533, %v5533
  %v5536 = vsel %vm547, %v5534, 0.0
  %5537 = vadd.xlane.f32.xlu0 %v5536
  %v5538 = vpop.xlane.xlu0 %5537
  %v5539 = vsel %vm547, %v5535, 0.0
  %5540 = vadd.xlane.f32.xlu0 %v5539
  %v5541 = vpop.xlane.xlu0 %5540
  %v5542 = vmul.f32 %v5538, %v2326
  %v5543 = vmul.f32 %v5541, %v2326
  %v5544 = vadd.f32 %v5542, 1e-05
  %v5545 = vadd.f32 %v5543, 1e-05
  %v5546 = vrsqrt.pop %v5544
  %v5547 = vrsqrt.pop %v5545
  %v5548 = vmul.f32 %v5532, %v5546
  %v5549 = vmul.f32 %v5533, %v5547
  %v5551 = vlaneseq
  %v5552 = vshrl.u32 %v5551, 7
  %v5553 = vsub.s32 0, %v5552
  %v5554 = vrot.slane %v5522, %v5553
  %v5556 = vmul.f32 %v5548, %v5554
  %v5557 = vmul.f32 %v5549, %v5554
  %v5559 = vlaneseq
  %v5560 = vshrl.u32 %v5559, 7
  %v5561 = vsub.s32 0, %v5560
  %v5562 = vrot.slane %v5523, %v5561
  %v5564 = vadd.f32 %v5556, %v5562
  %v5565 = vadd.f32 %v5557, %v5562
  %v5566 = vpack.c.bf16 %v5565, %v5564
  %v5567 = vld [vmem:[%s89] sm:$0xf]
  %v5568 = vld [vmem:[%s89 + $0x4] sm:$0xf]
  %v5569 = vld [vmem:[%s89 + $0x8] sm:$0xf]
  %v5570 = vld [vmem:[%s89 + $0xc] sm:$0xf]
  %v5571 = vld [vmem:[%s91] sm:$0x1]
  %v5573 = vlaneseq
  %v5574 = vshrl.u32 %v5573, 7
  %v5575 = vsub.s32 0, %v5574
  %v5576 = vrot.slane %v5571, %v5575
  %v5582 = vunpack.c.l.b16 %v5567
  %v5583 = vunpack.c.l.b16 %v5568
  %v5584 = vunpack.c.l.b16 %v5569
  %v5585 = vunpack.c.l.b16 %v5570
  %v5586 = vpack.c.b16 %v5583, %v5582
  %v5587 = vpack.c.b16 %v5585, %v5584
  %v5591 = vsel %vm547, %v5566, 0
  %5593 = vmatprep.subr.bf16.mxu0 0
  %5594 = vmatpush1.bf16.msra.mxu0 %v5586
  %5595 = vmatprep.subr.bf16.mxu0 0
  %5596 = vmatpush1.bf16.msra.mxu0 %v5587
  %5597 = vmatprep.subr.bf16.mxu0 0
  %5598 = vmatpush1.bf16.msra.mxu0 0
  %5599 = vmatprep.subr.bf16.mxu0 0
  %5600 = vmatpush1.bf16.msra.mxu0 0
  %5601 = vmatprep.subr.bf16.mxu0 0
  %5602 = vmatpush1.bf16.msra.mxu0 0
  %5603 = vmatprep.subr.bf16.mxu0 0
  %5604 = vmatpush1.bf16.msra.mxu0 0
  %5605 = vmatprep.subr.bf16.mxu0 0
  %5606 = vmatpush1.bf16.msra.mxu0 0
  %5607 = vmatprep.subr.bf16.mxu0 0
  %5608 = vmatpush1.bf16.msra.mxu0 0
  %5609 = vmatprep.subr.bf16.mxu0 0
  %5610 = vmatpush1.bf16.msra.mxu0 0
  %5611 = vmatprep.subr.bf16.mxu0 0
  %5612 = vmatpush1.bf16.msra.mxu0 0
  %5613 = vmatprep.subr.bf16.mxu0 0
  %5614 = vmatpush1.bf16.msra.mxu0 0
  %5615 = vmatprep.subr.bf16.mxu0 0
  %5616 = vmatpush1.bf16.msra.mxu0 0
  %5617 = vmatprep.subr.bf16.mxu0 0
  %5618 = vmatpush1.bf16.msra.mxu0 0
  %5619 = vmatprep.subr.bf16.mxu0 0
  %5620 = vmatpush1.bf16.msra.mxu0 0
  %5621 = vmatprep.subr.bf16.mxu0 0
  %5622 = vmatpush1.bf16.msra.mxu0 0
  %5623 = vmatprep.subr.bf16.mxu0 0
  %5624 = vmatpush1.bf16.msra.mxu0 0
  %5625 = vmatprep.mubr.bf16.mxu0 0
  %5626 = vmatmul.mubr.bf16.gmra.mrb[0].mxu0 %v5591
  %v5627 = vpop.f32.mrb[0].mxu0
  %v5628 = vadd.f32 %v5576, %v5627
  %v5629 = vpop.f32.mrb[0].mxu0
  %v5630 = vpop.f32.mrb[0].mxu0
  %v5631 = vadd.f32 %v5576, %v5630
  %v5632 = vpop.f32.mrb[0].mxu0
  %5633 = vdwg.mxu0
  %v5634 = vmax.f32 %v5628, 0.0
  %v5635 = vmax.f32 %v5631, 0.0
  %v5636 = vpack.c.bf16 %v5635, %v5634
  %v5637 = vld [vmem:[%s93] sm:$0xf]
  %v5638 = vld [vmem:[%s93 + $0x4] sm:$0xf]
  %v5639 = vld [vmem:[%s93 + $0x8] sm:$0xf]
  %v5640 = vld [vmem:[%s93 + $0xc] sm:$0xf]
  %v5641 = vld [vmem:[%s93 + $0x10] sm:$0xf]
  %v5642 = vld [vmem:[%s93 + $0x14] sm:$0xf]
  %v5643 = vld [vmem:[%s93 + $0x18] sm:$0xf]
  %v5644 = vld [vmem:[%s93 + $0x1c] sm:$0xf]
  %v5645 = vld [vmem:[%s95] sm:$0x1]
  %v5647 = vlaneseq
  %v5648 = vshrl.u32 %v5647, 7
  %v5649 = vsub.s32 0, %v5648
  %v5650 = vrot.slane %v5645, %v5649
  %v5660 = vunpack.c.l.b16 %v5637
  %v5661 = vunpack.c.l.b16 %v5638
  %v5662 = vunpack.c.l.b16 %v5639
  %v5663 = vunpack.c.l.b16 %v5640
  %v5664 = vunpack.c.l.b16 %v5641
  %v5665 = vunpack.c.l.b16 %v5642
  %v5666 = vunpack.c.l.b16 %v5643
  %v5667 = vunpack.c.l.b16 %v5644
  %v5668 = vpack.c.b16 %v5661, %v5660
  %v5669 = vpack.c.b16 %v5663, %v5662
  %v5670 = vpack.c.b16 %v5665, %v5664
  %v5671 = vpack.c.b16 %v5667, %v5666
  %v5677 = vsel %vm2744, %v5636, 0
  %5679 = vmatprep.subr.bf16.mxu0 0
  %5680 = vmatpush1.bf16.msra.mxu0 %v5668
  %5681 = vmatprep.subr.bf16.mxu0 0
  %5682 = vmatpush1.bf16.msra.mxu0 %v5669
  %5683 = vmatprep.subr.bf16.mxu0 0
  %5684 = vmatpush1.bf16.msra.mxu0 %v5670
  %5685 = vmatprep.subr.bf16.mxu0 0
  %5686 = vmatpush1.bf16.msra.mxu0 %v5671
  %5687 = vmatprep.subr.bf16.mxu0 0
  %5688 = vmatpush1.bf16.msra.mxu0 0
  %5689 = vmatprep.subr.bf16.mxu0 0
  %5690 = vmatpush1.bf16.msra.mxu0 0
  %5691 = vmatprep.subr.bf16.mxu0 0
  %5692 = vmatpush1.bf16.msra.mxu0 0
  %5693 = vmatprep.subr.bf16.mxu0 0
  %5694 = vmatpush1.bf16.msra.mxu0 0
  %5695 = vmatprep.subr.bf16.mxu0 0
  %5696 = vmatpush1.bf16.msra.mxu0 0
  %5697 = vmatprep.subr.bf16.mxu0 0
  %5698 = vmatpush1.bf16.msra.mxu0 0
  %5699 = vmatprep.subr.bf16.mxu0 0
  %5700 = vmatpush1.bf16.msra.mxu0 0
  %5701 = vmatprep.subr.bf16.mxu0 0
  %5702 = vmatpush1.bf16.msra.mxu0 0
  %5703 = vmatprep.subr.bf16.mxu0 0
  %5704 = vmatpush1.bf16.msra.mxu0 0
  %5705 = vmatprep.subr.bf16.mxu0 0
  %5706 = vmatpush1.bf16.msra.mxu0 0
  %5707 = vmatprep.subr.bf16.mxu0 0
  %5708 = vmatpush1.bf16.msra.mxu0 0
  %5709 = vmatprep.subr.bf16.mxu0 0
  %5710 = vmatpush1.bf16.msra.mxu0 0
  %5711 = vmatprep.mubr.bf16.mxu0 0
  %5712 = vmatmul.mubr.bf16.gmra.mrb[0].mxu0 %v5677
  %v5713 = vpop.f32.mrb[0].mxu0
  %v5714 = vadd.f32 %v5650, %v5713
  %v5715 = vpop.f32.mrb[0].mxu0
  %v5716 = vpop.f32.mrb[0].mxu0
  %v5717 = vadd.f32 %v5650, %v5716
  %v5718 = vpop.f32.mrb[0].mxu0
  %5719 = vdwg.mxu0
  %v5720 = vadd.f32 %v5564, %v5714
  %v5721 = vadd.f32 %v5565, %v5717
  %v5722 = vld [vmem:[%s97] sm:$0x1]
  %v5723 = vld [vmem:[%s99] sm:$0x1]
  %v5724 = vsel %vm547, %v5720, 0.0
  %5725 = vadd.xlane.f32.xlu0 %v5724
  %v5726 = vpop.xlane.xlu0 %5725
  %v5727 = vsel %vm547, %v5721, 0.0
  %5728 = vadd.xlane.f32.xlu0 %v5727
  %v5729 = vpop.xlane.xlu0 %5728
  %v5730 = vmul.f32 %v5726, %v2326
  %v5731 = vmul.f32 %v5729, %v2326
  %v5732 = vsub.f32 %v5720, %v5730
  %v5733 = vsub.f32 %v5721, %v5731
  %v5734 = vmul.f32 %v5732, %v5732
  %v5735 = vmul.f32 %v5733, %v5733
  %v5736 = vsel %vm547, %v5734, 0.0
  %5737 = vadd.xlane.f32.xlu0 %v5736
  %v5738 = vpop.xlane.xlu0 %5737
  %v5739 = vsel %vm547, %v5735, 0.0
  %5740 = vadd.xlane.f32.xlu0 %v5739
  %v5741 = vpop.xlane.xlu0 %5740
  %v5742 = vmul.f32 %v5738, %v2326
  %v5743 = vmul.f32 %v5741, %v2326
  %v5744 = vadd.f32 %v5742, 1e-05
  %v5745 = vadd.f32 %v5743, 1e-05
  %v5746 = vrsqrt.pop %v5744
  %v5747 = vrsqrt.pop %v5745
  %v5748 = vmul.f32 %v5732, %v5746
  %v5749 = vmul.f32 %v5733, %v5747
  %v5751 = vlaneseq
  %v5752 = vshrl.u32 %v5751, 7
  %v5753 = vsub.s32 0, %v5752
  %v5754 = vrot.slane %v5722, %v5753
  %v5756 = vmul.f32 %v5748, %v5754
  %v5757 = vmul.f32 %v5749, %v5754
  %v5759 = vlaneseq
  %v5760 = vshrl.u32 %v5759, 7
  %v5761 = vsub.s32 0, %v5760
  %v5762 = vrot.slane %v5723, %v5761
  %v5764 = vadd.f32 %v5756, %v5762
  %v5765 = vadd.f32 %v5757, %v5762
  %v5766 = vpack.c.bf16 %v5765, %v5764
  %v5767 = vld [vmem:[%s101] sm:$0xf]
  %v5768 = vld [vmem:[%s101 + $0x4] sm:$0xf]
  %v5769 = vld [vmem:[%s101 + $0x8] sm:$0xf]
  %v5770 = vld [vmem:[%s101 + $0xc] sm:$0xf]
  %v5771 = vld [vmem:[%s103] sm:$0x1]
  %v5773 = vlaneseq
  %v5774 = vshrl.u32 %v5773, 7
  %v5775 = vsub.s32 0, %v5774
  %v5776 = vrot.slane %v5771, %v5775
  %v5782 = vunpack.c.l.b16 %v5767
  %v5783 = vunpack.c.l.b16 %v5768
  %v5784 = vunpack.c.l.b16 %v5769
  %v5785 = vunpack.c.l.b16 %v5770
  %v5786 = vpack.c.b16 %v5783, %v5782
  %v5787 = vpack.c.b16 %v5785, %v5784
  %v5791 = vsel %vm547, %v5766, 0
  %5793 = vmatprep.subr.bf16.mxu0 0
  %5794 = vmatpush1.bf16.msra.mxu0 %v5786
  %5795 = vmatprep.subr.bf16.mxu0 0
  %5796 = vmatpush1.bf16.msra.mxu0 %v5787
  %5797 = vmatprep.subr.bf16.mxu0 0
  %5798 = vmatpush1.bf16.msra.mxu0 0
  %5799 = vmatprep.subr.bf16.mxu0 0
  %5800 = vmatpush1.bf16.msra.mxu0 0
  %5801 = vmatprep.subr.bf16.mxu0 0
  %5802 = vmatpush1.bf16.msra.mxu0 0
  %5803 = vmatprep.subr.bf16.mxu0 0
  %5804 = vmatpush1.bf16.msra.mxu0 0
  %5805 = vmatprep.subr.bf16.mxu0 0
  %5806 = vmatpush1.bf16.msra.mxu0 0
  %5807 = vmatprep.subr.bf16.mxu0 0
  %5808 = vmatpush1.bf16.msra.mxu0 0
  %5809 = vmatprep.subr.bf16.mxu0 0
  %5810 = vmatpush1.bf16.msra.mxu0 0
  %5811 = vmatprep.subr.bf16.mxu0 0
  %5812 = vmatpush1.bf16.msra.mxu0 0
  %5813 = vmatprep.subr.bf16.mxu0 0
  %5814 = vmatpush1.bf16.msra.mxu0 0
  %5815 = vmatprep.subr.bf16.mxu0 0
  %5816 = vmatpush1.bf16.msra.mxu0 0
  %5817 = vmatprep.subr.bf16.mxu0 0
  %5818 = vmatpush1.bf16.msra.mxu0 0
  %5819 = vmatprep.subr.bf16.mxu0 0
  %5820 = vmatpush1.bf16.msra.mxu0 0
  %5821 = vmatprep.subr.bf16.mxu0 0
  %5822 = vmatpush1.bf16.msra.mxu0 0
  %5823 = vmatprep.subr.bf16.mxu0 0
  %5824 = vmatpush1.bf16.msra.mxu0 0
  %5825 = vmatprep.mubr.bf16.mxu0 0
  %5826 = vmatmul.mubr.bf16.gmra.mrb[0].mxu0 %v5791
  %v5827 = vpop.f32.mrb[0].mxu0
  %v5828 = vadd.f32 %v5776, %v5827
  %v5829 = vpop.f32.mrb[0].mxu0
  %v5830 = vpop.f32.mrb[0].mxu0
  %v5831 = vadd.f32 %v5776, %v5830
  %v5832 = vpop.f32.mrb[0].mxu0
  %5833 = vdwg.mxu0
  %5834 = vst [vmem:[%s105] sm:$0xff] %v5828
  %5835 = vst [vmem:[%s105 + $0x8] sm:$0xff] %v5831
  // Predicated region
  $region210: #{temporal_transformer_forward.1} parent=0 // pred_check
    _
  $region211: #{temporal_transformer_forward.1} parent=0 // pred_check_branch
    %5837 = sbr.rel (0) target = $region213
  $region212: #{temporal_transformer_forward.1} parent=0 // pred_region
    _
  $region213: #{temporal_transformer_forward.1} parent=0 // pred_fallthru
    _
  // Predicated region
  $region214: #{temporal_transformer_forward.1} parent=0 // pred_check
    _
  $region215: #{temporal_transformer_forward.1} parent=0 // pred_check_branch
    %5839 = sbr.rel (0) target = $region217
  $region216: #{temporal_transformer_forward.1} parent=0 // pred_region
    _
  $region217: #{temporal_transformer_forward.1} parent=0 // pred_fallthru
    _

</llo_original>
